<compile_context>
chip_gen: v5e
topology: v5e:2x2
jax: 0.10.0
libtpu: 0.0.40
codegen_flags: <defaults>
</compile_context>

<pallas_src>
import functools

import jax
import jax.numpy as jnp
from jax import lax
from jax.experimental import pallas as pl
from jax.experimental.pallas import tpu as pltpu

# ----------------------------- model config (scaled-down ViT) ----------------
IMG_SIZE = 32          # original module uses 224
PATCH = 16
IN_CHANS = 3
VIT_DIM = 128          # plays the role of 768 in ViT-Base
NUM_HEADS = 2
HEAD_DIM = VIT_DIM // NUM_HEADS
DEPTH = 2              # ViT-Base has 12 blocks
MLP_DIM = 4 * VIT_DIM
EMBED_DIM = 256        # to_embedding output (original default 2048)
LN_EPS = 1e-6          # DINO VisionTransformer uses LayerNorm(eps=1e-6)
GRID_STEPS = 2         # one parallel grid step per TensorCore on v7x

_SQRT_HALF = 0.7071067811865476


# ----------------------------- in-kernel helpers ------------------------------
def _erf_approx(x):
    # float32-accurate rational approximation of erf (Abramowitz & Stegun 7.1.26,
    # max abs err ~1.5e-7) -> matches torch.nn.GELU (exact/erf form) at f32
    # tolerance while only using ops that lower on Mosaic.  The divide runs on
    # the EUP via pl.reciprocal(approx=True).
    a1, a2, a3, a4, a5 = (0.254829592, -0.284496736, 1.421413741,
                          -1.453152027, 1.061405429)
    pconst = 0.3275911
    sgn = jnp.where(x >= 0.0, 1.0, -1.0)
    ax = jnp.abs(x)
    t = pl.reciprocal(1.0 + pconst * ax, approx=True)
    poly = ((((a5 * t + a4) * t + a3) * t + a2) * t + a1) * t
    return sgn * (1.0 - poly * jnp.exp(-ax * ax))


def _gelu(y):
    return 0.5 * y * (1.0 + _erf_approx(y * _SQRT_HALF))


def _layernorm(x, g, b, eps):
    # x: [R, D] f32, g/b: [1, D] f32
    mean = jnp.mean(x, axis=-1, keepdims=True)
    xc = x - mean
    var = jnp.mean(xc * xc, axis=-1, keepdims=True)   # biased, like torch
    return xc * lax.rsqrt(var + eps) * g + b


# ----------------------------- fused ViT kernel -------------------------------
def _vit_encoder_kernel(patches_ref, add_tok_ref, patch_w_ref,
                        ln1_g_ref, ln1_b_ref, qkv_w_ref, qkv_b_ref,
                        proj_w_ref, proj_b_ref, ln2_g_ref, ln2_b_ref,
                        fc1_w_ref, fc1_b_ref, fc2_w_ref, fc2_b_ref,
                        norm_g_ref, norm_b_ref, emb_w_ref, emb_b_ref,
                        out_ref, attn_ref,
                        *, depth, num_heads, head_dim, n_tok, imgs_per_step, eps):
    dim = num_heads * head_dim
    bf16 = jnp.bfloat16

    # ---- patch embedding, batched over all images of this step -----------------
    # Every image's row 0 of `patches` is all zeros (CLS slot); `add_tok` carries
    # cls_token + pos_embed (+ patch bias on the non-CLS rows).
    p = patches_ref[0]                                               # [R, cpp] bf16
    x = jnp.dot(p, patch_w_ref[...], preferred_element_type=jnp.float32)
    x = x + add_tok_ref[...]                                         # [R, D] f32

    for d in range(depth):                     # static unroll over blocks
        # ---- MHSA (pre-LN): LN1 -> QKV -> per-image/head attention -> proj ----
        h = _layernorm(x, ln1_g_ref[d], ln1_b_ref[d], eps)
        qkv = jnp.dot(h.astype(bf16), qkv_w_ref[d],
                      preferred_element_type=jnp.float32) + qkv_b_ref[d]  # [R,3D]
        # Q columns were pre-scaled by head_dim**-0.5 in pack_params.
        for i in range(imgs_per_step):         # static unroll over images
            r0 = i * n_tok
            for hh in range(num_heads):        # static unroll over heads
                c = hh * head_dim
                qh = qkv[r0:r0 + n_tok, c:c + head_dim].astype(bf16)
                kh = qkv[r0:r0 + n_tok, dim + c:dim + c + head_dim].astype(bf16)
                vh = qkv[r0:r0 + n_tok,
                         2 * dim + c:2 * dim + c + head_dim].astype(bf16)
                s = lax.dot_general(qh, kh, (((1,), (1,)), ((), ())),
                                    preferred_element_type=jnp.float32)
                s = s - jnp.max(s, axis=-1, keepdims=True)
                e = jnp.exp(s)
                pa = e * pl.reciprocal(jnp.sum(e, axis=-1, keepdims=True),
                                       approx=True)
                # store this head's output at its lane/sublane offset (no concat)
                attn_ref[r0:r0 + n_tok, c:c + head_dim] = jnp.dot(
                    pa.astype(bf16), vh, preferred_element_type=jnp.float32)
        # output projection batched over all rows of the step
        x = x + jnp.dot(attn_ref[...].astype(bf16), proj_w_ref[d],
                        preferred_element_type=jnp.float32) + proj_b_ref[d]

        # ---- MLP (pre-LN): LN2 -> fc1 -> exact GELU -> fc2 -> +res -------------
        h = _layernorm(x, ln2_g_ref[d], ln2_b_ref[d], eps)
        h = jnp.dot(h.astype(bf16), fc1_w_ref[d],
                    preferred_element_type=jnp.float32) + fc1_b_ref[d]
        h = _gelu(h)
        x = x + jnp.dot(h.astype(bf16), fc2_w_ref[d],
                        preferred_element_type=jnp.float32) + fc2_b_ref[d]

    # ---- final LN + to_embedding ------------------------------------------------
    x = _layernorm(x, norm_g_ref[...], norm_b_ref[...], eps)
    out = jnp.dot(x.astype(bf16), emb_w_ref[...],
                  preferred_element_type=jnp.float32) + emb_b_ref[...]   # [R, E]
    out_ref[0] = out.astype(out_ref.dtype)     # single lane-dense contiguous store


# ----------------------------- parameters -------------------------------------
def init_params(key):
    """Deterministic synthetic weights (original module loads a DINO checkpoint)."""
    kit = iter(jax.random.split(key, 64))

    def nrm(shape, std=0.02):
        return (std * jax.random.normal(next(kit), shape)).astype(jnp.float32)

    num_tokens = (IMG_SIZE // PATCH) ** 2 + 1
    params = {
        # PatchEmbed conv weight [D, C, p, p] stored flattened/transposed as
        # [C*p*p, D] with (c, kh, kw) ordering, matching the conv reduction order.
        "patch_w": nrm((IN_CHANS * PATCH * PATCH, VIT_DIM)),
        "patch_b": jnp.zeros((VIT_DIM,), jnp.float32),
        "cls_token": nrm((1, 1, VIT_DIM)),
        "pos_embed": nrm((1, num_tokens, VIT_DIM)),
        "norm_g": jnp.ones((VIT_DIM,), jnp.float32),
        "norm_b": jnp.zeros((VIT_DIM,), jnp.float32),
        # to_embedding: weight ~ U(-0.1, 0.1) as in init_weights(); stored [in, out]
        "emb_w": jax.random.uniform(next(kit), (VIT_DIM, EMBED_DIM),
                                    jnp.float32, -0.1, 0.1),
        "emb_b": jax.random.uniform(next(kit), (EMBED_DIM,), jnp.float32,
                                    -1.0, 1.0) / jnp.sqrt(float(VIT_DIM)),
        "blocks": [],
    }
    for _ in range(DEPTH):
        params["blocks"].append({
            "ln1_g": jnp.ones((VIT_DIM,), jnp.float32),
            "ln1_b": jnp.zeros((VIT_DIM,), jnp.float32),
            "qkv_w": nrm((VIT_DIM, 3 * VIT_DIM)),
            "qkv_b": jnp.zeros((3 * VIT_DIM,), jnp.float32),
            "proj_w": nrm((VIT_DIM, VIT_DIM)),
            "proj_b": jnp.zeros((VIT_DIM,), jnp.float32),
            "ln2_g": jnp.ones((VIT_DIM,), jnp.float32),
            "ln2_b": jnp.zeros((VIT_DIM,), jnp.float32),
            "fc1_w": nrm((VIT_DIM, MLP_DIM)),
            "fc1_b": jnp.zeros((MLP_DIM,), jnp.float32),
            "fc2_w": nrm((MLP_DIM, VIT_DIM)),
            "fc2_b": jnp.zeros((VIT_DIM,), jnp.float32),
        })
    return params


def pack_params(params):
    """Stack per-block weights along DEPTH, cast matmul operands to bf16, fold the
    attention scale into the Q columns, and fold cls_token + pos_embed + patch bias
    into one additive [n_tok, D] term (the CLS row of `patches` is all zeros)."""
    D, E = VIT_DIM, EMBED_DIM
    bf16, f32 = jnp.bfloat16, jnp.float32

    def stack(name):
        return jnp.stack([blk[name] for blk in params["blocks"]], axis=0)

    pos = params["pos_embed"][0].astype(f32)                       # [n_tok, D]
    add_tok = pos + params["patch_b"][None, :].astype(f32)         # rows 1.. need +patch_b
    add_tok = add_tok.at[0].set(params["cls_token"][0, 0] + pos[0])  # CLS row

    # Pre-scale Q columns by head_dim**-0.5 (= 0.125 exactly, so bf16-exact).
    qscale = float(HEAD_DIM) ** -0.5
    qkv_w = stack("qkv_w")
    qkv_w = qkv_w.at[:, :, :D].multiply(qscale)
    qkv_b = stack("qkv_b")
    qkv_b = qkv_b.at[:, :D].multiply(qscale)

    return {
        "add_tok": add_tok,                                        # [n_tok, D] f32
        "patch_w": params["patch_w"].astype(bf16),
        "ln1_g": stack("ln1_g")[:, None, :].astype(f32),
        "ln1_b": stack("ln1_b")[:, None, :].astype(f32),
        "qkv_w": qkv_w.astype(bf16),
        "qkv_b": qkv_b[:, None, :].astype(f32),
        "proj_w": stack("proj_w").astype(bf16),
        "proj_b": stack("proj_b")[:, None, :].astype(f32),
        "ln2_g": stack("ln2_g")[:, None, :].astype(f32),
        "ln2_b": stack("ln2_b")[:, None, :].astype(f32),
        "fc1_w": stack("fc1_w").astype(bf16),
        "fc1_b": stack("fc1_b")[:, None, :].astype(f32),
        "fc2_w": stack("fc2_w").astype(bf16),
        "fc2_b": stack("fc2_b")[:, None, :].astype(f32),
        "norm_g": params["norm_g"].reshape(1, D).astype(f32),
        "norm_b": params["norm_b"].reshape(1, D).astype(f32),
        "emb_w": params["emb_w"].astype(bf16),
        "emb_b": params["emb_b"].reshape(1, E).astype(f32),
    }


# ----------------------------- forward -----------------------------------------
def vit_encoder_forward(packed, images, *, grid_steps=GRID_STEPS):
    """Returns (out[:, 1:], out[:, 0]) like ViTEncoder.forward."""
    B, C, H, W = images.shape
    # TODO(synk): original module bilinearly resizes to 224x224 when H != 224;
    # this scaled-down kernel requires H == W == IMG_SIZE instead.
    assert H == IMG_SIZE and W == IMG_SIZE and C == IN_CHANS
    assert B % grid_steps == 0, "batch must split evenly across grid steps"
    b_blk = B // grid_steps
    p = PATCH
    nh, nw = H // p, W // p
    n_patch = nh * nw
    n_tok = n_patch + 1
    cpp = C * p * p
    rows = b_blk * n_tok          # MXU M per step (pick B so this is a mult. of 8)

    # Patchify NCHW -> [B, n_patch, C*p*p], prepend a zero row per image (the CLS
    # slot; add_tok supplies cls_token + pos_embed there), stack per grid step and
    # cast to bf16 (halves the only batch-scaling HBM->VMEM DMA).
    # TODO(synk): fold this strided patchify + CLS-row concat into the kernel's
    # DMA (BlockSpec over (b, nh, nw) windows) for the full 224x224 configuration.
    patches = images.reshape(B, C, nh, p, nw, p)
    patches = jnp.transpose(patches, (0, 2, 4, 1, 3, 5)).reshape(B, n_patch, cpp)
    patches = jnp.concatenate(
        [jnp.zeros((B, 1, cpp), patches.dtype), patches], axis=1)   # [B, n_tok, cpp]
    patches = patches.reshape(grid_steps, rows, cpp).astype(jnp.bfloat16)

    # cls/pos/patch-bias additive term, tiled over the images of one step.
    add_tok = jnp.tile(packed["add_tok"], (b_blk, 1))               # [rows, D] f32

    def const_spec(arr):
        nd = arr.ndim
        return pl.BlockSpec(arr.shape, lambda g, nd=nd: (0,) * nd)

    in_arrays = (patches, add_tok, packed["patch_w"],
                 packed["ln1_g"], packed["ln1_b"], packed["qkv_w"], packed["qkv_b"],
                 packed["proj_w"], packed["proj_b"], packed["ln2_g"], packed["ln2_b"],
                 packed["fc1_w"], packed["fc1_b"], packed["fc2_w"], packed["fc2_b"],
                 packed["norm_g"], packed["norm_b"], packed["emb_w"], packed["emb_b"])
    in_specs = ([pl.BlockSpec((1, rows, cpp), lambda g: (g, 0, 0))]
                + [const_spec(a) for a in in_arrays[1:]])

    out_shape = jax.ShapeDtypeStruct((grid_steps, rows, EMBED_DIM), jnp.float32)
    out_specs = pl.BlockSpec((1, rows, EMBED_DIM), lambda g: (g, 0, 0))

    kern = functools.partial(_vit_encoder_kernel, depth=DEPTH,
                             num_heads=NUM_HEADS, head_dim=HEAD_DIM,
                             n_tok=n_tok, imgs_per_step=b_blk, eps=LN_EPS)
    out = pl.pallas_call(
        kern,
        out_shape=out_shape,
        grid=(grid_steps,),
        in_specs=in_specs,
        out_specs=out_specs,
        scratch_shapes=[pltpu.VMEM((rows, VIT_DIM), jnp.float32)],  # head outputs
        compiler_params=pltpu.CompilerParams(
            dimension_semantics=("parallel",)),   # one image-group per TC on v7x
    )(*in_arrays)

    out = out.reshape(B, n_tok, EMBED_DIM)
    return out[:, 1:], out[:, 0]


# ----------------------------- pure-JAX reference -------------------------------
def reference_forward(params, images):
    B, C, H, W = images.shape
    p = PATCH
    nh, nw = H // p, W // p
    n_patch = nh * nw
    patches = images.reshape(B, C, nh, p, nw, p)
    patches = jnp.transpose(patches, (0, 2, 4, 1, 3, 5)).reshape(B, n_patch, C * p * p)
    x = patches @ params["patch_w"] + params["patch_b"]
    cls = jnp.broadcast_to(params["cls_token"], (B, 1, VIT_DIM))
    x = jnp.concatenate([cls, x], axis=1) + params["pos_embed"]
    scale = HEAD_DIM ** -0.5

    def ln(x, g, b):
        m = jnp.mean(x, -1, keepdims=True)
        v = jnp.mean((x - m) ** 2, -1, keepdims=True)
        return (x - m) * lax.rsqrt(v + LN_EPS) * g + b

    for blk in params["blocks"]:
        h = ln(x, blk["ln1_g"], blk["ln1_b"])
        qkv = (h @ blk["qkv_w"] + blk["qkv_b"]).reshape(B, -1, 3, NUM_HEADS, HEAD_DIM)
        q = jnp.moveaxis(qkv[:, :, 0], 2, 1)
        k = jnp.moveaxis(qkv[:, :, 1], 2, 1)
        v = jnp.moveaxis(qkv[:, :, 2], 2, 1)
        s = jnp.einsum("bhqd,bhkd->bhqk", q, k) * scale
        pa = jax.nn.softmax(s, axis=-1)
        o = jnp.einsum("bhqk,bhkd->bhqd", pa, v)
        o = jnp.moveaxis(o, 1, 2).reshape(B, -1, VIT_DIM)
        x = x + o @ blk["proj_w"] + blk["proj_b"]
        h = ln(x, blk["ln2_g"], blk["ln2_b"])
        h = jax.nn.gelu(h @ blk["fc1_w"] + blk["fc1_b"], approximate=False)
        x = x + h @ blk["fc2_w"] + blk["fc2_b"]
    x = ln(x, params["norm_g"], params["norm_b"])
    out = x @ params["emb_w"] + params["emb_b"]
    return out[:, 1:], out[:, 0]


# ----------------------------- main ---------------------------------------------
if __name__ == "__main__":
    root = jax.random.PRNGKey(0)
    pkey, ikey = jax.random.split(root)
    params = init_params(pkey)
    packed = pack_params(params)

    # 16 images -> 2 grid steps x 8 images x 5 tokens = 40 MXU rows per step
    # (a multiple of 8; at the real 224x224 geometry this is 197 tokens/image).
    BATCH = 16
    images = jax.random.normal(ikey, (BATCH, IN_CHANS, IMG_SIZE, IMG_SIZE),
                               jnp.float32)

    fwd = jax.jit(vit_encoder_forward)
    patch_tokens, cls_tok = fwd(packed, images)
    jax.block_until_ready((patch_tokens, cls_tok))

    n_patch = (IMG_SIZE // PATCH) ** 2
    assert patch_tokens.shape == (BATCH, n_patch, EMBED_DIM)
    assert cls_tok.shape == (BATCH, EMBED_DIM)
    assert bool(jnp.all(jnp.isfinite(patch_tokens))) and bool(jnp.all(jnp.isfinite(cls_tok)))

    # Loose check vs. f32 reference (kernel matmuls run in bf16 on the MXU,
    # softmax/GELU use approx reciprocals).
    ref_patch, ref_cls = jax.jit(reference_forward)(params, images)
    err = max(float(jnp.max(jnp.abs(patch_tokens - ref_patch))),
              float(jnp.max(jnp.abs(cls_tok - ref_cls))))
    assert err < 0.1, f"mismatch vs reference: {err}"

    print("KERNEL_OK")
</pallas_src>

<mosaic_0001>
module attributes {stable_mosaic.version = 11 : i64} {
  func.func @_vit_encoder_kernel(%arg0: i32, %arg1: memref<1x40x768xbf16, #tpu.memory_space<vmem>>, %arg2: memref<40x128xf32, #tpu.memory_space<vmem>>, %arg3: memref<768x128xbf16, #tpu.memory_space<vmem>>, %arg4: memref<2x1x128xf32, #tpu.memory_space<vmem>>, %arg5: memref<2x1x128xf32, #tpu.memory_space<vmem>>, %arg6: memref<2x128x384xbf16, #tpu.memory_space<vmem>>, %arg7: memref<2x1x384xf32, #tpu.memory_space<vmem>>, %arg8: memref<2x128x128xbf16, #tpu.memory_space<vmem>>, %arg9: memref<2x1x128xf32, #tpu.memory_space<vmem>>, %arg10: memref<2x1x128xf32, #tpu.memory_space<vmem>>, %arg11: memref<2x1x128xf32, #tpu.memory_space<vmem>>, %arg12: memref<2x128x512xbf16, #tpu.memory_space<vmem>>, %arg13: memref<2x1x512xf32, #tpu.memory_space<vmem>>, %arg14: memref<2x512x128xbf16, #tpu.memory_space<vmem>>, %arg15: memref<2x1x128xf32, #tpu.memory_space<vmem>>, %arg16: memref<1x128xf32, #tpu.memory_space<vmem>>, %arg17: memref<1x128xf32, #tpu.memory_space<vmem>>, %arg18: memref<128x256xbf16, #tpu.memory_space<vmem>>, %arg19: memref<1x256xf32, #tpu.memory_space<vmem>>, %arg20: memref<1x40x256xf32, #tpu.memory_space<vmem>>, %arg21: memref<40x128xf32, #tpu.memory_space<vmem>>) attributes {dimension_semantics = [#tpu.dimension_semantics<parallel>], iteration_bounds = array<i64: 2>, scalar_prefetch = 0 : i64, scratch_operands = 1 : i64, tpu.core_type = #tpu.core_type<tc>, window_params = [{transform_indices = @transform_0, window_bounds = array<i64: 1, 40, 768>}, {pipeline_mode = #tpu.pipeline_mode<synchronous>, transform_indices = @transform_1, window_bounds = array<i64: 40, 128>}, {pipeline_mode = #tpu.pipeline_mode<synchronous>, transform_indices = @transform_2, window_bounds = array<i64: 768, 128>}, {pipeline_mode = #tpu.pipeline_mode<synchronous>, transform_indices = @transform_3, window_bounds = array<i64: 2, 1, 128>}, {pipeline_mode = #tpu.pipeline_mode<synchronous>, transform_indices = @transform_4, window_bounds = array<i64: 2, 1, 128>}, {pipeline_mode = #tpu.pipeline_mode<synchronous>, transform_indices = @transform_5, window_bounds = array<i64: 2, 128, 384>}, {pipeline_mode = #tpu.pipeline_mode<synchronous>, transform_indices = @transform_6, window_bounds = array<i64: 2, 1, 384>}, {pipeline_mode = #tpu.pipeline_mode<synchronous>, transform_indices = @transform_7, window_bounds = array<i64: 2, 128, 128>}, {pipeline_mode = #tpu.pipeline_mode<synchronous>, transform_indices = @transform_8, window_bounds = array<i64: 2, 1, 128>}, {pipeline_mode = #tpu.pipeline_mode<synchronous>, transform_indices = @transform_9, window_bounds = array<i64: 2, 1, 128>}, {pipeline_mode = #tpu.pipeline_mode<synchronous>, transform_indices = @transform_10, window_bounds = array<i64: 2, 1, 128>}, {pipeline_mode = #tpu.pipeline_mode<synchronous>, transform_indices = @transform_11, window_bounds = array<i64: 2, 128, 512>}, {pipeline_mode = #tpu.pipeline_mode<synchronous>, transform_indices = @transform_12, window_bounds = array<i64: 2, 1, 512>}, {pipeline_mode = #tpu.pipeline_mode<synchronous>, transform_indices = @transform_13, window_bounds = array<i64: 2, 512, 128>}, {pipeline_mode = #tpu.pipeline_mode<synchronous>, transform_indices = @transform_14, window_bounds = array<i64: 2, 1, 128>}, {pipeline_mode = #tpu.pipeline_mode<synchronous>, transform_indices = @transform_15, window_bounds = array<i64: 1, 128>}, {pipeline_mode = #tpu.pipeline_mode<synchronous>, transform_indices = @transform_16, window_bounds = array<i64: 1, 128>}, {pipeline_mode = #tpu.pipeline_mode<synchronous>, transform_indices = @transform_17, window_bounds = array<i64: 128, 256>}, {pipeline_mode = #tpu.pipeline_mode<synchronous>, transform_indices = @transform_18, window_bounds = array<i64: 1, 256>}, {transform_indices = @transform_19, window_bounds = array<i64: 1, 40, 256>}]} {
    %c0 = arith.constant 0 : index
    %c0_0 = arith.constant 0 : index
    %c0_1 = arith.constant 0 : index
    %0 = vector.load %arg1[%c0, %c0_0, %c0_1] : memref<1x40x768xbf16, #tpu.memory_space<vmem>>, vector<1x40x768xbf16>
    %1 = vector.shape_cast %0 : vector<1x40x768xbf16> to vector<40x768xbf16>
    %c0_2 = arith.constant 0 : index
    %c0_3 = arith.constant 0 : index
    %2 = vector.load %arg3[%c0_2, %c0_3] : memref<768x128xbf16, #tpu.memory_space<vmem>>, vector<768x128xbf16>
    %cst = arith.constant dense<0.000000e+00> : vector<40x128xf32>
    %3 = tpu.matmul %1, %2, %cst {dimension_numbers = #tpu.dot_dimension_numbers<[1], [0], [0], [1], [0, 0, 1, 1], [], []>} : vector<40x768xbf16>, vector<768x128xbf16>, vector<40x128xf32> -> vector<40x128xf32>
    %c0_4 = arith.constant 0 : index
    %c0_5 = arith.constant 0 : index
    %4 = vector.load %arg2[%c0_4, %c0_5] : memref<40x128xf32, #tpu.memory_space<vmem>>, vector<40x128xf32>
    %5 = arith.addf %3, %4 : vector<40x128xf32>
    %c0_6 = arith.constant 0 : index
    %c0_7 = arith.constant 0 : index
    %c0_8 = arith.constant 0 : index
    %6 = vector.load %arg4[%c0_6, %c0_7, %c0_8] : memref<2x1x128xf32, #tpu.memory_space<vmem>>, vector<1x1x128xf32>
    %7 = vector.shape_cast %6 : vector<1x1x128xf32> to vector<1x128xf32>
    %c0_9 = arith.constant 0 : index
    %c0_10 = arith.constant 0 : index
    %c0_11 = arith.constant 0 : index
    %8 = vector.load %arg5[%c0_9, %c0_10, %c0_11] : memref<2x1x128xf32, #tpu.memory_space<vmem>>, vector<1x1x128xf32>
    %9 = vector.shape_cast %8 : vector<1x1x128xf32> to vector<1x128xf32>
    %cst_12 = arith.constant dense<0.000000e+00> : vector<40xf32>
    %10 = vector.multi_reduction <add>, %5, %cst_12 [1] : vector<40x128xf32> to vector<40xf32>
    %11 = vector.shape_cast %10 : vector<40xf32> to vector<40x1xf32>
    %cst_13 = arith.constant 1.280000e+02 : f32
    %12 = vector.broadcast %cst_13 : f32 to vector<40x1xf32>
    %13 = arith.divf %11, %12 : vector<40x1xf32>
    %14 = vector.broadcast %13 : vector<40x1xf32> to vector<40x128xf32>
    %15 = arith.subf %5, %14 : vector<40x128xf32>
    %16 = arith.mulf %15, %15 : vector<40x128xf32>
    %cst_14 = arith.constant dense<0.000000e+00> : vector<40xf32>
    %17 = vector.multi_reduction <add>, %16, %cst_14 [1] : vector<40x128xf32> to vector<40xf32>
    %18 = vector.shape_cast %17 : vector<40xf32> to vector<40x1xf32>
    %cst_15 = arith.constant 1.280000e+02 : f32
    %19 = vector.broadcast %cst_15 : f32 to vector<40x1xf32>
    %20 = arith.divf %18, %19 : vector<40x1xf32>
    %cst_16 = arith.constant 9.99999997E-7 : f32
    %21 = vector.broadcast %cst_16 : f32 to vector<40x1xf32>
    %22 = arith.addf %20, %21 : vector<40x1xf32>
    %23 = math.rsqrt %22 : vector<40x1xf32>
    %24 = vector.broadcast %23 : vector<40x1xf32> to vector<40x128xf32>
    %25 = arith.mulf %15, %24 : vector<40x128xf32>
    %26 = vector.broadcast %7 : vector<1x128xf32> to vector<40x128xf32>
    %27 = arith.mulf %25, %26 : vector<40x128xf32>
    %28 = vector.broadcast %9 : vector<1x128xf32> to vector<40x128xf32>
    %29 = arith.addf %27, %28 : vector<40x128xf32>
    %30 = arith.truncf %29 : vector<40x128xf32> to vector<40x128xbf16>
    %c0_17 = arith.constant 0 : index
    %c0_18 = arith.constant 0 : index
    %c0_19 = arith.constant 0 : index
    %31 = vector.load %arg6[%c0_17, %c0_18, %c0_19] : memref<2x128x384xbf16, #tpu.memory_space<vmem>>, vector<1x128x384xbf16>
    %32 = vector.shape_cast %31 : vector<1x128x384xbf16> to vector<128x384xbf16>
    %cst_20 = arith.constant dense<0.000000e+00> : vector<40x384xf32>
    %33 = tpu.matmul %30, %32, %cst_20 {dimension_numbers = #tpu.dot_dimension_numbers<[1], [0], [0], [1], [0, 0, 1, 1], [], []>} : vector<40x128xbf16>, vector<128x384xbf16>, vector<40x384xf32> -> vector<40x384xf32>
    %c0_21 = arith.constant 0 : index
    %c0_22 = arith.constant 0 : index
    %c0_23 = arith.constant 0 : index
    %34 = vector.load %arg7[%c0_21, %c0_22, %c0_23] : memref<2x1x384xf32, #tpu.memory_space<vmem>>, vector<1x1x384xf32>
    %35 = vector.shape_cast %34 : vector<1x1x384xf32> to vector<1x384xf32>
    %36 = vector.broadcast %35 : vector<1x384xf32> to vector<40x384xf32>
    %37 = arith.addf %33, %36 : vector<40x384xf32>
    %38 = vector.extract_strided_slice %37 {offsets = [0, 0], sizes = [5, 64], strides = [1, 1]} : vector<40x384xf32> to vector<5x64xf32>
    %39 = arith.truncf %38 : vector<5x64xf32> to vector<5x64xbf16>
    %40 = vector.extract_strided_slice %37 {offsets = [0, 128], sizes = [5, 64], strides = [1, 1]} : vector<40x384xf32> to vector<5x64xf32>
    %41 = arith.truncf %40 : vector<5x64xf32> to vector<5x64xbf16>
    %42 = vector.extract_strided_slice %37 {offsets = [0, 256], sizes = [5, 64], strides = [1, 1]} : vector<40x384xf32> to vector<5x64xf32>
    %43 = arith.truncf %42 : vector<5x64xf32> to vector<5x64xbf16>
    %cst_24 = arith.constant dense<0.000000e+00> : vector<5x5xf32>
    %44 = tpu.matmul %39, %41, %cst_24 {dimension_numbers = #tpu.dot_dimension_numbers<[1], [1], [0], [0], [0, 0, 1, 0], [], []>} : vector<5x64xbf16>, vector<5x64xbf16>, vector<5x5xf32> -> vector<5x5xf32>
    %cst_25 = arith.constant dense<0xFF800000> : vector<5xf32>
    %45 = vector.multi_reduction <maximumf>, %44, %cst_25 [1] : vector<5x5xf32> to vector<5xf32>
    %46 = vector.shape_cast %45 : vector<5xf32> to vector<5x1xf32>
    %47 = vector.broadcast %46 : vector<5x1xf32> to vector<5x5xf32>
    %48 = arith.subf %44, %47 : vector<5x5xf32>
    %49 = math.exp %48 : vector<5x5xf32>
    %cst_26 = arith.constant dense<0.000000e+00> : vector<5xf32>
    %50 = vector.multi_reduction <add>, %49, %cst_26 [1] : vector<5x5xf32> to vector<5xf32>
    %51 = vector.shape_cast %50 : vector<5xf32> to vector<5x1xf32>
    %52 = tpu.reciprocal %51 {approx = true} : vector<5x1xf32> -> vector<5x1xf32>
    %53 = vector.broadcast %52 : vector<5x1xf32> to vector<5x5xf32>
    %54 = arith.mulf %49, %53 : vector<5x5xf32>
    %55 = arith.truncf %54 : vector<5x5xf32> to vector<5x5xbf16>
    %cst_27 = arith.constant dense<0.000000e+00> : vector<5x64xf32>
    %56 = tpu.matmul %55, %43, %cst_27 {dimension_numbers = #tpu.dot_dimension_numbers<[1], [0], [0], [1], [0, 0, 1, 1], [], []>} : vector<5x5xbf16>, vector<5x64xbf16>, vector<5x64xf32> -> vector<5x64xf32>
    %c0_28 = arith.constant 0 : index
    %c0_29 = arith.constant 0 : index
    %57 = vector.load %arg21[%c0_28, %c0_29] : memref<40x128xf32, #tpu.memory_space<vmem>>, vector<5x64xf32>
    tpu.vector_store %arg21[%c0_28, %c0_29], %56 {strides = array<i32>} : memref<40x128xf32, #tpu.memory_space<vmem>>, vector<5x64xf32>,
    %58 = vector.extract_strided_slice %37 {offsets = [0, 64], sizes = [5, 64], strides = [1, 1]} : vector<40x384xf32> to vector<5x64xf32>
    %59 = arith.truncf %58 : vector<5x64xf32> to vector<5x64xbf16>
    %60 = vector.extract_strided_slice %37 {offsets = [0, 192], sizes = [5, 64], strides = [1, 1]} : vector<40x384xf32> to vector<5x64xf32>
    %61 = arith.truncf %60 : vector<5x64xf32> to vector<5x64xbf16>
    %62 = vector.extract_strided_slice %37 {offsets = [0, 320], sizes = [5, 64], strides = [1, 1]} : vector<40x384xf32> to vector<5x64xf32>
    %63 = arith.truncf %62 : vector<5x64xf32> to vector<5x64xbf16>
    %cst_30 = arith.constant dense<0.000000e+00> : vector<5x5xf32>
    %64 = tpu.matmul %59, %61, %cst_30 {dimension_numbers = #tpu.dot_dimension_numbers<[1], [1], [0], [0], [0, 0, 1, 0], [], []>} : vector<5x64xbf16>, vector<5x64xbf16>, vector<5x5xf32> -> vector<5x5xf32>
    %cst_31 = arith.constant dense<0xFF800000> : vector<5xf32>
    %65 = vector.multi_reduction <maximumf>, %64, %cst_31 [1] : vector<5x5xf32> to vector<5xf32>
    %66 = vector.shape_cast %65 : vector<5xf32> to vector<5x1xf32>
    %67 = vector.broadcast %66 : vector<5x1xf32> to vector<5x5xf32>
    %68 = arith.subf %64, %67 : vector<5x5xf32>
    %69 = math.exp %68 : vector<5x5xf32>
    %cst_32 = arith.constant dense<0.000000e+00> : vector<5xf32>
    %70 = vector.multi_reduction <add>, %69, %cst_32 [1] : vector<5x5xf32> to vector<5xf32>
    %71 = vector.shape_cast %70 : vector<5xf32> to vector<5x1xf32>
    %72 = tpu.reciprocal %71 {approx = true} : vector<5x1xf32> -> vector<5x1xf32>
    %73 = vector.broadcast %72 : vector<5x1xf32> to vector<5x5xf32>
    %74 = arith.mulf %69, %73 : vector<5x5xf32>
    %75 = arith.truncf %74 : vector<5x5xf32> to vector<5x5xbf16>
    %cst_33 = arith.constant dense<0.000000e+00> : vector<5x64xf32>
    %76 = tpu.matmul %75, %63, %cst_33 {dimension_numbers = #tpu.dot_dimension_numbers<[1], [0], [0], [1], [0, 0, 1, 1], [], []>} : vector<5x5xbf16>, vector<5x64xbf16>, vector<5x64xf32> -> vector<5x64xf32>
    %c0_34 = arith.constant 0 : index
    %c64 = arith.constant 64 : index
    %77 = vector.load %arg21[%c0_34, %c64] : memref<40x128xf32, #tpu.memory_space<vmem>>, vector<5x64xf32>
    tpu.vector_store %arg21[%c0_34, %c64], %76 {strides = array<i32>} : memref<40x128xf32, #tpu.memory_space<vmem>>, vector<5x64xf32>,
    %78 = vector.extract_strided_slice %37 {offsets = [5, 0], sizes = [5, 64], strides = [1, 1]} : vector<40x384xf32> to vector<5x64xf32>
    %79 = arith.truncf %78 : vector<5x64xf32> to vector<5x64xbf16>
    %80 = vector.extract_strided_slice %37 {offsets = [5, 128], sizes = [5, 64], strides = [1, 1]} : vector<40x384xf32> to vector<5x64xf32>
    %81 = arith.truncf %80 : vector<5x64xf32> to vector<5x64xbf16>
    %82 = vector.extract_strided_slice %37 {offsets = [5, 256], sizes = [5, 64], strides = [1, 1]} : vector<40x384xf32> to vector<5x64xf32>
    %83 = arith.truncf %82 : vector<5x64xf32> to vector<5x64xbf16>
    %cst_35 = arith.constant dense<0.000000e+00> : vector<5x5xf32>
    %84 = tpu.matmul %79, %81, %cst_35 {dimension_numbers = #tpu.dot_dimension_numbers<[1], [1], [0], [0], [0, 0, 1, 0], [], []>} : vector<5x64xbf16>, vector<5x64xbf16>, vector<5x5xf32> -> vector<5x5xf32>
    %cst_36 = arith.constant dense<0xFF800000> : vector<5xf32>
    %85 = vector.multi_reduction <maximumf>, %84, %cst_36 [1] : vector<5x5xf32> to vector<5xf32>
    %86 = vector.shape_cast %85 : vector<5xf32> to vector<5x1xf32>
    %87 = vector.broadcast %86 : vector<5x1xf32> to vector<5x5xf32>
    %88 = arith.subf %84, %87 : vector<5x5xf32>
    %89 = math.exp %88 : vector<5x5xf32>
    %cst_37 = arith.constant dense<0.000000e+00> : vector<5xf32>
    %90 = vector.multi_reduction <add>, %89, %cst_37 [1] : vector<5x5xf32> to vector<5xf32>
    %91 = vector.shape_cast %90 : vector<5xf32> to vector<5x1xf32>
    %92 = tpu.reciprocal %91 {approx = true} : vector<5x1xf32> -> vector<5x1xf32>
    %93 = vector.broadcast %92 : vector<5x1xf32> to vector<5x5xf32>
    %94 = arith.mulf %89, %93 : vector<5x5xf32>
    %95 = arith.truncf %94 : vector<5x5xf32> to vector<5x5xbf16>
    %cst_38 = arith.constant dense<0.000000e+00> : vector<5x64xf32>
    %96 = tpu.matmul %95, %83, %cst_38 {dimension_numbers = #tpu.dot_dimension_numbers<[1], [0], [0], [1], [0, 0, 1, 1], [], []>} : vector<5x5xbf16>, vector<5x64xbf16>, vector<5x64xf32> -> vector<5x64xf32>
    %c5 = arith.constant 5 : index
    %c0_39 = arith.constant 0 : index
    %97 = vector.load %arg21[%c5, %c0_39] : memref<40x128xf32, #tpu.memory_space<vmem>>, vector<5x64xf32>
    tpu.vector_store %arg21[%c5, %c0_39], %96 {strides = array<i32>} : memref<40x128xf32, #tpu.memory_space<vmem>>, vector<5x64xf32>,
    %98 = vector.extract_strided_slice %37 {offsets = [5, 64], sizes = [5, 64], strides = [1, 1]} : vector<40x384xf32> to vector<5x64xf32>
    %99 = arith.truncf %98 : vector<5x64xf32> to vector<5x64xbf16>
    %100 = vector.extract_strided_slice %37 {offsets = [5, 192], sizes = [5, 64], strides = [1, 1]} : vector<40x384xf32> to vector<5x64xf32>
    %101 = arith.truncf %100 : vector<5x64xf32> to vector<5x64xbf16>
    %102 = vector.extract_strided_slice %37 {offsets = [5, 320], sizes = [5, 64], strides = [1, 1]} : vector<40x384xf32> to vector<5x64xf32>
    %103 = arith.truncf %102 : vector<5x64xf32> to vector<5x64xbf16>
    %cst_40 = arith.constant dense<0.000000e+00> : vector<5x5xf32>
    %104 = tpu.matmul %99, %101, %cst_40 {dimension_numbers = #tpu.dot_dimension_numbers<[1], [1], [0], [0], [0, 0, 1, 0], [], []>} : vector<5x64xbf16>, vector<5x64xbf16>, vector<5x5xf32> -> vector<5x5xf32>
    %cst_41 = arith.constant dense<0xFF800000> : vector<5xf32>
    %105 = vector.multi_reduction <maximumf>, %104, %cst_41 [1] : vector<5x5xf32> to vector<5xf32>
    %106 = vector.shape_cast %105 : vector<5xf32> to vector<5x1xf32>
    %107 = vector.broadcast %106 : vector<5x1xf32> to vector<5x5xf32>
    %108 = arith.subf %104, %107 : vector<5x5xf32>
    %109 = math.exp %108 : vector<5x5xf32>
    %cst_42 = arith.constant dense<0.000000e+00> : vector<5xf32>
    %110 = vector.multi_reduction <add>, %109, %cst_42 [1] : vector<5x5xf32> to vector<5xf32>
    %111 = vector.shape_cast %110 : vector<5xf32> to vector<5x1xf32>
    %112 = tpu.reciprocal %111 {approx = true} : vector<5x1xf32> -> vector<5x1xf32>
    %113 = vector.broadcast %112 : vector<5x1xf32> to vector<5x5xf32>
    %114 = arith.mulf %109, %113 : vector<5x5xf32>
    %115 = arith.truncf %114 : vector<5x5xf32> to vector<5x5xbf16>
    %cst_43 = arith.constant dense<0.000000e+00> : vector<5x64xf32>
    %116 = tpu.matmul %115, %103, %cst_43 {dimension_numbers = #tpu.dot_dimension_numbers<[1], [0], [0], [1], [0, 0, 1, 1], [], []>} : vector<5x5xbf16>, vector<5x64xbf16>, vector<5x64xf32> -> vector<5x64xf32>
    %c5_44 = arith.constant 5 : index
    %c64_45 = arith.constant 64 : index
    %117 = vector.load %arg21[%c5_44, %c64_45] : memref<40x128xf32, #tpu.memory_space<vmem>>, vector<5x64xf32>
    tpu.vector_store %arg21[%c5_44, %c64_45], %116 {strides = array<i32>} : memref<40x128xf32, #tpu.memory_space<vmem>>, vector<5x64xf32>,
    %118 = vector.extract_strided_slice %37 {offsets = [10, 0], sizes = [5, 64], strides = [1, 1]} : vector<40x384xf32> to vector<5x64xf32>
    %119 = arith.truncf %118 : vector<5x64xf32> to vector<5x64xbf16>
    %120 = vector.extract_strided_slice %37 {offsets = [10, 128], sizes = [5, 64], strides = [1, 1]} : vector<40x384xf32> to vector<5x64xf32>
    %121 = arith.truncf %120 : vector<5x64xf32> to vector<5x64xbf16>
    %122 = vector.extract_strided_slice %37 {offsets = [10, 256], sizes = [5, 64], strides = [1, 1]} : vector<40x384xf32> to vector<5x64xf32>
    %123 = arith.truncf %122 : vector<5x64xf32> to vector<5x64xbf16>
    %cst_46 = arith.constant dense<0.000000e+00> : vector<5x5xf32>
    %124 = tpu.matmul %119, %121, %cst_46 {dimension_numbers = #tpu.dot_dimension_numbers<[1], [1], [0], [0], [0, 0, 1, 0], [], []>} : vector<5x64xbf16>, vector<5x64xbf16>, vector<5x5xf32> -> vector<5x5xf32>
    %cst_47 = arith.constant dense<0xFF800000> : vector<5xf32>
    %125 = vector.multi_reduction <maximumf>, %124, %cst_47 [1] : vector<5x5xf32> to vector<5xf32>
    %126 = vector.shape_cast %125 : vector<5xf32> to vector<5x1xf32>
    %127 = vector.broadcast %126 : vector<5x1xf32> to vector<5x5xf32>
    %128 = arith.subf %124, %127 : vector<5x5xf32>
    %129 = math.exp %128 : vector<5x5xf32>
    %cst_48 = arith.constant dense<0.000000e+00> : vector<5xf32>
    %130 = vector.multi_reduction <add>, %129, %cst_48 [1] : vector<5x5xf32> to vector<5xf32>
    %131 = vector.shape_cast %130 : vector<5xf32> to vector<5x1xf32>
    %132 = tpu.reciprocal %131 {approx = true} : vector<5x1xf32> -> vector<5x1xf32>
    %133 = vector.broadcast %132 : vector<5x1xf32> to vector<5x5xf32>
    %134 = arith.mulf %129, %133 : vector<5x5xf32>
    %135 = arith.truncf %134 : vector<5x5xf32> to vector<5x5xbf16>
    %cst_49 = arith.constant dense<0.000000e+00> : vector<5x64xf32>
    %136 = tpu.matmul %135, %123, %cst_49 {dimension_numbers = #tpu.dot_dimension_numbers<[1], [0], [0], [1], [0, 0, 1, 1], [], []>} : vector<5x5xbf16>, vector<5x64xbf16>, vector<5x64xf32> -> vector<5x64xf32>
    %c10 = arith.constant 10 : index
    %c0_50 = arith.constant 0 : index
    %137 = vector.load %arg21[%c10, %c0_50] : memref<40x128xf32, #tpu.memory_space<vmem>>, vector<5x64xf32>
    tpu.vector_store %arg21[%c10, %c0_50], %136 {strides = array<i32>} : memref<40x128xf32, #tpu.memory_space<vmem>>, vector<5x64xf32>,
    %138 = vector.extract_strided_slice %37 {offsets = [10, 64], sizes = [5, 64], strides = [1, 1]} : vector<40x384xf32> to vector<5x64xf32>
    %139 = arith.truncf %138 : vector<5x64xf32> to vector<5x64xbf16>
    %140 = vector.extract_strided_slice %37 {offsets = [10, 192], sizes = [5, 64], strides = [1, 1]} : vector<40x384xf32> to vector<5x64xf32>
    %141 = arith.truncf %140 : vector<5x64xf32> to vector<5x64xbf16>
    %142 = vector.extract_strided_slice %37 {offsets = [10, 320], sizes = [5, 64], strides = [1, 1]} : vector<40x384xf32> to vector<5x64xf32>
    %143 = arith.truncf %142 : vector<5x64xf32> to vector<5x64xbf16>
    %cst_51 = arith.constant dense<0.000000e+00> : vector<5x5xf32>
    %144 = tpu.matmul %139, %141, %cst_51 {dimension_numbers = #tpu.dot_dimension_numbers<[1], [1], [0], [0], [0, 0, 1, 0], [], []>} : vector<5x64xbf16>, vector<5x64xbf16>, vector<5x5xf32> -> vector<5x5xf32>
    %cst_52 = arith.constant dense<0xFF800000> : vector<5xf32>
    %145 = vector.multi_reduction <maximumf>, %144, %cst_52 [1] : vector<5x5xf32> to vector<5xf32>
    %146 = vector.shape_cast %145 : vector<5xf32> to vector<5x1xf32>
    %147 = vector.broadcast %146 : vector<5x1xf32> to vector<5x5xf32>
    %148 = arith.subf %144, %147 : vector<5x5xf32>
    %149 = math.exp %148 : vector<5x5xf32>
    %cst_53 = arith.constant dense<0.000000e+00> : vector<5xf32>
    %150 = vector.multi_reduction <add>, %149, %cst_53 [1] : vector<5x5xf32> to vector<5xf32>
    %151 = vector.shape_cast %150 : vector<5xf32> to vector<5x1xf32>
    %152 = tpu.reciprocal %151 {approx = true} : vector<5x1xf32> -> vector<5x1xf32>
    %153 = vector.broadcast %152 : vector<5x1xf32> to vector<5x5xf32>
    %154 = arith.mulf %149, %153 : vector<5x5xf32>
    %155 = arith.truncf %154 : vector<5x5xf32> to vector<5x5xbf16>
    %cst_54 = arith.constant dense<0.000000e+00> : vector<5x64xf32>
    %156 = tpu.matmul %155, %143, %cst_54 {dimension_numbers = #tpu.dot_dimension_numbers<[1], [0], [0], [1], [0, 0, 1, 1], [], []>} : vector<5x5xbf16>, vector<5x64xbf16>, vector<5x64xf32> -> vector<5x64xf32>
    %c10_55 = arith.constant 10 : index
    %c64_56 = arith.constant 64 : index
    %157 = vector.load %arg21[%c10_55, %c64_56] : memref<40x128xf32, #tpu.memory_space<vmem>>, vector<5x64xf32>
    tpu.vector_store %arg21[%c10_55, %c64_56], %156 {strides = array<i32>} : memref<40x128xf32, #tpu.memory_space<vmem>>, vector<5x64xf32>,
    %158 = vector.extract_strided_slice %37 {offsets = [15, 0], sizes = [5, 64], strides = [1, 1]} : vector<40x384xf32> to vector<5x64xf32>
    %159 = arith.truncf %158 : vector<5x64xf32> to vector<5x64xbf16>
    %160 = vector.extract_strided_slice %37 {offsets = [15, 128], sizes = [5, 64], strides = [1, 1]} : vector<40x384xf32> to vector<5x64xf32>
    %161 = arith.truncf %160 : vector<5x64xf32> to vector<5x64xbf16>
    %162 = vector.extract_strided_slice %37 {offsets = [15, 256], sizes = [5, 64], strides = [1, 1]} : vector<40x384xf32> to vector<5x64xf32>
    %163 = arith.truncf %162 : vector<5x64xf32> to vector<5x64xbf16>
    %cst_57 = arith.constant dense<0.000000e+00> : vector<5x5xf32>
    %164 = tpu.matmul %159, %161, %cst_57 {dimension_numbers = #tpu.dot_dimension_numbers<[1], [1], [0], [0], [0, 0, 1, 0], [], []>} : vector<5x64xbf16>, vector<5x64xbf16>, vector<5x5xf32> -> vector<5x5xf32>
    %cst_58 = arith.constant dense<0xFF800000> : vector<5xf32>
    %165 = vector.multi_reduction <maximumf>, %164, %cst_58 [1] : vector<5x5xf32> to vector<5xf32>
    %166 = vector.shape_cast %165 : vector<5xf32> to vector<5x1xf32>
    %167 = vector.broadcast %166 : vector<5x1xf32> to vector<5x5xf32>
    %168 = arith.subf %164, %167 : vector<5x5xf32>
    %169 = math.exp %168 : vector<5x5xf32>
    %cst_59 = arith.constant dense<0.000000e+00> : vector<5xf32>
    %170 = vector.multi_reduction <add>, %169, %cst_59 [1] : vector<5x5xf32> to vector<5xf32>
    %171 = vector.shape_cast %170 : vector<5xf32> to vector<5x1xf32>
    %172 = tpu.reciprocal %171 {approx = true} : vector<5x1xf32> -> vector<5x1xf32>
    %173 = vector.broadcast %172 : vector<5x1xf32> to vector<5x5xf32>
    %174 = arith.mulf %169, %173 : vector<5x5xf32>
    %175 = arith.truncf %174 : vector<5x5xf32> to vector<5x5xbf16>
    %cst_60 = arith.constant dense<0.000000e+00> : vector<5x64xf32>
    %176 = tpu.matmul %175, %163, %cst_60 {dimension_numbers = #tpu.dot_dimension_numbers<[1], [0], [0], [1], [0, 0, 1, 1], [], []>} : vector<5x5xbf16>, vector<5x64xbf16>, vector<5x64xf32> -> vector<5x64xf32>
    %c15 = arith.constant 15 : index
    %c0_61 = arith.constant 0 : index
    %177 = vector.load %arg21[%c15, %c0_61] : memref<40x128xf32, #tpu.memory_space<vmem>>, vector<5x64xf32>
    tpu.vector_store %arg21[%c15, %c0_61], %176 {strides = array<i32>} : memref<40x128xf32, #tpu.memory_space<vmem>>, vector<5x64xf32>,
    %178 = vector.extract_strided_slice %37 {offsets = [15, 64], sizes = [5, 64], strides = [1, 1]} : vector<40x384xf32> to vector<5x64xf32>
    %179 = arith.truncf %178 : vector<5x64xf32> to vector<5x64xbf16>
    %180 = vector.extract_strided_slice %37 {offsets = [15, 192], sizes = [5, 64], strides = [1, 1]} : vector<40x384xf32> to vector<5x64xf32>
    %181 = arith.truncf %180 : vector<5x64xf32> to vector<5x64xbf16>
    %182 = vector.extract_strided_slice %37 {offsets = [15, 320], sizes = [5, 64], strides = [1, 1]} : vector<40x384xf32> to vector<5x64xf32>
    %183 = arith.truncf %182 : vector<5x64xf32> to vector<5x64xbf16>
    %cst_62 = arith.constant dense<0.000000e+00> : vector<5x5xf32>
    %184 = tpu.matmul %179, %181, %cst_62 {dimension_numbers = #tpu.dot_dimension_numbers<[1], [1], [0], [0], [0, 0, 1, 0], [], []>} : vector<5x64xbf16>, vector<5x64xbf16>, vector<5x5xf32> -> vector<5x5xf32>
    %cst_63 = arith.constant dense<0xFF800000> : vector<5xf32>
    %185 = vector.multi_reduction <maximumf>, %184, %cst_63 [1] : vector<5x5xf32> to vector<5xf32>
    %186 = vector.shape_cast %185 : vector<5xf32> to vector<5x1xf32>
    %187 = vector.broadcast %186 : vector<5x1xf32> to vector<5x5xf32>
    %188 = arith.subf %184, %187 : vector<5x5xf32>
    %189 = math.exp %188 : vector<5x5xf32>
    %cst_64 = arith.constant dense<0.000000e+00> : vector<5xf32>
    %190 = vector.multi_reduction <add>, %189, %cst_64 [1] : vector<5x5xf32> to vector<5xf32>
    %191 = vector.shape_cast %190 : vector<5xf32> to vector<5x1xf32>
    %192 = tpu.reciprocal %191 {approx = true} : vector<5x1xf32> -> vector<5x1xf32>
    %193 = vector.broadcast %192 : vector<5x1xf32> to vector<5x5xf32>
    %194 = arith.mulf %189, %193 : vector<5x5xf32>
    %195 = arith.truncf %194 : vector<5x5xf32> to vector<5x5xbf16>
    %cst_65 = arith.constant dense<0.000000e+00> : vector<5x64xf32>
    %196 = tpu.matmul %195, %183, %cst_65 {dimension_numbers = #tpu.dot_dimension_numbers<[1], [0], [0], [1], [0, 0, 1, 1], [], []>} : vector<5x5xbf16>, vector<5x64xbf16>, vector<5x64xf32> -> vector<5x64xf32>
    %c15_66 = arith.constant 15 : index
    %c64_67 = arith.constant 64 : index
    %197 = vector.load %arg21[%c15_66, %c64_67] : memref<40x128xf32, #tpu.memory_space<vmem>>, vector<5x64xf32>
    tpu.vector_store %arg21[%c15_66, %c64_67], %196 {strides = array<i32>} : memref<40x128xf32, #tpu.memory_space<vmem>>, vector<5x64xf32>,
    %198 = vector.extract_strided_slice %37 {offsets = [20, 0], sizes = [5, 64], strides = [1, 1]} : vector<40x384xf32> to vector<5x64xf32>
    %199 = arith.truncf %198 : vector<5x64xf32> to vector<5x64xbf16>
    %200 = vector.extract_strided_slice %37 {offsets = [20, 128], sizes = [5, 64], strides = [1, 1]} : vector<40x384xf32> to vector<5x64xf32>
    %201 = arith.truncf %200 : vector<5x64xf32> to vector<5x64xbf16>
    %202 = vector.extract_strided_slice %37 {offsets = [20, 256], sizes = [5, 64], strides = [1, 1]} : vector<40x384xf32> to vector<5x64xf32>
    %203 = arith.truncf %202 : vector<5x64xf32> to vector<5x64xbf16>
    %cst_68 = arith.constant dense<0.000000e+00> : vector<5x5xf32>
    %204 = tpu.matmul %199, %201, %cst_68 {dimension_numbers = #tpu.dot_dimension_numbers<[1], [1], [0], [0], [0, 0, 1, 0], [], []>} : vector<5x64xbf16>, vector<5x64xbf16>, vector<5x5xf32> -> vector<5x5xf32>
    %cst_69 = arith.constant dense<0xFF800000> : vector<5xf32>
    %205 = vector.multi_reduction <maximumf>, %204, %cst_69 [1] : vector<5x5xf32> to vector<5xf32>
    %206 = vector.shape_cast %205 : vector<5xf32> to vector<5x1xf32>
    %207 = vector.broadcast %206 : vector<5x1xf32> to vector<5x5xf32>
    %208 = arith.subf %204, %207 : vector<5x5xf32>
    %209 = math.exp %208 : vector<5x5xf32>
    %cst_70 = arith.constant dense<0.000000e+00> : vector<5xf32>
    %210 = vector.multi_reduction <add>, %209, %cst_70 [1] : vector<5x5xf32> to vector<5xf32>
    %211 = vector.shape_cast %210 : vector<5xf32> to vector<5x1xf32>
    %212 = tpu.reciprocal %211 {approx = true} : vector<5x1xf32> -> vector<5x1xf32>
    %213 = vector.broadcast %212 : vector<5x1xf32> to vector<5x5xf32>
    %214 = arith.mulf %209, %213 : vector<5x5xf32>
    %215 = arith.truncf %214 : vector<5x5xf32> to vector<5x5xbf16>
    %cst_71 = arith.constant dense<0.000000e+00> : vector<5x64xf32>
    %216 = tpu.matmul %215, %203, %cst_71 {dimension_numbers = #tpu.dot_dimension_numbers<[1], [0], [0], [1], [0, 0, 1, 1], [], []>} : vector<5x5xbf16>, vector<5x64xbf16>, vector<5x64xf32> -> vector<5x64xf32>
    %c20 = arith.constant 20 : index
    %c0_72 = arith.constant 0 : index
    %217 = vector.load %arg21[%c20, %c0_72] : memref<40x128xf32, #tpu.memory_space<vmem>>, vector<5x64xf32>
    tpu.vector_store %arg21[%c20, %c0_72], %216 {strides = array<i32>} : memref<40x128xf32, #tpu.memory_space<vmem>>, vector<5x64xf32>,
    %218 = vector.extract_strided_slice %37 {offsets = [20, 64], sizes = [5, 64], strides = [1, 1]} : vector<40x384xf32> to vector<5x64xf32>
    %219 = arith.truncf %218 : vector<5x64xf32> to vector<5x64xbf16>
    %220 = vector.extract_strided_slice %37 {offsets = [20, 192], sizes = [5, 64], strides = [1, 1]} : vector<40x384xf32> to vector<5x64xf32>
    %221 = arith.truncf %220 : vector<5x64xf32> to vector<5x64xbf16>
    %222 = vector.extract_strided_slice %37 {offsets = [20, 320], sizes = [5, 64], strides = [1, 1]} : vector<40x384xf32> to vector<5x64xf32>
    %223 = arith.truncf %222 : vector<5x64xf32> to vector<5x64xbf16>
    %cst_73 = arith.constant dense<0.000000e+00> : vector<5x5xf32>
    %224 = tpu.matmul %219, %221, %cst_73 {dimension_numbers = #tpu.dot_dimension_numbers<[1], [1], [0], [0], [0, 0, 1, 0], [], []>} : vector<5x64xbf16>, vector<5x64xbf16>, vector<5x5xf32> -> vector<5x5xf32>
    %cst_74 = arith.constant dense<0xFF800000> : vector<5xf32>
    %225 = vector.multi_reduction <maximumf>, %224, %cst_74 [1] : vector<5x5xf32> to vector<5xf32>
    %226 = vector.shape_cast %225 : vector<5xf32> to vector<5x1xf32>
    %227 = vector.broadcast %226 : vector<5x1xf32> to vector<5x5xf32>
    %228 = arith.subf %224, %227 : vector<5x5xf32>
    %229 = math.exp %228 : vector<5x5xf32>
    %cst_75 = arith.constant dense<0.000000e+00> : vector<5xf32>
    %230 = vector.multi_reduction <add>, %229, %cst_75 [1] : vector<5x5xf32> to vector<5xf32>
    %231 = vector.shape_cast %230 : vector<5xf32> to vector<5x1xf32>
    %232 = tpu.reciprocal %231 {approx = true} : vector<5x1xf32> -> vector<5x1xf32>
    %233 = vector.broadcast %232 : vector<5x1xf32> to vector<5x5xf32>
    %234 = arith.mulf %229, %233 : vector<5x5xf32>
    %235 = arith.truncf %234 : vector<5x5xf32> to vector<5x5xbf16>
    %cst_76 = arith.constant dense<0.000000e+00> : vector<5x64xf32>
    %236 = tpu.matmul %235, %223, %cst_76 {dimension_numbers = #tpu.dot_dimension_numbers<[1], [0], [0], [1], [0, 0, 1, 1], [], []>} : vector<5x5xbf16>, vector<5x64xbf16>, vector<5x64xf32> -> vector<5x64xf32>
    %c20_77 = arith.constant 20 : index
    %c64_78 = arith.constant 64 : index
    %237 = vector.load %arg21[%c20_77, %c64_78] : memref<40x128xf32, #tpu.memory_space<vmem>>, vector<5x64xf32>
    tpu.vector_store %arg21[%c20_77, %c64_78], %236 {strides = array<i32>} : memref<40x128xf32, #tpu.memory_space<vmem>>, vector<5x64xf32>,
    %238 = vector.extract_strided_slice %37 {offsets = [25, 0], sizes = [5, 64], strides = [1, 1]} : vector<40x384xf32> to vector<5x64xf32>
    %239 = arith.truncf %238 : vector<5x64xf32> to vector<5x64xbf16>
    %240 = vector.extract_strided_slice %37 {offsets = [25, 128], sizes = [5, 64], strides = [1, 1]} : vector<40x384xf32> to vector<5x64xf32>
    %241 = arith.truncf %240 : vector<5x64xf32> to vector<5x64xbf16>
    %242 = vector.extract_strided_slice %37 {offsets = [25, 256], sizes = [5, 64], strides = [1, 1]} : vector<40x384xf32> to vector<5x64xf32>
    %243 = arith.truncf %242 : vector<5x64xf32> to vector<5x64xbf16>
    %cst_79 = arith.constant dense<0.000000e+00> : vector<5x5xf32>
    %244 = tpu.matmul %239, %241, %cst_79 {dimension_numbers = #tpu.dot_dimension_numbers<[1], [1], [0], [0], [0, 0, 1, 0], [], []>} : vector<5x64xbf16>, vector<5x64xbf16>, vector<5x5xf32> -> vector<5x5xf32>
    %cst_80 = arith.constant dense<0xFF800000> : vector<5xf32>
    %245 = vector.multi_reduction <maximumf>, %244, %cst_80 [1] : vector<5x5xf32> to vector<5xf32>
    %246 = vector.shape_cast %245 : vector<5xf32> to vector<5x1xf32>
    %247 = vector.broadcast %246 : vector<5x1xf32> to vector<5x5xf32>
    %248 = arith.subf %244, %247 : vector<5x5xf32>
    %249 = math.exp %248 : vector<5x5xf32>
    %cst_81 = arith.constant dense<0.000000e+00> : vector<5xf32>
    %250 = vector.multi_reduction <add>, %249, %cst_81 [1] : vector<5x5xf32> to vector<5xf32>
    %251 = vector.shape_cast %250 : vector<5xf32> to vector<5x1xf32>
    %252 = tpu.reciprocal %251 {approx = true} : vector<5x1xf32> -> vector<5x1xf32>
    %253 = vector.broadcast %252 : vector<5x1xf32> to vector<5x5xf32>
    %254 = arith.mulf %249, %253 : vector<5x5xf32>
    %255 = arith.truncf %254 : vector<5x5xf32> to vector<5x5xbf16>
    %cst_82 = arith.constant dense<0.000000e+00> : vector<5x64xf32>
    %256 = tpu.matmul %255, %243, %cst_82 {dimension_numbers = #tpu.dot_dimension_numbers<[1], [0], [0], [1], [0, 0, 1, 1], [], []>} : vector<5x5xbf16>, vector<5x64xbf16>, vector<5x64xf32> -> vector<5x64xf32>
    %c25 = arith.constant 25 : index
    %c0_83 = arith.constant 0 : index
    %257 = vector.load %arg21[%c25, %c0_83] : memref<40x128xf32, #tpu.memory_space<vmem>>, vector<5x64xf32>
    tpu.vector_store %arg21[%c25, %c0_83], %256 {strides = array<i32>} : memref<40x128xf32, #tpu.memory_space<vmem>>, vector<5x64xf32>,
    %258 = vector.extract_strided_slice %37 {offsets = [25, 64], sizes = [5, 64], strides = [1, 1]} : vector<40x384xf32> to vector<5x64xf32>
    %259 = arith.truncf %258 : vector<5x64xf32> to vector<5x64xbf16>
    %260 = vector.extract_strided_slice %37 {offsets = [25, 192], sizes = [5, 64], strides = [1, 1]} : vector<40x384xf32> to vector<5x64xf32>
    %261 = arith.truncf %260 : vector<5x64xf32> to vector<5x64xbf16>
    %262 = vector.extract_strided_slice %37 {offsets = [25, 320], sizes = [5, 64], strides = [1, 1]} : vector<40x384xf32> to vector<5x64xf32>
    %263 = arith.truncf %262 : vector<5x64xf32> to vector<5x64xbf16>
    %cst_84 = arith.constant dense<0.000000e+00> : vector<5x5xf32>
    %264 = tpu.matmul %259, %261, %cst_84 {dimension_numbers = #tpu.dot_dimension_numbers<[1], [1], [0], [0], [0, 0, 1, 0], [], []>} : vector<5x64xbf16>, vector<5x64xbf16>, vector<5x5xf32> -> vector<5x5xf32>
    %cst_85 = arith.constant dense<0xFF800000> : vector<5xf32>
    %265 = vector.multi_reduction <maximumf>, %264, %cst_85 [1] : vector<5x5xf32> to vector<5xf32>
    %266 = vector.shape_cast %265 : vector<5xf32> to vector<5x1xf32>
    %267 = vector.broadcast %266 : vector<5x1xf32> to vector<5x5xf32>
    %268 = arith.subf %264, %267 : vector<5x5xf32>
    %269 = math.exp %268 : vector<5x5xf32>
    %cst_86 = arith.constant dense<0.000000e+00> : vector<5xf32>
    %270 = vector.multi_reduction <add>, %269, %cst_86 [1] : vector<5x5xf32> to vector<5xf32>
    %271 = vector.shape_cast %270 : vector<5xf32> to vector<5x1xf32>
    %272 = tpu.reciprocal %271 {approx = true} : vector<5x1xf32> -> vector<5x1xf32>
    %273 = vector.broadcast %272 : vector<5x1xf32> to vector<5x5xf32>
    %274 = arith.mulf %269, %273 : vector<5x5xf32>
    %275 = arith.truncf %274 : vector<5x5xf32> to vector<5x5xbf16>
    %cst_87 = arith.constant dense<0.000000e+00> : vector<5x64xf32>
    %276 = tpu.matmul %275, %263, %cst_87 {dimension_numbers = #tpu.dot_dimension_numbers<[1], [0], [0], [1], [0, 0, 1, 1], [], []>} : vector<5x5xbf16>, vector<5x64xbf16>, vector<5x64xf32> -> vector<5x64xf32>
    %c25_88 = arith.constant 25 : index
    %c64_89 = arith.constant 64 : index
    %277 = vector.load %arg21[%c25_88, %c64_89] : memref<40x128xf32, #tpu.memory_space<vmem>>, vector<5x64xf32>
    tpu.vector_store %arg21[%c25_88, %c64_89], %276 {strides = array<i32>} : memref<40x128xf32, #tpu.memory_space<vmem>>, vector<5x64xf32>,
    %278 = vector.extract_strided_slice %37 {offsets = [30, 0], sizes = [5, 64], strides = [1, 1]} : vector<40x384xf32> to vector<5x64xf32>
    %279 = arith.truncf %278 : vector<5x64xf32> to vector<5x64xbf16>
    %280 = vector.extract_strided_slice %37 {offsets = [30, 128], sizes = [5, 64], strides = [1, 1]} : vector<40x384xf32> to vector<5x64xf32>
    %281 = arith.truncf %280 : vector<5x64xf32> to vector<5x64xbf16>
    %282 = vector.extract_strided_slice %37 {offsets = [30, 256], sizes = [5, 64], strides = [1, 1]} : vector<40x384xf32> to vector<5x64xf32>
    %283 = arith.truncf %282 : vector<5x64xf32> to vector<5x64xbf16>
    %cst_90 = arith.constant dense<0.000000e+00> : vector<5x5xf32>
    %284 = tpu.matmul %279, %281, %cst_90 {dimension_numbers = #tpu.dot_dimension_numbers<[1], [1], [0], [0], [0, 0, 1, 0], [], []>} : vector<5x64xbf16>, vector<5x64xbf16>, vector<5x5xf32> -> vector<5x5xf32>
    %cst_91 = arith.constant dense<0xFF800000> : vector<5xf32>
    %285 = vector.multi_reduction <maximumf>, %284, %cst_91 [1] : vector<5x5xf32> to vector<5xf32>
    %286 = vector.shape_cast %285 : vector<5xf32> to vector<5x1xf32>
    %287 = vector.broadcast %286 : vector<5x1xf32> to vector<5x5xf32>
    %288 = arith.subf %284, %287 : vector<5x5xf32>
    %289 = math.exp %288 : vector<5x5xf32>
    %cst_92 = arith.constant dense<0.000000e+00> : vector<5xf32>
    %290 = vector.multi_reduction <add>, %289, %cst_92 [1] : vector<5x5xf32> to vector<5xf32>
    %291 = vector.shape_cast %290 : vector<5xf32> to vector<5x1xf32>
    %292 = tpu.reciprocal %291 {approx = true} : vector<5x1xf32> -> vector<5x1xf32>
    %293 = vector.broadcast %292 : vector<5x1xf32> to vector<5x5xf32>
    %294 = arith.mulf %289, %293 : vector<5x5xf32>
    %295 = arith.truncf %294 : vector<5x5xf32> to vector<5x5xbf16>
    %cst_93 = arith.constant dense<0.000000e+00> : vector<5x64xf32>
    %296 = tpu.matmul %295, %283, %cst_93 {dimension_numbers = #tpu.dot_dimension_numbers<[1], [0], [0], [1], [0, 0, 1, 1], [], []>} : vector<5x5xbf16>, vector<5x64xbf16>, vector<5x64xf32> -> vector<5x64xf32>
    %c30 = arith.constant 30 : index
    %c0_94 = arith.constant 0 : index
    %297 = vector.load %arg21[%c30, %c0_94] : memref<40x128xf32, #tpu.memory_space<vmem>>, vector<5x64xf32>
    tpu.vector_store %arg21[%c30, %c0_94], %296 {strides = array<i32>} : memref<40x128xf32, #tpu.memory_space<vmem>>, vector<5x64xf32>,
    %298 = vector.extract_strided_slice %37 {offsets = [30, 64], sizes = [5, 64], strides = [1, 1]} : vector<40x384xf32> to vector<5x64xf32>
    %299 = arith.truncf %298 : vector<5x64xf32> to vector<5x64xbf16>
    %300 = vector.extract_strided_slice %37 {offsets = [30, 192], sizes = [5, 64], strides = [1, 1]} : vector<40x384xf32> to vector<5x64xf32>
    %301 = arith.truncf %300 : vector<5x64xf32> to vector<5x64xbf16>
    %302 = vector.extract_strided_slice %37 {offsets = [30, 320], sizes = [5, 64], strides = [1, 1]} : vector<40x384xf32> to vector<5x64xf32>
    %303 = arith.truncf %302 : vector<5x64xf32> to vector<5x64xbf16>
    %cst_95 = arith.constant dense<0.000000e+00> : vector<5x5xf32>
    %304 = tpu.matmul %299, %301, %cst_95 {dimension_numbers = #tpu.dot_dimension_numbers<[1], [1], [0], [0], [0, 0, 1, 0], [], []>} : vector<5x64xbf16>, vector<5x64xbf16>, vector<5x5xf32> -> vector<5x5xf32>
    %cst_96 = arith.constant dense<0xFF800000> : vector<5xf32>
    %305 = vector.multi_reduction <maximumf>, %304, %cst_96 [1] : vector<5x5xf32> to vector<5xf32>
    %306 = vector.shape_cast %305 : vector<5xf32> to vector<5x1xf32>
    %307 = vector.broadcast %306 : vector<5x1xf32> to vector<5x5xf32>
    %308 = arith.subf %304, %307 : vector<5x5xf32>
    %309 = math.exp %308 : vector<5x5xf32>
    %cst_97 = arith.constant dense<0.000000e+00> : vector<5xf32>
    %310 = vector.multi_reduction <add>, %309, %cst_97 [1] : vector<5x5xf32> to vector<5xf32>
    %311 = vector.shape_cast %310 : vector<5xf32> to vector<5x1xf32>
    %312 = tpu.reciprocal %311 {approx = true} : vector<5x1xf32> -> vector<5x1xf32>
    %313 = vector.broadcast %312 : vector<5x1xf32> to vector<5x5xf32>
    %314 = arith.mulf %309, %313 : vector<5x5xf32>
    %315 = arith.truncf %314 : vector<5x5xf32> to vector<5x5xbf16>
    %cst_98 = arith.constant dense<0.000000e+00> : vector<5x64xf32>
    %316 = tpu.matmul %315, %303, %cst_98 {dimension_numbers = #tpu.dot_dimension_numbers<[1], [0], [0], [1], [0, 0, 1, 1], [], []>} : vector<5x5xbf16>, vector<5x64xbf16>, vector<5x64xf32> -> vector<5x64xf32>
    %c30_99 = arith.constant 30 : index
    %c64_100 = arith.constant 64 : index
    %317 = vector.load %arg21[%c30_99, %c64_100] : memref<40x128xf32, #tpu.memory_space<vmem>>, vector<5x64xf32>
    tpu.vector_store %arg21[%c30_99, %c64_100], %316 {strides = array<i32>} : memref<40x128xf32, #tpu.memory_space<vmem>>, vector<5x64xf32>,
    %318 = vector.extract_strided_slice %37 {offsets = [35, 0], sizes = [5, 64], strides = [1, 1]} : vector<40x384xf32> to vector<5x64xf32>
    %319 = arith.truncf %318 : vector<5x64xf32> to vector<5x64xbf16>
    %320 = vector.extract_strided_slice %37 {offsets = [35, 128], sizes = [5, 64], strides = [1, 1]} : vector<40x384xf32> to vector<5x64xf32>
    %321 = arith.truncf %320 : vector<5x64xf32> to vector<5x64xbf16>
    %322 = vector.extract_strided_slice %37 {offsets = [35, 256], sizes = [5, 64], strides = [1, 1]} : vector<40x384xf32> to vector<5x64xf32>
    %323 = arith.truncf %322 : vector<5x64xf32> to vector<5x64xbf16>
    %cst_101 = arith.constant dense<0.000000e+00> : vector<5x5xf32>
    %324 = tpu.matmul %319, %321, %cst_101 {dimension_numbers = #tpu.dot_dimension_numbers<[1], [1], [0], [0], [0, 0, 1, 0], [], []>} : vector<5x64xbf16>, vector<5x64xbf16>, vector<5x5xf32> -> vector<5x5xf32>
    %cst_102 = arith.constant dense<0xFF800000> : vector<5xf32>
    %325 = vector.multi_reduction <maximumf>, %324, %cst_102 [1] : vector<5x5xf32> to vector<5xf32>
    %326 = vector.shape_cast %325 : vector<5xf32> to vector<5x1xf32>
    %327 = vector.broadcast %326 : vector<5x1xf32> to vector<5x5xf32>
    %328 = arith.subf %324, %327 : vector<5x5xf32>
    %329 = math.exp %328 : vector<5x5xf32>
    %cst_103 = arith.constant dense<0.000000e+00> : vector<5xf32>
    %330 = vector.multi_reduction <add>, %329, %cst_103 [1] : vector<5x5xf32> to vector<5xf32>
    %331 = vector.shape_cast %330 : vector<5xf32> to vector<5x1xf32>
    %332 = tpu.reciprocal %331 {approx = true} : vector<5x1xf32> -> vector<5x1xf32>
    %333 = vector.broadcast %332 : vector<5x1xf32> to vector<5x5xf32>
    %334 = arith.mulf %329, %333 : vector<5x5xf32>
    %335 = arith.truncf %334 : vector<5x5xf32> to vector<5x5xbf16>
    %cst_104 = arith.constant dense<0.000000e+00> : vector<5x64xf32>
    %336 = tpu.matmul %335, %323, %cst_104 {dimension_numbers = #tpu.dot_dimension_numbers<[1], [0], [0], [1], [0, 0, 1, 1], [], []>} : vector<5x5xbf16>, vector<5x64xbf16>, vector<5x64xf32> -> vector<5x64xf32>
    %c35 = arith.constant 35 : index
    %c0_105 = arith.constant 0 : index
    %337 = vector.load %arg21[%c35, %c0_105] : memref<40x128xf32, #tpu.memory_space<vmem>>, vector<5x64xf32>
    tpu.vector_store %arg21[%c35, %c0_105], %336 {strides = array<i32>} : memref<40x128xf32, #tpu.memory_space<vmem>>, vector<5x64xf32>,
    %338 = vector.extract_strided_slice %37 {offsets = [35, 64], sizes = [5, 64], strides = [1, 1]} : vector<40x384xf32> to vector<5x64xf32>
    %339 = arith.truncf %338 : vector<5x64xf32> to vector<5x64xbf16>
    %340 = vector.extract_strided_slice %37 {offsets = [35, 192], sizes = [5, 64], strides = [1, 1]} : vector<40x384xf32> to vector<5x64xf32>
    %341 = arith.truncf %340 : vector<5x64xf32> to vector<5x64xbf16>
    %342 = vector.extract_strided_slice %37 {offsets = [35, 320], sizes = [5, 64], strides = [1, 1]} : vector<40x384xf32> to vector<5x64xf32>
    %343 = arith.truncf %342 : vector<5x64xf32> to vector<5x64xbf16>
    %cst_106 = arith.constant dense<0.000000e+00> : vector<5x5xf32>
    %344 = tpu.matmul %339, %341, %cst_106 {dimension_numbers = #tpu.dot_dimension_numbers<[1], [1], [0], [0], [0, 0, 1, 0], [], []>} : vector<5x64xbf16>, vector<5x64xbf16>, vector<5x5xf32> -> vector<5x5xf32>
    %cst_107 = arith.constant dense<0xFF800000> : vector<5xf32>
    %345 = vector.multi_reduction <maximumf>, %344, %cst_107 [1] : vector<5x5xf32> to vector<5xf32>
    %346 = vector.shape_cast %345 : vector<5xf32> to vector<5x1xf32>
    %347 = vector.broadcast %346 : vector<5x1xf32> to vector<5x5xf32>
    %348 = arith.subf %344, %347 : vector<5x5xf32>
    %349 = math.exp %348 : vector<5x5xf32>
    %cst_108 = arith.constant dense<0.000000e+00> : vector<5xf32>
    %350 = vector.multi_reduction <add>, %349, %cst_108 [1] : vector<5x5xf32> to vector<5xf32>
    %351 = vector.shape_cast %350 : vector<5xf32> to vector<5x1xf32>
    %352 = tpu.reciprocal %351 {approx = true} : vector<5x1xf32> -> vector<5x1xf32>
    %353 = vector.broadcast %352 : vector<5x1xf32> to vector<5x5xf32>
    %354 = arith.mulf %349, %353 : vector<5x5xf32>
    %355 = arith.truncf %354 : vector<5x5xf32> to vector<5x5xbf16>
    %cst_109 = arith.constant dense<0.000000e+00> : vector<5x64xf32>
    %356 = tpu.matmul %355, %343, %cst_109 {dimension_numbers = #tpu.dot_dimension_numbers<[1], [0], [0], [1], [0, 0, 1, 1], [], []>} : vector<5x5xbf16>, vector<5x64xbf16>, vector<5x64xf32> -> vector<5x64xf32>
    %c35_110 = arith.constant 35 : index
    %c64_111 = arith.constant 64 : index
    %357 = vector.load %arg21[%c35_110, %c64_111] : memref<40x128xf32, #tpu.memory_space<vmem>>, vector<5x64xf32>
    tpu.vector_store %arg21[%c35_110, %c64_111], %356 {strides = array<i32>} : memref<40x128xf32, #tpu.memory_space<vmem>>, vector<5x64xf32>,
    %c0_112 = arith.constant 0 : index
    %c0_113 = arith.constant 0 : index
    %358 = vector.load %arg21[%c0_112, %c0_113] : memref<40x128xf32, #tpu.memory_space<vmem>>, vector<40x128xf32>
    %359 = arith.truncf %358 : vector<40x128xf32> to vector<40x128xbf16>
    %c0_114 = arith.constant 0 : index
    %c0_115 = arith.constant 0 : index
    %c0_116 = arith.constant 0 : index
    %360 = vector.load %arg8[%c0_114, %c0_115, %c0_116] : memref<2x128x128xbf16, #tpu.memory_space<vmem>>, vector<1x128x128xbf16>
    %361 = vector.shape_cast %360 : vector<1x128x128xbf16> to vector<128x128xbf16>
    %cst_117 = arith.constant dense<0.000000e+00> : vector<40x128xf32>
    %362 = tpu.matmul %359, %361, %cst_117 {dimension_numbers = #tpu.dot_dimension_numbers<[1], [0], [0], [1], [0, 0, 1, 1], [], []>} : vector<40x128xbf16>, vector<128x128xbf16>, vector<40x128xf32> -> vector<40x128xf32>
    %363 = arith.addf %5, %362 : vector<40x128xf32>
    %c0_118 = arith.constant 0 : index
    %c0_119 = arith.constant 0 : index
    %c0_120 = arith.constant 0 : index
    %364 = vector.load %arg9[%c0_118, %c0_119, %c0_120] : memref<2x1x128xf32, #tpu.memory_space<vmem>>, vector<1x1x128xf32>
    %365 = vector.shape_cast %364 : vector<1x1x128xf32> to vector<1x128xf32>
    %366 = vector.broadcast %365 : vector<1x128xf32> to vector<40x128xf32>
    %367 = arith.addf %363, %366 : vector<40x128xf32>
    %c0_121 = arith.constant 0 : index
    %c0_122 = arith.constant 0 : index
    %c0_123 = arith.constant 0 : index
    %368 = vector.load %arg10[%c0_121, %c0_122, %c0_123] : memref<2x1x128xf32, #tpu.memory_space<vmem>>, vector<1x1x128xf32>
    %369 = vector.shape_cast %368 : vector<1x1x128xf32> to vector<1x128xf32>
    %c0_124 = arith.constant 0 : index
    %c0_125 = arith.constant 0 : index
    %c0_126 = arith.constant 0 : index
    %370 = vector.load %arg11[%c0_124, %c0_125, %c0_126] : memref<2x1x128xf32, #tpu.memory_space<vmem>>, vector<1x1x128xf32>
    %371 = vector.shape_cast %370 : vector<1x1x128xf32> to vector<1x128xf32>
    %cst_127 = arith.constant dense<0.000000e+00> : vector<40xf32>
    %372 = vector.multi_reduction <add>, %367, %cst_127 [1] : vector<40x128xf32> to vector<40xf32>
    %373 = vector.shape_cast %372 : vector<40xf32> to vector<40x1xf32>
    %cst_128 = arith.constant 1.280000e+02 : f32
    %374 = vector.broadcast %cst_128 : f32 to vector<40x1xf32>
    %375 = arith.divf %373, %374 : vector<40x1xf32>
    %376 = vector.broadcast %375 : vector<40x1xf32> to vector<40x128xf32>
    %377 = arith.subf %367, %376 : vector<40x128xf32>
    %378 = arith.mulf %377, %377 : vector<40x128xf32>
    %cst_129 = arith.constant dense<0.000000e+00> : vector<40xf32>
    %379 = vector.multi_reduction <add>, %378, %cst_129 [1] : vector<40x128xf32> to vector<40xf32>
    %380 = vector.shape_cast %379 : vector<40xf32> to vector<40x1xf32>
    %cst_130 = arith.constant 1.280000e+02 : f32
    %381 = vector.broadcast %cst_130 : f32 to vector<40x1xf32>
    %382 = arith.divf %380, %381 : vector<40x1xf32>
    %cst_131 = arith.constant 9.99999997E-7 : f32
    %383 = vector.broadcast %cst_131 : f32 to vector<40x1xf32>
    %384 = arith.addf %382, %383 : vector<40x1xf32>
    %385 = math.rsqrt %384 : vector<40x1xf32>
    %386 = vector.broadcast %385 : vector<40x1xf32> to vector<40x128xf32>
    %387 = arith.mulf %377, %386 : vector<40x128xf32>
    %388 = vector.broadcast %369 : vector<1x128xf32> to vector<40x128xf32>
    %389 = arith.mulf %387, %388 : vector<40x128xf32>
    %390 = vector.broadcast %371 : vector<1x128xf32> to vector<40x128xf32>
    %391 = arith.addf %389, %390 : vector<40x128xf32>
    %392 = arith.truncf %391 : vector<40x128xf32> to vector<40x128xbf16>
    %c0_132 = arith.constant 0 : index
    %c0_133 = arith.constant 0 : index
    %c0_134 = arith.constant 0 : index
    %393 = vector.load %arg12[%c0_132, %c0_133, %c0_134] : memref<2x128x512xbf16, #tpu.memory_space<vmem>>, vector<1x128x512xbf16>
    %394 = vector.shape_cast %393 : vector<1x128x512xbf16> to vector<128x512xbf16>
    %cst_135 = arith.constant dense<0.000000e+00> : vector<40x512xf32>
    %395 = tpu.matmul %392, %394, %cst_135 {dimension_numbers = #tpu.dot_dimension_numbers<[1], [0], [0], [1], [0, 0, 1, 1], [], []>} : vector<40x128xbf16>, vector<128x512xbf16>, vector<40x512xf32> -> vector<40x512xf32>
    %c0_136 = arith.constant 0 : index
    %c0_137 = arith.constant 0 : index
    %c0_138 = arith.constant 0 : index
    %396 = vector.load %arg13[%c0_136, %c0_137, %c0_138] : memref<2x1x512xf32, #tpu.memory_space<vmem>>, vector<1x1x512xf32>
    %397 = vector.shape_cast %396 : vector<1x1x512xf32> to vector<1x512xf32>
    %398 = vector.broadcast %397 : vector<1x512xf32> to vector<40x512xf32>
    %399 = arith.addf %395, %398 : vector<40x512xf32>
    %cst_139 = arith.constant 5.000000e-01 : f32
    %400 = vector.broadcast %cst_139 : f32 to vector<40x512xf32>
    %401 = arith.mulf %400, %399 : vector<40x512xf32>
    %cst_140 = arith.constant 0.707106769 : f32
    %402 = vector.broadcast %cst_140 : f32 to vector<40x512xf32>
    %403 = arith.mulf %399, %402 : vector<40x512xf32>
    %cst_141 = arith.constant 0.000000e+00 : f32
    %404 = vector.broadcast %cst_141 : f32 to vector<40x512xf32>
    %405 = arith.cmpf oge, %403, %404 : vector<40x512xf32>
    %cst_142 = arith.constant 1.000000e+00 : f32
    %cst_143 = arith.constant -1.000000e+00 : f32
    %406 = vector.broadcast %cst_142 : f32 to vector<40x512xf32>
    %407 = vector.broadcast %cst_143 : f32 to vector<40x512xf32>
    %408 = arith.select %405, %406, %407 : vector<40x512xi1>, vector<40x512xf32>
    %409 = math.absf %403 : vector<40x512xf32>
    %cst_144 = arith.constant 0.327591091 : f32
    %410 = vector.broadcast %cst_144 : f32 to vector<40x512xf32>
    %411 = arith.mulf %410, %409 : vector<40x512xf32>
    %cst_145 = arith.constant 1.000000e+00 : f32
    %412 = vector.broadcast %cst_145 : f32 to vector<40x512xf32>
    %413 = arith.addf %412, %411 : vector<40x512xf32>
    %414 = tpu.reciprocal %413 {approx = true} : vector<40x512xf32> -> vector<40x512xf32>
    %cst_146 = arith.constant 1.06140542 : f32
    %415 = vector.broadcast %cst_146 : f32 to vector<40x512xf32>
    %416 = arith.mulf %415, %414 : vector<40x512xf32>
    %cst_147 = arith.constant -1.45315206 : f32
    %417 = vector.broadcast %cst_147 : f32 to vector<40x512xf32>
    %418 = arith.addf %416, %417 : vector<40x512xf32>
    %419 = arith.mulf %418, %414 : vector<40x512xf32>
    %cst_148 = arith.constant 1.42141378 : f32
    %420 = vector.broadcast %cst_148 : f32 to vector<40x512xf32>
    %421 = arith.addf %419, %420 : vector<40x512xf32>
    %422 = arith.mulf %421, %414 : vector<40x512xf32>
    %cst_149 = arith.constant -0.284496725 : f32
    %423 = vector.broadcast %cst_149 : f32 to vector<40x512xf32>
    %424 = arith.addf %422, %423 : vector<40x512xf32>
    %425 = arith.mulf %424, %414 : vector<40x512xf32>
    %cst_150 = arith.constant 0.254829586 : f32
    %426 = vector.broadcast %cst_150 : f32 to vector<40x512xf32>
    %427 = arith.addf %425, %426 : vector<40x512xf32>
    %428 = arith.mulf %427, %414 : vector<40x512xf32>
    %cst_151 = arith.constant 0.000000e+00 : f32
    %429 = vector.broadcast %cst_151 : f32 to vector<40x512xf32>
    %430 = arith.subf %429, %409 : vector<40x512xf32>
    %431 = arith.mulf %430, %409 : vector<40x512xf32>
    %432 = math.exp %431 : vector<40x512xf32>
    %433 = arith.mulf %428, %432 : vector<40x512xf32>
    %cst_152 = arith.constant 1.000000e+00 : f32
    %434 = vector.broadcast %cst_152 : f32 to vector<40x512xf32>
    %435 = arith.subf %434, %433 : vector<40x512xf32>
    %436 = arith.mulf %408, %435 : vector<40x512xf32>
    %cst_153 = arith.constant 1.000000e+00 : f32
    %437 = vector.broadcast %cst_153 : f32 to vector<40x512xf32>
    %438 = arith.addf %437, %436 : vector<40x512xf32>
    %439 = arith.mulf %401, %438 : vector<40x512xf32>
    %440 = arith.truncf %439 : vector<40x512xf32> to vector<40x512xbf16>
    %c0_154 = arith.constant 0 : index
    %c0_155 = arith.constant 0 : index
    %c0_156 = arith.constant 0 : index
    %441 = vector.load %arg14[%c0_154, %c0_155, %c0_156] : memref<2x512x128xbf16, #tpu.memory_space<vmem>>, vector<1x512x128xbf16>
    %442 = vector.shape_cast %441 : vector<1x512x128xbf16> to vector<512x128xbf16>
    %cst_157 = arith.constant dense<0.000000e+00> : vector<40x128xf32>
    %443 = tpu.matmul %440, %442, %cst_157 {dimension_numbers = #tpu.dot_dimension_numbers<[1], [0], [0], [1], [0, 0, 1, 1], [], []>} : vector<40x512xbf16>, vector<512x128xbf16>, vector<40x128xf32> -> vector<40x128xf32>
    %444 = arith.addf %367, %443 : vector<40x128xf32>
    %c0_158 = arith.constant 0 : index
    %c0_159 = arith.constant 0 : index
    %c0_160 = arith.constant 0 : index
    %445 = vector.load %arg15[%c0_158, %c0_159, %c0_160] : memref<2x1x128xf32, #tpu.memory_space<vmem>>, vector<1x1x128xf32>
    %446 = vector.shape_cast %445 : vector<1x1x128xf32> to vector<1x128xf32>
    %447 = vector.broadcast %446 : vector<1x128xf32> to vector<40x128xf32>
    %448 = arith.addf %444, %447 : vector<40x128xf32>
    %c1 = arith.constant 1 : index
    %c0_161 = arith.constant 0 : index
    %c0_162 = arith.constant 0 : index
    %449 = vector.load %arg4[%c1, %c0_161, %c0_162] : memref<2x1x128xf32, #tpu.memory_space<vmem>>, vector<1x1x128xf32>
    %450 = vector.shape_cast %449 : vector<1x1x128xf32> to vector<1x128xf32>
    %c1_163 = arith.constant 1 : index
    %c0_164 = arith.constant 0 : index
    %c0_165 = arith.constant 0 : index
    %451 = vector.load %arg5[%c1_163, %c0_164, %c0_165] : memref<2x1x128xf32, #tpu.memory_space<vmem>>, vector<1x1x128xf32>
    %452 = vector.shape_cast %451 : vector<1x1x128xf32> to vector<1x128xf32>
    %cst_166 = arith.constant dense<0.000000e+00> : vector<40xf32>
    %453 = vector.multi_reduction <add>, %448, %cst_166 [1] : vector<40x128xf32> to vector<40xf32>
    %454 = vector.shape_cast %453 : vector<40xf32> to vector<40x1xf32>
    %cst_167 = arith.constant 1.280000e+02 : f32
    %455 = vector.broadcast %cst_167 : f32 to vector<40x1xf32>
    %456 = arith.divf %454, %455 : vector<40x1xf32>
    %457 = vector.broadcast %456 : vector<40x1xf32> to vector<40x128xf32>
    %458 = arith.subf %448, %457 : vector<40x128xf32>
    %459 = arith.mulf %458, %458 : vector<40x128xf32>
    %cst_168 = arith.constant dense<0.000000e+00> : vector<40xf32>
    %460 = vector.multi_reduction <add>, %459, %cst_168 [1] : vector<40x128xf32> to vector<40xf32>
    %461 = vector.shape_cast %460 : vector<40xf32> to vector<40x1xf32>
    %cst_169 = arith.constant 1.280000e+02 : f32
    %462 = vector.broadcast %cst_169 : f32 to vector<40x1xf32>
    %463 = arith.divf %461, %462 : vector<40x1xf32>
    %cst_170 = arith.constant 9.99999997E-7 : f32
    %464 = vector.broadcast %cst_170 : f32 to vector<40x1xf32>
    %465 = arith.addf %463, %464 : vector<40x1xf32>
    %466 = math.rsqrt %465 : vector<40x1xf32>
    %467 = vector.broadcast %466 : vector<40x1xf32> to vector<40x128xf32>
    %468 = arith.mulf %458, %467 : vector<40x128xf32>
    %469 = vector.broadcast %450 : vector<1x128xf32> to vector<40x128xf32>
    %470 = arith.mulf %468, %469 : vector<40x128xf32>
    %471 = vector.broadcast %452 : vector<1x128xf32> to vector<40x128xf32>
    %472 = arith.addf %470, %471 : vector<40x128xf32>
    %473 = arith.truncf %472 : vector<40x128xf32> to vector<40x128xbf16>
    %c1_171 = arith.constant 1 : index
    %c0_172 = arith.constant 0 : index
    %c0_173 = arith.constant 0 : index
    %474 = vector.load %arg6[%c1_171, %c0_172, %c0_173] : memref<2x128x384xbf16, #tpu.memory_space<vmem>>, vector<1x128x384xbf16>
    %475 = vector.shape_cast %474 : vector<1x128x384xbf16> to vector<128x384xbf16>
    %cst_174 = arith.constant dense<0.000000e+00> : vector<40x384xf32>
    %476 = tpu.matmul %473, %475, %cst_174 {dimension_numbers = #tpu.dot_dimension_numbers<[1], [0], [0], [1], [0, 0, 1, 1], [], []>} : vector<40x128xbf16>, vector<128x384xbf16>, vector<40x384xf32> -> vector<40x384xf32>
    %c1_175 = arith.constant 1 : index
    %c0_176 = arith.constant 0 : index
    %c0_177 = arith.constant 0 : index
    %477 = vector.load %arg7[%c1_175, %c0_176, %c0_177] : memref<2x1x384xf32, #tpu.memory_space<vmem>>, vector<1x1x384xf32>
    %478 = vector.shape_cast %477 : vector<1x1x384xf32> to vector<1x384xf32>
    %479 = vector.broadcast %478 : vector<1x384xf32> to vector<40x384xf32>
    %480 = arith.addf %476, %479 : vector<40x384xf32>
    %481 = vector.extract_strided_slice %480 {offsets = [0, 0], sizes = [5, 64], strides = [1, 1]} : vector<40x384xf32> to vector<5x64xf32>
    %482 = arith.truncf %481 : vector<5x64xf32> to vector<5x64xbf16>
    %483 = vector.extract_strided_slice %480 {offsets = [0, 128], sizes = [5, 64], strides = [1, 1]} : vector<40x384xf32> to vector<5x64xf32>
    %484 = arith.truncf %483 : vector<5x64xf32> to vector<5x64xbf16>
    %485 = vector.extract_strided_slice %480 {offsets = [0, 256], sizes = [5, 64], strides = [1, 1]} : vector<40x384xf32> to vector<5x64xf32>
    %486 = arith.truncf %485 : vector<5x64xf32> to vector<5x64xbf16>
    %cst_178 = arith.constant dense<0.000000e+00> : vector<5x5xf32>
    %487 = tpu.matmul %482, %484, %cst_178 {dimension_numbers = #tpu.dot_dimension_numbers<[1], [1], [0], [0], [0, 0, 1, 0], [], []>} : vector<5x64xbf16>, vector<5x64xbf16>, vector<5x5xf32> -> vector<5x5xf32>
    %cst_179 = arith.constant dense<0xFF800000> : vector<5xf32>
    %488 = vector.multi_reduction <maximumf>, %487, %cst_179 [1] : vector<5x5xf32> to vector<5xf32>
    %489 = vector.shape_cast %488 : vector<5xf32> to vector<5x1xf32>
    %490 = vector.broadcast %489 : vector<5x1xf32> to vector<5x5xf32>
    %491 = arith.subf %487, %490 : vector<5x5xf32>
    %492 = math.exp %491 : vector<5x5xf32>
    %cst_180 = arith.constant dense<0.000000e+00> : vector<5xf32>
    %493 = vector.multi_reduction <add>, %492, %cst_180 [1] : vector<5x5xf32> to vector<5xf32>
    %494 = vector.shape_cast %493 : vector<5xf32> to vector<5x1xf32>
    %495 = tpu.reciprocal %494 {approx = true} : vector<5x1xf32> -> vector<5x1xf32>
    %496 = vector.broadcast %495 : vector<5x1xf32> to vector<5x5xf32>
    %497 = arith.mulf %492, %496 : vector<5x5xf32>
    %498 = arith.truncf %497 : vector<5x5xf32> to vector<5x5xbf16>
    %cst_181 = arith.constant dense<0.000000e+00> : vector<5x64xf32>
    %499 = tpu.matmul %498, %486, %cst_181 {dimension_numbers = #tpu.dot_dimension_numbers<[1], [0], [0], [1], [0, 0, 1, 1], [], []>} : vector<5x5xbf16>, vector<5x64xbf16>, vector<5x64xf32> -> vector<5x64xf32>
    %c0_182 = arith.constant 0 : index
    %c0_183 = arith.constant 0 : index
    %500 = vector.load %arg21[%c0_182, %c0_183] : memref<40x128xf32, #tpu.memory_space<vmem>>, vector<5x64xf32>
    tpu.vector_store %arg21[%c0_182, %c0_183], %499 {strides = array<i32>} : memref<40x128xf32, #tpu.memory_space<vmem>>, vector<5x64xf32>,
    %501 = vector.extract_strided_slice %480 {offsets = [0, 64], sizes = [5, 64], strides = [1, 1]} : vector<40x384xf32> to vector<5x64xf32>
    %502 = arith.truncf %501 : vector<5x64xf32> to vector<5x64xbf16>
    %503 = vector.extract_strided_slice %480 {offsets = [0, 192], sizes = [5, 64], strides = [1, 1]} : vector<40x384xf32> to vector<5x64xf32>
    %504 = arith.truncf %503 : vector<5x64xf32> to vector<5x64xbf16>
    %505 = vector.extract_strided_slice %480 {offsets = [0, 320], sizes = [5, 64], strides = [1, 1]} : vector<40x384xf32> to vector<5x64xf32>
    %506 = arith.truncf %505 : vector<5x64xf32> to vector<5x64xbf16>
    %cst_184 = arith.constant dense<0.000000e+00> : vector<5x5xf32>
    %507 = tpu.matmul %502, %504, %cst_184 {dimension_numbers = #tpu.dot_dimension_numbers<[1], [1], [0], [0], [0, 0, 1, 0], [], []>} : vector<5x64xbf16>, vector<5x64xbf16>, vector<5x5xf32> -> vector<5x5xf32>
    %cst_185 = arith.constant dense<0xFF800000> : vector<5xf32>
    %508 = vector.multi_reduction <maximumf>, %507, %cst_185 [1] : vector<5x5xf32> to vector<5xf32>
    %509 = vector.shape_cast %508 : vector<5xf32> to vector<5x1xf32>
    %510 = vector.broadcast %509 : vector<5x1xf32> to vector<5x5xf32>
    %511 = arith.subf %507, %510 : vector<5x5xf32>
    %512 = math.exp %511 : vector<5x5xf32>
    %cst_186 = arith.constant dense<0.000000e+00> : vector<5xf32>
    %513 = vector.multi_reduction <add>, %512, %cst_186 [1] : vector<5x5xf32> to vector<5xf32>
    %514 = vector.shape_cast %513 : vector<5xf32> to vector<5x1xf32>
    %515 = tpu.reciprocal %514 {approx = true} : vector<5x1xf32> -> vector<5x1xf32>
    %516 = vector.broadcast %515 : vector<5x1xf32> to vector<5x5xf32>
    %517 = arith.mulf %512, %516 : vector<5x5xf32>
    %518 = arith.truncf %517 : vector<5x5xf32> to vector<5x5xbf16>
    %cst_187 = arith.constant dense<0.000000e+00> : vector<5x64xf32>
    %519 = tpu.matmul %518, %506, %cst_187 {dimension_numbers = #tpu.dot_dimension_numbers<[1], [0], [0], [1], [0, 0, 1, 1], [], []>} : vector<5x5xbf16>, vector<5x64xbf16>, vector<5x64xf32> -> vector<5x64xf32>
    %c0_188 = arith.constant 0 : index
    %c64_189 = arith.constant 64 : index
    %520 = vector.load %arg21[%c0_188, %c64_189] : memref<40x128xf32, #tpu.memory_space<vmem>>, vector<5x64xf32>
    tpu.vector_store %arg21[%c0_188, %c64_189], %519 {strides = array<i32>} : memref<40x128xf32, #tpu.memory_space<vmem>>, vector<5x64xf32>,
    %521 = vector.extract_strided_slice %480 {offsets = [5, 0], sizes = [5, 64], strides = [1, 1]} : vector<40x384xf32> to vector<5x64xf32>
    %522 = arith.truncf %521 : vector<5x64xf32> to vector<5x64xbf16>
    %523 = vector.extract_strided_slice %480 {offsets = [5, 128], sizes = [5, 64], strides = [1, 1]} : vector<40x384xf32> to vector<5x64xf32>
    %524 = arith.truncf %523 : vector<5x64xf32> to vector<5x64xbf16>
    %525 = vector.extract_strided_slice %480 {offsets = [5, 256], sizes = [5, 64], strides = [1, 1]} : vector<40x384xf32> to vector<5x64xf32>
    %526 = arith.truncf %525 : vector<5x64xf32> to vector<5x64xbf16>
    %cst_190 = arith.constant dense<0.000000e+00> : vector<5x5xf32>
    %527 = tpu.matmul %522, %524, %cst_190 {dimension_numbers = #tpu.dot_dimension_numbers<[1], [1], [0], [0], [0, 0, 1, 0], [], []>} : vector<5x64xbf16>, vector<5x64xbf16>, vector<5x5xf32> -> vector<5x5xf32>
    %cst_191 = arith.constant dense<0xFF800000> : vector<5xf32>
    %528 = vector.multi_reduction <maximumf>, %527, %cst_191 [1] : vector<5x5xf32> to vector<5xf32>
    %529 = vector.shape_cast %528 : vector<5xf32> to vector<5x1xf32>
    %530 = vector.broadcast %529 : vector<5x1xf32> to vector<5x5xf32>
    %531 = arith.subf %527, %530 : vector<5x5xf32>
    %532 = math.exp %531 : vector<5x5xf32>
    %cst_192 = arith.constant dense<0.000000e+00> : vector<5xf32>
    %533 = vector.multi_reduction <add>, %532, %cst_192 [1] : vector<5x5xf32> to vector<5xf32>
    %534 = vector.shape_cast %533 : vector<5xf32> to vector<5x1xf32>
    %535 = tpu.reciprocal %534 {approx = true} : vector<5x1xf32> -> vector<5x1xf32>
    %536 = vector.broadcast %535 : vector<5x1xf32> to vector<5x5xf32>
    %537 = arith.mulf %532, %536 : vector<5x5xf32>
    %538 = arith.truncf %537 : vector<5x5xf32> to vector<5x5xbf16>
    %cst_193 = arith.constant dense<0.000000e+00> : vector<5x64xf32>
    %539 = tpu.matmul %538, %526, %cst_193 {dimension_numbers = #tpu.dot_dimension_numbers<[1], [0], [0], [1], [0, 0, 1, 1], [], []>} : vector<5x5xbf16>, vector<5x64xbf16>, vector<5x64xf32> -> vector<5x64xf32>
    %c5_194 = arith.constant 5 : index
    %c0_195 = arith.constant 0 : index
    %540 = vector.load %arg21[%c5_194, %c0_195] : memref<40x128xf32, #tpu.memory_space<vmem>>, vector<5x64xf32>
    tpu.vector_store %arg21[%c5_194, %c0_195], %539 {strides = array<i32>} : memref<40x128xf32, #tpu.memory_space<vmem>>, vector<5x64xf32>,
    %541 = vector.extract_strided_slice %480 {offsets = [5, 64], sizes = [5, 64], strides = [1, 1]} : vector<40x384xf32> to vector<5x64xf32>
    %542 = arith.truncf %541 : vector<5x64xf32> to vector<5x64xbf16>
    %543 = vector.extract_strided_slice %480 {offsets = [5, 192], sizes = [5, 64], strides = [1, 1]} : vector<40x384xf32> to vector<5x64xf32>
    %544 = arith.truncf %543 : vector<5x64xf32> to vector<5x64xbf16>
    %545 = vector.extract_strided_slice %480 {offsets = [5, 320], sizes = [5, 64], strides = [1, 1]} : vector<40x384xf32> to vector<5x64xf32>
    %546 = arith.truncf %545 : vector<5x64xf32> to vector<5x64xbf16>
    %cst_196 = arith.constant dense<0.000000e+00> : vector<5x5xf32>
    %547 = tpu.matmul %542, %544, %cst_196 {dimension_numbers = #tpu.dot_dimension_numbers<[1], [1], [0], [0], [0, 0, 1, 0], [], []>} : vector<5x64xbf16>, vector<5x64xbf16>, vector<5x5xf32> -> vector<5x5xf32>
    %cst_197 = arith.constant dense<0xFF800000> : vector<5xf32>
    %548 = vector.multi_reduction <maximumf>, %547, %cst_197 [1] : vector<5x5xf32> to vector<5xf32>
    %549 = vector.shape_cast %548 : vector<5xf32> to vector<5x1xf32>
    %550 = vector.broadcast %549 : vector<5x1xf32> to vector<5x5xf32>
    %551 = arith.subf %547, %550 : vector<5x5xf32>
    %552 = math.exp %551 : vector<5x5xf32>
    %cst_198 = arith.constant dense<0.000000e+00> : vector<5xf32>
    %553 = vector.multi_reduction <add>, %552, %cst_198 [1] : vector<5x5xf32> to vector<5xf32>
    %554 = vector.shape_cast %553 : vector<5xf32> to vector<5x1xf32>
    %555 = tpu.reciprocal %554 {approx = true} : vector<5x1xf32> -> vector<5x1xf32>
    %556 = vector.broadcast %555 : vector<5x1xf32> to vector<5x5xf32>
    %557 = arith.mulf %552, %556 : vector<5x5xf32>
    %558 = arith.truncf %557 : vector<5x5xf32> to vector<5x5xbf16>
    %cst_199 = arith.constant dense<0.000000e+00> : vector<5x64xf32>
    %559 = tpu.matmul %558, %546, %cst_199 {dimension_numbers = #tpu.dot_dimension_numbers<[1], [0], [0], [1], [0, 0, 1, 1], [], []>} : vector<5x5xbf16>, vector<5x64xbf16>, vector<5x64xf32> -> vector<5x64xf32>
    %c5_200 = arith.constant 5 : index
    %c64_201 = arith.constant 64 : index
    %560 = vector.load %arg21[%c5_200, %c64_201] : memref<40x128xf32, #tpu.memory_space<vmem>>, vector<5x64xf32>
    tpu.vector_store %arg21[%c5_200, %c64_201], %559 {strides = array<i32>} : memref<40x128xf32, #tpu.memory_space<vmem>>, vector<5x64xf32>,
    %561 = vector.extract_strided_slice %480 {offsets = [10, 0], sizes = [5, 64], strides = [1, 1]} : vector<40x384xf32> to vector<5x64xf32>
    %562 = arith.truncf %561 : vector<5x64xf32> to vector<5x64xbf16>
    %563 = vector.extract_strided_slice %480 {offsets = [10, 128], sizes = [5, 64], strides = [1, 1]} : vector<40x384xf32> to vector<5x64xf32>
    %564 = arith.truncf %563 : vector<5x64xf32> to vector<5x64xbf16>
    %565 = vector.extract_strided_slice %480 {offsets = [10, 256], sizes = [5, 64], strides = [1, 1]} : vector<40x384xf32> to vector<5x64xf32>
    %566 = arith.truncf %565 : vector<5x64xf32> to vector<5x64xbf16>
    %cst_202 = arith.constant dense<0.000000e+00> : vector<5x5xf32>
    %567 = tpu.matmul %562, %564, %cst_202 {dimension_numbers = #tpu.dot_dimension_numbers<[1], [1], [0], [0], [0, 0, 1, 0], [], []>} : vector<5x64xbf16>, vector<5x64xbf16>, vector<5x5xf32> -> vector<5x5xf32>
    %cst_203 = arith.constant dense<0xFF800000> : vector<5xf32>
    %568 = vector.multi_reduction <maximumf>, %567, %cst_203 [1] : vector<5x5xf32> to vector<5xf32>
    %569 = vector.shape_cast %568 : vector<5xf32> to vector<5x1xf32>
    %570 = vector.broadcast %569 : vector<5x1xf32> to vector<5x5xf32>
    %571 = arith.subf %567, %570 : vector<5x5xf32>
    %572 = math.exp %571 : vector<5x5xf32>
    %cst_204 = arith.constant dense<0.000000e+00> : vector<5xf32>
    %573 = vector.multi_reduction <add>, %572, %cst_204 [1] : vector<5x5xf32> to vector<5xf32>
    %574 = vector.shape_cast %573 : vector<5xf32> to vector<5x1xf32>
    %575 = tpu.reciprocal %574 {approx = true} : vector<5x1xf32> -> vector<5x1xf32>
    %576 = vector.broadcast %575 : vector<5x1xf32> to vector<5x5xf32>
    %577 = arith.mulf %572, %576 : vector<5x5xf32>
    %578 = arith.truncf %577 : vector<5x5xf32> to vector<5x5xbf16>
    %cst_205 = arith.constant dense<0.000000e+00> : vector<5x64xf32>
    %579 = tpu.matmul %578, %566, %cst_205 {dimension_numbers = #tpu.dot_dimension_numbers<[1], [0], [0], [1], [0, 0, 1, 1], [], []>} : vector<5x5xbf16>, vector<5x64xbf16>, vector<5x64xf32> -> vector<5x64xf32>
    %c10_206 = arith.constant 10 : index
    %c0_207 = arith.constant 0 : index
    %580 = vector.load %arg21[%c10_206, %c0_207] : memref<40x128xf32, #tpu.memory_space<vmem>>, vector<5x64xf32>
    tpu.vector_store %arg21[%c10_206, %c0_207], %579 {strides = array<i32>} : memref<40x128xf32, #tpu.memory_space<vmem>>, vector<5x64xf32>,
    %581 = vector.extract_strided_slice %480 {offsets = [10, 64], sizes = [5, 64], strides = [1, 1]} : vector<40x384xf32> to vector<5x64xf32>
    %582 = arith.truncf %581 : vector<5x64xf32> to vector<5x64xbf16>
    %583 = vector.extract_strided_slice %480 {offsets = [10, 192], sizes = [5, 64], strides = [1, 1]} : vector<40x384xf32> to vector<5x64xf32>
    %584 = arith.truncf %583 : vector<5x64xf32> to vector<5x64xbf16>
    %585 = vector.extract_strided_slice %480 {offsets = [10, 320], sizes = [5, 64], strides = [1, 1]} : vector<40x384xf32> to vector<5x64xf32>
    %586 = arith.truncf %585 : vector<5x64xf32> to vector<5x64xbf16>
    %cst_208 = arith.constant dense<0.000000e+00> : vector<5x5xf32>
    %587 = tpu.matmul %582, %584, %cst_208 {dimension_numbers = #tpu.dot_dimension_numbers<[1], [1], [0], [0], [0, 0, 1, 0], [], []>} : vector<5x64xbf16>, vector<5x64xbf16>, vector<5x5xf32> -> vector<5x5xf32>
    %cst_209 = arith.constant dense<0xFF800000> : vector<5xf32>
    %588 = vector.multi_reduction <maximumf>, %587, %cst_209 [1] : vector<5x5xf32> to vector<5xf32>
    %589 = vector.shape_cast %588 : vector<5xf32> to vector<5x1xf32>
    %590 = vector.broadcast %589 : vector<5x1xf32> to vector<5x5xf32>
    %591 = arith.subf %587, %590 : vector<5x5xf32>
    %592 = math.exp %591 : vector<5x5xf32>
    %cst_210 = arith.constant dense<0.000000e+00> : vector<5xf32>
    %593 = vector.multi_reduction <add>, %592, %cst_210 [1] : vector<5x5xf32> to vector<5xf32>
    %594 = vector.shape_cast %593 : vector<5xf32> to vector<5x1xf32>
    %595 = tpu.reciprocal %594 {approx = true} : vector<5x1xf32> -> vector<5x1xf32>
    %596 = vector.broadcast %595 : vector<5x1xf32> to vector<5x5xf32>
    %597 = arith.mulf %592, %596 : vector<5x5xf32>
    %598 = arith.truncf %597 : vector<5x5xf32> to vector<5x5xbf16>
    %cst_211 = arith.constant dense<0.000000e+00> : vector<5x64xf32>
    %599 = tpu.matmul %598, %586, %cst_211 {dimension_numbers = #tpu.dot_dimension_numbers<[1], [0], [0], [1], [0, 0, 1, 1], [], []>} : vector<5x5xbf16>, vector<5x64xbf16>, vector<5x64xf32> -> vector<5x64xf32>
    %c10_212 = arith.constant 10 : index
    %c64_213 = arith.constant 64 : index
    %600 = vector.load %arg21[%c10_212, %c64_213] : memref<40x128xf32, #tpu.memory_space<vmem>>, vector<5x64xf32>
    tpu.vector_store %arg21[%c10_212, %c64_213], %599 {strides = array<i32>} : memref<40x128xf32, #tpu.memory_space<vmem>>, vector<5x64xf32>,
    %601 = vector.extract_strided_slice %480 {offsets = [15, 0], sizes = [5, 64], strides = [1, 1]} : vector<40x384xf32> to vector<5x64xf32>
    %602 = arith.truncf %601 : vector<5x64xf32> to vector<5x64xbf16>
    %603 = vector.extract_strided_slice %480 {offsets = [15, 128], sizes = [5, 64], strides = [1, 1]} : vector<40x384xf32> to vector<5x64xf32>
    %604 = arith.truncf %603 : vector<5x64xf32> to vector<5x64xbf16>
    %605 = vector.extract_strided_slice %480 {offsets = [15, 256], sizes = [5, 64], strides = [1, 1]} : vector<40x384xf32> to vector<5x64xf32>
    %606 = arith.truncf %605 : vector<5x64xf32> to vector<5x64xbf16>
    %cst_214 = arith.constant dense<0.000000e+00> : vector<5x5xf32>
    %607 = tpu.matmul %602, %604, %cst_214 {dimension_numbers = #tpu.dot_dimension_numbers<[1], [1], [0], [0], [0, 0, 1, 0], [], []>} : vector<5x64xbf16>, vector<5x64xbf16>, vector<5x5xf32> -> vector<5x5xf32>
    %cst_215 = arith.constant dense<0xFF800000> : vector<5xf32>
    %608 = vector.multi_reduction <maximumf>, %607, %cst_215 [1] : vector<5x5xf32> to vector<5xf32>
    %609 = vector.shape_cast %608 : vector<5xf32> to vector<5x1xf32>
    %610 = vector.broadcast %609 : vector<5x1xf32> to vector<5x5xf32>
    %611 = arith.subf %607, %610 : vector<5x5xf32>
    %612 = math.exp %611 : vector<5x5xf32>
    %cst_216 = arith.constant dense<0.000000e+00> : vector<5xf32>
    %613 = vector.multi_reduction <add>, %612, %cst_216 [1] : vector<5x5xf32> to vector<5xf32>
    %614 = vector.shape_cast %613 : vector<5xf32> to vector<5x1xf32>
    %615 = tpu.reciprocal %614 {approx = true} : vector<5x1xf32> -> vector<5x1xf32>
    %616 = vector.broadcast %615 : vector<5x1xf32> to vector<5x5xf32>
    %617 = arith.mulf %612, %616 : vector<5x5xf32>
    %618 = arith.truncf %617 : vector<5x5xf32> to vector<5x5xbf16>
    %cst_217 = arith.constant dense<0.000000e+00> : vector<5x64xf32>
    %619 = tpu.matmul %618, %606, %cst_217 {dimension_numbers = #tpu.dot_dimension_numbers<[1], [0], [0], [1], [0, 0, 1, 1], [], []>} : vector<5x5xbf16>, vector<5x64xbf16>, vector<5x64xf32> -> vector<5x64xf32>
    %c15_218 = arith.constant 15 : index
    %c0_219 = arith.constant 0 : index
    %620 = vector.load %arg21[%c15_218, %c0_219] : memref<40x128xf32, #tpu.memory_space<vmem>>, vector<5x64xf32>
    tpu.vector_store %arg21[%c15_218, %c0_219], %619 {strides = array<i32>} : memref<40x128xf32, #tpu.memory_space<vmem>>, vector<5x64xf32>,
    %621 = vector.extract_strided_slice %480 {offsets = [15, 64], sizes = [5, 64], strides = [1, 1]} : vector<40x384xf32> to vector<5x64xf32>
    %622 = arith.truncf %621 : vector<5x64xf32> to vector<5x64xbf16>
    %623 = vector.extract_strided_slice %480 {offsets = [15, 192], sizes = [5, 64], strides = [1, 1]} : vector<40x384xf32> to vector<5x64xf32>
    %624 = arith.truncf %623 : vector<5x64xf32> to vector<5x64xbf16>
    %625 = vector.extract_strided_slice %480 {offsets = [15, 320], sizes = [5, 64], strides = [1, 1]} : vector<40x384xf32> to vector<5x64xf32>
    %626 = arith.truncf %625 : vector<5x64xf32> to vector<5x64xbf16>
    %cst_220 = arith.constant dense<0.000000e+00> : vector<5x5xf32>
    %627 = tpu.matmul %622, %624, %cst_220 {dimension_numbers = #tpu.dot_dimension_numbers<[1], [1], [0], [0], [0, 0, 1, 0], [], []>} : vector<5x64xbf16>, vector<5x64xbf16>, vector<5x5xf32> -> vector<5x5xf32>
    %cst_221 = arith.constant dense<0xFF800000> : vector<5xf32>
    %628 = vector.multi_reduction <maximumf>, %627, %cst_221 [1] : vector<5x5xf32> to vector<5xf32>
    %629 = vector.shape_cast %628 : vector<5xf32> to vector<5x1xf32>
    %630 = vector.broadcast %629 : vector<5x1xf32> to vector<5x5xf32>
    %631 = arith.subf %627, %630 : vector<5x5xf32>
    %632 = math.exp %631 : vector<5x5xf32>
    %cst_222 = arith.constant dense<0.000000e+00> : vector<5xf32>
    %633 = vector.multi_reduction <add>, %632, %cst_222 [1] : vector<5x5xf32> to vector<5xf32>
    %634 = vector.shape_cast %633 : vector<5xf32> to vector<5x1xf32>
    %635 = tpu.reciprocal %634 {approx = true} : vector<5x1xf32> -> vector<5x1xf32>
    %636 = vector.broadcast %635 : vector<5x1xf32> to vector<5x5xf32>
    %637 = arith.mulf %632, %636 : vector<5x5xf32>
    %638 = arith.truncf %637 : vector<5x5xf32> to vector<5x5xbf16>
    %cst_223 = arith.constant dense<0.000000e+00> : vector<5x64xf32>
    %639 = tpu.matmul %638, %626, %cst_223 {dimension_numbers = #tpu.dot_dimension_numbers<[1], [0], [0], [1], [0, 0, 1, 1], [], []>} : vector<5x5xbf16>, vector<5x64xbf16>, vector<5x64xf32> -> vector<5x64xf32>
    %c15_224 = arith.constant 15 : index
    %c64_225 = arith.constant 64 : index
    %640 = vector.load %arg21[%c15_224, %c64_225] : memref<40x128xf32, #tpu.memory_space<vmem>>, vector<5x64xf32>
    tpu.vector_store %arg21[%c15_224, %c64_225], %639 {strides = array<i32>} : memref<40x128xf32, #tpu.memory_space<vmem>>, vector<5x64xf32>,
    %641 = vector.extract_strided_slice %480 {offsets = [20, 0], sizes = [5, 64], strides = [1, 1]} : vector<40x384xf32> to vector<5x64xf32>
    %642 = arith.truncf %641 : vector<5x64xf32> to vector<5x64xbf16>
    %643 = vector.extract_strided_slice %480 {offsets = [20, 128], sizes = [5, 64], strides = [1, 1]} : vector<40x384xf32> to vector<5x64xf32>
    %644 = arith.truncf %643 : vector<5x64xf32> to vector<5x64xbf16>
    %645 = vector.extract_strided_slice %480 {offsets = [20, 256], sizes = [5, 64], strides = [1, 1]} : vector<40x384xf32> to vector<5x64xf32>
    %646 = arith.truncf %645 : vector<5x64xf32> to vector<5x64xbf16>
    %cst_226 = arith.constant dense<0.000000e+00> : vector<5x5xf32>
    %647 = tpu.matmul %642, %644, %cst_226 {dimension_numbers = #tpu.dot_dimension_numbers<[1], [1], [0], [0], [0, 0, 1, 0], [], []>} : vector<5x64xbf16>, vector<5x64xbf16>, vector<5x5xf32> -> vector<5x5xf32>
    %cst_227 = arith.constant dense<0xFF800000> : vector<5xf32>
    %648 = vector.multi_reduction <maximumf>, %647, %cst_227 [1] : vector<5x5xf32> to vector<5xf32>
    %649 = vector.shape_cast %648 : vector<5xf32> to vector<5x1xf32>
    %650 = vector.broadcast %649 : vector<5x1xf32> to vector<5x5xf32>
    %651 = arith.subf %647, %650 : vector<5x5xf32>
    %652 = math.exp %651 : vector<5x5xf32>
    %cst_228 = arith.constant dense<0.000000e+00> : vector<5xf32>
    %653 = vector.multi_reduction <add>, %652, %cst_228 [1] : vector<5x5xf32> to vector<5xf32>
    %654 = vector.shape_cast %653 : vector<5xf32> to vector<5x1xf32>
    %655 = tpu.reciprocal %654 {approx = true} : vector<5x1xf32> -> vector<5x1xf32>
    %656 = vector.broadcast %655 : vector<5x1xf32> to vector<5x5xf32>
    %657 = arith.mulf %652, %656 : vector<5x5xf32>
    %658 = arith.truncf %657 : vector<5x5xf32> to vector<5x5xbf16>
    %cst_229 = arith.constant dense<0.000000e+00> : vector<5x64xf32>
    %659 = tpu.matmul %658, %646, %cst_229 {dimension_numbers = #tpu.dot_dimension_numbers<[1], [0], [0], [1], [0, 0, 1, 1], [], []>} : vector<5x5xbf16>, vector<5x64xbf16>, vector<5x64xf32> -> vector<5x64xf32>
    %c20_230 = arith.constant 20 : index
    %c0_231 = arith.constant 0 : index
    %660 = vector.load %arg21[%c20_230, %c0_231] : memref<40x128xf32, #tpu.memory_space<vmem>>, vector<5x64xf32>
    tpu.vector_store %arg21[%c20_230, %c0_231], %659 {strides = array<i32>} : memref<40x128xf32, #tpu.memory_space<vmem>>, vector<5x64xf32>,
    %661 = vector.extract_strided_slice %480 {offsets = [20, 64], sizes = [5, 64], strides = [1, 1]} : vector<40x384xf32> to vector<5x64xf32>
    %662 = arith.truncf %661 : vector<5x64xf32> to vector<5x64xbf16>
    %663 = vector.extract_strided_slice %480 {offsets = [20, 192], sizes = [5, 64], strides = [1, 1]} : vector<40x384xf32> to vector<5x64xf32>
    %664 = arith.truncf %663 : vector<5x64xf32> to vector<5x64xbf16>
    %665 = vector.extract_strided_slice %480 {offsets = [20, 320], sizes = [5, 64], strides = [1, 1]} : vector<40x384xf32> to vector<5x64xf32>
    %666 = arith.truncf %665 : vector<5x64xf32> to vector<5x64xbf16>
    %cst_232 = arith.constant dense<0.000000e+00> : vector<5x5xf32>
    %667 = tpu.matmul %662, %664, %cst_232 {dimension_numbers = #tpu.dot_dimension_numbers<[1], [1], [0], [0], [0, 0, 1, 0], [], []>} : vector<5x64xbf16>, vector<5x64xbf16>, vector<5x5xf32> -> vector<5x5xf32>
    %cst_233 = arith.constant dense<0xFF800000> : vector<5xf32>
    %668 = vector.multi_reduction <maximumf>, %667, %cst_233 [1] : vector<5x5xf32> to vector<5xf32>
    %669 = vector.shape_cast %668 : vector<5xf32> to vector<5x1xf32>
    %670 = vector.broadcast %669 : vector<5x1xf32> to vector<5x5xf32>
    %671 = arith.subf %667, %670 : vector<5x5xf32>
    %672 = math.exp %671 : vector<5x5xf32>
    %cst_234 = arith.constant dense<0.000000e+00> : vector<5xf32>
    %673 = vector.multi_reduction <add>, %672, %cst_234 [1] : vector<5x5xf32> to vector<5xf32>
    %674 = vector.shape_cast %673 : vector<5xf32> to vector<5x1xf32>
    %675 = tpu.reciprocal %674 {approx = true} : vector<5x1xf32> -> vector<5x1xf32>
    %676 = vector.broadcast %675 : vector<5x1xf32> to vector<5x5xf32>
    %677 = arith.mulf %672, %676 : vector<5x5xf32>
    %678 = arith.truncf %677 : vector<5x5xf32> to vector<5x5xbf16>
    %cst_235 = arith.constant dense<0.000000e+00> : vector<5x64xf32>
    %679 = tpu.matmul %678, %666, %cst_235 {dimension_numbers = #tpu.dot_dimension_numbers<[1], [0], [0], [1], [0, 0, 1, 1], [], []>} : vector<5x5xbf16>, vector<5x64xbf16>, vector<5x64xf32> -> vector<5x64xf32>
    %c20_236 = arith.constant 20 : index
    %c64_237 = arith.constant 64 : index
    %680 = vector.load %arg21[%c20_236, %c64_237] : memref<40x128xf32, #tpu.memory_space<vmem>>, vector<5x64xf32>
    tpu.vector_store %arg21[%c20_236, %c64_237], %679 {strides = array<i32>} : memref<40x128xf32, #tpu.memory_space<vmem>>, vector<5x64xf32>,
    %681 = vector.extract_strided_slice %480 {offsets = [25, 0], sizes = [5, 64], strides = [1, 1]} : vector<40x384xf32> to vector<5x64xf32>
    %682 = arith.truncf %681 : vector<5x64xf32> to vector<5x64xbf16>
    %683 = vector.extract_strided_slice %480 {offsets = [25, 128], sizes = [5, 64], strides = [1, 1]} : vector<40x384xf32> to vector<5x64xf32>
    %684 = arith.truncf %683 : vector<5x64xf32> to vector<5x64xbf16>
    %685 = vector.extract_strided_slice %480 {offsets = [25, 256], sizes = [5, 64], strides = [1, 1]} : vector<40x384xf32> to vector<5x64xf32>
    %686 = arith.truncf %685 : vector<5x64xf32> to vector<5x64xbf16>
    %cst_238 = arith.constant dense<0.000000e+00> : vector<5x5xf32>
    %687 = tpu.matmul %682, %684, %cst_238 {dimension_numbers = #tpu.dot_dimension_numbers<[1], [1], [0], [0], [0, 0, 1, 0], [], []>} : vector<5x64xbf16>, vector<5x64xbf16>, vector<5x5xf32> -> vector<5x5xf32>
    %cst_239 = arith.constant dense<0xFF800000> : vector<5xf32>
    %688 = vector.multi_reduction <maximumf>, %687, %cst_239 [1] : vector<5x5xf32> to vector<5xf32>
    %689 = vector.shape_cast %688 : vector<5xf32> to vector<5x1xf32>
    %690 = vector.broadcast %689 : vector<5x1xf32> to vector<5x5xf32>
    %691 = arith.subf %687, %690 : vector<5x5xf32>
    %692 = math.exp %691 : vector<5x5xf32>
    %cst_240 = arith.constant dense<0.000000e+00> : vector<5xf32>
    %693 = vector.multi_reduction <add>, %692, %cst_240 [1] : vector<5x5xf32> to vector<5xf32>
    %694 = vector.shape_cast %693 : vector<5xf32> to vector<5x1xf32>
    %695 = tpu.reciprocal %694 {approx = true} : vector<5x1xf32> -> vector<5x1xf32>
    %696 = vector.broadcast %695 : vector<5x1xf32> to vector<5x5xf32>
    %697 = arith.mulf %692, %696 : vector<5x5xf32>
    %698 = arith.truncf %697 : vector<5x5xf32> to vector<5x5xbf16>
    %cst_241 = arith.constant dense<0.000000e+00> : vector<5x64xf32>
    %699 = tpu.matmul %698, %686, %cst_241 {dimension_numbers = #tpu.dot_dimension_numbers<[1], [0], [0], [1], [0, 0, 1, 1], [], []>} : vector<5x5xbf16>, vector<5x64xbf16>, vector<5x64xf32> -> vector<5x64xf32>
    %c25_242 = arith.constant 25 : index
    %c0_243 = arith.constant 0 : index
    %700 = vector.load %arg21[%c25_242, %c0_243] : memref<40x128xf32, #tpu.memory_space<vmem>>, vector<5x64xf32>
    tpu.vector_store %arg21[%c25_242, %c0_243], %699 {strides = array<i32>} : memref<40x128xf32, #tpu.memory_space<vmem>>, vector<5x64xf32>,
    %701 = vector.extract_strided_slice %480 {offsets = [25, 64], sizes = [5, 64], strides = [1, 1]} : vector<40x384xf32> to vector<5x64xf32>
    %702 = arith.truncf %701 : vector<5x64xf32> to vector<5x64xbf16>
    %703 = vector.extract_strided_slice %480 {offsets = [25, 192], sizes = [5, 64], strides = [1, 1]} : vector<40x384xf32> to vector<5x64xf32>
    %704 = arith.truncf %703 : vector<5x64xf32> to vector<5x64xbf16>
    %705 = vector.extract_strided_slice %480 {offsets = [25, 320], sizes = [5, 64], strides = [1, 1]} : vector<40x384xf32> to vector<5x64xf32>
    %706 = arith.truncf %705 : vector<5x64xf32> to vector<5x64xbf16>
    %cst_244 = arith.constant dense<0.000000e+00> : vector<5x5xf32>
    %707 = tpu.matmul %702, %704, %cst_244 {dimension_numbers = #tpu.dot_dimension_numbers<[1], [1], [0], [0], [0, 0, 1, 0], [], []>} : vector<5x64xbf16>, vector<5x64xbf16>, vector<5x5xf32> -> vector<5x5xf32>
    %cst_245 = arith.constant dense<0xFF800000> : vector<5xf32>
    %708 = vector.multi_reduction <maximumf>, %707, %cst_245 [1] : vector<5x5xf32> to vector<5xf32>
    %709 = vector.shape_cast %708 : vector<5xf32> to vector<5x1xf32>
    %710 = vector.broadcast %709 : vector<5x1xf32> to vector<5x5xf32>
    %711 = arith.subf %707, %710 : vector<5x5xf32>
    %712 = math.exp %711 : vector<5x5xf32>
    %cst_246 = arith.constant dense<0.000000e+00> : vector<5xf32>
    %713 = vector.multi_reduction <add>, %712, %cst_246 [1] : vector<5x5xf32> to vector<5xf32>
    %714 = vector.shape_cast %713 : vector<5xf32> to vector<5x1xf32>
    %715 = tpu.reciprocal %714 {approx = true} : vector<5x1xf32> -> vector<5x1xf32>
    %716 = vector.broadcast %715 : vector<5x1xf32> to vector<5x5xf32>
    %717 = arith.mulf %712, %716 : vector<5x5xf32>
    %718 = arith.truncf %717 : vector<5x5xf32> to vector<5x5xbf16>
    %cst_247 = arith.constant dense<0.000000e+00> : vector<5x64xf32>
    %719 = tpu.matmul %718, %706, %cst_247 {dimension_numbers = #tpu.dot_dimension_numbers<[1], [0], [0], [1], [0, 0, 1, 1], [], []>} : vector<5x5xbf16>, vector<5x64xbf16>, vector<5x64xf32> -> vector<5x64xf32>
    %c25_248 = arith.constant 25 : index
    %c64_249 = arith.constant 64 : index
    %720 = vector.load %arg21[%c25_248, %c64_249] : memref<40x128xf32, #tpu.memory_space<vmem>>, vector<5x64xf32>
    tpu.vector_store %arg21[%c25_248, %c64_249], %719 {strides = array<i32>} : memref<40x128xf32, #tpu.memory_space<vmem>>, vector<5x64xf32>,
    %721 = vector.extract_strided_slice %480 {offsets = [30, 0], sizes = [5, 64], strides = [1, 1]} : vector<40x384xf32> to vector<5x64xf32>
    %722 = arith.truncf %721 : vector<5x64xf32> to vector<5x64xbf16>
    %723 = vector.extract_strided_slice %480 {offsets = [30, 128], sizes = [5, 64], strides = [1, 1]} : vector<40x384xf32> to vector<5x64xf32>
    %724 = arith.truncf %723 : vector<5x64xf32> to vector<5x64xbf16>
    %725 = vector.extract_strided_slice %480 {offsets = [30, 256], sizes = [5, 64], strides = [1, 1]} : vector<40x384xf32> to vector<5x64xf32>
    %726 = arith.truncf %725 : vector<5x64xf32> to vector<5x64xbf16>
    %cst_250 = arith.constant dense<0.000000e+00> : vector<5x5xf32>
    %727 = tpu.matmul %722, %724, %cst_250 {dimension_numbers = #tpu.dot_dimension_numbers<[1], [1], [0], [0], [0, 0, 1, 0], [], []>} : vector<5x64xbf16>, vector<5x64xbf16>, vector<5x5xf32> -> vector<5x5xf32>
    %cst_251 = arith.constant dense<0xFF800000> : vector<5xf32>
    %728 = vector.multi_reduction <maximumf>, %727, %cst_251 [1] : vector<5x5xf32> to vector<5xf32>
    %729 = vector.shape_cast %728 : vector<5xf32> to vector<5x1xf32>
    %730 = vector.broadcast %729 : vector<5x1xf32> to vector<5x5xf32>
    %731 = arith.subf %727, %730 : vector<5x5xf32>
    %732 = math.exp %731 : vector<5x5xf32>
    %cst_252 = arith.constant dense<0.000000e+00> : vector<5xf32>
    %733 = vector.multi_reduction <add>, %732, %cst_252 [1] : vector<5x5xf32> to vector<5xf32>
    %734 = vector.shape_cast %733 : vector<5xf32> to vector<5x1xf32>
    %735 = tpu.reciprocal %734 {approx = true} : vector<5x1xf32> -> vector<5x1xf32>
    %736 = vector.broadcast %735 : vector<5x1xf32> to vector<5x5xf32>
    %737 = arith.mulf %732, %736 : vector<5x5xf32>
    %738 = arith.truncf %737 : vector<5x5xf32> to vector<5x5xbf16>
    %cst_253 = arith.constant dense<0.000000e+00> : vector<5x64xf32>
    %739 = tpu.matmul %738, %726, %cst_253 {dimension_numbers = #tpu.dot_dimension_numbers<[1], [0], [0], [1], [0, 0, 1, 1], [], []>} : vector<5x5xbf16>, vector<5x64xbf16>, vector<5x64xf32> -> vector<5x64xf32>
    %c30_254 = arith.constant 30 : index
    %c0_255 = arith.constant 0 : index
    %740 = vector.load %arg21[%c30_254, %c0_255] : memref<40x128xf32, #tpu.memory_space<vmem>>, vector<5x64xf32>
    tpu.vector_store %arg21[%c30_254, %c0_255], %739 {strides = array<i32>} : memref<40x128xf32, #tpu.memory_space<vmem>>, vector<5x64xf32>,
    %741 = vector.extract_strided_slice %480 {offsets = [30, 64], sizes = [5, 64], strides = [1, 1]} : vector<40x384xf32> to vector<5x64xf32>
    %742 = arith.truncf %741 : vector<5x64xf32> to vector<5x64xbf16>
    %743 = vector.extract_strided_slice %480 {offsets = [30, 192], sizes = [5, 64], strides = [1, 1]} : vector<40x384xf32> to vector<5x64xf32>
    %744 = arith.truncf %743 : vector<5x64xf32> to vector<5x64xbf16>
    %745 = vector.extract_strided_slice %480 {offsets = [30, 320], sizes = [5, 64], strides = [1, 1]} : vector<40x384xf32> to vector<5x64xf32>
    %746 = arith.truncf %745 : vector<5x64xf32> to vector<5x64xbf16>
    %cst_256 = arith.constant dense<0.000000e+00> : vector<5x5xf32>
    %747 = tpu.matmul %742, %744, %cst_256 {dimension_numbers = #tpu.dot_dimension_numbers<[1], [1], [0], [0], [0, 0, 1, 0], [], []>} : vector<5x64xbf16>, vector<5x64xbf16>, vector<5x5xf32> -> vector<5x5xf32>
    %cst_257 = arith.constant dense<0xFF800000> : vector<5xf32>
    %748 = vector.multi_reduction <maximumf>, %747, %cst_257 [1] : vector<5x5xf32> to vector<5xf32>
    %749 = vector.shape_cast %748 : vector<5xf32> to vector<5x1xf32>
    %750 = vector.broadcast %749 : vector<5x1xf32> to vector<5x5xf32>
    %751 = arith.subf %747, %750 : vector<5x5xf32>
    %752 = math.exp %751 : vector<5x5xf32>
    %cst_258 = arith.constant dense<0.000000e+00> : vector<5xf32>
    %753 = vector.multi_reduction <add>, %752, %cst_258 [1] : vector<5x5xf32> to vector<5xf32>
    %754 = vector.shape_cast %753 : vector<5xf32> to vector<5x1xf32>
    %755 = tpu.reciprocal %754 {approx = true} : vector<5x1xf32> -> vector<5x1xf32>
    %756 = vector.broadcast %755 : vector<5x1xf32> to vector<5x5xf32>
    %757 = arith.mulf %752, %756 : vector<5x5xf32>
    %758 = arith.truncf %757 : vector<5x5xf32> to vector<5x5xbf16>
    %cst_259 = arith.constant dense<0.000000e+00> : vector<5x64xf32>
    %759 = tpu.matmul %758, %746, %cst_259 {dimension_numbers = #tpu.dot_dimension_numbers<[1], [0], [0], [1], [0, 0, 1, 1], [], []>} : vector<5x5xbf16>, vector<5x64xbf16>, vector<5x64xf32> -> vector<5x64xf32>
    %c30_260 = arith.constant 30 : index
    %c64_261 = arith.constant 64 : index
    %760 = vector.load %arg21[%c30_260, %c64_261] : memref<40x128xf32, #tpu.memory_space<vmem>>, vector<5x64xf32>
    tpu.vector_store %arg21[%c30_260, %c64_261], %759 {strides = array<i32>} : memref<40x128xf32, #tpu.memory_space<vmem>>, vector<5x64xf32>,
    %761 = vector.extract_strided_slice %480 {offsets = [35, 0], sizes = [5, 64], strides = [1, 1]} : vector<40x384xf32> to vector<5x64xf32>
    %762 = arith.truncf %761 : vector<5x64xf32> to vector<5x64xbf16>
    %763 = vector.extract_strided_slice %480 {offsets = [35, 128], sizes = [5, 64], strides = [1, 1]} : vector<40x384xf32> to vector<5x64xf32>
    %764 = arith.truncf %763 : vector<5x64xf32> to vector<5x64xbf16>
    %765 = vector.extract_strided_slice %480 {offsets = [35, 256], sizes = [5, 64], strides = [1, 1]} : vector<40x384xf32> to vector<5x64xf32>
    %766 = arith.truncf %765 : vector<5x64xf32> to vector<5x64xbf16>
    %cst_262 = arith.constant dense<0.000000e+00> : vector<5x5xf32>
    %767 = tpu.matmul %762, %764, %cst_262 {dimension_numbers = #tpu.dot_dimension_numbers<[1], [1], [0], [0], [0, 0, 1, 0], [], []>} : vector<5x64xbf16>, vector<5x64xbf16>, vector<5x5xf32> -> vector<5x5xf32>
    %cst_263 = arith.constant dense<0xFF800000> : vector<5xf32>
    %768 = vector.multi_reduction <maximumf>, %767, %cst_263 [1] : vector<5x5xf32> to vector<5xf32>
    %769 = vector.shape_cast %768 : vector<5xf32> to vector<5x1xf32>
    %770 = vector.broadcast %769 : vector<5x1xf32> to vector<5x5xf32>
    %771 = arith.subf %767, %770 : vector<5x5xf32>
    %772 = math.exp %771 : vector<5x5xf32>
    %cst_264 = arith.constant dense<0.000000e+00> : vector<5xf32>
    %773 = vector.multi_reduction <add>, %772, %cst_264 [1] : vector<5x5xf32> to vector<5xf32>
    %774 = vector.shape_cast %773 : vector<5xf32> to vector<5x1xf32>
    %775 = tpu.reciprocal %774 {approx = true} : vector<5x1xf32> -> vector<5x1xf32>
    %776 = vector.broadcast %775 : vector<5x1xf32> to vector<5x5xf32>
    %777 = arith.mulf %772, %776 : vector<5x5xf32>
    %778 = arith.truncf %777 : vector<5x5xf32> to vector<5x5xbf16>
    %cst_265 = arith.constant dense<0.000000e+00> : vector<5x64xf32>
    %779 = tpu.matmul %778, %766, %cst_265 {dimension_numbers = #tpu.dot_dimension_numbers<[1], [0], [0], [1], [0, 0, 1, 1], [], []>} : vector<5x5xbf16>, vector<5x64xbf16>, vector<5x64xf32> -> vector<5x64xf32>
    %c35_266 = arith.constant 35 : index
    %c0_267 = arith.constant 0 : index
    %780 = vector.load %arg21[%c35_266, %c0_267] : memref<40x128xf32, #tpu.memory_space<vmem>>, vector<5x64xf32>
    tpu.vector_store %arg21[%c35_266, %c0_267], %779 {strides = array<i32>} : memref<40x128xf32, #tpu.memory_space<vmem>>, vector<5x64xf32>,
    %781 = vector.extract_strided_slice %480 {offsets = [35, 64], sizes = [5, 64], strides = [1, 1]} : vector<40x384xf32> to vector<5x64xf32>
    %782 = arith.truncf %781 : vector<5x64xf32> to vector<5x64xbf16>
    %783 = vector.extract_strided_slice %480 {offsets = [35, 192], sizes = [5, 64], strides = [1, 1]} : vector<40x384xf32> to vector<5x64xf32>
    %784 = arith.truncf %783 : vector<5x64xf32> to vector<5x64xbf16>
    %785 = vector.extract_strided_slice %480 {offsets = [35, 320], sizes = [5, 64], strides = [1, 1]} : vector<40x384xf32> to vector<5x64xf32>
    %786 = arith.truncf %785 : vector<5x64xf32> to vector<5x64xbf16>
    %cst_268 = arith.constant dense<0.000000e+00> : vector<5x5xf32>
    %787 = tpu.matmul %782, %784, %cst_268 {dimension_numbers = #tpu.dot_dimension_numbers<[1], [1], [0], [0], [0, 0, 1, 0], [], []>} : vector<5x64xbf16>, vector<5x64xbf16>, vector<5x5xf32> -> vector<5x5xf32>
    %cst_269 = arith.constant dense<0xFF800000> : vector<5xf32>
    %788 = vector.multi_reduction <maximumf>, %787, %cst_269 [1] : vector<5x5xf32> to vector<5xf32>
    %789 = vector.shape_cast %788 : vector<5xf32> to vector<5x1xf32>
    %790 = vector.broadcast %789 : vector<5x1xf32> to vector<5x5xf32>
    %791 = arith.subf %787, %790 : vector<5x5xf32>
    %792 = math.exp %791 : vector<5x5xf32>
    %cst_270 = arith.constant dense<0.000000e+00> : vector<5xf32>
    %793 = vector.multi_reduction <add>, %792, %cst_270 [1] : vector<5x5xf32> to vector<5xf32>
    %794 = vector.shape_cast %793 : vector<5xf32> to vector<5x1xf32>
    %795 = tpu.reciprocal %794 {approx = true} : vector<5x1xf32> -> vector<5x1xf32>
    %796 = vector.broadcast %795 : vector<5x1xf32> to vector<5x5xf32>
    %797 = arith.mulf %792, %796 : vector<5x5xf32>
    %798 = arith.truncf %797 : vector<5x5xf32> to vector<5x5xbf16>
    %cst_271 = arith.constant dense<0.000000e+00> : vector<5x64xf32>
    %799 = tpu.matmul %798, %786, %cst_271 {dimension_numbers = #tpu.dot_dimension_numbers<[1], [0], [0], [1], [0, 0, 1, 1], [], []>} : vector<5x5xbf16>, vector<5x64xbf16>, vector<5x64xf32> -> vector<5x64xf32>
    %c35_272 = arith.constant 35 : index
    %c64_273 = arith.constant 64 : index
    %800 = vector.load %arg21[%c35_272, %c64_273] : memref<40x128xf32, #tpu.memory_space<vmem>>, vector<5x64xf32>
    tpu.vector_store %arg21[%c35_272, %c64_273], %799 {strides = array<i32>} : memref<40x128xf32, #tpu.memory_space<vmem>>, vector<5x64xf32>,
    %c0_274 = arith.constant 0 : index
    %c0_275 = arith.constant 0 : index
    %801 = vector.load %arg21[%c0_274, %c0_275] : memref<40x128xf32, #tpu.memory_space<vmem>>, vector<40x128xf32>
    %802 = arith.truncf %801 : vector<40x128xf32> to vector<40x128xbf16>
    %c1_276 = arith.constant 1 : index
    %c0_277 = arith.constant 0 : index
    %c0_278 = arith.constant 0 : index
    %803 = vector.load %arg8[%c1_276, %c0_277, %c0_278] : memref<2x128x128xbf16, #tpu.memory_space<vmem>>, vector<1x128x128xbf16>
    %804 = vector.shape_cast %803 : vector<1x128x128xbf16> to vector<128x128xbf16>
    %cst_279 = arith.constant dense<0.000000e+00> : vector<40x128xf32>
    %805 = tpu.matmul %802, %804, %cst_279 {dimension_numbers = #tpu.dot_dimension_numbers<[1], [0], [0], [1], [0, 0, 1, 1], [], []>} : vector<40x128xbf16>, vector<128x128xbf16>, vector<40x128xf32> -> vector<40x128xf32>
    %806 = arith.addf %448, %805 : vector<40x128xf32>
    %c1_280 = arith.constant 1 : index
    %c0_281 = arith.constant 0 : index
    %c0_282 = arith.constant 0 : index
    %807 = vector.load %arg9[%c1_280, %c0_281, %c0_282] : memref<2x1x128xf32, #tpu.memory_space<vmem>>, vector<1x1x128xf32>
    %808 = vector.shape_cast %807 : vector<1x1x128xf32> to vector<1x128xf32>
    %809 = vector.broadcast %808 : vector<1x128xf32> to vector<40x128xf32>
    %810 = arith.addf %806, %809 : vector<40x128xf32>
    %c1_283 = arith.constant 1 : index
    %c0_284 = arith.constant 0 : index
    %c0_285 = arith.constant 0 : index
    %811 = vector.load %arg10[%c1_283, %c0_284, %c0_285] : memref<2x1x128xf32, #tpu.memory_space<vmem>>, vector<1x1x128xf32>
    %812 = vector.shape_cast %811 : vector<1x1x128xf32> to vector<1x128xf32>
    %c1_286 = arith.constant 1 : index
    %c0_287 = arith.constant 0 : index
    %c0_288 = arith.constant 0 : index
    %813 = vector.load %arg11[%c1_286, %c0_287, %c0_288] : memref<2x1x128xf32, #tpu.memory_space<vmem>>, vector<1x1x128xf32>
    %814 = vector.shape_cast %813 : vector<1x1x128xf32> to vector<1x128xf32>
    %cst_289 = arith.constant dense<0.000000e+00> : vector<40xf32>
    %815 = vector.multi_reduction <add>, %810, %cst_289 [1] : vector<40x128xf32> to vector<40xf32>
    %816 = vector.shape_cast %815 : vector<40xf32> to vector<40x1xf32>
    %cst_290 = arith.constant 1.280000e+02 : f32
    %817 = vector.broadcast %cst_290 : f32 to vector<40x1xf32>
    %818 = arith.divf %816, %817 : vector<40x1xf32>
    %819 = vector.broadcast %818 : vector<40x1xf32> to vector<40x128xf32>
    %820 = arith.subf %810, %819 : vector<40x128xf32>
    %821 = arith.mulf %820, %820 : vector<40x128xf32>
    %cst_291 = arith.constant dense<0.000000e+00> : vector<40xf32>
    %822 = vector.multi_reduction <add>, %821, %cst_291 [1] : vector<40x128xf32> to vector<40xf32>
    %823 = vector.shape_cast %822 : vector<40xf32> to vector<40x1xf32>
    %cst_292 = arith.constant 1.280000e+02 : f32
    %824 = vector.broadcast %cst_292 : f32 to vector<40x1xf32>
    %825 = arith.divf %823, %824 : vector<40x1xf32>
    %cst_293 = arith.constant 9.99999997E-7 : f32
    %826 = vector.broadcast %cst_293 : f32 to vector<40x1xf32>
    %827 = arith.addf %825, %826 : vector<40x1xf32>
    %828 = math.rsqrt %827 : vector<40x1xf32>
    %829 = vector.broadcast %828 : vector<40x1xf32> to vector<40x128xf32>
    %830 = arith.mulf %820, %829 : vector<40x128xf32>
    %831 = vector.broadcast %812 : vector<1x128xf32> to vector<40x128xf32>
    %832 = arith.mulf %830, %831 : vector<40x128xf32>
    %833 = vector.broadcast %814 : vector<1x128xf32> to vector<40x128xf32>
    %834 = arith.addf %832, %833 : vector<40x128xf32>
    %835 = arith.truncf %834 : vector<40x128xf32> to vector<40x128xbf16>
    %c1_294 = arith.constant 1 : index
    %c0_295 = arith.constant 0 : index
    %c0_296 = arith.constant 0 : index
    %836 = vector.load %arg12[%c1_294, %c0_295, %c0_296] : memref<2x128x512xbf16, #tpu.memory_space<vmem>>, vector<1x128x512xbf16>
    %837 = vector.shape_cast %836 : vector<1x128x512xbf16> to vector<128x512xbf16>
    %cst_297 = arith.constant dense<0.000000e+00> : vector<40x512xf32>
    %838 = tpu.matmul %835, %837, %cst_297 {dimension_numbers = #tpu.dot_dimension_numbers<[1], [0], [0], [1], [0, 0, 1, 1], [], []>} : vector<40x128xbf16>, vector<128x512xbf16>, vector<40x512xf32> -> vector<40x512xf32>
    %c1_298 = arith.constant 1 : index
    %c0_299 = arith.constant 0 : index
    %c0_300 = arith.constant 0 : index
    %839 = vector.load %arg13[%c1_298, %c0_299, %c0_300] : memref<2x1x512xf32, #tpu.memory_space<vmem>>, vector<1x1x512xf32>
    %840 = vector.shape_cast %839 : vector<1x1x512xf32> to vector<1x512xf32>
    %841 = vector.broadcast %840 : vector<1x512xf32> to vector<40x512xf32>
    %842 = arith.addf %838, %841 : vector<40x512xf32>
    %cst_301 = arith.constant 5.000000e-01 : f32
    %843 = vector.broadcast %cst_301 : f32 to vector<40x512xf32>
    %844 = arith.mulf %843, %842 : vector<40x512xf32>
    %cst_302 = arith.constant 0.707106769 : f32
    %845 = vector.broadcast %cst_302 : f32 to vector<40x512xf32>
    %846 = arith.mulf %842, %845 : vector<40x512xf32>
    %cst_303 = arith.constant 0.000000e+00 : f32
    %847 = vector.broadcast %cst_303 : f32 to vector<40x512xf32>
    %848 = arith.cmpf oge, %846, %847 : vector<40x512xf32>
    %cst_304 = arith.constant 1.000000e+00 : f32
    %cst_305 = arith.constant -1.000000e+00 : f32
    %849 = vector.broadcast %cst_304 : f32 to vector<40x512xf32>
    %850 = vector.broadcast %cst_305 : f32 to vector<40x512xf32>
    %851 = arith.select %848, %849, %850 : vector<40x512xi1>, vector<40x512xf32>
    %852 = math.absf %846 : vector<40x512xf32>
    %cst_306 = arith.constant 0.327591091 : f32
    %853 = vector.broadcast %cst_306 : f32 to vector<40x512xf32>
    %854 = arith.mulf %853, %852 : vector<40x512xf32>
    %cst_307 = arith.constant 1.000000e+00 : f32
    %855 = vector.broadcast %cst_307 : f32 to vector<40x512xf32>
    %856 = arith.addf %855, %854 : vector<40x512xf32>
    %857 = tpu.reciprocal %856 {approx = true} : vector<40x512xf32> -> vector<40x512xf32>
    %cst_308 = arith.constant 1.06140542 : f32
    %858 = vector.broadcast %cst_308 : f32 to vector<40x512xf32>
    %859 = arith.mulf %858, %857 : vector<40x512xf32>
    %cst_309 = arith.constant -1.45315206 : f32
    %860 = vector.broadcast %cst_309 : f32 to vector<40x512xf32>
    %861 = arith.addf %859, %860 : vector<40x512xf32>
    %862 = arith.mulf %861, %857 : vector<40x512xf32>
    %cst_310 = arith.constant 1.42141378 : f32
    %863 = vector.broadcast %cst_310 : f32 to vector<40x512xf32>
    %864 = arith.addf %862, %863 : vector<40x512xf32>
    %865 = arith.mulf %864, %857 : vector<40x512xf32>
    %cst_311 = arith.constant -0.284496725 : f32
    %866 = vector.broadcast %cst_311 : f32 to vector<40x512xf32>
    %867 = arith.addf %865, %866 : vector<40x512xf32>
    %868 = arith.mulf %867, %857 : vector<40x512xf32>
    %cst_312 = arith.constant 0.254829586 : f32
    %869 = vector.broadcast %cst_312 : f32 to vector<40x512xf32>
    %870 = arith.addf %868, %869 : vector<40x512xf32>
    %871 = arith.mulf %870, %857 : vector<40x512xf32>
    %cst_313 = arith.constant 0.000000e+00 : f32
    %872 = vector.broadcast %cst_313 : f32 to vector<40x512xf32>
    %873 = arith.subf %872, %852 : vector<40x512xf32>
    %874 = arith.mulf %873, %852 : vector<40x512xf32>
    %875 = math.exp %874 : vector<40x512xf32>
    %876 = arith.mulf %871, %875 : vector<40x512xf32>
    %cst_314 = arith.constant 1.000000e+00 : f32
    %877 = vector.broadcast %cst_314 : f32 to vector<40x512xf32>
    %878 = arith.subf %877, %876 : vector<40x512xf32>
    %879 = arith.mulf %851, %878 : vector<40x512xf32>
    %cst_315 = arith.constant 1.000000e+00 : f32
    %880 = vector.broadcast %cst_315 : f32 to vector<40x512xf32>
    %881 = arith.addf %880, %879 : vector<40x512xf32>
    %882 = arith.mulf %844, %881 : vector<40x512xf32>
    %883 = arith.truncf %882 : vector<40x512xf32> to vector<40x512xbf16>
    %c1_316 = arith.constant 1 : index
    %c0_317 = arith.constant 0 : index
    %c0_318 = arith.constant 0 : index
    %884 = vector.load %arg14[%c1_316, %c0_317, %c0_318] : memref<2x512x128xbf16, #tpu.memory_space<vmem>>, vector<1x512x128xbf16>
    %885 = vector.shape_cast %884 : vector<1x512x128xbf16> to vector<512x128xbf16>
    %cst_319 = arith.constant dense<0.000000e+00> : vector<40x128xf32>
    %886 = tpu.matmul %883, %885, %cst_319 {dimension_numbers = #tpu.dot_dimension_numbers<[1], [0], [0], [1], [0, 0, 1, 1], [], []>} : vector<40x512xbf16>, vector<512x128xbf16>, vector<40x128xf32> -> vector<40x128xf32>
    %887 = arith.addf %810, %886 : vector<40x128xf32>
    %c1_320 = arith.constant 1 : index
    %c0_321 = arith.constant 0 : index
    %c0_322 = arith.constant 0 : index
    %888 = vector.load %arg15[%c1_320, %c0_321, %c0_322] : memref<2x1x128xf32, #tpu.memory_space<vmem>>, vector<1x1x128xf32>
    %889 = vector.shape_cast %888 : vector<1x1x128xf32> to vector<1x128xf32>
    %890 = vector.broadcast %889 : vector<1x128xf32> to vector<40x128xf32>
    %891 = arith.addf %887, %890 : vector<40x128xf32>
    %c0_323 = arith.constant 0 : index
    %c0_324 = arith.constant 0 : index
    %892 = vector.load %arg16[%c0_323, %c0_324] : memref<1x128xf32, #tpu.memory_space<vmem>>, vector<1x128xf32>
    %c0_325 = arith.constant 0 : index
    %c0_326 = arith.constant 0 : index
    %893 = vector.load %arg17[%c0_325, %c0_326] : memref<1x128xf32, #tpu.memory_space<vmem>>, vector<1x128xf32>
    %cst_327 = arith.constant dense<0.000000e+00> : vector<40xf32>
    %894 = vector.multi_reduction <add>, %891, %cst_327 [1] : vector<40x128xf32> to vector<40xf32>
    %895 = vector.shape_cast %894 : vector<40xf32> to vector<40x1xf32>
    %cst_328 = arith.constant 1.280000e+02 : f32
    %896 = vector.broadcast %cst_328 : f32 to vector<40x1xf32>
    %897 = arith.divf %895, %896 : vector<40x1xf32>
    %898 = vector.broadcast %897 : vector<40x1xf32> to vector<40x128xf32>
    %899 = arith.subf %891, %898 : vector<40x128xf32>
    %900 = arith.mulf %899, %899 : vector<40x128xf32>
    %cst_329 = arith.constant dense<0.000000e+00> : vector<40xf32>
    %901 = vector.multi_reduction <add>, %900, %cst_329 [1] : vector<40x128xf32> to vector<40xf32>
    %902 = vector.shape_cast %901 : vector<40xf32> to vector<40x1xf32>
    %cst_330 = arith.constant 1.280000e+02 : f32
    %903 = vector.broadcast %cst_330 : f32 to vector<40x1xf32>
    %904 = arith.divf %902, %903 : vector<40x1xf32>
    %cst_331 = arith.constant 9.99999997E-7 : f32
    %905 = vector.broadcast %cst_331 : f32 to vector<40x1xf32>
    %906 = arith.addf %904, %905 : vector<40x1xf32>
    %907 = math.rsqrt %906 : vector<40x1xf32>
    %908 = vector.broadcast %907 : vector<40x1xf32> to vector<40x128xf32>
    %909 = arith.mulf %899, %908 : vector<40x128xf32>
    %910 = vector.broadcast %892 : vector<1x128xf32> to vector<40x128xf32>
    %911 = arith.mulf %909, %910 : vector<40x128xf32>
    %912 = vector.broadcast %893 : vector<1x128xf32> to vector<40x128xf32>
    %913 = arith.addf %911, %912 : vector<40x128xf32>
    %914 = arith.truncf %913 : vector<40x128xf32> to vector<40x128xbf16>
    %c0_332 = arith.constant 0 : index
    %c0_333 = arith.constant 0 : index
    %915 = vector.load %arg18[%c0_332, %c0_333] : memref<128x256xbf16, #tpu.memory_space<vmem>>, vector<128x256xbf16>
    %cst_334 = arith.constant dense<0.000000e+00> : vector<40x256xf32>
    %916 = tpu.matmul %914, %915, %cst_334 {dimension_numbers = #tpu.dot_dimension_numbers<[1], [0], [0], [1], [0, 0, 1, 1], [], []>} : vector<40x128xbf16>, vector<128x256xbf16>, vector<40x256xf32> -> vector<40x256xf32>
    %c0_335 = arith.constant 0 : index
    %c0_336 = arith.constant 0 : index
    %917 = vector.load %arg19[%c0_335, %c0_336] : memref<1x256xf32, #tpu.memory_space<vmem>>, vector<1x256xf32>
    %918 = vector.broadcast %917 : vector<1x256xf32> to vector<40x256xf32>
    %919 = arith.addf %916, %918 : vector<40x256xf32>
    %c0_337 = arith.constant 0 : index
    %c0_338 = arith.constant 0 : index
    %c0_339 = arith.constant 0 : index
    %920 = vector.load %arg20[%c0_337, %c0_338, %c0_339] : memref<1x40x256xf32, #tpu.memory_space<vmem>>, vector<1x40x256xf32>
    %921 = vector.shape_cast %920 : vector<1x40x256xf32> to vector<40x256xf32>
    %922 = vector.shape_cast %919 : vector<40x256xf32> to vector<1x40x256xf32>
    tpu.vector_store %arg20[%c0_337, %c0_338, %c0_339], %922 {strides = array<i32>} : memref<1x40x256xf32, #tpu.memory_space<vmem>>, vector<1x40x256xf32>,
    return
  }
  func.func @transform_0(%arg0: i32) -> (i32, i32, i32) {
    %c0_i32 = arith.constant 0 : i32
    %c0_i32_0 = arith.constant 0 : i32
    %c0_i32_1 = arith.constant 0 : i32
    return %arg0, %c0_i32, %c0_i32_0 : i32, i32, i32
  }
  func.func @transform_1(%arg0: i32) -> (i32, i32) {
    %c0_i32 = arith.constant 0 : i32
    %c0_i32_0 = arith.constant 0 : i32
    %c0_i32_1 = arith.constant 0 : i32
    return %c0_i32, %c0_i32_0 : i32, i32
  }
  func.func @transform_2(%arg0: i32) -> (i32, i32) {
    %c0_i32 = arith.constant 0 : i32
    %c0_i32_0 = arith.constant 0 : i32
    %c0_i32_1 = arith.constant 0 : i32
    return %c0_i32, %c0_i32_0 : i32, i32
  }
  func.func @transform_3(%arg0: i32) -> (i32, i32, i32) {
    %c0_i32 = arith.constant 0 : i32
    %c0_i32_0 = arith.constant 0 : i32
    %c0_i32_1 = arith.constant 0 : i32
    %c0_i32_2 = arith.constant 0 : i32
    return %c0_i32, %c0_i32_0, %c0_i32_1 : i32, i32, i32
  }
  func.func @transform_4(%arg0: i32) -> (i32, i32, i32) {
    %c0_i32 = arith.constant 0 : i32
    %c0_i32_0 = arith.constant 0 : i32
    %c0_i32_1 = arith.constant 0 : i32
    %c0_i32_2 = arith.constant 0 : i32
    return %c0_i32, %c0_i32_0, %c0_i32_1 : i32, i32, i32
  }
  func.func @transform_5(%arg0: i32) -> (i32, i32, i32) {
    %c0_i32 = arith.constant 0 : i32
    %c0_i32_0 = arith.constant 0 : i32
    %c0_i32_1 = arith.constant 0 : i32
    %c0_i32_2 = arith.constant 0 : i32
    return %c0_i32, %c0_i32_0, %c0_i32_1 : i32, i32, i32
  }
  func.func @transform_6(%arg0: i32) -> (i32, i32, i32) {
    %c0_i32 = arith.constant 0 : i32
    %c0_i32_0 = arith.constant 0 : i32
    %c0_i32_1 = arith.constant 0 : i32
    %c0_i32_2 = arith.constant 0 : i32
    return %c0_i32, %c0_i32_0, %c0_i32_1 : i32, i32, i32
  }
  func.func @transform_7(%arg0: i32) -> (i32, i32, i32) {
    %c0_i32 = arith.constant 0 : i32
    %c0_i32_0 = arith.constant 0 : i32
    %c0_i32_1 = arith.constant 0 : i32
    %c0_i32_2 = arith.constant 0 : i32
    return %c0_i32, %c0_i32_0, %c0_i32_1 : i32, i32, i32
  }
  func.func @transform_8(%arg0: i32) -> (i32, i32, i32) {
    %c0_i32 = arith.constant 0 : i32
    %c0_i32_0 = arith.constant 0 : i32
    %c0_i32_1 = arith.constant 0 : i32
    %c0_i32_2 = arith.constant 0 : i32
    return %c0_i32, %c0_i32_0, %c0_i32_1 : i32, i32, i32
  }
  func.func @transform_9(%arg0: i32) -> (i32, i32, i32) {
    %c0_i32 = arith.constant 0 : i32
    %c0_i32_0 = arith.constant 0 : i32
    %c0_i32_1 = arith.constant 0 : i32
    %c0_i32_2 = arith.constant 0 : i32
    return %c0_i32, %c0_i32_0, %c0_i32_1 : i32, i32, i32
  }
  func.func @transform_10(%arg0: i32) -> (i32, i32, i32) {
    %c0_i32 = arith.constant 0 : i32
    %c0_i32_0 = arith.constant 0 : i32
    %c0_i32_1 = arith.constant 0 : i32
    %c0_i32_2 = arith.constant 0 : i32
    return %c0_i32, %c0_i32_0, %c0_i32_1 : i32, i32, i32
  }
  func.func @transform_11(%arg0: i32) -> (i32, i32, i32) {
    %c0_i32 = arith.constant 0 : i32
    %c0_i32_0 = arith.constant 0 : i32
    %c0_i32_1 = arith.constant 0 : i32
    %c0_i32_2 = arith.constant 0 : i32
    return %c0_i32, %c0_i32_0, %c0_i32_1 : i32, i32, i32
  }
  func.func @transform_12(%arg0: i32) -> (i32, i32, i32) {
    %c0_i32 = arith.constant 0 : i32
    %c0_i32_0 = arith.constant 0 : i32
    %c0_i32_1 = arith.constant 0 : i32
    %c0_i32_2 = arith.constant 0 : i32
    return %c0_i32, %c0_i32_0, %c0_i32_1 : i32, i32, i32
  }
  func.func @transform_13(%arg0: i32) -> (i32, i32, i32) {
    %c0_i32 = arith.constant 0 : i32
    %c0_i32_0 = arith.constant 0 : i32
    %c0_i32_1 = arith.constant 0 : i32
    %c0_i32_2 = arith.constant 0 : i32
    return %c0_i32, %c0_i32_0, %c0_i32_1 : i32, i32, i32
  }
  func.func @transform_14(%arg0: i32) -> (i32, i32, i32) {
    %c0_i32 = arith.constant 0 : i32
    %c0_i32_0 = arith.constant 0 : i32
    %c0_i32_1 = arith.constant 0 : i32
    %c0_i32_2 = arith.constant 0 : i32
    return %c0_i32, %c0_i32_0, %c0_i32_1 : i32, i32, i32
  }
  func.func @transform_15(%arg0: i32) -> (i32, i32) {
    %c0_i32 = arith.constant 0 : i32
    %c0_i32_0 = arith.constant 0 : i32
    %c0_i32_1 = arith.constant 0 : i32
    return %c0_i32, %c0_i32_0 : i32, i32
  }
  func.func @transform_16(%arg0: i32) -> (i32, i32) {
    %c0_i32 = arith.constant 0 : i32
    %c0_i32_0 = arith.constant 0 : i32
    %c0_i32_1 = arith.constant 0 : i32
    return %c0_i32, %c0_i32_0 : i32, i32
  }
  func.func @transform_17(%arg0: i32) -> (i32, i32) {
    %c0_i32 = arith.constant 0 : i32
    %c0_i32_0 = arith.constant 0 : i32
    %c0_i32_1 = arith.constant 0 : i32
    return %c0_i32, %c0_i32_0 : i32, i32
  }
  func.func @transform_18(%arg0: i32) -> (i32, i32) {
    %c0_i32 = arith.constant 0 : i32
    %c0_i32_0 = arith.constant 0 : i32
    %c0_i32_1 = arith.constant 0 : i32
    return %c0_i32, %c0_i32_0 : i32, i32
  }
  func.func @transform_19(%arg0: i32) -> (i32, i32, i32) {
    %c0_i32 = arith.constant 0 : i32
    %c0_i32_0 = arith.constant 0 : i32
    %c0_i32_1 = arith.constant 0 : i32
    return %arg0, %c0_i32, %c0_i32_0 : i32, i32, i32
  }
}

</mosaic_0001>

<llo_original>
// kernel: tile.9
$region0: #{tile.9}
  %s0 = inlined_call_operand.vmem [shape: f32[8,5,128], index: 0, kind: input, shape index: {}]
  %s1 = inlined_call_operand.vmem [shape: f32[40,128], index: 1, kind: output, shape index: {}]
  %v2 = vld [vmem:[%s0] sm:$0x1f]
  %3 = vst [vmem:[%s1] sm:$0x1f] %v2
  %s4 = scalar_lea.vmem %s0, 8
  %v5 = vld [vmem:[%s4] sm:$0x1f]
  %s6 = scalar_lea.vmem %s1, 5
  %7 = vst [vmem:[%s6] sm:$0x1f] %v5
  %s8 = scalar_lea.vmem %s0, 16
  %v9 = vld [vmem:[%s8] sm:$0x1f]
  %s10 = scalar_lea.vmem %s1, 10
  %11 = vst [vmem:[%s10] sm:$0x1f] %v9
  %s12 = scalar_lea.vmem %s0, 24
  %v13 = vld [vmem:[%s12] sm:$0x1f]
  %s14 = scalar_lea.vmem %s1, 15
  %15 = vst [vmem:[%s14] sm:$0x1f] %v13
  %s16 = scalar_lea.vmem %s0, 32
  %v17 = vld [vmem:[%s16] sm:$0x1f]
  %s18 = scalar_lea.vmem %s1, 20
  %19 = vst [vmem:[%s18] sm:$0x1f] %v17
  %s20 = scalar_lea.vmem %s0, 40
  %v21 = vld [vmem:[%s20] sm:$0x1f]
  %s22 = scalar_lea.vmem %s1, 25
  %23 = vst [vmem:[%s22] sm:$0x1f] %v21
  %s24 = scalar_lea.vmem %s0, 48
  %v25 = vld [vmem:[%s24] sm:$0x1f]
  %s26 = scalar_lea.vmem %s1, 30
  %27 = vst [vmem:[%s26] sm:$0x1f] %v25
  %s28 = scalar_lea.vmem %s0, 56
  %v29 = vld [vmem:[%s28] sm:$0x1f]
  %s30 = scalar_lea.vmem %s1, 35
  %31 = vst [vmem:[%s30] sm:$0x1f] %v29

// kernel: vit_encoder_forward.1
$region0: #{vit_encoder_forward.1}
  #allocation0 [shape = 'u32[]', space=smem, size = 0x4, offset = 0x4, fixed_abs, tag = 'smem constant byte address 0x4 - core index']
  #allocation1 [shape = 'u32[72,128]{1,0:T(1,128)}', space=vmem, size = 0x9000, scoped, tag = 'internal scratch']
  #allocation2 [shape = 'f32[40,128]{1,0:T(8,128)}', space=vmem, size = 0x5000, scoped, tag = 'scratch operand']
  %s0 = inlined_call_operand.vmem [shape: bf16[2,40,768], index: 0, kind: input, shape index: {}]
  %s1 = inlined_call_operand.vmem [shape: f32[40,128], index: 1, kind: input, shape index: {}]
  %s2 = inlined_call_operand.vmem [shape: bf16[768,128], index: 2, kind: input, shape index: {}]
  %s3 = inlined_call_operand.vmem [shape: f32[2,1,128], index: 3, kind: input, shape index: {}]
  %s4 = inlined_call_operand.vmem [shape: f32[2,1,128], index: 4, kind: input, shape index: {}]
  %s5 = inlined_call_operand.vmem [shape: bf16[2,128,384], index: 5, kind: input, shape index: {}]
  %s6 = inlined_call_operand.vmem [shape: f32[2,1,384], index: 6, kind: input, shape index: {}]
  %s7 = inlined_call_operand.vmem [shape: bf16[2,128,128], index: 7, kind: input, shape index: {}]
  %s8 = inlined_call_operand.vmem [shape: f32[2,1,128], index: 8, kind: input, shape index: {}]
  %s9 = inlined_call_operand.vmem [shape: f32[2,1,128], index: 9, kind: input, shape index: {}]
  %s10 = inlined_call_operand.vmem [shape: f32[2,1,128], index: 10, kind: input, shape index: {}]
  %s11 = inlined_call_operand.vmem [shape: bf16[2,128,512], index: 11, kind: input, shape index: {}]
  %s12 = inlined_call_operand.vmem [shape: f32[2,1,512], index: 12, kind: input, shape index: {}]
  %s13 = inlined_call_operand.vmem [shape: bf16[2,512,128], index: 13, kind: input, shape index: {}]
  %s14 = inlined_call_operand.vmem [shape: f32[2,1,128], index: 14, kind: input, shape index: {}]
  %s15 = inlined_call_operand.vmem [shape: f32[1,128], index: 15, kind: input, shape index: {}]
  %s16 = inlined_call_operand.vmem [shape: f32[1,128], index: 16, kind: input, shape index: {}]
  %s17 = inlined_call_operand.vmem [shape: bf16[128,256], index: 17, kind: input, shape index: {}]
  %s18 = inlined_call_operand.vmem [shape: f32[1,256], index: 18, kind: input, shape index: {}]
  %s19 = inlined_call_operand.vmem [shape: f32[2,40,256], index: 19, kind: output, shape index: {}]
  %s20 = sld [smem:[#allocation0]]
  $region109: #{vit_encoder_forward.1} parent=0
    _
  %s22 = ssub.s32 1, %s20
  %s23 = scalar_select 0, %s22, %s20
  loop: start=0, step=1, limit=4
  $region2: #{vit_encoder_forward.1} parent=0 // loop_pre_header
    _
  $region3: #{vit_encoder_forward.1} parent=0 // loop_header
    %s25 = sphi 0, %s29
    %p26 = scmp.ge.s32.totalorder %s25, 4
    %s35 = sphi 0, %s37
    %s38 = sphi 0, %s35
    %s39 = sphi 0, %s38
    %s55 = sphi 0, %s39
    %s59 = sphi 0, %s59
    %s61 = sphi 0, %s59
    %s62 = sphi 0, %s61
    %s76 = sphi 0, %s62
    %s80 = sphi 0, %s80
    %s82 = sphi 0, %s80
    %s83 = sphi 0, %s82
    %s97 = sphi 0, %s83
    %s101 = sphi 0, %s101
    %s103 = sphi 0, %s101
    %s104 = sphi 0, %s103
    %s118 = sphi 0, %s104
    %s122 = sphi 0, %s122
    %s124 = sphi 0, %s122
    %s125 = sphi 0, %s124
    %s139 = sphi 0, %s125
    %s143 = sphi 0, %s143
    %s145 = sphi 0, %s143
    %s146 = sphi 0, %s145
    %s160 = sphi 0, %s146
    %s164 = sphi 0, %s164
    %s166 = sphi 0, %s164
    %s167 = sphi 0, %s166
    %s181 = sphi 0, %s167
    %s185 = sphi 0, %s185
    %s187 = sphi 0, %s185
    %s188 = sphi 0, %s187
    %s202 = sphi 0, %s188
    %s206 = sphi 0, %s206
    %s208 = sphi 0, %s206
    %s209 = sphi 0, %s208
    %s223 = sphi 0, %s209
    %s227 = sphi 0, %s227
    %s229 = sphi 0, %s227
    %s230 = sphi 0, %s229
    %s244 = sphi 0, %s230
    %s248 = sphi 0, %s248
    %s250 = sphi 0, %s248
    %s251 = sphi 0, %s250
    %s265 = sphi 0, %s251
    %s269 = sphi 0, %s269
    %s271 = sphi 0, %s269
    %s272 = sphi 0, %s271
    %s286 = sphi 0, %s272
    %s290 = sphi 0, %s290
    %s292 = sphi 0, %s290
    %s293 = sphi 0, %s292
    %s307 = sphi 0, %s293
    %s311 = sphi 0, %s311
    %s313 = sphi 0, %s311
    %s314 = sphi 0, %s313
    %s328 = sphi 0, %s314
    %s332 = sphi 0, %s332
    %s334 = sphi 0, %s332
    %s335 = sphi 0, %s334
    %s349 = sphi 0, %s335
    %s353 = sphi 0, %s353
    %s355 = sphi 0, %s353
    %s356 = sphi 0, %s355
    %s370 = sphi 0, %s356
    %s374 = sphi 0, %s374
    %s376 = sphi 0, %s374
    %s377 = sphi 0, %s376
    %s391 = sphi 0, %s377
    %s395 = sphi 0, %s395
    %s397 = sphi 0, %s395
    %s398 = sphi 0, %s397
    %s412 = sphi 0, %s398
    %s416 = sphi 0, %s416
    %s418 = sphi 0, %s416
    %s419 = sphi 0, %s418
    %s433 = sphi 0, %s419
    %s439 = sphi 0, %s441
    %s442 = sphi 0, %s439
    %s443 = sphi 0, %s442
    %s459 = sphi 0, %s443
  $region4: #{vit_encoder_forward.1} parent=0 // loop_header_branch
    %28 = sbr.rel (%p26) target = $region8
  $region5: #{vit_encoder_forward.1} parent=0 // loop_body
    %s30 = ssub.s32 %s25, 1
    %s31 = ssub.s32 %s25, 2
    %s32 = sadd.s32 %s25, 1
    %s33 = ssub.s32 %s25, %s32
    %p34 = scmp.eq.s32.totalorder %s33, 0
    %s36 = sadd.s32 %s35, 1
    %s37 = scalar_select %p34, %s35, %s36
    %p40 = pneg %p34
    %p41 = scmp.eq.s32.totalorder %s25, 1
    %p42 = por %p40, %p41
    %p43 = scmp.ne.s32.totalorder %s35, %s38
    %p44 = scmp.eq.s32.totalorder %s25, 0
    %p45 = por %p43, %p44
    %p46 = scmp.ne.s32.totalorder %s35, %s38
    %p47 = scmp.eq.s32.totalorder %s30, 1
    %p48 = por %p46, %p47
    %p49 = scmp.ne.s32.totalorder %s38, %s39
    %p50 = scmp.eq.s32.totalorder %s30, 0
    %p51 = por %p49, %p50
    %p52 = scmp.ne.s32.totalorder %s38, %s39
    %p53 = scmp.eq.s32.totalorder %s31, 1
    %p54 = por %p52, %p53
    %p56 = scmp.ne.s32.totalorder %s39, %s55
    %p57 = scmp.eq.s32.totalorder %s31, 0
    %p58 = por %p56, %p57
    %s60 = sadd.s32 %s59, 1
    %p63 = scmp.eq.s32.totalorder %s25, 1
    %p64 = scmp.ne.s32.totalorder %s59, %s61
    %p65 = scmp.eq.s32.totalorder %s25, 0
    %p66 = por %p64, %p65
    %p67 = scmp.ne.s32.totalorder %s59, %s61
    %p68 = scmp.eq.s32.totalorder %s30, 1
    %p69 = por %p67, %p68
    %p70 = scmp.ne.s32.totalorder %s61, %s62
    %p71 = scmp.eq.s32.totalorder %s30, 0
    %p72 = por %p70, %p71
    %p73 = scmp.ne.s32.totalorder %s61, %s62
    %p74 = scmp.eq.s32.totalorder %s31, 1
    %p75 = por %p73, %p74
    %p77 = scmp.ne.s32.totalorder %s62, %s76
    %p78 = scmp.eq.s32.totalorder %s31, 0
    %p79 = por %p77, %p78
    %s81 = sadd.s32 %s80, 1
    %p84 = scmp.eq.s32.totalorder %s25, 1
    %p85 = scmp.ne.s32.totalorder %s80, %s82
    %p86 = scmp.eq.s32.totalorder %s25, 0
    %p87 = por %p85, %p86
    %p88 = scmp.ne.s32.totalorder %s80, %s82
    %p89 = scmp.eq.s32.totalorder %s30, 1
    %p90 = por %p88, %p89
    %p91 = scmp.ne.s32.totalorder %s82, %s83
    %p92 = scmp.eq.s32.totalorder %s30, 0
    %p93 = por %p91, %p92
    %p94 = scmp.ne.s32.totalorder %s82, %s83
    %p95 = scmp.eq.s32.totalorder %s31, 1
    %p96 = por %p94, %p95
    %p98 = scmp.ne.s32.totalorder %s83, %s97
    %p99 = scmp.eq.s32.totalorder %s31, 0
    %p100 = por %p98, %p99
    %s102 = sadd.s32 %s101, 1
    %p105 = scmp.eq.s32.totalorder %s25, 1
    %p106 = scmp.ne.s32.totalorder %s101, %s103
    %p107 = scmp.eq.s32.totalorder %s25, 0
    %p108 = por %p106, %p107
    %p109 = scmp.ne.s32.totalorder %s101, %s103
    %p110 = scmp.eq.s32.totalorder %s30, 1
    %p111 = por %p109, %p110
    %p112 = scmp.ne.s32.totalorder %s103, %s104
    %p113 = scmp.eq.s32.totalorder %s30, 0
    %p114 = por %p112, %p113
    %p115 = scmp.ne.s32.totalorder %s103, %s104
    %p116 = scmp.eq.s32.totalorder %s31, 1
    %p117 = por %p115, %p116
    %p119 = scmp.ne.s32.totalorder %s104, %s118
    %p120 = scmp.eq.s32.totalorder %s31, 0
    %p121 = por %p119, %p120
    %s123 = sadd.s32 %s122, 1
    %p126 = scmp.eq.s32.totalorder %s25, 1
    %p127 = scmp.ne.s32.totalorder %s122, %s124
    %p128 = scmp.eq.s32.totalorder %s25, 0
    %p129 = por %p127, %p128
    %p130 = scmp.ne.s32.totalorder %s122, %s124
    %p131 = scmp.eq.s32.totalorder %s30, 1
    %p132 = por %p130, %p131
    %p133 = scmp.ne.s32.totalorder %s124, %s125
    %p134 = scmp.eq.s32.totalorder %s30, 0
    %p135 = por %p133, %p134
    %p136 = scmp.ne.s32.totalorder %s124, %s125
    %p137 = scmp.eq.s32.totalorder %s31, 1
    %p138 = por %p136, %p137
    %p140 = scmp.ne.s32.totalorder %s125, %s139
    %p141 = scmp.eq.s32.totalorder %s31, 0
    %p142 = por %p140, %p141
    %s144 = sadd.s32 %s143, 1
    %p147 = scmp.eq.s32.totalorder %s25, 1
    %p148 = scmp.ne.s32.totalorder %s143, %s145
    %p149 = scmp.eq.s32.totalorder %s25, 0
    %p150 = por %p148, %p149
    %p151 = scmp.ne.s32.totalorder %s143, %s145
    %p152 = scmp.eq.s32.totalorder %s30, 1
    %p153 = por %p151, %p152
    %p154 = scmp.ne.s32.totalorder %s145, %s146
    %p155 = scmp.eq.s32.totalorder %s30, 0
    %p156 = por %p154, %p155
    %p157 = scmp.ne.s32.totalorder %s145, %s146
    %p158 = scmp.eq.s32.totalorder %s31, 1
    %p159 = por %p157, %p158
    %p161 = scmp.ne.s32.totalorder %s146, %s160
    %p162 = scmp.eq.s32.totalorder %s31, 0
    %p163 = por %p161, %p162
    %s165 = sadd.s32 %s164, 1
    %p168 = scmp.eq.s32.totalorder %s25, 1
    %p169 = scmp.ne.s32.totalorder %s164, %s166
    %p170 = scmp.eq.s32.totalorder %s25, 0
    %p171 = por %p169, %p170
    %p172 = scmp.ne.s32.totalorder %s164, %s166
    %p173 = scmp.eq.s32.totalorder %s30, 1
    %p174 = por %p172, %p173
    %p175 = scmp.ne.s32.totalorder %s166, %s167
    %p176 = scmp.eq.s32.totalorder %s30, 0
    %p177 = por %p175, %p176
    %p178 = scmp.ne.s32.totalorder %s166, %s167
    %p179 = scmp.eq.s32.totalorder %s31, 1
    %p180 = por %p178, %p179
    %p182 = scmp.ne.s32.totalorder %s167, %s181
    %p183 = scmp.eq.s32.totalorder %s31, 0
    %p184 = por %p182, %p183
    %s186 = sadd.s32 %s185, 1
    %p189 = scmp.eq.s32.totalorder %s25, 1
    %p190 = scmp.ne.s32.totalorder %s185, %s187
    %p191 = scmp.eq.s32.totalorder %s25, 0
    %p192 = por %p190, %p191
    %p193 = scmp.ne.s32.totalorder %s185, %s187
    %p194 = scmp.eq.s32.totalorder %s30, 1
    %p195 = por %p193, %p194
    %p196 = scmp.ne.s32.totalorder %s187, %s188
    %p197 = scmp.eq.s32.totalorder %s30, 0
    %p198 = por %p196, %p197
    %p199 = scmp.ne.s32.totalorder %s187, %s188
    %p200 = scmp.eq.s32.totalorder %s31, 1
    %p201 = por %p199, %p200
    %p203 = scmp.ne.s32.totalorder %s188, %s202
    %p204 = scmp.eq.s32.totalorder %s31, 0
    %p205 = por %p203, %p204
    %s207 = sadd.s32 %s206, 1
    %p210 = scmp.eq.s32.totalorder %s25, 1
    %p211 = scmp.ne.s32.totalorder %s206, %s208
    %p212 = scmp.eq.s32.totalorder %s25, 0
    %p213 = por %p211, %p212
    %p214 = scmp.ne.s32.totalorder %s206, %s208
    %p215 = scmp.eq.s32.totalorder %s30, 1
    %p216 = por %p214, %p215
    %p217 = scmp.ne.s32.totalorder %s208, %s209
    %p218 = scmp.eq.s32.totalorder %s30, 0
    %p219 = por %p217, %p218
    %p220 = scmp.ne.s32.totalorder %s208, %s209
    %p221 = scmp.eq.s32.totalorder %s31, 1
    %p222 = por %p220, %p221
    %p224 = scmp.ne.s32.totalorder %s209, %s223
    %p225 = scmp.eq.s32.totalorder %s31, 0
    %p226 = por %p224, %p225
    %s228 = sadd.s32 %s227, 1
    %p231 = scmp.eq.s32.totalorder %s25, 1
    %p232 = scmp.ne.s32.totalorder %s227, %s229
    %p233 = scmp.eq.s32.totalorder %s25, 0
    %p234 = por %p232, %p233
    %p235 = scmp.ne.s32.totalorder %s227, %s229
    %p236 = scmp.eq.s32.totalorder %s30, 1
    %p237 = por %p235, %p236
    %p238 = scmp.ne.s32.totalorder %s229, %s230
    %p239 = scmp.eq.s32.totalorder %s30, 0
    %p240 = por %p238, %p239
    %p241 = scmp.ne.s32.totalorder %s229, %s230
    %p242 = scmp.eq.s32.totalorder %s31, 1
    %p243 = por %p241, %p242
    %p245 = scmp.ne.s32.totalorder %s230, %s244
    %p246 = scmp.eq.s32.totalorder %s31, 0
    %p247 = por %p245, %p246
    %s249 = sadd.s32 %s248, 1
    %p252 = scmp.eq.s32.totalorder %s25, 1
    %p253 = scmp.ne.s32.totalorder %s248, %s250
    %p254 = scmp.eq.s32.totalorder %s25, 0
    %p255 = por %p253, %p254
    %p256 = scmp.ne.s32.totalorder %s248, %s250
    %p257 = scmp.eq.s32.totalorder %s30, 1
    %p258 = por %p256, %p257
    %p259 = scmp.ne.s32.totalorder %s250, %s251
    %p260 = scmp.eq.s32.totalorder %s30, 0
    %p261 = por %p259, %p260
    %p262 = scmp.ne.s32.totalorder %s250, %s251
    %p263 = scmp.eq.s32.totalorder %s31, 1
    %p264 = por %p262, %p263
    %p266 = scmp.ne.s32.totalorder %s251, %s265
    %p267 = scmp.eq.s32.totalorder %s31, 0
    %p268 = por %p266, %p267
    %s270 = sadd.s32 %s269, 1
    %p273 = scmp.eq.s32.totalorder %s25, 1
    %p274 = scmp.ne.s32.totalorder %s269, %s271
    %p275 = scmp.eq.s32.totalorder %s25, 0
    %p276 = por %p274, %p275
    %p277 = scmp.ne.s32.totalorder %s269, %s271
    %p278 = scmp.eq.s32.totalorder %s30, 1
    %p279 = por %p277, %p278
    %p280 = scmp.ne.s32.totalorder %s271, %s272
    %p281 = scmp.eq.s32.totalorder %s30, 0
    %p282 = por %p280, %p281
    %p283 = scmp.ne.s32.totalorder %s271, %s272
    %p284 = scmp.eq.s32.totalorder %s31, 1
    %p285 = por %p283, %p284
    %p287 = scmp.ne.s32.totalorder %s272, %s286
    %p288 = scmp.eq.s32.totalorder %s31, 0
    %p289 = por %p287, %p288
    %s291 = sadd.s32 %s290, 1
    %p294 = scmp.eq.s32.totalorder %s25, 1
    %p295 = scmp.ne.s32.totalorder %s290, %s292
    %p296 = scmp.eq.s32.totalorder %s25, 0
    %p297 = por %p295, %p296
    %p298 = scmp.ne.s32.totalorder %s290, %s292
    %p299 = scmp.eq.s32.totalorder %s30, 1
    %p300 = por %p298, %p299
    %p301 = scmp.ne.s32.totalorder %s292, %s293
    %p302 = scmp.eq.s32.totalorder %s30, 0
    %p303 = por %p301, %p302
    %p304 = scmp.ne.s32.totalorder %s292, %s293
    %p305 = scmp.eq.s32.totalorder %s31, 1
    %p306 = por %p304, %p305
    %p308 = scmp.ne.s32.totalorder %s293, %s307
    %p309 = scmp.eq.s32.totalorder %s31, 0
    %p310 = por %p308, %p309
    %s312 = sadd.s32 %s311, 1
    %p315 = scmp.eq.s32.totalorder %s25, 1
    %p316 = scmp.ne.s32.totalorder %s311, %s313
    %p317 = scmp.eq.s32.totalorder %s25, 0
    %p318 = por %p316, %p317
    %p319 = scmp.ne.s32.totalorder %s311, %s313
    %p320 = scmp.eq.s32.totalorder %s30, 1
    %p321 = por %p319, %p320
    %p322 = scmp.ne.s32.totalorder %s313, %s314
    %p323 = scmp.eq.s32.totalorder %s30, 0
    %p324 = por %p322, %p323
    %p325 = scmp.ne.s32.totalorder %s313, %s314
    %p326 = scmp.eq.s32.totalorder %s31, 1
    %p327 = por %p325, %p326
    %p329 = scmp.ne.s32.totalorder %s314, %s328
    %p330 = scmp.eq.s32.totalorder %s31, 0
    %p331 = por %p329, %p330
    %s333 = sadd.s32 %s332, 1
    %p336 = scmp.eq.s32.totalorder %s25, 1
    %p337 = scmp.ne.s32.totalorder %s332, %s334
    %p338 = scmp.eq.s32.totalorder %s25, 0
    %p339 = por %p337, %p338
    %p340 = scmp.ne.s32.totalorder %s332, %s334
    %p341 = scmp.eq.s32.totalorder %s30, 1
    %p342 = por %p340, %p341
    %p343 = scmp.ne.s32.totalorder %s334, %s335
    %p344 = scmp.eq.s32.totalorder %s30, 0
    %p345 = por %p343, %p344
    %p346 = scmp.ne.s32.totalorder %s334, %s335
    %p347 = scmp.eq.s32.totalorder %s31, 1
    %p348 = por %p346, %p347
    %p350 = scmp.ne.s32.totalorder %s335, %s349
    %p351 = scmp.eq.s32.totalorder %s31, 0
    %p352 = por %p350, %p351
    %s354 = sadd.s32 %s353, 1
    %p357 = scmp.eq.s32.totalorder %s25, 1
    %p358 = scmp.ne.s32.totalorder %s353, %s355
    %p359 = scmp.eq.s32.totalorder %s25, 0
    %p360 = por %p358, %p359
    %p361 = scmp.ne.s32.totalorder %s353, %s355
    %p362 = scmp.eq.s32.totalorder %s30, 1
    %p363 = por %p361, %p362
    %p364 = scmp.ne.s32.totalorder %s355, %s356
    %p365 = scmp.eq.s32.totalorder %s30, 0
    %p366 = por %p364, %p365
    %p367 = scmp.ne.s32.totalorder %s355, %s356
    %p368 = scmp.eq.s32.totalorder %s31, 1
    %p369 = por %p367, %p368
    %p371 = scmp.ne.s32.totalorder %s356, %s370
    %p372 = scmp.eq.s32.totalorder %s31, 0
    %p373 = por %p371, %p372
    %s375 = sadd.s32 %s374, 1
    %p378 = scmp.eq.s32.totalorder %s25, 1
    %p379 = scmp.ne.s32.totalorder %s374, %s376
    %p380 = scmp.eq.s32.totalorder %s25, 0
    %p381 = por %p379, %p380
    %p382 = scmp.ne.s32.totalorder %s374, %s376
    %p383 = scmp.eq.s32.totalorder %s30, 1
    %p384 = por %p382, %p383
    %p385 = scmp.ne.s32.totalorder %s376, %s377
    %p386 = scmp.eq.s32.totalorder %s30, 0
    %p387 = por %p385, %p386
    %p388 = scmp.ne.s32.totalorder %s376, %s377
    %p389 = scmp.eq.s32.totalorder %s31, 1
    %p390 = por %p388, %p389
    %p392 = scmp.ne.s32.totalorder %s377, %s391
    %p393 = scmp.eq.s32.totalorder %s31, 0
    %p394 = por %p392, %p393
    %s396 = sadd.s32 %s395, 1
    %p399 = scmp.eq.s32.totalorder %s25, 1
    %p400 = scmp.ne.s32.totalorder %s395, %s397
    %p401 = scmp.eq.s32.totalorder %s25, 0
    %p402 = por %p400, %p401
    %p403 = scmp.ne.s32.totalorder %s395, %s397
    %p404 = scmp.eq.s32.totalorder %s30, 1
    %p405 = por %p403, %p404
    %p406 = scmp.ne.s32.totalorder %s397, %s398
    %p407 = scmp.eq.s32.totalorder %s30, 0
    %p408 = por %p406, %p407
    %p409 = scmp.ne.s32.totalorder %s397, %s398
    %p410 = scmp.eq.s32.totalorder %s31, 1
    %p411 = por %p409, %p410
    %p413 = scmp.ne.s32.totalorder %s398, %s412
    %p414 = scmp.eq.s32.totalorder %s31, 0
    %p415 = por %p413, %p414
    %s417 = sadd.s32 %s416, 1
    %p420 = scmp.eq.s32.totalorder %s25, 1
    %p421 = scmp.ne.s32.totalorder %s416, %s418
    %p422 = scmp.eq.s32.totalorder %s25, 0
    %p423 = por %p421, %p422
    %p424 = scmp.ne.s32.totalorder %s416, %s418
    %p425 = scmp.eq.s32.totalorder %s30, 1
    %p426 = por %p424, %p425
    %p427 = scmp.ne.s32.totalorder %s418, %s419
    %p428 = scmp.eq.s32.totalorder %s30, 0
    %p429 = por %p427, %p428
    %p430 = scmp.ne.s32.totalorder %s418, %s419
    %p431 = scmp.eq.s32.totalorder %s31, 1
    %p432 = por %p430, %p431
    %p434 = scmp.ne.s32.totalorder %s419, %s433
    %p435 = scmp.eq.s32.totalorder %s31, 0
    %p436 = por %p434, %p435
    %s437 = ssub.s32 %s25, %s32
    %p438 = scmp.eq.s32.totalorder %s437, 0
    %s440 = sadd.s32 %s439, 1
    %s441 = scalar_select %p438, %s439, %s440
    %p444 = pneg %p438
    %p445 = scmp.eq.s32.totalorder %s25, 1
    %p446 = por %p444, %p445
    %p447 = scmp.ne.s32.totalorder %s439, %s442
    %p448 = scmp.eq.s32.totalorder %s25, 0
    %p449 = por %p447, %p448
    %p450 = scmp.ne.s32.totalorder %s439, %s442
    %p451 = scmp.eq.s32.totalorder %s30, 1
    %p452 = por %p450, %p451
    %p453 = scmp.ne.s32.totalorder %s442, %s443
    %p454 = scmp.eq.s32.totalorder %s30, 0
    %p455 = por %p453, %p454
    %p456 = scmp.ne.s32.totalorder %s442, %s443
    %p457 = scmp.eq.s32.totalorder %s31, 1
    %p458 = por %p456, %p457
    %p460 = scmp.ne.s32.totalorder %s443, %s459
    %p461 = scmp.eq.s32.totalorder %s31, 0
    %p462 = por %p460, %p461
    %p463 = scmp.le.s32.totalorder 1, %s25
    %p464 = scmp.lt.s32.totalorder %s25, 3
    %p465 = pnand %p463, %p464
    %p466 = pneg %p465
    // Predicated region
    $region9: #{vit_encoder_forward.1} parent=5 // pred_check
      _
    $region10: #{vit_encoder_forward.1} parent=5 // pred_check_branch
      %468 = sbr.rel (%p465) target = $region12
    $region11: #{vit_encoder_forward.1} parent=5 // pred_region
      %s469 = ssub.s32 %s25, 1
      // Predicated region
      $region13: #{vit_encoder_forward.1} parent=11 // pred_check
        %p470 = pneg %p72
      $region14: #{vit_encoder_forward.1} parent=11 // pred_check_branch
        %472 = sbr.rel (%p470) target = $region16
      $region15: #{vit_encoder_forward.1} parent=11 // pred_region
        _
      $region16: #{vit_encoder_forward.1} parent=11 // pred_fallthru
        _
      // Predicated region
      $region17: #{vit_encoder_forward.1} parent=11 // pred_check
        %p473 = pneg %p93
      $region18: #{vit_encoder_forward.1} parent=11 // pred_check_branch
        %475 = sbr.rel (%p473) target = $region20
      $region19: #{vit_encoder_forward.1} parent=11 // pred_region
        _
      $region20: #{vit_encoder_forward.1} parent=11 // pred_fallthru
        _
      // Predicated region
      $region21: #{vit_encoder_forward.1} parent=11 // pred_check
        %p476 = pneg %p114
      $region22: #{vit_encoder_forward.1} parent=11 // pred_check_branch
        %478 = sbr.rel (%p476) target = $region24
      $region23: #{vit_encoder_forward.1} parent=11 // pred_region
        _
      $region24: #{vit_encoder_forward.1} parent=11 // pred_fallthru
        _
      // Predicated region
      $region25: #{vit_encoder_forward.1} parent=11 // pred_check
        %p479 = pneg %p135
      $region26: #{vit_encoder_forward.1} parent=11 // pred_check_branch
        %481 = sbr.rel (%p479) target = $region28
      $region27: #{vit_encoder_forward.1} parent=11 // pred_region
        _
      $region28: #{vit_encoder_forward.1} parent=11 // pred_fallthru
        _
      // Predicated region
      $region29: #{vit_encoder_forward.1} parent=11 // pred_check
        %p482 = pneg %p156
      $region30: #{vit_encoder_forward.1} parent=11 // pred_check_branch
        %484 = sbr.rel (%p482) target = $region32
      $region31: #{vit_encoder_forward.1} parent=11 // pred_region
        _
      $region32: #{vit_encoder_forward.1} parent=11 // pred_fallthru
        _
      // Predicated region
      $region33: #{vit_encoder_forward.1} parent=11 // pred_check
        %p485 = pneg %p177
      $region34: #{vit_encoder_forward.1} parent=11 // pred_check_branch
        %487 = sbr.rel (%p485) target = $region36
      $region35: #{vit_encoder_forward.1} parent=11 // pred_region
        _
      $region36: #{vit_encoder_forward.1} parent=11 // pred_fallthru
        _
      // Predicated region
      $region37: #{vit_encoder_forward.1} parent=11 // pred_check
        %p488 = pneg %p198
      $region38: #{vit_encoder_forward.1} parent=11 // pred_check_branch
        %490 = sbr.rel (%p488) target = $region40
      $region39: #{vit_encoder_forward.1} parent=11 // pred_region
        _
      $region40: #{vit_encoder_forward.1} parent=11 // pred_fallthru
        _
      // Predicated region
      $region41: #{vit_encoder_forward.1} parent=11 // pred_check
        %p491 = pneg %p219
      $region42: #{vit_encoder_forward.1} parent=11 // pred_check_branch
        %493 = sbr.rel (%p491) target = $region44
      $region43: #{vit_encoder_forward.1} parent=11 // pred_region
        _
      $region44: #{vit_encoder_forward.1} parent=11 // pred_fallthru
        _
      // Predicated region
      $region45: #{vit_encoder_forward.1} parent=11 // pred_check
        %p494 = pneg %p240
      $region46: #{vit_encoder_forward.1} parent=11 // pred_check_branch
        %496 = sbr.rel (%p494) target = $region48
      $region47: #{vit_encoder_forward.1} parent=11 // pred_region
        _
      $region48: #{vit_encoder_forward.1} parent=11 // pred_fallthru
        _
      // Predicated region
      $region49: #{vit_encoder_forward.1} parent=11 // pred_check
        %p497 = pneg %p261
      $region50: #{vit_encoder_forward.1} parent=11 // pred_check_branch
        %499 = sbr.rel (%p497) target = $region52
      $region51: #{vit_encoder_forward.1} parent=11 // pred_region
        _
      $region52: #{vit_encoder_forward.1} parent=11 // pred_fallthru
        _
      // Predicated region
      $region53: #{vit_encoder_forward.1} parent=11 // pred_check
        %p500 = pneg %p282
      $region54: #{vit_encoder_forward.1} parent=11 // pred_check_branch
        %502 = sbr.rel (%p500) target = $region56
      $region55: #{vit_encoder_forward.1} parent=11 // pred_region
        _
      $region56: #{vit_encoder_forward.1} parent=11 // pred_fallthru
        _
      // Predicated region
      $region57: #{vit_encoder_forward.1} parent=11 // pred_check
        %p503 = pneg %p303
      $region58: #{vit_encoder_forward.1} parent=11 // pred_check_branch
        %505 = sbr.rel (%p503) target = $region60
      $region59: #{vit_encoder_forward.1} parent=11 // pred_region
        _
      $region60: #{vit_encoder_forward.1} parent=11 // pred_fallthru
        _
      // Predicated region
      $region61: #{vit_encoder_forward.1} parent=11 // pred_check
        %p506 = pneg %p324
      $region62: #{vit_encoder_forward.1} parent=11 // pred_check_branch
        %508 = sbr.rel (%p506) target = $region64
      $region63: #{vit_encoder_forward.1} parent=11 // pred_region
        _
      $region64: #{vit_encoder_forward.1} parent=11 // pred_fallthru
        _
      // Predicated region
      $region65: #{vit_encoder_forward.1} parent=11 // pred_check
        %p509 = pneg %p345
      $region66: #{vit_encoder_forward.1} parent=11 // pred_check_branch
        %511 = sbr.rel (%p509) target = $region68
      $region67: #{vit_encoder_forward.1} parent=11 // pred_region
        _
      $region68: #{vit_encoder_forward.1} parent=11 // pred_fallthru
        _
      // Predicated region
      $region69: #{vit_encoder_forward.1} parent=11 // pred_check
        %p512 = pneg %p366
      $region70: #{vit_encoder_forward.1} parent=11 // pred_check_branch
        %514 = sbr.rel (%p512) target = $region72
      $region71: #{vit_encoder_forward.1} parent=11 // pred_region
        _
      $region72: #{vit_encoder_forward.1} parent=11 // pred_fallthru
        _
      // Predicated region
      $region73: #{vit_encoder_forward.1} parent=11 // pred_check
        %p515 = pneg %p387
      $region74: #{vit_encoder_forward.1} parent=11 // pred_check_branch
        %517 = sbr.rel (%p515) target = $region76
      $region75: #{vit_encoder_forward.1} parent=11 // pred_region
        _
      $region76: #{vit_encoder_forward.1} parent=11 // pred_fallthru
        _
      // Predicated region
      $region77: #{vit_encoder_forward.1} parent=11 // pred_check
        %p518 = pneg %p408
      $region78: #{vit_encoder_forward.1} parent=11 // pred_check_branch
        %520 = sbr.rel (%p518) target = $region80
      $region79: #{vit_encoder_forward.1} parent=11 // pred_region
        _
      $region80: #{vit_encoder_forward.1} parent=11 // pred_fallthru
        _
      // Predicated region
      $region81: #{vit_encoder_forward.1} parent=11 // pred_check
        %p521 = pneg %p429
      $region82: #{vit_encoder_forward.1} parent=11 // pred_check_branch
        %523 = sbr.rel (%p521) target = $region84
      $region83: #{vit_encoder_forward.1} parent=11 // pred_region
        _
      $region84: #{vit_encoder_forward.1} parent=11 // pred_fallthru
        _
    $region12: #{vit_encoder_forward.1} parent=5 // pred_fallthru
      _
    %p524 = scmp.lt.s32.totalorder %s25, 2
    // Predicated region
    $region85: #{vit_encoder_forward.1} parent=5 // pred_check
      %p525 = pneg %p524
    $region86: #{vit_encoder_forward.1} parent=5 // pred_check_branch
      %527 = sbr.rel (%p525) target = $region88
    $region87: #{vit_encoder_forward.1} parent=5 // pred_region
      // Predicated region
      $region89: #{vit_encoder_forward.1} parent=87 // pred_check
        %p528 = pneg %p45
      $region90: #{vit_encoder_forward.1} parent=87 // pred_check_branch
        %530 = sbr.rel (%p528) target = $region92
      $region91: #{vit_encoder_forward.1} parent=87 // pred_region
        %p531 = scmp.lt.s32.totalorder %s25, 1
        %s532 = scalar_select %p531, %s25, 1
        %s533 = smul.addr %s532, 30
        %s534 = smul.addr %s533, 4
        %s535 = scalar_lea.vmem %s0, %s534
      $region92: #{vit_encoder_forward.1} parent=87 // pred_fallthru
        _
    $region88: #{vit_encoder_forward.1} parent=5 // pred_fallthru
      _
    %p536 = scmp.le.s32.totalorder 1, %s25
    %p537 = scmp.lt.s32.totalorder %s25, 3
    %p538 = pnand %p536, %p537
    %p539 = pneg %p538
    // Predicated region
    $region93: #{vit_encoder_forward.1} parent=5 // pred_check
      _
    $region94: #{vit_encoder_forward.1} parent=5 // pred_check_branch
      %541 = sbr.rel (%p538) target = $region96
    $region95: #{vit_encoder_forward.1} parent=5 // pred_region
      %s542 = ssub.s32 %s25, 1
      %p543 = scmp.lt.s32.totalorder %s30, 1
      %s544 = scalar_select %p543, %s30, 1
      %s545 = smul.addr %s544, 30
      %s546 = smul.addr %s545, 4
      %s547 = scalar_lea.vmem %s0, %s546
      %p548 = pneg %p51
      %p549 = pneg %p48
      %p550 = pneg %p72
      %p551 = pneg %p69
      %p552 = pneg %p93
      %p553 = pneg %p90
      %p554 = pneg %p114
      %p555 = pneg %p111
      %p556 = pneg %p135
      %p557 = pneg %p132
      %p558 = pneg %p156
      %p559 = pneg %p153
      %p560 = pneg %p177
      %p561 = pneg %p174
      %p562 = pneg %p198
      %p563 = pneg %p195
      %p564 = pneg %p219
      %p565 = pneg %p216
      %p566 = pneg %p240
      %p567 = pneg %p237
      %p568 = pneg %p261
      %p569 = pneg %p258
      %p570 = pneg %p282
      %p571 = pneg %p279
      %p572 = pneg %p303
      %p573 = pneg %p300
      %p574 = pneg %p324
      %p575 = pneg %p321
      %p576 = pneg %p345
      %p577 = pneg %p342
      %p578 = pneg %p366
      %p579 = pneg %p363
      %p580 = pneg %p387
      %p581 = pneg %p384
      %p582 = pneg %p408
      %p583 = pneg %p405
      %p584 = pneg %p429
      %p585 = pneg %p426
      %p586 = pneg %p455
      %p587 = pneg %p452
      %p588 = scmp.lt.s32.totalorder %s30, 1
      %s589 = scalar_select %p588, %s30, 1
      %s590 = smul.addr %s589, 10
      %s591 = smul.addr %s590, 8
      %s592 = scalar_lea.vmem %s19, %s591
      %p593 = scmp.lt.s32.totalorder %s30, 1
      %s594 = scalar_select %p593, %s30, 1
      %s595 = smul.addr %s594, 30
      %s596 = smul.addr %s595, 4
      %s597 = scalar_lea.vmem %s0, %s596
      %p598 = scmp.lt.s32.totalorder %s30, 1
      %s599 = scalar_select %p598, %s30, 1
      %s600 = smul.addr %s599, 10
      %s601 = smul.addr %s600, 8
      %s602 = scalar_lea.vmem %s19, %s601
      %v604 = vld [vmem:[%s597] sm:$0xff]
      %v605 = vld [vmem:[%s597 + $0x8] sm:$0xff]
      %v606 = vld [vmem:[%s597 + $0x10] sm:$0xff]
      %v607 = vld [vmem:[%s597 + $0x18] sm:$0xff]
      %v608 = vld [vmem:[%s597 + $0x20] sm:$0xff]
      %v609 = vld [vmem:[%s597 + $0x28] sm:$0xff]
      %v610 = vld [vmem:[%s597 + $0x30] sm:$0xff]
      %v611 = vld [vmem:[%s597 + $0x38] sm:$0xff]
      %v612 = vld [vmem:[%s597 + $0x40] sm:$0xff]
      %v613 = vld [vmem:[%s597 + $0x48] sm:$0xff]
      %v614 = vld [vmem:[%s597 + $0x50] sm:$0xff]
      %v615 = vld [vmem:[%s597 + $0x58] sm:$0xff]
      %v616 = vld [vmem:[%s597 + $0x60] sm:$0xff]
      %v617 = vld [vmem:[%s597 + $0x68] sm:$0xff]
      %v618 = vld [vmem:[%s597 + $0x70] sm:$0xff]
      %v619 = vld [vmem:[%s2] sm:$0xf]
      %v620 = vld [vmem:[%s2 + $0x4] sm:$0xf]
      %v621 = vld [vmem:[%s2 + $0x8] sm:$0xf]
      %v622 = vld [vmem:[%s2 + $0xc] sm:$0xf]
      %v623 = vld [vmem:[%s2 + $0x10] sm:$0xf]
      %v624 = vld [vmem:[%s2 + $0x14] sm:$0xf]
      %v625 = vld [vmem:[%s2 + $0x18] sm:$0xf]
      %v626 = vld [vmem:[%s2 + $0x1c] sm:$0xf]
      %v627 = vld [vmem:[%s2 + $0x20] sm:$0xf]
      %v628 = vld [vmem:[%s2 + $0x24] sm:$0xf]
      %v629 = vld [vmem:[%s2 + $0x28] sm:$0xf]
      %v630 = vld [vmem:[%s2 + $0x2c] sm:$0xf]
      %v631 = vld [vmem:[%s2 + $0x30] sm:$0xf]
      %v632 = vld [vmem:[%s2 + $0x34] sm:$0xf]
      %v633 = vld [vmem:[%s2 + $0x38] sm:$0xf]
      %v634 = vld [vmem:[%s2 + $0x3c] sm:$0xf]
      %v635 = vld [vmem:[%s2 + $0x40] sm:$0xf]
      %v636 = vld [vmem:[%s2 + $0x44] sm:$0xf]
      %v637 = vld [vmem:[%s2 + $0x48] sm:$0xf]
      %v638 = vld [vmem:[%s2 + $0x4c] sm:$0xf]
      %v639 = vld [vmem:[%s2 + $0x50] sm:$0xf]
      %v640 = vld [vmem:[%s2 + $0x54] sm:$0xf]
      %v641 = vld [vmem:[%s2 + $0x58] sm:$0xf]
      %v642 = vld [vmem:[%s2 + $0x5c] sm:$0xf]
      %v643 = vld [vmem:[%s2 + $0x60] sm:$0xf]
      %v644 = vld [vmem:[%s2 + $0x64] sm:$0xf]
      %v645 = vld [vmem:[%s2 + $0x68] sm:$0xf]
      %v646 = vld [vmem:[%s2 + $0x6c] sm:$0xf]
      %v647 = vld [vmem:[%s2 + $0x70] sm:$0xf]
      %v648 = vld [vmem:[%s2 + $0x74] sm:$0xf]
      %v649 = vld [vmem:[%s2 + $0x78] sm:$0xf]
      %v650 = vld [vmem:[%s2 + $0x7c] sm:$0xf]
      %v651 = vld [vmem:[%s2 + $0x80] sm:$0xf]
      %v652 = vld [vmem:[%s2 + $0x84] sm:$0xf]
      %v653 = vld [vmem:[%s2 + $0x88] sm:$0xf]
      %v654 = vld [vmem:[%s2 + $0x8c] sm:$0xf]
      %v655 = vld [vmem:[%s2 + $0x90] sm:$0xf]
      %v656 = vld [vmem:[%s2 + $0x94] sm:$0xf]
      %v657 = vld [vmem:[%s2 + $0x98] sm:$0xf]
      %v658 = vld [vmem:[%s2 + $0x9c] sm:$0xf]
      %v659 = vld [vmem:[%s2 + $0xa0] sm:$0xf]
      %v660 = vld [vmem:[%s2 + $0xa4] sm:$0xf]
      %v661 = vld [vmem:[%s2 + $0xa8] sm:$0xf]
      %v662 = vld [vmem:[%s2 + $0xac] sm:$0xf]
      %v663 = vld [vmem:[%s2 + $0xb0] sm:$0xf]
      %v664 = vld [vmem:[%s2 + $0xb4] sm:$0xf]
      %v665 = vld [vmem:[%s2 + $0xb8] sm:$0xf]
      %v666 = vld [vmem:[%s2 + $0xbc] sm:$0xf]
      %v667 = vld [vmem:[%s2 + $0xc0] sm:$0xf]
      %v668 = vld [vmem:[%s2 + $0xc4] sm:$0xf]
      %v669 = vld [vmem:[%s2 + $0xc8] sm:$0xf]
      %v670 = vld [vmem:[%s2 + $0xcc] sm:$0xf]
      %v671 = vld [vmem:[%s2 + $0xd0] sm:$0xf]
      %v672 = vld [vmem:[%s2 + $0xd4] sm:$0xf]
      %v673 = vld [vmem:[%s2 + $0xd8] sm:$0xf]
      %v674 = vld [vmem:[%s2 + $0xdc] sm:$0xf]
      %v675 = vld [vmem:[%s2 + $0xe0] sm:$0xf]
      %v676 = vld [vmem:[%s2 + $0xe4] sm:$0xf]
      %v677 = vld [vmem:[%s2 + $0xe8] sm:$0xf]
      %v678 = vld [vmem:[%s2 + $0xec] sm:$0xf]
      %v679 = vld [vmem:[%s2 + $0xf0] sm:$0xf]
      %v680 = vld [vmem:[%s2 + $0xf4] sm:$0xf]
      %v681 = vld [vmem:[%s2 + $0xf8] sm:$0xf]
      %v682 = vld [vmem:[%s2 + $0xfc] sm:$0xf]
      %v683 = vld [vmem:[%s2 + $0x100] sm:$0xf]
      %v684 = vld [vmem:[%s2 + $0x104] sm:$0xf]
      %v685 = vld [vmem:[%s2 + $0x108] sm:$0xf]
      %v686 = vld [vmem:[%s2 + $0x10c] sm:$0xf]
      %v687 = vld [vmem:[%s2 + $0x110] sm:$0xf]
      %v688 = vld [vmem:[%s2 + $0x114] sm:$0xf]
      %v689 = vld [vmem:[%s2 + $0x118] sm:$0xf]
      %v690 = vld [vmem:[%s2 + $0x11c] sm:$0xf]
      %v691 = vld [vmem:[%s2 + $0x120] sm:$0xf]
      %v692 = vld [vmem:[%s2 + $0x124] sm:$0xf]
      %v693 = vld [vmem:[%s2 + $0x128] sm:$0xf]
      %v694 = vld [vmem:[%s2 + $0x12c] sm:$0xf]
      %v695 = vld [vmem:[%s2 + $0x130] sm:$0xf]
      %v696 = vld [vmem:[%s2 + $0x134] sm:$0xf]
      %v697 = vld [vmem:[%s2 + $0x138] sm:$0xf]
      %v698 = vld [vmem:[%s2 + $0x13c] sm:$0xf]
      %v699 = vld [vmem:[%s2 + $0x140] sm:$0xf]
      %v700 = vld [vmem:[%s2 + $0x144] sm:$0xf]
      %v701 = vld [vmem:[%s2 + $0x148] sm:$0xf]
      %v702 = vld [vmem:[%s2 + $0x14c] sm:$0xf]
      %v703 = vld [vmem:[%s2 + $0x150] sm:$0xf]
      %v704 = vld [vmem:[%s2 + $0x154] sm:$0xf]
      %v705 = vld [vmem:[%s2 + $0x158] sm:$0xf]
      %v706 = vld [vmem:[%s2 + $0x15c] sm:$0xf]
      %v707 = vld [vmem:[%s2 + $0x160] sm:$0xf]
      %v708 = vld [vmem:[%s2 + $0x164] sm:$0xf]
      %v709 = vld [vmem:[%s2 + $0x168] sm:$0xf]
      %v710 = vld [vmem:[%s2 + $0x16c] sm:$0xf]
      %v711 = vld [vmem:[%s2 + $0x170] sm:$0xf]
      %v712 = vld [vmem:[%s2 + $0x174] sm:$0xf]
      %v713 = vld [vmem:[%s2 + $0x178] sm:$0xf]
      %v714 = vld [vmem:[%s2 + $0x17c] sm:$0xf]
      %v715 = vld [vmem:[%s1] sm:$0xff]
      %v716 = vld [vmem:[%s1 + $0x8] sm:$0xff]
      %v717 = vld [vmem:[%s1 + $0x10] sm:$0xff]
      %v718 = vld [vmem:[%s1 + $0x18] sm:$0xff]
      %v719 = vld [vmem:[%s1 + $0x20] sm:$0xff]
      %v735 = vunpack.c.l.b16 %v604
      %v736 = vunpack.c.h.b16 %v604
      %v737 = vunpack.c.l.b16 %v605
      %v738 = vunpack.c.h.b16 %v605
      %v739 = vunpack.c.l.b16 %v606
      %v740 = vunpack.c.h.b16 %v606
      %v741 = vunpack.c.l.b16 %v607
      %v742 = vunpack.c.h.b16 %v607
      %v743 = vunpack.c.l.b16 %v608
      %v744 = vunpack.c.h.b16 %v608
      %v745 = vunpack.c.l.b16 %v609
      %v746 = vunpack.c.h.b16 %v609
      %v747 = vunpack.c.l.b16 %v610
      %v748 = vunpack.c.h.b16 %v610
      %v749 = vunpack.c.l.b16 %v611
      %v750 = vunpack.c.h.b16 %v611
      %v751 = vunpack.c.l.b16 %v612
      %v752 = vunpack.c.h.b16 %v612
      %v753 = vunpack.c.l.b16 %v613
      %v754 = vunpack.c.h.b16 %v613
      %v755 = vunpack.c.l.b16 %v614
      %v756 = vunpack.c.h.b16 %v614
      %v757 = vunpack.c.l.b16 %v615
      %v758 = vunpack.c.h.b16 %v615
      %v759 = vunpack.c.l.b16 %v616
      %v760 = vunpack.c.h.b16 %v616
      %v761 = vunpack.c.l.b16 %v617
      %v762 = vunpack.c.h.b16 %v617
      %v763 = vunpack.c.l.b16 %v618
      %v764 = vunpack.c.h.b16 %v618
      %v765 = vpack.c.b16 %v741, %v735
      %v766 = vpack.c.b16 %v742, %v736
      %v767 = vpack.c.b16 %v743, %v737
      %v768 = vpack.c.b16 %v744, %v738
      %v769 = vpack.c.b16 %v745, %v739
      %v770 = vpack.c.b16 %v746, %v740
      %v771 = vpack.c.b16 %v753, %v747
      %v772 = vpack.c.b16 %v754, %v748
      %v773 = vpack.c.b16 %v755, %v749
      %v774 = vpack.c.b16 %v756, %v750
      %v775 = vpack.c.b16 %v757, %v751
      %v776 = vpack.c.b16 %v758, %v752
      %v777 = vpack.c.b16 %v759, %v759
      %v778 = vpack.c.b16 %v760, %v760
      %v779 = vpack.c.b16 %v761, %v761
      %v780 = vpack.c.b16 %v762, %v762
      %v781 = vpack.c.b16 %v763, %v763
      %v782 = vpack.c.b16 %v764, %v764
      %v897 = vunpack.c.l.b16 %v619
      %v898 = vunpack.c.l.b16 %v620
      %v899 = vunpack.c.l.b16 %v621
      %v900 = vunpack.c.l.b16 %v622
      %v901 = vunpack.c.l.b16 %v623
      %v902 = vunpack.c.l.b16 %v624
      %v903 = vunpack.c.l.b16 %v625
      %v904 = vunpack.c.l.b16 %v626
      %v905 = vunpack.c.l.b16 %v627
      %v906 = vunpack.c.l.b16 %v628
      %v907 = vunpack.c.l.b16 %v629
      %v908 = vunpack.c.l.b16 %v630
      %v909 = vunpack.c.l.b16 %v631
      %v910 = vunpack.c.l.b16 %v632
      %v911 = vunpack.c.l.b16 %v633
      %v912 = vunpack.c.l.b16 %v634
      %v913 = vunpack.c.l.b16 %v635
      %v914 = vunpack.c.l.b16 %v636
      %v915 = vunpack.c.l.b16 %v637
      %v916 = vunpack.c.l.b16 %v638
      %v917 = vunpack.c.l.b16 %v639
      %v918 = vunpack.c.l.b16 %v640
      %v919 = vunpack.c.l.b16 %v641
      %v920 = vunpack.c.l.b16 %v642
      %v921 = vunpack.c.l.b16 %v643
      %v922 = vunpack.c.l.b16 %v644
      %v923 = vunpack.c.l.b16 %v645
      %v924 = vunpack.c.l.b16 %v646
      %v925 = vunpack.c.l.b16 %v647
      %v926 = vunpack.c.l.b16 %v648
      %v927 = vunpack.c.l.b16 %v649
      %v928 = vunpack.c.l.b16 %v650
      %v929 = vunpack.c.l.b16 %v651
      %v930 = vunpack.c.l.b16 %v652
      %v931 = vunpack.c.l.b16 %v653
      %v932 = vunpack.c.l.b16 %v654
      %v933 = vunpack.c.l.b16 %v655
      %v934 = vunpack.c.l.b16 %v656
      %v935 = vunpack.c.l.b16 %v657
      %v936 = vunpack.c.l.b16 %v658
      %v937 = vunpack.c.l.b16 %v659
      %v938 = vunpack.c.l.b16 %v660
      %v939 = vunpack.c.l.b16 %v661
      %v940 = vunpack.c.l.b16 %v662
      %v941 = vunpack.c.l.b16 %v663
      %v942 = vunpack.c.l.b16 %v664
      %v943 = vunpack.c.l.b16 %v665
      %v944 = vunpack.c.l.b16 %v666
      %v945 = vunpack.c.l.b16 %v667
      %v946 = vunpack.c.l.b16 %v668
      %v947 = vunpack.c.l.b16 %v669
      %v948 = vunpack.c.l.b16 %v670
      %v949 = vunpack.c.l.b16 %v671
      %v950 = vunpack.c.l.b16 %v672
      %v951 = vunpack.c.l.b16 %v673
      %v952 = vunpack.c.l.b16 %v674
      %v953 = vunpack.c.l.b16 %v675
      %v954 = vunpack.c.l.b16 %v676
      %v955 = vunpack.c.l.b16 %v677
      %v956 = vunpack.c.l.b16 %v678
      %v957 = vunpack.c.l.b16 %v679
      %v958 = vunpack.c.l.b16 %v680
      %v959 = vunpack.c.l.b16 %v681
      %v960 = vunpack.c.l.b16 %v682
      %v961 = vunpack.c.l.b16 %v683
      %v962 = vunpack.c.l.b16 %v684
      %v963 = vunpack.c.l.b16 %v685
      %v964 = vunpack.c.l.b16 %v686
      %v965 = vunpack.c.l.b16 %v687
      %v966 = vunpack.c.l.b16 %v688
      %v967 = vunpack.c.l.b16 %v689
      %v968 = vunpack.c.l.b16 %v690
      %v969 = vunpack.c.l.b16 %v691
      %v970 = vunpack.c.l.b16 %v692
      %v971 = vunpack.c.l.b16 %v693
      %v972 = vunpack.c.l.b16 %v694
      %v973 = vunpack.c.l.b16 %v695
      %v974 = vunpack.c.l.b16 %v696
      %v975 = vunpack.c.l.b16 %v697
      %v976 = vunpack.c.l.b16 %v698
      %v977 = vunpack.c.l.b16 %v699
      %v978 = vunpack.c.l.b16 %v700
      %v979 = vunpack.c.l.b16 %v701
      %v980 = vunpack.c.l.b16 %v702
      %v981 = vunpack.c.l.b16 %v703
      %v982 = vunpack.c.l.b16 %v704
      %v983 = vunpack.c.l.b16 %v705
      %v984 = vunpack.c.l.b16 %v706
      %v985 = vunpack.c.l.b16 %v707
      %v986 = vunpack.c.l.b16 %v708
      %v987 = vunpack.c.l.b16 %v709
      %v988 = vunpack.c.l.b16 %v710
      %v989 = vunpack.c.l.b16 %v711
      %v990 = vunpack.c.l.b16 %v712
      %v991 = vunpack.c.l.b16 %v713
      %v992 = vunpack.c.l.b16 %v714
      %v993 = vpack.c.b16 %v898, %v897
      %v994 = vpack.c.b16 %v900, %v899
      %v995 = vpack.c.b16 %v902, %v901
      %v996 = vpack.c.b16 %v904, %v903
      %v997 = vpack.c.b16 %v906, %v905
      %v998 = vpack.c.b16 %v908, %v907
      %v999 = vpack.c.b16 %v910, %v909
      %v1000 = vpack.c.b16 %v912, %v911
      %v1001 = vpack.c.b16 %v914, %v913
      %v1002 = vpack.c.b16 %v916, %v915
      %v1003 = vpack.c.b16 %v918, %v917
      %v1004 = vpack.c.b16 %v920, %v919
      %v1005 = vpack.c.b16 %v922, %v921
      %v1006 = vpack.c.b16 %v924, %v923
      %v1007 = vpack.c.b16 %v926, %v925
      %v1008 = vpack.c.b16 %v928, %v927
      %v1009 = vpack.c.b16 %v930, %v929
      %v1010 = vpack.c.b16 %v932, %v931
      %v1011 = vpack.c.b16 %v934, %v933
      %v1012 = vpack.c.b16 %v936, %v935
      %v1013 = vpack.c.b16 %v938, %v937
      %v1014 = vpack.c.b16 %v940, %v939
      %v1015 = vpack.c.b16 %v942, %v941
      %v1016 = vpack.c.b16 %v944, %v943
      %v1017 = vpack.c.b16 %v946, %v945
      %v1018 = vpack.c.b16 %v948, %v947
      %v1019 = vpack.c.b16 %v950, %v949
      %v1020 = vpack.c.b16 %v952, %v951
      %v1021 = vpack.c.b16 %v954, %v953
      %v1022 = vpack.c.b16 %v956, %v955
      %v1023 = vpack.c.b16 %v958, %v957
      %v1024 = vpack.c.b16 %v960, %v959
      %v1025 = vpack.c.b16 %v962, %v961
      %v1026 = vpack.c.b16 %v964, %v963
      %v1027 = vpack.c.b16 %v966, %v965
      %v1028 = vpack.c.b16 %v968, %v967
      %v1029 = vpack.c.b16 %v970, %v969
      %v1030 = vpack.c.b16 %v972, %v971
      %v1031 = vpack.c.b16 %v974, %v973
      %v1032 = vpack.c.b16 %v976, %v975
      %v1033 = vpack.c.b16 %v978, %v977
      %v1034 = vpack.c.b16 %v980, %v979
      %v1035 = vpack.c.b16 %v982, %v981
      %v1036 = vpack.c.b16 %v984, %v983
      %v1037 = vpack.c.b16 %v986, %v985
      %v1038 = vpack.c.b16 %v988, %v987
      %v1039 = vpack.c.b16 %v990, %v989
      %v1040 = vpack.c.b16 %v992, %v991
      %1089 = vmatpush.bf16.msra.mxu0 %v1000
      %1090 = vmatpush.bf16.msra.mxu0 %v999
      %1091 = vmatpush.bf16.msra.mxu0 %v998
      %1092 = vmatpush.bf16.msra.mxu0 %v997
      %1093 = vmatpush.bf16.msra.mxu0 %v996
      %1094 = vmatpush.bf16.msra.mxu0 %v995
      %1095 = vmatpush.bf16.msra.mxu0 %v994
      %1096 = vmatpush.bf16.msra.mxu0 %v993
      %1097 = vmatmul.bf16.gmra.mxu0 %v765
      %v1098 = vpop.f32.mrf.mxu0
      %v1099 = vadd.f32 %v715, %v1098
      %v1100 = vpop.f32.mrf.mxu0
      %v1101 = vadd.f32 %v716, %v1100
      %1102 = vmatmul.bf16.gmra.mxu0 %v771
      %v1103 = vpop.f32.mrf.mxu0
      %v1104 = vadd.f32 %v717, %v1103
      %v1105 = vpop.f32.mrf.mxu0
      %v1106 = vadd.f32 %v718, %v1105
      %1107 = vmatmul.bf16.gmra.mxu0 %v777
      %v1108 = vpop.f32.mrf.mxu0
      %v1109 = vadd.f32 %v719, %v1108
      %v1110 = vpop.f32.mrf.mxu0
      %1111 = vdwg.mxu0
      %1112 = vmatpush.bf16.msra.mxu0 %v1008
      %1113 = vmatpush.bf16.msra.mxu0 %v1007
      %1114 = vmatpush.bf16.msra.mxu0 %v1006
      %1115 = vmatpush.bf16.msra.mxu0 %v1005
      %1116 = vmatpush.bf16.msra.mxu0 %v1004
      %1117 = vmatpush.bf16.msra.mxu0 %v1003
      %1118 = vmatpush.bf16.msra.mxu0 %v1002
      %1119 = vmatpush.bf16.msra.mxu0 %v1001
      %1120 = vmatmul.bf16.gmra.mxu0 %v766
      %v1121 = vpop.f32.mrf.mxu0
      %v1122 = vadd.f32 %v1099, %v1121
      %v1123 = vpop.f32.mrf.mxu0
      %v1124 = vadd.f32 %v1101, %v1123
      %1125 = vmatmul.bf16.gmra.mxu0 %v772
      %v1126 = vpop.f32.mrf.mxu0
      %v1127 = vadd.f32 %v1104, %v1126
      %v1128 = vpop.f32.mrf.mxu0
      %v1129 = vadd.f32 %v1106, %v1128
      %1130 = vmatmul.bf16.gmra.mxu0 %v778
      %v1131 = vpop.f32.mrf.mxu0
      %v1132 = vadd.f32 %v1109, %v1131
      %v1133 = vpop.f32.mrf.mxu0
      %1134 = vdwg.mxu0
      %1135 = vmatpush.bf16.msra.mxu0 %v1016
      %1136 = vmatpush.bf16.msra.mxu0 %v1015
      %1137 = vmatpush.bf16.msra.mxu0 %v1014
      %1138 = vmatpush.bf16.msra.mxu0 %v1013
      %1139 = vmatpush.bf16.msra.mxu0 %v1012
      %1140 = vmatpush.bf16.msra.mxu0 %v1011
      %1141 = vmatpush.bf16.msra.mxu0 %v1010
      %1142 = vmatpush.bf16.msra.mxu0 %v1009
      %1143 = vmatmul.bf16.gmra.mxu0 %v767
      %v1144 = vpop.f32.mrf.mxu0
      %v1145 = vadd.f32 %v1122, %v1144
      %v1146 = vpop.f32.mrf.mxu0
      %v1147 = vadd.f32 %v1124, %v1146
      %1148 = vmatmul.bf16.gmra.mxu0 %v773
      %v1149 = vpop.f32.mrf.mxu0
      %v1150 = vadd.f32 %v1127, %v1149
      %v1151 = vpop.f32.mrf.mxu0
      %v1152 = vadd.f32 %v1129, %v1151
      %1153 = vmatmul.bf16.gmra.mxu0 %v779
      %v1154 = vpop.f32.mrf.mxu0
      %v1155 = vadd.f32 %v1132, %v1154
      %v1156 = vpop.f32.mrf.mxu0
      %1157 = vdwg.mxu0
      %1158 = vmatpush.bf16.msra.mxu0 %v1024
      %1159 = vmatpush.bf16.msra.mxu0 %v1023
      %1160 = vmatpush.bf16.msra.mxu0 %v1022
      %1161 = vmatpush.bf16.msra.mxu0 %v1021
      %1162 = vmatpush.bf16.msra.mxu0 %v1020
      %1163 = vmatpush.bf16.msra.mxu0 %v1019
      %1164 = vmatpush.bf16.msra.mxu0 %v1018
      %1165 = vmatpush.bf16.msra.mxu0 %v1017
      %1166 = vmatmul.bf16.gmra.mxu0 %v768
      %v1167 = vpop.f32.mrf.mxu0
      %v1168 = vadd.f32 %v1145, %v1167
      %v1169 = vpop.f32.mrf.mxu0
      %v1170 = vadd.f32 %v1147, %v1169
      %1171 = vmatmul.bf16.gmra.mxu0 %v774
      %v1172 = vpop.f32.mrf.mxu0
      %v1173 = vadd.f32 %v1150, %v1172
      %v1174 = vpop.f32.mrf.mxu0
      %v1175 = vadd.f32 %v1152, %v1174
      %1176 = vmatmul.bf16.gmra.mxu0 %v780
      %v1177 = vpop.f32.mrf.mxu0
      %v1178 = vadd.f32 %v1155, %v1177
      %v1179 = vpop.f32.mrf.mxu0
      %1180 = vdwg.mxu0
      %1181 = vmatpush.bf16.msra.mxu0 %v1032
      %1182 = vmatpush.bf16.msra.mxu0 %v1031
      %1183 = vmatpush.bf16.msra.mxu0 %v1030
      %1184 = vmatpush.bf16.msra.mxu0 %v1029
      %1185 = vmatpush.bf16.msra.mxu0 %v1028
      %1186 = vmatpush.bf16.msra.mxu0 %v1027
      %1187 = vmatpush.bf16.msra.mxu0 %v1026
      %1188 = vmatpush.bf16.msra.mxu0 %v1025
      %1189 = vmatmul.bf16.gmra.mxu0 %v769
      %v1190 = vpop.f32.mrf.mxu0
      %v1191 = vadd.f32 %v1168, %v1190
      %v1192 = vpop.f32.mrf.mxu0
      %v1193 = vadd.f32 %v1170, %v1192
      %1194 = vmatmul.bf16.gmra.mxu0 %v775
      %v1195 = vpop.f32.mrf.mxu0
      %v1196 = vadd.f32 %v1173, %v1195
      %v1197 = vpop.f32.mrf.mxu0
      %v1198 = vadd.f32 %v1175, %v1197
      %1199 = vmatmul.bf16.gmra.mxu0 %v781
      %v1200 = vpop.f32.mrf.mxu0
      %v1201 = vadd.f32 %v1178, %v1200
      %v1202 = vpop.f32.mrf.mxu0
      %1203 = vdwg.mxu0
      %1204 = vmatpush.bf16.msra.mxu0 %v1040
      %1205 = vmatpush.bf16.msra.mxu0 %v1039
      %1206 = vmatpush.bf16.msra.mxu0 %v1038
      %1207 = vmatpush.bf16.msra.mxu0 %v1037
      %1208 = vmatpush.bf16.msra.mxu0 %v1036
      %1209 = vmatpush.bf16.msra.mxu0 %v1035
      %1210 = vmatpush.bf16.msra.mxu0 %v1034
      %1211 = vmatpush.bf16.msra.mxu0 %v1033
      %1212 = vmatmul.bf16.gmra.mxu0 %v770
      %v1213 = vpop.f32.mrf.mxu0
      %v1214 = vadd.f32 %v1191, %v1213
      %v1215 = vpop.f32.mrf.mxu0
      %v1216 = vadd.f32 %v1193, %v1215
      %1217 = vmatmul.bf16.gmra.mxu0 %v776
      %v1218 = vpop.f32.mrf.mxu0
      %v1219 = vadd.f32 %v1196, %v1218
      %v1220 = vpop.f32.mrf.mxu0
      %v1221 = vadd.f32 %v1198, %v1220
      %1222 = vmatmul.bf16.gmra.mxu0 %v782
      %v1223 = vpop.f32.mrf.mxu0
      %v1224 = vadd.f32 %v1201, %v1223
      %v1225 = vpop.f32.mrf.mxu0
      %1226 = vdwg.mxu0
      %v1227 = vld [vmem:[%s3] sm:$0x1]
      %v1228 = vld [vmem:[%s4] sm:$0x1]
      %1229 = vadd.xlane.f32.xlu0 %v1214
      %v1230 = vpop.xlane.xlu0 %1229
      %1231 = vadd.xlane.f32.xlu0 %v1216
      %v1232 = vpop.xlane.xlu0 %1231
      %1233 = vadd.xlane.f32.xlu0 %v1219
      %v1234 = vpop.xlane.xlu0 %1233
      %1235 = vadd.xlane.f32.xlu0 %v1221
      %v1236 = vpop.xlane.xlu0 %1235
      %1237 = vadd.xlane.f32.xlu0 %v1224
      %v1238 = vpop.xlane.xlu0 %1237
      %v1239 = vrcp.pop 128.0
      %v1240 = vmul.f32 128.0, %v1239
      %v1241 = vsub.f32 1.0, %v1240
      %v1242 = vmul.f32 %v1239, %v1241
      %v1243 = vadd.f32 %v1239, %v1242
      %vm1244 = vweird.f32 %v1239
      %v1245 = vsel %vm1244, %v1239, %v1243
      %v1246 = vmul.f32 %v1230, %v1245
      %v1247 = vmul.f32 %v1232, %v1245
      %v1248 = vmul.f32 %v1234, %v1245
      %v1249 = vmul.f32 %v1236, %v1245
      %v1250 = vmul.f32 %v1238, %v1245
      %v1251 = vsub.f32 %v1214, %v1246
      %v1252 = vsub.f32 %v1216, %v1247
      %v1253 = vsub.f32 %v1219, %v1248
      %v1254 = vsub.f32 %v1221, %v1249
      %v1255 = vsub.f32 %v1224, %v1250
      %v1256 = vmul.f32 %v1251, %v1251
      %v1257 = vmul.f32 %v1252, %v1252
      %v1258 = vmul.f32 %v1253, %v1253
      %v1259 = vmul.f32 %v1254, %v1254
      %v1260 = vmul.f32 %v1255, %v1255
      %1261 = vadd.xlane.f32.xlu0 %v1256
      %v1262 = vpop.xlane.xlu0 %1261
      %1263 = vadd.xlane.f32.xlu0 %v1257
      %v1264 = vpop.xlane.xlu0 %1263
      %1265 = vadd.xlane.f32.xlu0 %v1258
      %v1266 = vpop.xlane.xlu0 %1265
      %1267 = vadd.xlane.f32.xlu0 %v1259
      %v1268 = vpop.xlane.xlu0 %1267
      %1269 = vadd.xlane.f32.xlu0 %v1260
      %v1270 = vpop.xlane.xlu0 %1269
      %v1271 = vmul.f32 %v1262, %v1245
      %v1272 = vmul.f32 %v1264, %v1245
      %v1273 = vmul.f32 %v1266, %v1245
      %v1274 = vmul.f32 %v1268, %v1245
      %v1275 = vmul.f32 %v1270, %v1245
      %v1276 = vadd.f32 %v1271, 1e-06
      %v1277 = vadd.f32 %v1272, 1e-06
      %v1278 = vadd.f32 %v1273, 1e-06
      %v1279 = vadd.f32 %v1274, 1e-06
      %v1280 = vadd.f32 %v1275, 1e-06
      %v1281 = vrsqrt.pop %v1276
      %v1282 = vmul.f32 %v1281, %v1276
      %v1283 = vmul.f32 %v1282, %v1281
      %v1284 = vmul.f32 0.5, %v1283
      %v1285 = vsub.f32 1.5, %v1284
      %v1286 = vmul.f32 %v1281, %v1285
      %vm1287 = vweird.f32 %v1276
      %vm1288 = vweird.f32 %v1281
      %vm1289 = vmor %vm1287, %vm1288
      %v1290 = vsel %vm1289, %v1281, %v1286
      %v1291 = vrsqrt.pop %v1277
      %v1292 = vmul.f32 %v1291, %v1277
      %v1293 = vmul.f32 %v1292, %v1291
      %v1294 = vmul.f32 0.5, %v1293
      %v1295 = vsub.f32 1.5, %v1294
      %v1296 = vmul.f32 %v1291, %v1295
      %vm1297 = vweird.f32 %v1277
      %vm1298 = vweird.f32 %v1291
      %vm1299 = vmor %vm1297, %vm1298
      %v1300 = vsel %vm1299, %v1291, %v1296
      %v1301 = vrsqrt.pop %v1278
      %v1302 = vmul.f32 %v1301, %v1278
      %v1303 = vmul.f32 %v1302, %v1301
      %v1304 = vmul.f32 0.5, %v1303
      %v1305 = vsub.f32 1.5, %v1304
      %v1306 = vmul.f32 %v1301, %v1305
      %vm1307 = vweird.f32 %v1278
      %vm1308 = vweird.f32 %v1301
      %vm1309 = vmor %vm1307, %vm1308
      %v1310 = vsel %vm1309, %v1301, %v1306
      %v1311 = vrsqrt.pop %v1279
      %v1312 = vmul.f32 %v1311, %v1279
      %v1313 = vmul.f32 %v1312, %v1311
      %v1314 = vmul.f32 0.5, %v1313
      %v1315 = vsub.f32 1.5, %v1314
      %v1316 = vmul.f32 %v1311, %v1315
      %vm1317 = vweird.f32 %v1279
      %vm1318 = vweird.f32 %v1311
      %vm1319 = vmor %vm1317, %vm1318
      %v1320 = vsel %vm1319, %v1311, %v1316
      %v1321 = vrsqrt.pop %v1280
      %v1322 = vmul.f32 %v1321, %v1280
      %v1323 = vmul.f32 %v1322, %v1321
      %v1324 = vmul.f32 0.5, %v1323
      %v1325 = vsub.f32 1.5, %v1324
      %v1326 = vmul.f32 %v1321, %v1325
      %vm1327 = vweird.f32 %v1280
      %vm1328 = vweird.f32 %v1321
      %vm1329 = vmor %vm1327, %vm1328
      %v1330 = vsel %vm1329, %v1321, %v1326
      %v1331 = vmul.f32 %v1251, %v1290
      %v1332 = vmul.f32 %v1252, %v1300
      %v1333 = vmul.f32 %v1253, %v1310
      %v1334 = vmul.f32 %v1254, %v1320
      %v1335 = vmul.f32 %v1255, %v1330
      %v1337 = vperm.slane %v1227, 0
      %v1339 = vmul.f32 %v1331, %v1337
      %v1340 = vmul.f32 %v1332, %v1337
      %v1341 = vmul.f32 %v1333, %v1337
      %v1342 = vmul.f32 %v1334, %v1337
      %v1343 = vmul.f32 %v1335, %v1337
      %v1345 = vperm.slane %v1228, 0
      %v1347 = vadd.f32 %v1339, %v1345
      %v1348 = vadd.f32 %v1340, %v1345
      %v1349 = vadd.f32 %v1341, %v1345
      %v1350 = vadd.f32 %v1342, %v1345
      %v1351 = vadd.f32 %v1343, %v1345
      %v1352 = vpack.c.bf16 %v1348, %v1347
      %v1353 = vpack.c.bf16 %v1350, %v1349
      %v1354 = vpack.c.bf16 %v1351, %v1351
      %v1355 = vld [vmem:[%s5] sm:$0xff]
      %v1356 = vld [vmem:[%s5 + $0x8] sm:$0xf]
      %v1357 = vld [vmem:[%s5 + $0xc] sm:$0xff]
      %v1358 = vld [vmem:[%s5 + $0x14] sm:$0xf]
      %v1359 = vld [vmem:[%s5 + $0x18] sm:$0xff]
      %v1360 = vld [vmem:[%s5 + $0x20] sm:$0xf]
      %v1361 = vld [vmem:[%s5 + $0x24] sm:$0xff]
      %v1362 = vld [vmem:[%s5 + $0x2c] sm:$0xf]
      %v1363 = vld [vmem:[%s5 + $0x30] sm:$0xff]
      %v1364 = vld [vmem:[%s5 + $0x38] sm:$0xf]
      %v1365 = vld [vmem:[%s5 + $0x3c] sm:$0xff]
      %v1366 = vld [vmem:[%s5 + $0x44] sm:$0xf]
      %v1367 = vld [vmem:[%s5 + $0x48] sm:$0xff]
      %v1368 = vld [vmem:[%s5 + $0x50] sm:$0xf]
      %v1369 = vld [vmem:[%s5 + $0x54] sm:$0xff]
      %v1370 = vld [vmem:[%s5 + $0x5c] sm:$0xf]
      %v1371 = vld [vmem:[%s5 + $0x60] sm:$0xff]
      %v1372 = vld [vmem:[%s5 + $0x68] sm:$0xf]
      %v1373 = vld [vmem:[%s5 + $0x6c] sm:$0xff]
      %v1374 = vld [vmem:[%s5 + $0x74] sm:$0xf]
      %v1375 = vld [vmem:[%s5 + $0x78] sm:$0xff]
      %v1376 = vld [vmem:[%s5 + $0x80] sm:$0xf]
      %v1377 = vld [vmem:[%s5 + $0x84] sm:$0xff]
      %v1378 = vld [vmem:[%s5 + $0x8c] sm:$0xf]
      %v1379 = vld [vmem:[%s5 + $0x90] sm:$0xff]
      %v1380 = vld [vmem:[%s5 + $0x98] sm:$0xf]
      %v1381 = vld [vmem:[%s5 + $0x9c] sm:$0xff]
      %v1382 = vld [vmem:[%s5 + $0xa4] sm:$0xf]
      %v1383 = vld [vmem:[%s5 + $0xa8] sm:$0xff]
      %v1384 = vld [vmem:[%s5 + $0xb0] sm:$0xf]
      %v1385 = vld [vmem:[%s5 + $0xb4] sm:$0xff]
      %v1386 = vld [vmem:[%s5 + $0xbc] sm:$0xf]
      %v1387 = vld [vmem:[%s6] sm:$0x7]
      %v1389 = vperm.slane %v1387, 0
      %v1390 = vperm.slane %v1387, 1
      %v1391 = vperm.slane %v1387, 2
      %v1427 = vunpack.c.l.b16 %v1355
      %v1428 = vunpack.c.h.b16 %v1355
      %v1429 = vunpack.c.l.b16 %v1356
      %v1430 = vunpack.c.l.b16 %v1357
      %v1431 = vunpack.c.h.b16 %v1357
      %v1432 = vunpack.c.l.b16 %v1358
      %v1433 = vunpack.c.l.b16 %v1359
      %v1434 = vunpack.c.h.b16 %v1359
      %v1435 = vunpack.c.l.b16 %v1360
      %v1436 = vunpack.c.l.b16 %v1361
      %v1437 = vunpack.c.h.b16 %v1361
      %v1438 = vunpack.c.l.b16 %v1362
      %v1439 = vunpack.c.l.b16 %v1363
      %v1440 = vunpack.c.h.b16 %v1363
      %v1441 = vunpack.c.l.b16 %v1364
      %v1442 = vunpack.c.l.b16 %v1365
      %v1443 = vunpack.c.h.b16 %v1365
      %v1444 = vunpack.c.l.b16 %v1366
      %v1445 = vunpack.c.l.b16 %v1367
      %v1446 = vunpack.c.h.b16 %v1367
      %v1447 = vunpack.c.l.b16 %v1368
      %v1448 = vunpack.c.l.b16 %v1369
      %v1449 = vunpack.c.h.b16 %v1369
      %v1450 = vunpack.c.l.b16 %v1370
      %v1451 = vunpack.c.l.b16 %v1371
      %v1452 = vunpack.c.h.b16 %v1371
      %v1453 = vunpack.c.l.b16 %v1372
      %v1454 = vunpack.c.l.b16 %v1373
      %v1455 = vunpack.c.h.b16 %v1373
      %v1456 = vunpack.c.l.b16 %v1374
      %v1457 = vunpack.c.l.b16 %v1375
      %v1458 = vunpack.c.h.b16 %v1375
      %v1459 = vunpack.c.l.b16 %v1376
      %v1460 = vunpack.c.l.b16 %v1377
      %v1461 = vunpack.c.h.b16 %v1377
      %v1462 = vunpack.c.l.b16 %v1378
      %v1463 = vunpack.c.l.b16 %v1379
      %v1464 = vunpack.c.h.b16 %v1379
      %v1465 = vunpack.c.l.b16 %v1380
      %v1466 = vunpack.c.l.b16 %v1381
      %v1467 = vunpack.c.h.b16 %v1381
      %v1468 = vunpack.c.l.b16 %v1382
      %v1469 = vunpack.c.l.b16 %v1383
      %v1470 = vunpack.c.h.b16 %v1383
      %v1471 = vunpack.c.l.b16 %v1384
      %v1472 = vunpack.c.l.b16 %v1385
      %v1473 = vunpack.c.h.b16 %v1385
      %v1474 = vunpack.c.l.b16 %v1386
      %v1475 = vpack.c.b16 %v1430, %v1427
      %v1476 = vpack.c.b16 %v1431, %v1428
      %v1477 = vpack.c.b16 %v1432, %v1429
      %v1478 = vpack.c.b16 %v1436, %v1433
      %v1479 = vpack.c.b16 %v1437, %v1434
      %v1480 = vpack.c.b16 %v1438, %v1435
      %v1481 = vpack.c.b16 %v1442, %v1439
      %v1482 = vpack.c.b16 %v1443, %v1440
      %v1483 = vpack.c.b16 %v1444, %v1441
      %v1484 = vpack.c.b16 %v1448, %v1445
      %v1485 = vpack.c.b16 %v1449, %v1446
      %v1486 = vpack.c.b16 %v1450, %v1447
      %v1487 = vpack.c.b16 %v1454, %v1451
      %v1488 = vpack.c.b16 %v1455, %v1452
      %v1489 = vpack.c.b16 %v1456, %v1453
      %v1490 = vpack.c.b16 %v1460, %v1457
      %v1491 = vpack.c.b16 %v1461, %v1458
      %v1492 = vpack.c.b16 %v1462, %v1459
      %v1493 = vpack.c.b16 %v1466, %v1463
      %v1494 = vpack.c.b16 %v1467, %v1464
      %v1495 = vpack.c.b16 %v1468, %v1465
      %v1496 = vpack.c.b16 %v1472, %v1469
      %v1497 = vpack.c.b16 %v1473, %v1470
      %v1498 = vpack.c.b16 %v1474, %v1471
      %1523 = vmatpush.bf16.msra.mxu0 %v1496
      %1524 = vmatpush.bf16.msra.mxu0 %v1493
      %1525 = vmatpush.bf16.msra.mxu0 %v1490
      %1526 = vmatpush.bf16.msra.mxu0 %v1487
      %1527 = vmatpush.bf16.msra.mxu0 %v1484
      %1528 = vmatpush.bf16.msra.mxu0 %v1481
      %1529 = vmatpush.bf16.msra.mxu0 %v1478
      %1530 = vmatpush.bf16.msra.mxu0 %v1475
      %1531 = vmatmul.bf16.gmra.mxu0 %v1352
      %v1532 = vpop.f32.mrf.mxu0
      %v1533 = vadd.f32 %v1389, %v1532
      %v1534 = vpop.f32.mrf.mxu0
      %v1535 = vadd.f32 %v1389, %v1534
      %1536 = vmatmul.bf16.gmra.mxu0 %v1353
      %v1537 = vpop.f32.mrf.mxu0
      %v1538 = vadd.f32 %v1389, %v1537
      %v1539 = vpop.f32.mrf.mxu0
      %v1540 = vadd.f32 %v1389, %v1539
      %1541 = vmatmul.bf16.gmra.mxu0 %v1354
      %v1542 = vpop.f32.mrf.mxu0
      %v1543 = vadd.f32 %v1389, %v1542
      %v1544 = vpop.f32.mrf.mxu0
      %1545 = vdwg.mxu0
      %1546 = vmatpush.bf16.msra.mxu0 %v1497
      %1547 = vmatpush.bf16.msra.mxu0 %v1494
      %1548 = vmatpush.bf16.msra.mxu0 %v1491
      %1549 = vmatpush.bf16.msra.mxu0 %v1488
      %1550 = vmatpush.bf16.msra.mxu0 %v1485
      %1551 = vmatpush.bf16.msra.mxu0 %v1482
      %1552 = vmatpush.bf16.msra.mxu0 %v1479
      %1553 = vmatpush.bf16.msra.mxu0 %v1476
      %1554 = vmatmul.bf16.gmra.mxu0 %v1352
      %v1555 = vpop.f32.mrf.mxu0
      %v1556 = vadd.f32 %v1390, %v1555
      %v1557 = vpop.f32.mrf.mxu0
      %v1558 = vadd.f32 %v1390, %v1557
      %1559 = vmatmul.bf16.gmra.mxu0 %v1353
      %v1560 = vpop.f32.mrf.mxu0
      %v1561 = vadd.f32 %v1390, %v1560
      %v1562 = vpop.f32.mrf.mxu0
      %v1563 = vadd.f32 %v1390, %v1562
      %1564 = vmatmul.bf16.gmra.mxu0 %v1354
      %v1565 = vpop.f32.mrf.mxu0
      %v1566 = vadd.f32 %v1390, %v1565
      %v1567 = vpop.f32.mrf.mxu0
      %1568 = vdwg.mxu0
      %1569 = vmatpush.bf16.msra.mxu0 %v1498
      %1570 = vmatpush.bf16.msra.mxu0 %v1495
      %1571 = vmatpush.bf16.msra.mxu0 %v1492
      %1572 = vmatpush.bf16.msra.mxu0 %v1489
      %1573 = vmatpush.bf16.msra.mxu0 %v1486
      %1574 = vmatpush.bf16.msra.mxu0 %v1483
      %1575 = vmatpush.bf16.msra.mxu0 %v1480
      %1576 = vmatpush.bf16.msra.mxu0 %v1477
      %1577 = vmatmul.bf16.gmra.mxu0 %v1352
      %v1578 = vpop.f32.mrf.mxu0
      %v1579 = vadd.f32 %v1391, %v1578
      %v1580 = vpop.f32.mrf.mxu0
      %v1581 = vadd.f32 %v1391, %v1580
      %1582 = vmatmul.bf16.gmra.mxu0 %v1353
      %v1583 = vpop.f32.mrf.mxu0
      %v1584 = vadd.f32 %v1391, %v1583
      %v1585 = vpop.f32.mrf.mxu0
      %v1586 = vadd.f32 %v1391, %v1585
      %1587 = vmatmul.bf16.gmra.mxu0 %v1354
      %v1588 = vpop.f32.mrf.mxu0
      %v1589 = vadd.f32 %v1391, %v1588
      %v1590 = vpop.f32.mrf.mxu0
      %1591 = vdwg.mxu0
      %v1592 = vpack.c.bf16 %v1533, %v1533
      %v1593 = vpack.c.bf16 %v1556, %v1556
      %v1594 = vpack.c.bf16 %v1579, %v1579
      %vm1595 = vcmask 523264
      %v1597 = vsel %vm1595, %v1592, 0
      %v1600 = vsel %vm1595, %v1593, 0
      %1602 = vmatpush.bf16.xpose.msra.mxu0 0
      %1603 = vmatpush.bf16.xpose.msra.mxu0 0
      %1604 = vmatpush.bf16.xpose.msra.mxu0 0
      %1605 = vmatpush.bf16.xpose.msra.mxu0 0
      %1606 = vmatpush.bf16.xpose.msra.mxu0 0
      %1607 = vmatpush.bf16.xpose.msra.mxu0 0
      %1608 = vmatpush.bf16.xpose.msra.mxu0 0
      %1609 = vmatpush.bf16.xpose.msra.mxu0 %v1600
      %1610 = vmatmul.bf16.gmra.mxu0 %v1597
      %v1611 = vpop.f32.mrf.mxu0
      %v1612 = vadd.f32 0.0, %v1611
      %v1613 = vpop.f32.mrf.mxu0
      %1614 = vdwg.mxu0
      %vm1615 = vcmask 36864
      %v1616 = vsel %vm1615, %v1612, -inf
      %1617 = vmax.xlane.f32.xlu0 %v1616
      %v1618 = vpop.xlane.xlu0 %1617
      %v1619 = vsub.f32 %v1612, %v1618
      %v1620 = vmul.f32 %v1619, 1.442695
      %v1621 = vpow.pop %v1620
      %v1622 = vsel %vm1615, %v1621, 0.0
      %1623 = vadd.xlane.f32.xlu0 %v1622
      %v1624 = vpop.xlane.xlu0 %1623
      %v1625 = vrcp.pop %v1624
      %v1626 = vmul.f32 %v1621, %v1625
      %v1627 = vpack.c.bf16 %v1626, %v1626
      %vm1628 = vcmask 39936
      %v1630 = vsel %vm1628, %v1627, 0
      %vm1632 = vcmask 1041408
      %vm1633 = vcmask 1042432
      %v1634 = vsel %vm1632, 4294967295, 65535
      %v1635 = vsel %vm1633, %v1634, 0
      %v1637 = vand.u32 %v1594, %v1635
      %1639 = vmatpush.bf16.msra.mxu0 0
      %1640 = vmatpush.bf16.msra.mxu0 0
      %1641 = vmatpush.bf16.msra.mxu0 0
      %1642 = vmatpush.bf16.msra.mxu0 0
      %1643 = vmatpush.bf16.msra.mxu0 0
      %1644 = vmatpush.bf16.msra.mxu0 0
      %1645 = vmatpush.bf16.msra.mxu0 0
      %1646 = vmatpush.bf16.msra.mxu0 %v1637
      %1647 = vmatmul.bf16.gmra.mxu0 %v1630
      %v1648 = vpop.f32.mrf.mxu0
      %v1649 = vadd.f32 0.0, %v1648
      %v1650 = vpop.f32.mrf.mxu0
      %1651 = vdwg.mxu0
      %vm1652 = vcmask 520192
      %1653 = vst.msk [vmem:[#allocation2] sm:$0x1f] %vm1652, %v1649
      %1655 = vrot.lane.b32.xlu0 %v1592, 64
      %v1656 = vpop.permute.xlu0 %1655
      %1658 = vrot.lane.b32.xlu0 %v1593, 64
      %v1659 = vpop.permute.xlu0 %1658
      %v1661 = vsel %vm1595, %v1656, 0
      %v1664 = vsel %vm1595, %v1659, 0
      %1666 = vmatpush.bf16.xpose.msra.mxu0 0
      %1667 = vmatpush.bf16.xpose.msra.mxu0 0
      %1668 = vmatpush.bf16.xpose.msra.mxu0 0
      %1669 = vmatpush.bf16.xpose.msra.mxu0 0
      %1670 = vmatpush.bf16.xpose.msra.mxu0 0
      %1671 = vmatpush.bf16.xpose.msra.mxu0 0
      %1672 = vmatpush.bf16.xpose.msra.mxu0 0
      %1673 = vmatpush.bf16.xpose.msra.mxu0 %v1664
      %1674 = vmatmul.bf16.gmra.mxu0 %v1661
      %v1675 = vpop.f32.mrf.mxu0
      %v1676 = vadd.f32 0.0, %v1675
      %v1677 = vpop.f32.mrf.mxu0
      %1678 = vdwg.mxu0
      %v1679 = vsel %vm1615, %v1676, -inf
      %1680 = vmax.xlane.f32.xlu0 %v1679
      %v1681 = vpop.xlane.xlu0 %1680
      %v1682 = vsub.f32 %v1676, %v1681
      %v1683 = vmul.f32 %v1682, 1.442695
      %v1684 = vpow.pop %v1683
      %v1685 = vsel %vm1615, %v1684, 0.0
      %1686 = vadd.xlane.f32.xlu0 %v1685
      %v1687 = vpop.xlane.xlu0 %1686
      %v1688 = vrcp.pop %v1687
      %v1689 = vmul.f32 %v1684, %v1688
      %v1690 = vpack.c.bf16 %v1689, %v1689
      %1692 = vrot.lane.b32.xlu0 %v1594, 64
      %v1693 = vpop.permute.xlu0 %1692
      %v1695 = vsel %vm1628, %v1690, 0
      %v1698 = vand.u32 %v1693, %v1635
      %1700 = vmatpush.bf16.msra.mxu0 0
      %1701 = vmatpush.bf16.msra.mxu0 0
      %1702 = vmatpush.bf16.msra.mxu0 0
      %1703 = vmatpush.bf16.msra.mxu0 0
      %1704 = vmatpush.bf16.msra.mxu0 0
      %1705 = vmatpush.bf16.msra.mxu0 0
      %1706 = vmatpush.bf16.msra.mxu0 0
      %1707 = vmatpush.bf16.msra.mxu0 %v1698
      %1708 = vmatmul.bf16.gmra.mxu0 %v1695
      %v1709 = vpop.f32.mrf.mxu0
      %v1710 = vadd.f32 0.0, %v1709
      %v1711 = vpop.f32.mrf.mxu0
      %1712 = vdwg.mxu0
      %1714 = vrot.lane.b32.xlu0 %v1710, 64
      %v1715 = vpop.permute.xlu0 %1714
      %vm1717 = vcmask 1044992
      %1718 = vst.msk [vmem:[#allocation2] sm:$0x1f] %vm1717, %v1715
      %v1719 = vpack.c.bf16 %v1535, %v1533
      %v1720 = vpack.c.bf16 %v1558, %v1556
      %v1721 = vpack.c.bf16 %v1581, %v1579
      %v1723 = vshrl.u32 %v1719, 16
      %v1725 = vrot.slane %v1723, 2
      %v1726 = vshll.u32 %v1719, 16
      %v1728 = vrot.slane %v1726, 3
      %v1729 = vor.u32 %v1725, %v1728
      %v1731 = vshrl.u32 %v1720, 16
      %v1733 = vrot.slane %v1731, 2
      %v1734 = vshll.u32 %v1720, 16
      %v1736 = vrot.slane %v1734, 3
      %v1737 = vor.u32 %v1733, %v1736
      %v1739 = vsel %vm1595, %v1729, 0
      %v1742 = vsel %vm1595, %v1737, 0
      %1744 = vmatpush.bf16.xpose.msra.mxu0 0
      %1745 = vmatpush.bf16.xpose.msra.mxu0 0
      %1746 = vmatpush.bf16.xpose.msra.mxu0 0
      %1747 = vmatpush.bf16.xpose.msra.mxu0 0
      %1748 = vmatpush.bf16.xpose.msra.mxu0 0
      %1749 = vmatpush.bf16.xpose.msra.mxu0 0
      %1750 = vmatpush.bf16.xpose.msra.mxu0 0
      %1751 = vmatpush.bf16.xpose.msra.mxu0 %v1742
      %1752 = vmatmul.bf16.gmra.mxu0 %v1739
      %v1753 = vpop.f32.mrf.mxu0
      %v1754 = vadd.f32 0.0, %v1753
      %v1755 = vpop.f32.mrf.mxu0
      %1756 = vdwg.mxu0
      %v1757 = vsel %vm1615, %v1754, -inf
      %1758 = vmax.xlane.f32.xlu0 %v1757
      %v1759 = vpop.xlane.xlu0 %1758
      %v1760 = vsub.f32 %v1754, %v1759
      %v1761 = vmul.f32 %v1760, 1.442695
      %v1762 = vpow.pop %v1761
      %v1763 = vsel %vm1615, %v1762, 0.0
      %1764 = vadd.xlane.f32.xlu0 %v1763
      %v1765 = vpop.xlane.xlu0 %1764
      %v1766 = vrcp.pop %v1765
      %v1767 = vmul.f32 %v1762, %v1766
      %v1768 = vpack.c.bf16 %v1767, %v1767
      %v1770 = vshrl.u32 %v1721, 16
      %v1772 = vrot.slane %v1770, 2
      %v1773 = vshll.u32 %v1721, 16
      %v1775 = vrot.slane %v1773, 3
      %v1776 = vor.u32 %v1772, %v1775
      %v1778 = vsel %vm1628, %v1768, 0
      %v1781 = vand.u32 %v1776, %v1635
      %1783 = vmatpush.bf16.msra.mxu0 0
      %1784 = vmatpush.bf16.msra.mxu0 0
      %1785 = vmatpush.bf16.msra.mxu0 0
      %1786 = vmatpush.bf16.msra.mxu0 0
      %1787 = vmatpush.bf16.msra.mxu0 0
      %1788 = vmatpush.bf16.msra.mxu0 0
      %1789 = vmatpush.bf16.msra.mxu0 0
      %1790 = vmatpush.bf16.msra.mxu0 %v1781
      %1791 = vmatmul.bf16.gmra.mxu0 %v1778
      %v1792 = vpop.f32.mrf.mxu0
      %v1793 = vadd.f32 0.0, %v1792
      %v1794 = vpop.f32.mrf.mxu0
      %1795 = vdwg.mxu0
      %1796 = vst.msk [vmem:[#allocation2 + $0x5] sm:$0x1f] %vm1652, %v1793
      %1797 = vrot.lane.b32.xlu0 %v1729, 64
      %v1798 = vpop.permute.xlu0 %1797
      %1799 = vrot.lane.b32.xlu0 %v1737, 64
      %v1800 = vpop.permute.xlu0 %1799
      %v1802 = vsel %vm1595, %v1798, 0
      %v1805 = vsel %vm1595, %v1800, 0
      %1807 = vmatpush.bf16.xpose.msra.mxu0 0
      %1808 = vmatpush.bf16.xpose.msra.mxu0 0
      %1809 = vmatpush.bf16.xpose.msra.mxu0 0
      %1810 = vmatpush.bf16.xpose.msra.mxu0 0
      %1811 = vmatpush.bf16.xpose.msra.mxu0 0
      %1812 = vmatpush.bf16.xpose.msra.mxu0 0
      %1813 = vmatpush.bf16.xpose.msra.mxu0 0
      %1814 = vmatpush.bf16.xpose.msra.mxu0 %v1805
      %1815 = vmatmul.bf16.gmra.mxu0 %v1802
      %v1816 = vpop.f32.mrf.mxu0
      %v1817 = vadd.f32 0.0, %v1816
      %v1818 = vpop.f32.mrf.mxu0
      %1819 = vdwg.mxu0
      %v1820 = vsel %vm1615, %v1817, -inf
      %1821 = vmax.xlane.f32.xlu0 %v1820
      %v1822 = vpop.xlane.xlu0 %1821
      %v1823 = vsub.f32 %v1817, %v1822
      %v1824 = vmul.f32 %v1823, 1.442695
      %v1825 = vpow.pop %v1824
      %v1826 = vsel %vm1615, %v1825, 0.0
      %1827 = vadd.xlane.f32.xlu0 %v1826
      %v1828 = vpop.xlane.xlu0 %1827
      %v1829 = vrcp.pop %v1828
      %v1830 = vmul.f32 %v1825, %v1829
      %v1831 = vpack.c.bf16 %v1830, %v1830
      %1832 = vrot.lane.b32.xlu0 %v1776, 64
      %v1833 = vpop.permute.xlu0 %1832
      %v1835 = vsel %vm1628, %v1831, 0
      %v1838 = vand.u32 %v1833, %v1635
      %1840 = vmatpush.bf16.msra.mxu0 0
      %1841 = vmatpush.bf16.msra.mxu0 0
      %1842 = vmatpush.bf16.msra.mxu0 0
      %1843 = vmatpush.bf16.msra.mxu0 0
      %1844 = vmatpush.bf16.msra.mxu0 0
      %1845 = vmatpush.bf16.msra.mxu0 0
      %1846 = vmatpush.bf16.msra.mxu0 0
      %1847 = vmatpush.bf16.msra.mxu0 %v1838
      %1848 = vmatmul.bf16.gmra.mxu0 %v1835
      %v1849 = vpop.f32.mrf.mxu0
      %v1850 = vadd.f32 0.0, %v1849
      %v1851 = vpop.f32.mrf.mxu0
      %1852 = vdwg.mxu0
      %1854 = vrot.lane.b32.xlu0 %v1850, 64
      %v1855 = vpop.permute.xlu0 %1854
      %1857 = vst.msk [vmem:[#allocation2 + $0x5] sm:$0x1f] %vm1717, %v1855
      %v1858 = vpack.c.bf16 %v1535, %v1535
      %v1859 = vpack.c.bf16 %v1558, %v1558
      %v1860 = vpack.c.bf16 %v1581, %v1581
      %v1862 = vrot.slane %v1858, 1
      %v1864 = vrot.slane %v1859, 1
      %v1866 = vsel %vm1595, %v1862, 0
      %v1869 = vsel %vm1595, %v1864, 0
      %1871 = vmatpush.bf16.xpose.msra.mxu0 0
      %1872 = vmatpush.bf16.xpose.msra.mxu0 0
      %1873 = vmatpush.bf16.xpose.msra.mxu0 0
      %1874 = vmatpush.bf16.xpose.msra.mxu0 0
      %1875 = vmatpush.bf16.xpose.msra.mxu0 0
      %1876 = vmatpush.bf16.xpose.msra.mxu0 0
      %1877 = vmatpush.bf16.xpose.msra.mxu0 0
      %1878 = vmatpush.bf16.xpose.msra.mxu0 %v1869
      %1879 = vmatmul.bf16.gmra.mxu0 %v1866
      %v1880 = vpop.f32.mrf.mxu0
      %v1881 = vadd.f32 0.0, %v1880
      %v1882 = vpop.f32.mrf.mxu0
      %1883 = vdwg.mxu0
      %v1884 = vsel %vm1615, %v1881, -inf
      %1885 = vmax.xlane.f32.xlu0 %v1884
      %v1886 = vpop.xlane.xlu0 %1885
      %v1887 = vsub.f32 %v1881, %v1886
      %v1888 = vmul.f32 %v1887, 1.442695
      %v1889 = vpow.pop %v1888
      %v1890 = vsel %vm1615, %v1889, 0.0
      %1891 = vadd.xlane.f32.xlu0 %v1890
      %v1892 = vpop.xlane.xlu0 %1891
      %v1893 = vrcp.pop %v1892
      %v1894 = vmul.f32 %v1889, %v1893
      %v1895 = vpack.c.bf16 %v1894, %v1894
      %v1897 = vrot.slane %v1860, 1
      %v1899 = vsel %vm1628, %v1895, 0
      %v1902 = vand.u32 %v1897, %v1635
      %1904 = vmatpush.bf16.msra.mxu0 0
      %1905 = vmatpush.bf16.msra.mxu0 0
      %1906 = vmatpush.bf16.msra.mxu0 0
      %1907 = vmatpush.bf16.msra.mxu0 0
      %1908 = vmatpush.bf16.msra.mxu0 0
      %1909 = vmatpush.bf16.msra.mxu0 0
      %1910 = vmatpush.bf16.msra.mxu0 0
      %1911 = vmatpush.bf16.msra.mxu0 %v1902
      %1912 = vmatmul.bf16.gmra.mxu0 %v1899
      %v1913 = vpop.f32.mrf.mxu0
      %v1914 = vadd.f32 0.0, %v1913
      %v1915 = vpop.f32.mrf.mxu0
      %1916 = vdwg.mxu0
      %1917 = vst.msk [vmem:[#allocation2 + $0xa] sm:$0x1f] %vm1652, %v1914
      %1918 = vrot.lane.b32.xlu0 %v1862, 64
      %v1919 = vpop.permute.xlu0 %1918
      %1920 = vrot.lane.b32.xlu0 %v1864, 64
      %v1921 = vpop.permute.xlu0 %1920
      %v1923 = vsel %vm1595, %v1919, 0
      %v1926 = vsel %vm1595, %v1921, 0
      %1928 = vmatpush.bf16.xpose.msra.mxu0 0
      %1929 = vmatpush.bf16.xpose.msra.mxu0 0
      %1930 = vmatpush.bf16.xpose.msra.mxu0 0
      %1931 = vmatpush.bf16.xpose.msra.mxu0 0
      %1932 = vmatpush.bf16.xpose.msra.mxu0 0
      %1933 = vmatpush.bf16.xpose.msra.mxu0 0
      %1934 = vmatpush.bf16.xpose.msra.mxu0 0
      %1935 = vmatpush.bf16.xpose.msra.mxu0 %v1926
      %1936 = vmatmul.bf16.gmra.mxu0 %v1923
      %v1937 = vpop.f32.mrf.mxu0
      %v1938 = vadd.f32 0.0, %v1937
      %v1939 = vpop.f32.mrf.mxu0
      %1940 = vdwg.mxu0
      %v1941 = vsel %vm1615, %v1938, -inf
      %1942 = vmax.xlane.f32.xlu0 %v1941
      %v1943 = vpop.xlane.xlu0 %1942
      %v1944 = vsub.f32 %v1938, %v1943
      %v1945 = vmul.f32 %v1944, 1.442695
      %v1946 = vpow.pop %v1945
      %v1947 = vsel %vm1615, %v1946, 0.0
      %1948 = vadd.xlane.f32.xlu0 %v1947
      %v1949 = vpop.xlane.xlu0 %1948
      %v1950 = vrcp.pop %v1949
      %v1951 = vmul.f32 %v1946, %v1950
      %v1952 = vpack.c.bf16 %v1951, %v1951
      %1953 = vrot.lane.b32.xlu0 %v1897, 64
      %v1954 = vpop.permute.xlu0 %1953
      %v1956 = vsel %vm1628, %v1952, 0
      %v1959 = vand.u32 %v1954, %v1635
      %1961 = vmatpush.bf16.msra.mxu0 0
      %1962 = vmatpush.bf16.msra.mxu0 0
      %1963 = vmatpush.bf16.msra.mxu0 0
      %1964 = vmatpush.bf16.msra.mxu0 0
      %1965 = vmatpush.bf16.msra.mxu0 0
      %1966 = vmatpush.bf16.msra.mxu0 0
      %1967 = vmatpush.bf16.msra.mxu0 0
      %1968 = vmatpush.bf16.msra.mxu0 %v1959
      %1969 = vmatmul.bf16.gmra.mxu0 %v1956
      %v1970 = vpop.f32.mrf.mxu0
      %v1971 = vadd.f32 0.0, %v1970
      %v1972 = vpop.f32.mrf.mxu0
      %1973 = vdwg.mxu0
      %1975 = vrot.lane.b32.xlu0 %v1971, 64
      %v1976 = vpop.permute.xlu0 %1975
      %1978 = vst.msk [vmem:[#allocation2 + $0xa] sm:$0x1f] %vm1717, %v1976
      %v1979 = vpack.c.bf16 %v1538, %v1535
      %v1980 = vpack.c.bf16 %v1561, %v1558
      %v1981 = vpack.c.bf16 %v1584, %v1581
      %v1983 = vshrl.u32 %v1979, 16
      %v1985 = vrot.slane %v1983, 3
      %v1986 = vshll.u32 %v1979, 16
      %v1988 = vrot.slane %v1986, 4
      %v1989 = vor.u32 %v1985, %v1988
      %v1991 = vshrl.u32 %v1980, 16
      %v1993 = vrot.slane %v1991, 3
      %v1994 = vshll.u32 %v1980, 16
      %v1996 = vrot.slane %v1994, 4
      %v1997 = vor.u32 %v1993, %v1996
      %v1999 = vsel %vm1595, %v1989, 0
      %v2002 = vsel %vm1595, %v1997, 0
      %2004 = vmatpush.bf16.xpose.msra.mxu0 0
      %2005 = vmatpush.bf16.xpose.msra.mxu0 0
      %2006 = vmatpush.bf16.xpose.msra.mxu0 0
      %2007 = vmatpush.bf16.xpose.msra.mxu0 0
      %2008 = vmatpush.bf16.xpose.msra.mxu0 0
      %2009 = vmatpush.bf16.xpose.msra.mxu0 0
      %2010 = vmatpush.bf16.xpose.msra.mxu0 0
      %2011 = vmatpush.bf16.xpose.msra.mxu0 %v2002
      %2012 = vmatmul.bf16.gmra.mxu0 %v1999
      %v2013 = vpop.f32.mrf.mxu0
      %v2014 = vadd.f32 0.0, %v2013
      %v2015 = vpop.f32.mrf.mxu0
      %2016 = vdwg.mxu0
      %v2017 = vsel %vm1615, %v2014, -inf
      %2018 = vmax.xlane.f32.xlu0 %v2017
      %v2019 = vpop.xlane.xlu0 %2018
      %v2020 = vsub.f32 %v2014, %v2019
      %v2021 = vmul.f32 %v2020, 1.442695
      %v2022 = vpow.pop %v2021
      %v2023 = vsel %vm1615, %v2022, 0.0
      %2024 = vadd.xlane.f32.xlu0 %v2023
      %v2025 = vpop.xlane.xlu0 %2024
      %v2026 = vrcp.pop %v2025
      %v2027 = vmul.f32 %v2022, %v2026
      %v2028 = vpack.c.bf16 %v2027, %v2027
      %v2030 = vshrl.u32 %v1981, 16
      %v2032 = vrot.slane %v2030, 3
      %v2033 = vshll.u32 %v1981, 16
      %v2035 = vrot.slane %v2033, 4
      %v2036 = vor.u32 %v2032, %v2035
      %v2038 = vsel %vm1628, %v2028, 0
      %v2041 = vand.u32 %v2036, %v1635
      %2043 = vmatpush.bf16.msra.mxu0 0
      %2044 = vmatpush.bf16.msra.mxu0 0
      %2045 = vmatpush.bf16.msra.mxu0 0
      %2046 = vmatpush.bf16.msra.mxu0 0
      %2047 = vmatpush.bf16.msra.mxu0 0
      %2048 = vmatpush.bf16.msra.mxu0 0
      %2049 = vmatpush.bf16.msra.mxu0 0
      %2050 = vmatpush.bf16.msra.mxu0 %v2041
      %2051 = vmatmul.bf16.gmra.mxu0 %v2038
      %v2052 = vpop.f32.mrf.mxu0
      %v2053 = vadd.f32 0.0, %v2052
      %v2054 = vpop.f32.mrf.mxu0
      %2055 = vdwg.mxu0
      %2056 = vst.msk [vmem:[#allocation2 + $0xf] sm:$0x1f] %vm1652, %v2053
      %2057 = vrot.lane.b32.xlu0 %v1989, 64
      %v2058 = vpop.permute.xlu0 %2057
      %2059 = vrot.lane.b32.xlu0 %v1997, 64
      %v2060 = vpop.permute.xlu0 %2059
      %v2062 = vsel %vm1595, %v2058, 0
      %v2065 = vsel %vm1595, %v2060, 0
      %2067 = vmatpush.bf16.xpose.msra.mxu0 0
      %2068 = vmatpush.bf16.xpose.msra.mxu0 0
      %2069 = vmatpush.bf16.xpose.msra.mxu0 0
      %2070 = vmatpush.bf16.xpose.msra.mxu0 0
      %2071 = vmatpush.bf16.xpose.msra.mxu0 0
      %2072 = vmatpush.bf16.xpose.msra.mxu0 0
      %2073 = vmatpush.bf16.xpose.msra.mxu0 0
      %2074 = vmatpush.bf16.xpose.msra.mxu0 %v2065
      %2075 = vmatmul.bf16.gmra.mxu0 %v2062
      %v2076 = vpop.f32.mrf.mxu0
      %v2077 = vadd.f32 0.0, %v2076
      %v2078 = vpop.f32.mrf.mxu0
      %2079 = vdwg.mxu0
      %v2080 = vsel %vm1615, %v2077, -inf
      %2081 = vmax.xlane.f32.xlu0 %v2080
      %v2082 = vpop.xlane.xlu0 %2081
      %v2083 = vsub.f32 %v2077, %v2082
      %v2084 = vmul.f32 %v2083, 1.442695
      %v2085 = vpow.pop %v2084
      %v2086 = vsel %vm1615, %v2085, 0.0
      %2087 = vadd.xlane.f32.xlu0 %v2086
      %v2088 = vpop.xlane.xlu0 %2087
      %v2089 = vrcp.pop %v2088
      %v2090 = vmul.f32 %v2085, %v2089
      %v2091 = vpack.c.bf16 %v2090, %v2090
      %2092 = vrot.lane.b32.xlu0 %v2036, 64
      %v2093 = vpop.permute.xlu0 %2092
      %v2095 = vsel %vm1628, %v2091, 0
      %v2098 = vand.u32 %v2093, %v1635
      %2100 = vmatpush.bf16.msra.mxu0 0
      %2101 = vmatpush.bf16.msra.mxu0 0
      %2102 = vmatpush.bf16.msra.mxu0 0
      %2103 = vmatpush.bf16.msra.mxu0 0
      %2104 = vmatpush.bf16.msra.mxu0 0
      %2105 = vmatpush.bf16.msra.mxu0 0
      %2106 = vmatpush.bf16.msra.mxu0 0
      %2107 = vmatpush.bf16.msra.mxu0 %v2098
      %2108 = vmatmul.bf16.gmra.mxu0 %v2095
      %v2109 = vpop.f32.mrf.mxu0
      %v2110 = vadd.f32 0.0, %v2109
      %v2111 = vpop.f32.mrf.mxu0
      %2112 = vdwg.mxu0
      %2114 = vrot.lane.b32.xlu0 %v2110, 64
      %v2115 = vpop.permute.xlu0 %2114
      %2117 = vst.msk [vmem:[#allocation2 + $0xf] sm:$0x1f] %vm1717, %v2115
      %v2118 = vpack.c.bf16 %v1540, %v1538
      %v2119 = vpack.c.bf16 %v1563, %v1561
      %v2120 = vpack.c.bf16 %v1586, %v1584
      %v2122 = vrot.slane %v2118, 2
      %v2124 = vrot.slane %v2119, 2
      %v2126 = vsel %vm1595, %v2122, 0
      %v2129 = vsel %vm1595, %v2124, 0
      %2131 = vmatpush.bf16.xpose.msra.mxu0 0
      %2132 = vmatpush.bf16.xpose.msra.mxu0 0
      %2133 = vmatpush.bf16.xpose.msra.mxu0 0
      %2134 = vmatpush.bf16.xpose.msra.mxu0 0
      %2135 = vmatpush.bf16.xpose.msra.mxu0 0
      %2136 = vmatpush.bf16.xpose.msra.mxu0 0
      %2137 = vmatpush.bf16.xpose.msra.mxu0 0
      %2138 = vmatpush.bf16.xpose.msra.mxu0 %v2129
      %2139 = vmatmul.bf16.gmra.mxu0 %v2126
      %v2140 = vpop.f32.mrf.mxu0
      %v2141 = vadd.f32 0.0, %v2140
      %v2142 = vpop.f32.mrf.mxu0
      %2143 = vdwg.mxu0
      %v2144 = vsel %vm1615, %v2141, -inf
      %2145 = vmax.xlane.f32.xlu0 %v2144
      %v2146 = vpop.xlane.xlu0 %2145
      %v2147 = vsub.f32 %v2141, %v2146
      %v2148 = vmul.f32 %v2147, 1.442695
      %v2149 = vpow.pop %v2148
      %v2150 = vsel %vm1615, %v2149, 0.0
      %2151 = vadd.xlane.f32.xlu0 %v2150
      %v2152 = vpop.xlane.xlu0 %2151
      %v2153 = vrcp.pop %v2152
      %v2154 = vmul.f32 %v2149, %v2153
      %v2155 = vpack.c.bf16 %v2154, %v2154
      %v2157 = vrot.slane %v2120, 2
      %v2159 = vsel %vm1628, %v2155, 0
      %v2162 = vand.u32 %v2157, %v1635
      %2164 = vmatpush.bf16.msra.mxu0 0
      %2165 = vmatpush.bf16.msra.mxu0 0
      %2166 = vmatpush.bf16.msra.mxu0 0
      %2167 = vmatpush.bf16.msra.mxu0 0
      %2168 = vmatpush.bf16.msra.mxu0 0
      %2169 = vmatpush.bf16.msra.mxu0 0
      %2170 = vmatpush.bf16.msra.mxu0 0
      %2171 = vmatpush.bf16.msra.mxu0 %v2162
      %2172 = vmatmul.bf16.gmra.mxu0 %v2159
      %v2173 = vpop.f32.mrf.mxu0
      %v2174 = vadd.f32 0.0, %v2173
      %v2175 = vpop.f32.mrf.mxu0
      %2176 = vdwg.mxu0
      %2177 = vst.msk [vmem:[#allocation2 + $0x14] sm:$0x1f] %vm1652, %v2174
      %2178 = vrot.lane.b32.xlu0 %v2122, 64
      %v2179 = vpop.permute.xlu0 %2178
      %2180 = vrot.lane.b32.xlu0 %v2124, 64
      %v2181 = vpop.permute.xlu0 %2180
      %v2183 = vsel %vm1595, %v2179, 0
      %v2186 = vsel %vm1595, %v2181, 0
      %2188 = vmatpush.bf16.xpose.msra.mxu0 0
      %2189 = vmatpush.bf16.xpose.msra.mxu0 0
      %2190 = vmatpush.bf16.xpose.msra.mxu0 0
      %2191 = vmatpush.bf16.xpose.msra.mxu0 0
      %2192 = vmatpush.bf16.xpose.msra.mxu0 0
      %2193 = vmatpush.bf16.xpose.msra.mxu0 0
      %2194 = vmatpush.bf16.xpose.msra.mxu0 0
      %2195 = vmatpush.bf16.xpose.msra.mxu0 %v2186
      %2196 = vmatmul.bf16.gmra.mxu0 %v2183
      %v2197 = vpop.f32.mrf.mxu0
      %v2198 = vadd.f32 0.0, %v2197
      %v2199 = vpop.f32.mrf.mxu0
      %2200 = vdwg.mxu0
      %v2201 = vsel %vm1615, %v2198, -inf
      %2202 = vmax.xlane.f32.xlu0 %v2201
      %v2203 = vpop.xlane.xlu0 %2202
      %v2204 = vsub.f32 %v2198, %v2203
      %v2205 = vmul.f32 %v2204, 1.442695
      %v2206 = vpow.pop %v2205
      %v2207 = vsel %vm1615, %v2206, 0.0
      %2208 = vadd.xlane.f32.xlu0 %v2207
      %v2209 = vpop.xlane.xlu0 %2208
      %v2210 = vrcp.pop %v2209
      %v2211 = vmul.f32 %v2206, %v2210
      %v2212 = vpack.c.bf16 %v2211, %v2211
      %2213 = vrot.lane.b32.xlu0 %v2157, 64
      %v2214 = vpop.permute.xlu0 %2213
      %v2216 = vsel %vm1628, %v2212, 0
      %v2219 = vand.u32 %v2214, %v1635
      %2221 = vmatpush.bf16.msra.mxu0 0
      %2222 = vmatpush.bf16.msra.mxu0 0
      %2223 = vmatpush.bf16.msra.mxu0 0
      %2224 = vmatpush.bf16.msra.mxu0 0
      %2225 = vmatpush.bf16.msra.mxu0 0
      %2226 = vmatpush.bf16.msra.mxu0 0
      %2227 = vmatpush.bf16.msra.mxu0 0
      %2228 = vmatpush.bf16.msra.mxu0 %v2219
      %2229 = vmatmul.bf16.gmra.mxu0 %v2216
      %v2230 = vpop.f32.mrf.mxu0
      %v2231 = vadd.f32 0.0, %v2230
      %v2232 = vpop.f32.mrf.mxu0
      %2233 = vdwg.mxu0
      %2235 = vrot.lane.b32.xlu0 %v2231, 64
      %v2236 = vpop.permute.xlu0 %2235
      %2238 = vst.msk [vmem:[#allocation2 + $0x14] sm:$0x1f] %vm1717, %v2236
      %v2239 = vpack.c.bf16 %v1540, %v1540
      %v2240 = vpack.c.bf16 %v1563, %v1563
      %v2241 = vpack.c.bf16 %v1586, %v1586
      %v2243 = vshrl.u32 %v2239, 16
      %v2245 = vshll.u32 %v2239, 16
      %v2247 = vrot.slane %v2245, 1
      %v2248 = vor.u32 %v2243, %v2247
      %v2250 = vshrl.u32 %v2240, 16
      %v2252 = vshll.u32 %v2240, 16
      %v2254 = vrot.slane %v2252, 1
      %v2255 = vor.u32 %v2250, %v2254
      %v2257 = vsel %vm1595, %v2248, 0
      %v2260 = vsel %vm1595, %v2255, 0
      %2262 = vmatpush.bf16.xpose.msra.mxu0 0
      %2263 = vmatpush.bf16.xpose.msra.mxu0 0
      %2264 = vmatpush.bf16.xpose.msra.mxu0 0
      %2265 = vmatpush.bf16.xpose.msra.mxu0 0
      %2266 = vmatpush.bf16.xpose.msra.mxu0 0
      %2267 = vmatpush.bf16.xpose.msra.mxu0 0
      %2268 = vmatpush.bf16.xpose.msra.mxu0 0
      %2269 = vmatpush.bf16.xpose.msra.mxu0 %v2260
      %2270 = vmatmul.bf16.gmra.mxu0 %v2257
      %v2271 = vpop.f32.mrf.mxu0
      %v2272 = vadd.f32 0.0, %v2271
      %v2273 = vpop.f32.mrf.mxu0
      %2274 = vdwg.mxu0
      %v2275 = vsel %vm1615, %v2272, -inf
      %2276 = vmax.xlane.f32.xlu0 %v2275
      %v2277 = vpop.xlane.xlu0 %2276
      %v2278 = vsub.f32 %v2272, %v2277
      %v2279 = vmul.f32 %v2278, 1.442695
      %v2280 = vpow.pop %v2279
      %v2281 = vsel %vm1615, %v2280, 0.0
      %2282 = vadd.xlane.f32.xlu0 %v2281
      %v2283 = vpop.xlane.xlu0 %2282
      %v2284 = vrcp.pop %v2283
      %v2285 = vmul.f32 %v2280, %v2284
      %v2286 = vpack.c.bf16 %v2285, %v2285
      %v2288 = vshrl.u32 %v2241, 16
      %v2290 = vshll.u32 %v2241, 16
      %v2292 = vrot.slane %v2290, 1
      %v2293 = vor.u32 %v2288, %v2292
      %v2295 = vsel %vm1628, %v2286, 0
      %v2298 = vand.u32 %v2293, %v1635
      %2300 = vmatpush.bf16.msra.mxu0 0
      %2301 = vmatpush.bf16.msra.mxu0 0
      %2302 = vmatpush.bf16.msra.mxu0 0
      %2303 = vmatpush.bf16.msra.mxu0 0
      %2304 = vmatpush.bf16.msra.mxu0 0
      %2305 = vmatpush.bf16.msra.mxu0 0
      %2306 = vmatpush.bf16.msra.mxu0 0
      %2307 = vmatpush.bf16.msra.mxu0 %v2298
      %2308 = vmatmul.bf16.gmra.mxu0 %v2295
      %v2309 = vpop.f32.mrf.mxu0
      %v2310 = vadd.f32 0.0, %v2309
      %v2311 = vpop.f32.mrf.mxu0
      %2312 = vdwg.mxu0
      %2313 = vst.msk [vmem:[#allocation2 + $0x19] sm:$0x1f] %vm1652, %v2310
      %2314 = vrot.lane.b32.xlu0 %v2248, 64
      %v2315 = vpop.permute.xlu0 %2314
      %2316 = vrot.lane.b32.xlu0 %v2255, 64
      %v2317 = vpop.permute.xlu0 %2316
      %v2319 = vsel %vm1595, %v2315, 0
      %v2322 = vsel %vm1595, %v2317, 0
      %2324 = vmatpush.bf16.xpose.msra.mxu0 0
      %2325 = vmatpush.bf16.xpose.msra.mxu0 0
      %2326 = vmatpush.bf16.xpose.msra.mxu0 0
      %2327 = vmatpush.bf16.xpose.msra.mxu0 0
      %2328 = vmatpush.bf16.xpose.msra.mxu0 0
      %2329 = vmatpush.bf16.xpose.msra.mxu0 0
      %2330 = vmatpush.bf16.xpose.msra.mxu0 0
      %2331 = vmatpush.bf16.xpose.msra.mxu0 %v2322
      %2332 = vmatmul.bf16.gmra.mxu0 %v2319
      %v2333 = vpop.f32.mrf.mxu0
      %v2334 = vadd.f32 0.0, %v2333
      %v2335 = vpop.f32.mrf.mxu0
      %2336 = vdwg.mxu0
      %v2337 = vsel %vm1615, %v2334, -inf
      %2338 = vmax.xlane.f32.xlu0 %v2337
      %v2339 = vpop.xlane.xlu0 %2338
      %v2340 = vsub.f32 %v2334, %v2339
      %v2341 = vmul.f32 %v2340, 1.442695
      %v2342 = vpow.pop %v2341
      %v2343 = vsel %vm1615, %v2342, 0.0
      %2344 = vadd.xlane.f32.xlu0 %v2343
      %v2345 = vpop.xlane.xlu0 %2344
      %v2346 = vrcp.pop %v2345
      %v2347 = vmul.f32 %v2342, %v2346
      %v2348 = vpack.c.bf16 %v2347, %v2347
      %2349 = vrot.lane.b32.xlu0 %v2293, 64
      %v2350 = vpop.permute.xlu0 %2349
      %v2352 = vsel %vm1628, %v2348, 0
      %v2355 = vand.u32 %v2350, %v1635
      %2357 = vmatpush.bf16.msra.mxu0 0
      %2358 = vmatpush.bf16.msra.mxu0 0
      %2359 = vmatpush.bf16.msra.mxu0 0
      %2360 = vmatpush.bf16.msra.mxu0 0
      %2361 = vmatpush.bf16.msra.mxu0 0
      %2362 = vmatpush.bf16.msra.mxu0 0
      %2363 = vmatpush.bf16.msra.mxu0 0
      %2364 = vmatpush.bf16.msra.mxu0 %v2355
      %2365 = vmatmul.bf16.gmra.mxu0 %v2352
      %v2366 = vpop.f32.mrf.mxu0
      %v2367 = vadd.f32 0.0, %v2366
      %v2368 = vpop.f32.mrf.mxu0
      %2369 = vdwg.mxu0
      %2371 = vrot.lane.b32.xlu0 %v2367, 64
      %v2372 = vpop.permute.xlu0 %2371
      %2374 = vst.msk [vmem:[#allocation2 + $0x19] sm:$0x1f] %vm1717, %v2372
      %v2375 = vpack.c.bf16 %v1543, %v1540
      %v2376 = vpack.c.bf16 %v1566, %v1563
      %v2377 = vpack.c.bf16 %v1589, %v1586
      %v2379 = vrot.slane %v2375, 3
      %v2381 = vrot.slane %v2376, 3
      %v2383 = vsel %vm1595, %v2379, 0
      %v2386 = vsel %vm1595, %v2381, 0
      %2388 = vmatpush.bf16.xpose.msra.mxu0 0
      %2389 = vmatpush.bf16.xpose.msra.mxu0 0
      %2390 = vmatpush.bf16.xpose.msra.mxu0 0
      %2391 = vmatpush.bf16.xpose.msra.mxu0 0
      %2392 = vmatpush.bf16.xpose.msra.mxu0 0
      %2393 = vmatpush.bf16.xpose.msra.mxu0 0
      %2394 = vmatpush.bf16.xpose.msra.mxu0 0
      %2395 = vmatpush.bf16.xpose.msra.mxu0 %v2386
      %2396 = vmatmul.bf16.gmra.mxu0 %v2383
      %v2397 = vpop.f32.mrf.mxu0
      %v2398 = vadd.f32 0.0, %v2397
      %v2399 = vpop.f32.mrf.mxu0
      %2400 = vdwg.mxu0
      %v2401 = vsel %vm1615, %v2398, -inf
      %2402 = vmax.xlane.f32.xlu0 %v2401
      %v2403 = vpop.xlane.xlu0 %2402
      %v2404 = vsub.f32 %v2398, %v2403
      %v2405 = vmul.f32 %v2404, 1.442695
      %v2406 = vpow.pop %v2405
      %v2407 = vsel %vm1615, %v2406, 0.0
      %2408 = vadd.xlane.f32.xlu0 %v2407
      %v2409 = vpop.xlane.xlu0 %2408
      %v2410 = vrcp.pop %v2409
      %v2411 = vmul.f32 %v2406, %v2410
      %v2412 = vpack.c.bf16 %v2411, %v2411
      %v2414 = vrot.slane %v2377, 3
      %v2416 = vsel %vm1628, %v2412, 0
      %v2419 = vand.u32 %v2414, %v1635
      %2421 = vmatpush.bf16.msra.mxu0 0
      %2422 = vmatpush.bf16.msra.mxu0 0
      %2423 = vmatpush.bf16.msra.mxu0 0
      %2424 = vmatpush.bf16.msra.mxu0 0
      %2425 = vmatpush.bf16.msra.mxu0 0
      %2426 = vmatpush.bf16.msra.mxu0 0
      %2427 = vmatpush.bf16.msra.mxu0 0
      %2428 = vmatpush.bf16.msra.mxu0 %v2419
      %2429 = vmatmul.bf16.gmra.mxu0 %v2416
      %v2430 = vpop.f32.mrf.mxu0
      %v2431 = vadd.f32 0.0, %v2430
      %v2432 = vpop.f32.mrf.mxu0
      %2433 = vdwg.mxu0
      %2434 = vst.msk [vmem:[#allocation2 + $0x1e] sm:$0x1f] %vm1652, %v2431
      %2435 = vrot.lane.b32.xlu0 %v2379, 64
      %v2436 = vpop.permute.xlu0 %2435
      %2437 = vrot.lane.b32.xlu0 %v2381, 64
      %v2438 = vpop.permute.xlu0 %2437
      %v2440 = vsel %vm1595, %v2436, 0
      %v2443 = vsel %vm1595, %v2438, 0
      %2445 = vmatpush.bf16.xpose.msra.mxu0 0
      %2446 = vmatpush.bf16.xpose.msra.mxu0 0
      %2447 = vmatpush.bf16.xpose.msra.mxu0 0
      %2448 = vmatpush.bf16.xpose.msra.mxu0 0
      %2449 = vmatpush.bf16.xpose.msra.mxu0 0
      %2450 = vmatpush.bf16.xpose.msra.mxu0 0
      %2451 = vmatpush.bf16.xpose.msra.mxu0 0
      %2452 = vmatpush.bf16.xpose.msra.mxu0 %v2443
      %2453 = vmatmul.bf16.gmra.mxu0 %v2440
      %v2454 = vpop.f32.mrf.mxu0
      %v2455 = vadd.f32 0.0, %v2454
      %v2456 = vpop.f32.mrf.mxu0
      %2457 = vdwg.mxu0
      %v2458 = vsel %vm1615, %v2455, -inf
      %2459 = vmax.xlane.f32.xlu0 %v2458
      %v2460 = vpop.xlane.xlu0 %2459
      %v2461 = vsub.f32 %v2455, %v2460
      %v2462 = vmul.f32 %v2461, 1.442695
      %v2463 = vpow.pop %v2462
      %v2464 = vsel %vm1615, %v2463, 0.0
      %2465 = vadd.xlane.f32.xlu0 %v2464
      %v2466 = vpop.xlane.xlu0 %2465
      %v2467 = vrcp.pop %v2466
      %v2468 = vmul.f32 %v2463, %v2467
      %v2469 = vpack.c.bf16 %v2468, %v2468
      %2470 = vrot.lane.b32.xlu0 %v2414, 64
      %v2471 = vpop.permute.xlu0 %2470
      %v2473 = vsel %vm1628, %v2469, 0
      %v2476 = vand.u32 %v2471, %v1635
      %2478 = vmatpush.bf16.msra.mxu0 0
      %2479 = vmatpush.bf16.msra.mxu0 0
      %2480 = vmatpush.bf16.msra.mxu0 0
      %2481 = vmatpush.bf16.msra.mxu0 0
      %2482 = vmatpush.bf16.msra.mxu0 0
      %2483 = vmatpush.bf16.msra.mxu0 0
      %2484 = vmatpush.bf16.msra.mxu0 0
      %2485 = vmatpush.bf16.msra.mxu0 %v2476
      %2486 = vmatmul.bf16.gmra.mxu0 %v2473
      %v2487 = vpop.f32.mrf.mxu0
      %v2488 = vadd.f32 0.0, %v2487
      %v2489 = vpop.f32.mrf.mxu0
      %2490 = vdwg.mxu0
      %2492 = vrot.lane.b32.xlu0 %v2488, 64
      %v2493 = vpop.permute.xlu0 %2492
      %2495 = vst.msk [vmem:[#allocation2 + $0x1e] sm:$0x1f] %vm1717, %v2493
      %v2496 = vpack.c.bf16 %v1543, %v1543
      %v2497 = vpack.c.bf16 %v1566, %v1566
      %v2498 = vpack.c.bf16 %v1589, %v1589
      %v2500 = vshrl.u32 %v2496, 16
      %v2502 = vrot.slane %v2500, 1
      %v2503 = vshll.u32 %v2496, 16
      %v2505 = vrot.slane %v2503, 2
      %v2506 = vor.u32 %v2502, %v2505
      %v2508 = vshrl.u32 %v2497, 16
      %v2510 = vrot.slane %v2508, 1
      %v2511 = vshll.u32 %v2497, 16
      %v2513 = vrot.slane %v2511, 2
      %v2514 = vor.u32 %v2510, %v2513
      %v2516 = vsel %vm1595, %v2506, 0
      %v2519 = vsel %vm1595, %v2514, 0
      %2521 = vmatpush.bf16.xpose.msra.mxu0 0
      %2522 = vmatpush.bf16.xpose.msra.mxu0 0
      %2523 = vmatpush.bf16.xpose.msra.mxu0 0
      %2524 = vmatpush.bf16.xpose.msra.mxu0 0
      %2525 = vmatpush.bf16.xpose.msra.mxu0 0
      %2526 = vmatpush.bf16.xpose.msra.mxu0 0
      %2527 = vmatpush.bf16.xpose.msra.mxu0 0
      %2528 = vmatpush.bf16.xpose.msra.mxu0 %v2519
      %2529 = vmatmul.bf16.gmra.mxu0 %v2516
      %v2530 = vpop.f32.mrf.mxu0
      %v2531 = vadd.f32 0.0, %v2530
      %v2532 = vpop.f32.mrf.mxu0
      %2533 = vdwg.mxu0
      %v2534 = vsel %vm1615, %v2531, -inf
      %2535 = vmax.xlane.f32.xlu0 %v2534
      %v2536 = vpop.xlane.xlu0 %2535
      %v2537 = vsub.f32 %v2531, %v2536
      %v2538 = vmul.f32 %v2537, 1.442695
      %v2539 = vpow.pop %v2538
      %v2540 = vsel %vm1615, %v2539, 0.0
      %2541 = vadd.xlane.f32.xlu0 %v2540
      %v2542 = vpop.xlane.xlu0 %2541
      %v2543 = vrcp.pop %v2542
      %v2544 = vmul.f32 %v2539, %v2543
      %v2545 = vpack.c.bf16 %v2544, %v2544
      %v2547 = vshrl.u32 %v2498, 16
      %v2549 = vrot.slane %v2547, 1
      %v2550 = vshll.u32 %v2498, 16
      %v2552 = vrot.slane %v2550, 2
      %v2553 = vor.u32 %v2549, %v2552
      %v2555 = vsel %vm1628, %v2545, 0
      %v2558 = vand.u32 %v2553, %v1635
      %2560 = vmatpush.bf16.msra.mxu0 0
      %2561 = vmatpush.bf16.msra.mxu0 0
      %2562 = vmatpush.bf16.msra.mxu0 0
      %2563 = vmatpush.bf16.msra.mxu0 0
      %2564 = vmatpush.bf16.msra.mxu0 0
      %2565 = vmatpush.bf16.msra.mxu0 0
      %2566 = vmatpush.bf16.msra.mxu0 0
      %2567 = vmatpush.bf16.msra.mxu0 %v2558
      %2568 = vmatmul.bf16.gmra.mxu0 %v2555
      %v2569 = vpop.f32.mrf.mxu0
      %v2570 = vadd.f32 0.0, %v2569
      %v2571 = vpop.f32.mrf.mxu0
      %2572 = vdwg.mxu0
      %2573 = vst.msk [vmem:[#allocation2 + $0x23] sm:$0x1f] %vm1652, %v2570
      %2574 = vrot.lane.b32.xlu0 %v2506, 64
      %v2575 = vpop.permute.xlu0 %2574
      %2576 = vrot.lane.b32.xlu0 %v2514, 64
      %v2577 = vpop.permute.xlu0 %2576
      %v2579 = vsel %vm1595, %v2575, 0
      %v2582 = vsel %vm1595, %v2577, 0
      %2584 = vmatpush.bf16.xpose.msra.mxu0 0
      %2585 = vmatpush.bf16.xpose.msra.mxu0 0
      %2586 = vmatpush.bf16.xpose.msra.mxu0 0
      %2587 = vmatpush.bf16.xpose.msra.mxu0 0
      %2588 = vmatpush.bf16.xpose.msra.mxu0 0
      %2589 = vmatpush.bf16.xpose.msra.mxu0 0
      %2590 = vmatpush.bf16.xpose.msra.mxu0 0
      %2591 = vmatpush.bf16.xpose.msra.mxu0 %v2582
      %2592 = vmatmul.bf16.gmra.mxu0 %v2579
      %v2593 = vpop.f32.mrf.mxu0
      %v2594 = vadd.f32 0.0, %v2593
      %v2595 = vpop.f32.mrf.mxu0
      %2596 = vdwg.mxu0
      %v2597 = vsel %vm1615, %v2594, -inf
      %2598 = vmax.xlane.f32.xlu0 %v2597
      %v2599 = vpop.xlane.xlu0 %2598
      %v2600 = vsub.f32 %v2594, %v2599
      %v2601 = vmul.f32 %v2600, 1.442695
      %v2602 = vpow.pop %v2601
      %v2603 = vsel %vm1615, %v2602, 0.0
      %2604 = vadd.xlane.f32.xlu0 %v2603
      %v2605 = vpop.xlane.xlu0 %2604
      %v2606 = vrcp.pop %v2605
      %v2607 = vmul.f32 %v2602, %v2606
      %v2608 = vpack.c.bf16 %v2607, %v2607
      %2609 = vrot.lane.b32.xlu0 %v2553, 64
      %v2610 = vpop.permute.xlu0 %2609
      %v2612 = vsel %vm1628, %v2608, 0
      %v2615 = vand.u32 %v2610, %v1635
      %2617 = vmatpush.bf16.msra.mxu0 0
      %2618 = vmatpush.bf16.msra.mxu0 0
      %2619 = vmatpush.bf16.msra.mxu0 0
      %2620 = vmatpush.bf16.msra.mxu0 0
      %2621 = vmatpush.bf16.msra.mxu0 0
      %2622 = vmatpush.bf16.msra.mxu0 0
      %2623 = vmatpush.bf16.msra.mxu0 0
      %2624 = vmatpush.bf16.msra.mxu0 %v2615
      %2625 = vmatmul.bf16.gmra.mxu0 %v2612
      %v2626 = vpop.f32.mrf.mxu0
      %v2627 = vadd.f32 0.0, %v2626
      %v2628 = vpop.f32.mrf.mxu0
      %2629 = vdwg.mxu0
      %2631 = vrot.lane.b32.xlu0 %v2627, 64
      %v2632 = vpop.permute.xlu0 %2631
      %2634 = vst.msk [vmem:[#allocation2 + $0x23] sm:$0x1f] %vm1717, %v2632
      %v2635 = vld [vmem:[#allocation2] sm:$0xff]
      %v2636 = vld [vmem:[#allocation2 + $0x8] sm:$0xff]
      %v2637 = vld [vmem:[#allocation2 + $0x10] sm:$0xff]
      %v2638 = vld [vmem:[#allocation2 + $0x18] sm:$0xff]
      %v2639 = vld [vmem:[#allocation2 + $0x20] sm:$0xff]
      %v2640 = vpack.c.bf16 %v2636, %v2635
      %v2641 = vpack.c.bf16 %v2638, %v2637
      %v2642 = vpack.c.bf16 %v2639, %v2639
      %v2643 = vld [vmem:[%s7] sm:$0xf]
      %v2644 = vld [vmem:[%s7 + $0x4] sm:$0xf]
      %v2645 = vld [vmem:[%s7 + $0x8] sm:$0xf]
      %v2646 = vld [vmem:[%s7 + $0xc] sm:$0xf]
      %v2647 = vld [vmem:[%s7 + $0x10] sm:$0xf]
      %v2648 = vld [vmem:[%s7 + $0x14] sm:$0xf]
      %v2649 = vld [vmem:[%s7 + $0x18] sm:$0xf]
      %v2650 = vld [vmem:[%s7 + $0x1c] sm:$0xf]
      %v2651 = vld [vmem:[%s7 + $0x20] sm:$0xf]
      %v2652 = vld [vmem:[%s7 + $0x24] sm:$0xf]
      %v2653 = vld [vmem:[%s7 + $0x28] sm:$0xf]
      %v2654 = vld [vmem:[%s7 + $0x2c] sm:$0xf]
      %v2655 = vld [vmem:[%s7 + $0x30] sm:$0xf]
      %v2656 = vld [vmem:[%s7 + $0x34] sm:$0xf]
      %v2657 = vld [vmem:[%s7 + $0x38] sm:$0xf]
      %v2658 = vld [vmem:[%s7 + $0x3c] sm:$0xf]
      %v2675 = vunpack.c.l.b16 %v2643
      %v2676 = vunpack.c.l.b16 %v2644
      %v2677 = vunpack.c.l.b16 %v2645
      %v2678 = vunpack.c.l.b16 %v2646
      %v2679 = vunpack.c.l.b16 %v2647
      %v2680 = vunpack.c.l.b16 %v2648
      %v2681 = vunpack.c.l.b16 %v2649
      %v2682 = vunpack.c.l.b16 %v2650
      %v2683 = vunpack.c.l.b16 %v2651
      %v2684 = vunpack.c.l.b16 %v2652
      %v2685 = vunpack.c.l.b16 %v2653
      %v2686 = vunpack.c.l.b16 %v2654
      %v2687 = vunpack.c.l.b16 %v2655
      %v2688 = vunpack.c.l.b16 %v2656
      %v2689 = vunpack.c.l.b16 %v2657
      %v2690 = vunpack.c.l.b16 %v2658
      %v2691 = vpack.c.b16 %v2676, %v2675
      %v2692 = vpack.c.b16 %v2678, %v2677
      %v2693 = vpack.c.b16 %v2680, %v2679
      %v2694 = vpack.c.b16 %v2682, %v2681
      %v2695 = vpack.c.b16 %v2684, %v2683
      %v2696 = vpack.c.b16 %v2686, %v2685
      %v2697 = vpack.c.b16 %v2688, %v2687
      %v2698 = vpack.c.b16 %v2690, %v2689
      %2707 = vmatpush.bf16.msra.mxu0 %v2698
      %2708 = vmatpush.bf16.msra.mxu0 %v2697
      %2709 = vmatpush.bf16.msra.mxu0 %v2696
      %2710 = vmatpush.bf16.msra.mxu0 %v2695
      %2711 = vmatpush.bf16.msra.mxu0 %v2694
      %2712 = vmatpush.bf16.msra.mxu0 %v2693
      %2713 = vmatpush.bf16.msra.mxu0 %v2692
      %2714 = vmatpush.bf16.msra.mxu0 %v2691
      %2715 = vmatmul.bf16.gmra.mxu0 %v2640
      %v2716 = vpop.f32.mrf.mxu0
      %v2717 = vadd.f32 0.0, %v2716
      %v2718 = vpop.f32.mrf.mxu0
      %v2719 = vadd.f32 0.0, %v2718
      %2720 = vmatmul.bf16.gmra.mxu0 %v2641
      %v2721 = vpop.f32.mrf.mxu0
      %v2722 = vadd.f32 0.0, %v2721
      %v2723 = vpop.f32.mrf.mxu0
      %v2724 = vadd.f32 0.0, %v2723
      %2725 = vmatmul.bf16.gmra.mxu0 %v2642
      %v2726 = vpop.f32.mrf.mxu0
      %v2727 = vadd.f32 0.0, %v2726
      %v2728 = vpop.f32.mrf.mxu0
      %2729 = vdwg.mxu0
      %v2730 = vadd.f32 %v1214, %v2717
      %v2731 = vadd.f32 %v1216, %v2719
      %v2732 = vadd.f32 %v1219, %v2722
      %v2733 = vadd.f32 %v1221, %v2724
      %v2734 = vadd.f32 %v1224, %v2727
      %v2735 = vld [vmem:[%s8] sm:$0x1]
      %v2737 = vperm.slane %v2735, 0
      %v2739 = vadd.f32 %v2730, %v2737
      %v2740 = vadd.f32 %v2731, %v2737
      %v2741 = vadd.f32 %v2732, %v2737
      %v2742 = vadd.f32 %v2733, %v2737
      %v2743 = vadd.f32 %v2734, %v2737
      %v2744 = vld [vmem:[%s9] sm:$0x1]
      %v2745 = vld [vmem:[%s10] sm:$0x1]
      %2746 = vadd.xlane.f32.xlu0 %v2739
      %v2747 = vpop.xlane.xlu0 %2746
      %2748 = vadd.xlane.f32.xlu0 %v2740
      %v2749 = vpop.xlane.xlu0 %2748
      %2750 = vadd.xlane.f32.xlu0 %v2741
      %v2751 = vpop.xlane.xlu0 %2750
      %2752 = vadd.xlane.f32.xlu0 %v2742
      %v2753 = vpop.xlane.xlu0 %2752
      %2754 = vadd.xlane.f32.xlu0 %v2743
      %v2755 = vpop.xlane.xlu0 %2754
      %v2756 = vmul.f32 %v2747, %v1245
      %v2757 = vmul.f32 %v2749, %v1245
      %v2758 = vmul.f32 %v2751, %v1245
      %v2759 = vmul.f32 %v2753, %v1245
      %v2760 = vmul.f32 %v2755, %v1245
      %v2761 = vsub.f32 %v2739, %v2756
      %v2762 = vsub.f32 %v2740, %v2757
      %v2763 = vsub.f32 %v2741, %v2758
      %v2764 = vsub.f32 %v2742, %v2759
      %v2765 = vsub.f32 %v2743, %v2760
      %v2766 = vmul.f32 %v2761, %v2761
      %v2767 = vmul.f32 %v2762, %v2762
      %v2768 = vmul.f32 %v2763, %v2763
      %v2769 = vmul.f32 %v2764, %v2764
      %v2770 = vmul.f32 %v2765, %v2765
      %2771 = vadd.xlane.f32.xlu0 %v2766
      %v2772 = vpop.xlane.xlu0 %2771
      %2773 = vadd.xlane.f32.xlu0 %v2767
      %v2774 = vpop.xlane.xlu0 %2773
      %2775 = vadd.xlane.f32.xlu0 %v2768
      %v2776 = vpop.xlane.xlu0 %2775
      %2777 = vadd.xlane.f32.xlu0 %v2769
      %v2778 = vpop.xlane.xlu0 %2777
      %2779 = vadd.xlane.f32.xlu0 %v2770
      %v2780 = vpop.xlane.xlu0 %2779
      %v2781 = vmul.f32 %v2772, %v1245
      %v2782 = vmul.f32 %v2774, %v1245
      %v2783 = vmul.f32 %v2776, %v1245
      %v2784 = vmul.f32 %v2778, %v1245
      %v2785 = vmul.f32 %v2780, %v1245
      %v2786 = vadd.f32 %v2781, 1e-06
      %v2787 = vadd.f32 %v2782, 1e-06
      %v2788 = vadd.f32 %v2783, 1e-06
      %v2789 = vadd.f32 %v2784, 1e-06
      %v2790 = vadd.f32 %v2785, 1e-06
      %v2791 = vrsqrt.pop %v2786
      %v2792 = vmul.f32 %v2791, %v2786
      %v2793 = vmul.f32 %v2792, %v2791
      %v2794 = vmul.f32 0.5, %v2793
      %v2795 = vsub.f32 1.5, %v2794
      %v2796 = vmul.f32 %v2791, %v2795
      %vm2797 = vweird.f32 %v2786
      %vm2798 = vweird.f32 %v2791
      %vm2799 = vmor %vm2797, %vm2798
      %v2800 = vsel %vm2799, %v2791, %v2796
      %v2801 = vrsqrt.pop %v2787
      %v2802 = vmul.f32 %v2801, %v2787
      %v2803 = vmul.f32 %v2802, %v2801
      %v2804 = vmul.f32 0.5, %v2803
      %v2805 = vsub.f32 1.5, %v2804
      %v2806 = vmul.f32 %v2801, %v2805
      %vm2807 = vweird.f32 %v2787
      %vm2808 = vweird.f32 %v2801
      %vm2809 = vmor %vm2807, %vm2808
      %v2810 = vsel %vm2809, %v2801, %v2806
      %v2811 = vrsqrt.pop %v2788
      %v2812 = vmul.f32 %v2811, %v2788
      %v2813 = vmul.f32 %v2812, %v2811
      %v2814 = vmul.f32 0.5, %v2813
      %v2815 = vsub.f32 1.5, %v2814
      %v2816 = vmul.f32 %v2811, %v2815
      %vm2817 = vweird.f32 %v2788
      %vm2818 = vweird.f32 %v2811
      %vm2819 = vmor %vm2817, %vm2818
      %v2820 = vsel %vm2819, %v2811, %v2816
      %v2821 = vrsqrt.pop %v2789
      %v2822 = vmul.f32 %v2821, %v2789
      %v2823 = vmul.f32 %v2822, %v2821
      %v2824 = vmul.f32 0.5, %v2823
      %v2825 = vsub.f32 1.5, %v2824
      %v2826 = vmul.f32 %v2821, %v2825
      %vm2827 = vweird.f32 %v2789
      %vm2828 = vweird.f32 %v2821
      %vm2829 = vmor %vm2827, %vm2828
      %v2830 = vsel %vm2829, %v2821, %v2826
      %v2831 = vrsqrt.pop %v2790
      %v2832 = vmul.f32 %v2831, %v2790
      %v2833 = vmul.f32 %v2832, %v2831
      %v2834 = vmul.f32 0.5, %v2833
      %v2835 = vsub.f32 1.5, %v2834
      %v2836 = vmul.f32 %v2831, %v2835
      %vm2837 = vweird.f32 %v2790
      %vm2838 = vweird.f32 %v2831
      %vm2839 = vmor %vm2837, %vm2838
      %v2840 = vsel %vm2839, %v2831, %v2836
      %v2841 = vmul.f32 %v2761, %v2800
      %v2842 = vmul.f32 %v2762, %v2810
      %v2843 = vmul.f32 %v2763, %v2820
      %v2844 = vmul.f32 %v2764, %v2830
      %v2845 = vmul.f32 %v2765, %v2840
      %v2847 = vperm.slane %v2744, 0
      %v2849 = vmul.f32 %v2841, %v2847
      %v2850 = vmul.f32 %v2842, %v2847
      %v2851 = vmul.f32 %v2843, %v2847
      %v2852 = vmul.f32 %v2844, %v2847
      %v2853 = vmul.f32 %v2845, %v2847
      %v2855 = vperm.slane %v2745, 0
      %v2857 = vadd.f32 %v2849, %v2855
      %v2858 = vadd.f32 %v2850, %v2855
      %v2859 = vadd.f32 %v2851, %v2855
      %v2860 = vadd.f32 %v2852, %v2855
      %v2861 = vadd.f32 %v2853, %v2855
      %v2862 = vpack.c.bf16 %v2858, %v2857
      %v2863 = vpack.c.bf16 %v2860, %v2859
      %v2864 = vpack.c.bf16 %v2861, %v2861
      %v2865 = vld [vmem:[%s11] sm:$0xff]
      %v2866 = vld [vmem:[%s11 + $0x8] sm:$0xff]
      %v2867 = vld [vmem:[%s11 + $0x10] sm:$0xff]
      %v2868 = vld [vmem:[%s11 + $0x18] sm:$0xff]
      %v2869 = vld [vmem:[%s11 + $0x20] sm:$0xff]
      %v2870 = vld [vmem:[%s11 + $0x28] sm:$0xff]
      %v2871 = vld [vmem:[%s11 + $0x30] sm:$0xff]
      %v2872 = vld [vmem:[%s11 + $0x38] sm:$0xff]
      %v2873 = vld [vmem:[%s11 + $0x40] sm:$0xff]
      %v2874 = vld [vmem:[%s11 + $0x48] sm:$0xff]
      %v2875 = vld [vmem:[%s11 + $0x50] sm:$0xff]
      %v2876 = vld [vmem:[%s11 + $0x58] sm:$0xff]
      %v2877 = vld [vmem:[%s11 + $0x60] sm:$0xff]
      %v2878 = vld [vmem:[%s11 + $0x68] sm:$0xff]
      %v2879 = vld [vmem:[%s11 + $0x70] sm:$0xff]
      %v2880 = vld [vmem:[%s11 + $0x78] sm:$0xff]
      %v2881 = vld [vmem:[%s11 + $0x80] sm:$0xff]
      %v2882 = vld [vmem:[%s11 + $0x88] sm:$0xff]
      %v2883 = vld [vmem:[%s11 + $0x90] sm:$0xff]
      %v2884 = vld [vmem:[%s11 + $0x98] sm:$0xff]
      %v2885 = vld [vmem:[%s11 + $0xa0] sm:$0xff]
      %v2886 = vld [vmem:[%s11 + $0xa8] sm:$0xff]
      %v2887 = vld [vmem:[%s11 + $0xb0] sm:$0xff]
      %v2888 = vld [vmem:[%s11 + $0xb8] sm:$0xff]
      %v2889 = vld [vmem:[%s11 + $0xc0] sm:$0xff]
      %v2890 = vld [vmem:[%s11 + $0xc8] sm:$0xff]
      %v2891 = vld [vmem:[%s11 + $0xd0] sm:$0xff]
      %v2892 = vld [vmem:[%s11 + $0xd8] sm:$0xff]
      %v2893 = vld [vmem:[%s11 + $0xe0] sm:$0xff]
      %v2894 = vld [vmem:[%s11 + $0xe8] sm:$0xff]
      %v2895 = vld [vmem:[%s11 + $0xf0] sm:$0xff]
      %v2896 = vld [vmem:[%s11 + $0xf8] sm:$0xff]
      %v2897 = vld [vmem:[%s12] sm:$0xf]
      %v2899 = vperm.slane %v2897, 0
      %v2900 = vperm.slane %v2897, 1
      %v2901 = vperm.slane %v2897, 2
      %v2902 = vperm.slane %v2897, 3
      %v2939 = vunpack.c.l.b16 %v2865
      %v2940 = vunpack.c.h.b16 %v2865
      %v2941 = vunpack.c.l.b16 %v2866
      %v2942 = vunpack.c.h.b16 %v2866
      %v2943 = vunpack.c.l.b16 %v2867
      %v2944 = vunpack.c.h.b16 %v2867
      %v2945 = vunpack.c.l.b16 %v2868
      %v2946 = vunpack.c.h.b16 %v2868
      %v2947 = vunpack.c.l.b16 %v2869
      %v2948 = vunpack.c.h.b16 %v2869
      %v2949 = vunpack.c.l.b16 %v2870
      %v2950 = vunpack.c.h.b16 %v2870
      %v2951 = vunpack.c.l.b16 %v2871
      %v2952 = vunpack.c.h.b16 %v2871
      %v2953 = vunpack.c.l.b16 %v2872
      %v2954 = vunpack.c.h.b16 %v2872
      %v2955 = vunpack.c.l.b16 %v2873
      %v2956 = vunpack.c.h.b16 %v2873
      %v2957 = vunpack.c.l.b16 %v2874
      %v2958 = vunpack.c.h.b16 %v2874
      %v2959 = vunpack.c.l.b16 %v2875
      %v2960 = vunpack.c.h.b16 %v2875
      %v2961 = vunpack.c.l.b16 %v2876
      %v2962 = vunpack.c.h.b16 %v2876
      %v2963 = vunpack.c.l.b16 %v2877
      %v2964 = vunpack.c.h.b16 %v2877
      %v2965 = vunpack.c.l.b16 %v2878
      %v2966 = vunpack.c.h.b16 %v2878
      %v2967 = vunpack.c.l.b16 %v2879
      %v2968 = vunpack.c.h.b16 %v2879
      %v2969 = vunpack.c.l.b16 %v2880
      %v2970 = vunpack.c.h.b16 %v2880
      %v2971 = vunpack.c.l.b16 %v2881
      %v2972 = vunpack.c.h.b16 %v2881
      %v2973 = vunpack.c.l.b16 %v2882
      %v2974 = vunpack.c.h.b16 %v2882
      %v2975 = vunpack.c.l.b16 %v2883
      %v2976 = vunpack.c.h.b16 %v2883
      %v2977 = vunpack.c.l.b16 %v2884
      %v2978 = vunpack.c.h.b16 %v2884
      %v2979 = vunpack.c.l.b16 %v2885
      %v2980 = vunpack.c.h.b16 %v2885
      %v2981 = vunpack.c.l.b16 %v2886
      %v2982 = vunpack.c.h.b16 %v2886
      %v2983 = vunpack.c.l.b16 %v2887
      %v2984 = vunpack.c.h.b16 %v2887
      %v2985 = vunpack.c.l.b16 %v2888
      %v2986 = vunpack.c.h.b16 %v2888
      %v2987 = vunpack.c.l.b16 %v2889
      %v2988 = vunpack.c.h.b16 %v2889
      %v2989 = vunpack.c.l.b16 %v2890
      %v2990 = vunpack.c.h.b16 %v2890
      %v2991 = vunpack.c.l.b16 %v2891
      %v2992 = vunpack.c.h.b16 %v2891
      %v2993 = vunpack.c.l.b16 %v2892
      %v2994 = vunpack.c.h.b16 %v2892
      %v2995 = vunpack.c.l.b16 %v2893
      %v2996 = vunpack.c.h.b16 %v2893
      %v2997 = vunpack.c.l.b16 %v2894
      %v2998 = vunpack.c.h.b16 %v2894
      %v2999 = vunpack.c.l.b16 %v2895
      %v3000 = vunpack.c.h.b16 %v2895
      %v3001 = vunpack.c.l.b16 %v2896
      %v3002 = vunpack.c.h.b16 %v2896
      %v3003 = vpack.c.b16 %v2943, %v2939
      %v3004 = vpack.c.b16 %v2944, %v2940
      %v3005 = vpack.c.b16 %v2945, %v2941
      %v3006 = vpack.c.b16 %v2946, %v2942
      %v3007 = vpack.c.b16 %v2951, %v2947
      %v3008 = vpack.c.b16 %v2952, %v2948
      %v3009 = vpack.c.b16 %v2953, %v2949
      %v3010 = vpack.c.b16 %v2954, %v2950
      %v3011 = vpack.c.b16 %v2959, %v2955
      %v3012 = vpack.c.b16 %v2960, %v2956
      %v3013 = vpack.c.b16 %v2961, %v2957
      %v3014 = vpack.c.b16 %v2962, %v2958
      %v3015 = vpack.c.b16 %v2967, %v2963
      %v3016 = vpack.c.b16 %v2968, %v2964
      %v3017 = vpack.c.b16 %v2969, %v2965
      %v3018 = vpack.c.b16 %v2970, %v2966
      %v3019 = vpack.c.b16 %v2975, %v2971
      %v3020 = vpack.c.b16 %v2976, %v2972
      %v3021 = vpack.c.b16 %v2977, %v2973
      %v3022 = vpack.c.b16 %v2978, %v2974
      %v3023 = vpack.c.b16 %v2983, %v2979
      %v3024 = vpack.c.b16 %v2984, %v2980
      %v3025 = vpack.c.b16 %v2985, %v2981
      %v3026 = vpack.c.b16 %v2986, %v2982
      %v3027 = vpack.c.b16 %v2991, %v2987
      %v3028 = vpack.c.b16 %v2992, %v2988
      %v3029 = vpack.c.b16 %v2993, %v2989
      %v3030 = vpack.c.b16 %v2994, %v2990
      %v3031 = vpack.c.b16 %v2999, %v2995
      %v3032 = vpack.c.b16 %v3000, %v2996
      %v3033 = vpack.c.b16 %v3001, %v2997
      %v3034 = vpack.c.b16 %v3002, %v2998
      %3067 = vmatpush.bf16.msra.mxu0 %v3031
      %3068 = vmatpush.bf16.msra.mxu0 %v3027
      %3069 = vmatpush.bf16.msra.mxu0 %v3023
      %3070 = vmatpush.bf16.msra.mxu0 %v3019
      %3071 = vmatpush.bf16.msra.mxu0 %v3015
      %3072 = vmatpush.bf16.msra.mxu0 %v3011
      %3073 = vmatpush.bf16.msra.mxu0 %v3007
      %3074 = vmatpush.bf16.msra.mxu0 %v3003
      %3075 = vmatmul.bf16.gmra.mxu0 %v2862
      %v3076 = vpop.f32.mrf.mxu0
      %v3077 = vadd.f32 %v2899, %v3076
      %v3078 = vpop.f32.mrf.mxu0
      %v3079 = vadd.f32 %v2899, %v3078
      %3080 = vmatmul.bf16.gmra.mxu0 %v2863
      %v3081 = vpop.f32.mrf.mxu0
      %v3082 = vadd.f32 %v2899, %v3081
      %v3083 = vpop.f32.mrf.mxu0
      %v3084 = vadd.f32 %v2899, %v3083
      %3085 = vmatmul.bf16.gmra.mxu0 %v2864
      %v3086 = vpop.f32.mrf.mxu0
      %v3087 = vadd.f32 %v2899, %v3086
      %v3088 = vpop.f32.mrf.mxu0
      %3089 = vdwg.mxu0
      %3090 = vmatpush.bf16.msra.mxu0 %v3032
      %3091 = vmatpush.bf16.msra.mxu0 %v3028
      %3092 = vmatpush.bf16.msra.mxu0 %v3024
      %3093 = vmatpush.bf16.msra.mxu0 %v3020
      %3094 = vmatpush.bf16.msra.mxu0 %v3016
      %3095 = vmatpush.bf16.msra.mxu0 %v3012
      %3096 = vmatpush.bf16.msra.mxu0 %v3008
      %3097 = vmatpush.bf16.msra.mxu0 %v3004
      %3098 = vmatmul.bf16.gmra.mxu0 %v2862
      %v3099 = vpop.f32.mrf.mxu0
      %v3100 = vadd.f32 %v2900, %v3099
      %v3101 = vpop.f32.mrf.mxu0
      %v3102 = vadd.f32 %v2900, %v3101
      %3103 = vmatmul.bf16.gmra.mxu0 %v2863
      %v3104 = vpop.f32.mrf.mxu0
      %v3105 = vadd.f32 %v2900, %v3104
      %v3106 = vpop.f32.mrf.mxu0
      %v3107 = vadd.f32 %v2900, %v3106
      %3108 = vmatmul.bf16.gmra.mxu0 %v2864
      %v3109 = vpop.f32.mrf.mxu0
      %v3110 = vadd.f32 %v2900, %v3109
      %v3111 = vpop.f32.mrf.mxu0
      %3112 = vdwg.mxu0
      %3113 = vmatpush.bf16.msra.mxu0 %v3033
      %3114 = vmatpush.bf16.msra.mxu0 %v3029
      %3115 = vmatpush.bf16.msra.mxu0 %v3025
      %3116 = vmatpush.bf16.msra.mxu0 %v3021
      %3117 = vmatpush.bf16.msra.mxu0 %v3017
      %3118 = vmatpush.bf16.msra.mxu0 %v3013
      %3119 = vmatpush.bf16.msra.mxu0 %v3009
      %3120 = vmatpush.bf16.msra.mxu0 %v3005
      %3121 = vmatmul.bf16.gmra.mxu0 %v2862
      %v3122 = vpop.f32.mrf.mxu0
      %v3123 = vadd.f32 %v2901, %v3122
      %v3124 = vpop.f32.mrf.mxu0
      %v3125 = vadd.f32 %v2901, %v3124
      %3126 = vmatmul.bf16.gmra.mxu0 %v2863
      %v3127 = vpop.f32.mrf.mxu0
      %v3128 = vadd.f32 %v2901, %v3127
      %v3129 = vpop.f32.mrf.mxu0
      %v3130 = vadd.f32 %v2901, %v3129
      %3131 = vmatmul.bf16.gmra.mxu0 %v2864
      %v3132 = vpop.f32.mrf.mxu0
      %v3133 = vadd.f32 %v2901, %v3132
      %v3134 = vpop.f32.mrf.mxu0
      %3135 = vdwg.mxu0
      %3136 = vmatpush.bf16.msra.mxu0 %v3034
      %3137 = vmatpush.bf16.msra.mxu0 %v3030
      %3138 = vmatpush.bf16.msra.mxu0 %v3026
      %3139 = vmatpush.bf16.msra.mxu0 %v3022
      %3140 = vmatpush.bf16.msra.mxu0 %v3018
      %3141 = vmatpush.bf16.msra.mxu0 %v3014
      %3142 = vmatpush.bf16.msra.mxu0 %v3010
      %3143 = vmatpush.bf16.msra.mxu0 %v3006
      %3144 = vmatmul.bf16.gmra.mxu0 %v2862
      %v3145 = vpop.f32.mrf.mxu0
      %v3146 = vadd.f32 %v2902, %v3145
      %v3147 = vpop.f32.mrf.mxu0
      %v3148 = vadd.f32 %v2902, %v3147
      %3149 = vmatmul.bf16.gmra.mxu0 %v2863
      %v3150 = vpop.f32.mrf.mxu0
      %v3151 = vadd.f32 %v2902, %v3150
      %v3152 = vpop.f32.mrf.mxu0
      %v3153 = vadd.f32 %v2902, %v3152
      %3154 = vmatmul.bf16.gmra.mxu0 %v2864
      %v3155 = vpop.f32.mrf.mxu0
      %v3156 = vadd.f32 %v2902, %v3155
      %v3157 = vpop.f32.mrf.mxu0
      %3158 = vdwg.mxu0
      %v3159 = vmul.f32 %v3077, 0.5
      %v3160 = vmul.f32 %v3100, 0.5
      %v3161 = vmul.f32 %v3123, 0.5
      %v3162 = vmul.f32 %v3146, 0.5
      %v3163 = vmul.f32 %v3079, 0.5
      %v3164 = vmul.f32 %v3102, 0.5
      %v3165 = vmul.f32 %v3125, 0.5
      %v3166 = vmul.f32 %v3148, 0.5
      %v3167 = vmul.f32 %v3082, 0.5
      %v3168 = vmul.f32 %v3105, 0.5
      %v3169 = vmul.f32 %v3128, 0.5
      %v3170 = vmul.f32 %v3151, 0.5
      %v3171 = vmul.f32 %v3084, 0.5
      %v3172 = vmul.f32 %v3107, 0.5
      %v3173 = vmul.f32 %v3130, 0.5
      %v3174 = vmul.f32 %v3153, 0.5
      %v3175 = vmul.f32 %v3087, 0.5
      %v3176 = vmul.f32 %v3110, 0.5
      %v3177 = vmul.f32 %v3133, 0.5
      %v3178 = vmul.f32 %v3156, 0.5
      %v3179 = vmul.f32 %v3077, 0.70710677
      %v3180 = vmul.f32 %v3100, 0.70710677
      %v3181 = vmul.f32 %v3123, 0.70710677
      %v3182 = vmul.f32 %v3146, 0.70710677
      %v3183 = vmul.f32 %v3079, 0.70710677
      %v3184 = vmul.f32 %v3102, 0.70710677
      %v3185 = vmul.f32 %v3125, 0.70710677
      %v3186 = vmul.f32 %v3148, 0.70710677
      %v3187 = vmul.f32 %v3082, 0.70710677
      %v3188 = vmul.f32 %v3105, 0.70710677
      %v3189 = vmul.f32 %v3128, 0.70710677
      %v3190 = vmul.f32 %v3151, 0.70710677
      %v3191 = vmul.f32 %v3084, 0.70710677
      %v3192 = vmul.f32 %v3107, 0.70710677
      %v3193 = vmul.f32 %v3130, 0.70710677
      %v3194 = vmul.f32 %v3153, 0.70710677
      %v3195 = vmul.f32 %v3087, 0.70710677
      %v3196 = vmul.f32 %v3110, 0.70710677
      %v3197 = vmul.f32 %v3133, 0.70710677
      %v3198 = vmul.f32 %v3156, 0.70710677
      %vm3199 = vcmp.ge.f32.partialorder %v3179, 0.0
      %vm3200 = vcmp.ge.f32.partialorder %v3180, 0.0
      %vm3201 = vcmp.ge.f32.partialorder %v3181, 0.0
      %vm3202 = vcmp.ge.f32.partialorder %v3182, 0.0
      %vm3203 = vcmp.ge.f32.partialorder %v3183, 0.0
      %vm3204 = vcmp.ge.f32.partialorder %v3184, 0.0
      %vm3205 = vcmp.ge.f32.partialorder %v3185, 0.0
      %vm3206 = vcmp.ge.f32.partialorder %v3186, 0.0
      %vm3207 = vcmp.ge.f32.partialorder %v3187, 0.0
      %vm3208 = vcmp.ge.f32.partialorder %v3188, 0.0
      %vm3209 = vcmp.ge.f32.partialorder %v3189, 0.0
      %vm3210 = vcmp.ge.f32.partialorder %v3190, 0.0
      %vm3211 = vcmp.ge.f32.partialorder %v3191, 0.0
      %vm3212 = vcmp.ge.f32.partialorder %v3192, 0.0
      %vm3213 = vcmp.ge.f32.partialorder %v3193, 0.0
      %vm3214 = vcmp.ge.f32.partialorder %v3194, 0.0
      %vm3215 = vcmp.ge.f32.partialorder %v3195, 0.0
      %vm3216 = vcmp.ge.f32.partialorder %v3196, 0.0
      %vm3217 = vcmp.ge.f32.partialorder %v3197, 0.0
      %vm3218 = vcmp.ge.f32.partialorder %v3198, 0.0
      %v3219 = vsel %vm3199, 1.0, -1.0
      %v3220 = vsel %vm3200, 1.0, -1.0
      %v3221 = vsel %vm3201, 1.0, -1.0
      %v3222 = vsel %vm3202, 1.0, -1.0
      %v3223 = vsel %vm3203, 1.0, -1.0
      %v3224 = vsel %vm3204, 1.0, -1.0
      %v3225 = vsel %vm3205, 1.0, -1.0
      %v3226 = vsel %vm3206, 1.0, -1.0
      %v3227 = vsel %vm3207, 1.0, -1.0
      %v3228 = vsel %vm3208, 1.0, -1.0
      %v3229 = vsel %vm3209, 1.0, -1.0
      %v3230 = vsel %vm3210, 1.0, -1.0
      %v3231 = vsel %vm3211, 1.0, -1.0
      %v3232 = vsel %vm3212, 1.0, -1.0
      %v3233 = vsel %vm3213, 1.0, -1.0
      %v3234 = vsel %vm3214, 1.0, -1.0
      %v3235 = vsel %vm3215, 1.0, -1.0
      %v3236 = vsel %vm3216, 1.0, -1.0
      %v3237 = vsel %vm3217, 1.0, -1.0
      %v3238 = vsel %vm3218, 1.0, -1.0
      %v3239 = vand.u32 2147483647, %v3179
      %v3240 = vand.u32 2147483647, %v3180
      %v3241 = vand.u32 2147483647, %v3181
      %v3242 = vand.u32 2147483647, %v3182
      %v3243 = vand.u32 2147483647, %v3183
      %v3244 = vand.u32 2147483647, %v3184
      %v3245 = vand.u32 2147483647, %v3185
      %v3246 = vand.u32 2147483647, %v3186
      %v3247 = vand.u32 2147483647, %v3187
      %v3248 = vand.u32 2147483647, %v3188
      %v3249 = vand.u32 2147483647, %v3189
      %v3250 = vand.u32 2147483647, %v3190
      %v3251 = vand.u32 2147483647, %v3191
      %v3252 = vand.u32 2147483647, %v3192
      %v3253 = vand.u32 2147483647, %v3193
      %v3254 = vand.u32 2147483647, %v3194
      %v3255 = vand.u32 2147483647, %v3195
      %v3256 = vand.u32 2147483647, %v3196
      %v3257 = vand.u32 2147483647, %v3197
      %v3258 = vand.u32 2147483647, %v3198
      %v3259 = vmul.f32 %v3239, 0.3275911
      %v3260 = vmul.f32 %v3240, 0.3275911
      %v3261 = vmul.f32 %v3241, 0.3275911
      %v3262 = vmul.f32 %v3242, 0.3275911
      %v3263 = vmul.f32 %v3243, 0.3275911
      %v3264 = vmul.f32 %v3244, 0.3275911
      %v3265 = vmul.f32 %v3245, 0.3275911
      %v3266 = vmul.f32 %v3246, 0.3275911
      %v3267 = vmul.f32 %v3247, 0.3275911
      %v3268 = vmul.f32 %v3248, 0.3275911
      %v3269 = vmul.f32 %v3249, 0.3275911
      %v3270 = vmul.f32 %v3250, 0.3275911
      %v3271 = vmul.f32 %v3251, 0.3275911
      %v3272 = vmul.f32 %v3252, 0.3275911
      %v3273 = vmul.f32 %v3253, 0.3275911
      %v3274 = vmul.f32 %v3254, 0.3275911
      %v3275 = vmul.f32 %v3255, 0.3275911
      %v3276 = vmul.f32 %v3256, 0.3275911
      %v3277 = vmul.f32 %v3257, 0.3275911
      %v3278 = vmul.f32 %v3258, 0.3275911
      %v3279 = vadd.f32 %v3259, 1.0
      %v3280 = vadd.f32 %v3260, 1.0
      %v3281 = vadd.f32 %v3261, 1.0
      %v3282 = vadd.f32 %v3262, 1.0
      %v3283 = vadd.f32 %v3263, 1.0
      %v3284 = vadd.f32 %v3264, 1.0
      %v3285 = vadd.f32 %v3265, 1.0
      %v3286 = vadd.f32 %v3266, 1.0
      %v3287 = vadd.f32 %v3267, 1.0
      %v3288 = vadd.f32 %v3268, 1.0
      %v3289 = vadd.f32 %v3269, 1.0
      %v3290 = vadd.f32 %v3270, 1.0
      %v3291 = vadd.f32 %v3271, 1.0
      %v3292 = vadd.f32 %v3272, 1.0
      %v3293 = vadd.f32 %v3273, 1.0
      %v3294 = vadd.f32 %v3274, 1.0
      %v3295 = vadd.f32 %v3275, 1.0
      %v3296 = vadd.f32 %v3276, 1.0
      %v3297 = vadd.f32 %v3277, 1.0
      %v3298 = vadd.f32 %v3278, 1.0
      %v3299 = vrcp.pop %v3279
      %v3300 = vrcp.pop %v3280
      %v3301 = vrcp.pop %v3281
      %v3302 = vrcp.pop %v3282
      %v3303 = vrcp.pop %v3283
      %v3304 = vrcp.pop %v3284
      %v3305 = vrcp.pop %v3285
      %v3306 = vrcp.pop %v3286
      %v3307 = vrcp.pop %v3287
      %v3308 = vrcp.pop %v3288
      %v3309 = vrcp.pop %v3289
      %v3310 = vrcp.pop %v3290
      %v3311 = vrcp.pop %v3291
      %v3312 = vrcp.pop %v3292
      %v3313 = vrcp.pop %v3293
      %v3314 = vrcp.pop %v3294
      %v3315 = vrcp.pop %v3295
      %v3316 = vrcp.pop %v3296
      %v3317 = vrcp.pop %v3297
      %v3318 = vrcp.pop %v3298
      %v3319 = vmul.f32 %v3299, 1.0614054
      %v3320 = vmul.f32 %v3300, 1.0614054
      %v3321 = vmul.f32 %v3301, 1.0614054
      %v3322 = vmul.f32 %v3302, 1.0614054
      %v3323 = vmul.f32 %v3303, 1.0614054
      %v3324 = vmul.f32 %v3304, 1.0614054
      %v3325 = vmul.f32 %v3305, 1.0614054
      %v3326 = vmul.f32 %v3306, 1.0614054
      %v3327 = vmul.f32 %v3307, 1.0614054
      %v3328 = vmul.f32 %v3308, 1.0614054
      %v3329 = vmul.f32 %v3309, 1.0614054
      %v3330 = vmul.f32 %v3310, 1.0614054
      %v3331 = vmul.f32 %v3311, 1.0614054
      %v3332 = vmul.f32 %v3312, 1.0614054
      %v3333 = vmul.f32 %v3313, 1.0614054
      %v3334 = vmul.f32 %v3314, 1.0614054
      %v3335 = vmul.f32 %v3315, 1.0614054
      %v3336 = vmul.f32 %v3316, 1.0614054
      %v3337 = vmul.f32 %v3317, 1.0614054
      %v3338 = vmul.f32 %v3318, 1.0614054
      %v3339 = vadd.f32 %v3319, -1.4531521
      %v3340 = vadd.f32 %v3320, -1.4531521
      %v3341 = vadd.f32 %v3321, -1.4531521
      %v3342 = vadd.f32 %v3322, -1.4531521
      %v3343 = vadd.f32 %v3323, -1.4531521
      %v3344 = vadd.f32 %v3324, -1.4531521
      %v3345 = vadd.f32 %v3325, -1.4531521
      %v3346 = vadd.f32 %v3326, -1.4531521
      %v3347 = vadd.f32 %v3327, -1.4531521
      %v3348 = vadd.f32 %v3328, -1.4531521
      %v3349 = vadd.f32 %v3329, -1.4531521
      %v3350 = vadd.f32 %v3330, -1.4531521
      %v3351 = vadd.f32 %v3331, -1.4531521
      %v3352 = vadd.f32 %v3332, -1.4531521
      %v3353 = vadd.f32 %v3333, -1.4531521
      %v3354 = vadd.f32 %v3334, -1.4531521
      %v3355 = vadd.f32 %v3335, -1.4531521
      %v3356 = vadd.f32 %v3336, -1.4531521
      %v3357 = vadd.f32 %v3337, -1.4531521
      %v3358 = vadd.f32 %v3338, -1.4531521
      %v3359 = vmul.f32 %v3339, %v3299
      %v3360 = vmul.f32 %v3340, %v3300
      %v3361 = vmul.f32 %v3341, %v3301
      %v3362 = vmul.f32 %v3342, %v3302
      %v3363 = vmul.f32 %v3343, %v3303
      %v3364 = vmul.f32 %v3344, %v3304
      %v3365 = vmul.f32 %v3345, %v3305
      %v3366 = vmul.f32 %v3346, %v3306
      %v3367 = vmul.f32 %v3347, %v3307
      %v3368 = vmul.f32 %v3348, %v3308
      %v3369 = vmul.f32 %v3349, %v3309
      %v3370 = vmul.f32 %v3350, %v3310
      %v3371 = vmul.f32 %v3351, %v3311
      %v3372 = vmul.f32 %v3352, %v3312
      %v3373 = vmul.f32 %v3353, %v3313
      %v3374 = vmul.f32 %v3354, %v3314
      %v3375 = vmul.f32 %v3355, %v3315
      %v3376 = vmul.f32 %v3356, %v3316
      %v3377 = vmul.f32 %v3357, %v3317
      %v3378 = vmul.f32 %v3358, %v3318
      %v3379 = vadd.f32 %v3359, 1.4214138
      %v3380 = vadd.f32 %v3360, 1.4214138
      %v3381 = vadd.f32 %v3361, 1.4214138
      %v3382 = vadd.f32 %v3362, 1.4214138
      %v3383 = vadd.f32 %v3363, 1.4214138
      %v3384 = vadd.f32 %v3364, 1.4214138
      %v3385 = vadd.f32 %v3365, 1.4214138
      %v3386 = vadd.f32 %v3366, 1.4214138
      %v3387 = vadd.f32 %v3367, 1.4214138
      %v3388 = vadd.f32 %v3368, 1.4214138
      %v3389 = vadd.f32 %v3369, 1.4214138
      %v3390 = vadd.f32 %v3370, 1.4214138
      %v3391 = vadd.f32 %v3371, 1.4214138
      %v3392 = vadd.f32 %v3372, 1.4214138
      %v3393 = vadd.f32 %v3373, 1.4214138
      %v3394 = vadd.f32 %v3374, 1.4214138
      %v3395 = vadd.f32 %v3375, 1.4214138
      %v3396 = vadd.f32 %v3376, 1.4214138
      %v3397 = vadd.f32 %v3377, 1.4214138
      %v3398 = vadd.f32 %v3378, 1.4214138
      %v3399 = vmul.f32 %v3379, %v3299
      %v3400 = vmul.f32 %v3380, %v3300
      %v3401 = vmul.f32 %v3381, %v3301
      %v3402 = vmul.f32 %v3382, %v3302
      %v3403 = vmul.f32 %v3383, %v3303
      %v3404 = vmul.f32 %v3384, %v3304
      %v3405 = vmul.f32 %v3385, %v3305
      %v3406 = vmul.f32 %v3386, %v3306
      %v3407 = vmul.f32 %v3387, %v3307
      %v3408 = vmul.f32 %v3388, %v3308
      %v3409 = vmul.f32 %v3389, %v3309
      %v3410 = vmul.f32 %v3390, %v3310
      %v3411 = vmul.f32 %v3391, %v3311
      %v3412 = vmul.f32 %v3392, %v3312
      %v3413 = vmul.f32 %v3393, %v3313
      %v3414 = vmul.f32 %v3394, %v3314
      %v3415 = vmul.f32 %v3395, %v3315
      %v3416 = vmul.f32 %v3396, %v3316
      %v3417 = vmul.f32 %v3397, %v3317
      %v3418 = vmul.f32 %v3398, %v3318
      %v3419 = vadd.f32 %v3399, -0.28449672
      %v3420 = vadd.f32 %v3400, -0.28449672
      %v3421 = vadd.f32 %v3401, -0.28449672
      %v3422 = vadd.f32 %v3402, -0.28449672
      %v3423 = vadd.f32 %v3403, -0.28449672
      %v3424 = vadd.f32 %v3404, -0.28449672
      %v3425 = vadd.f32 %v3405, -0.28449672
      %v3426 = vadd.f32 %v3406, -0.28449672
      %v3427 = vadd.f32 %v3407, -0.28449672
      %v3428 = vadd.f32 %v3408, -0.28449672
      %v3429 = vadd.f32 %v3409, -0.28449672
      %v3430 = vadd.f32 %v3410, -0.28449672
      %v3431 = vadd.f32 %v3411, -0.28449672
      %v3432 = vadd.f32 %v3412, -0.28449672
      %v3433 = vadd.f32 %v3413, -0.28449672
      %v3434 = vadd.f32 %v3414, -0.28449672
      %v3435 = vadd.f32 %v3415, -0.28449672
      %v3436 = vadd.f32 %v3416, -0.28449672
      %v3437 = vadd.f32 %v3417, -0.28449672
      %v3438 = vadd.f32 %v3418, -0.28449672
      %v3439 = vmul.f32 %v3419, %v3299
      %v3440 = vmul.f32 %v3420, %v3300
      %v3441 = vmul.f32 %v3421, %v3301
      %v3442 = vmul.f32 %v3422, %v3302
      %v3443 = vmul.f32 %v3423, %v3303
      %v3444 = vmul.f32 %v3424, %v3304
      %v3445 = vmul.f32 %v3425, %v3305
      %v3446 = vmul.f32 %v3426, %v3306
      %v3447 = vmul.f32 %v3427, %v3307
      %v3448 = vmul.f32 %v3428, %v3308
      %v3449 = vmul.f32 %v3429, %v3309
      %v3450 = vmul.f32 %v3430, %v3310
      %v3451 = vmul.f32 %v3431, %v3311
      %v3452 = vmul.f32 %v3432, %v3312
      %v3453 = vmul.f32 %v3433, %v3313
      %v3454 = vmul.f32 %v3434, %v3314
      %v3455 = vmul.f32 %v3435, %v3315
      %v3456 = vmul.f32 %v3436, %v3316
      %v3457 = vmul.f32 %v3437, %v3317
      %v3458 = vmul.f32 %v3438, %v3318
      %v3459 = vadd.f32 %v3439, 0.2548296
      %v3460 = vadd.f32 %v3440, 0.2548296
      %v3461 = vadd.f32 %v3441, 0.2548296
      %v3462 = vadd.f32 %v3442, 0.2548296
      %v3463 = vadd.f32 %v3443, 0.2548296
      %v3464 = vadd.f32 %v3444, 0.2548296
      %v3465 = vadd.f32 %v3445, 0.2548296
      %v3466 = vadd.f32 %v3446, 0.2548296
      %v3467 = vadd.f32 %v3447, 0.2548296
      %v3468 = vadd.f32 %v3448, 0.2548296
      %v3469 = vadd.f32 %v3449, 0.2548296
      %v3470 = vadd.f32 %v3450, 0.2548296
      %v3471 = vadd.f32 %v3451, 0.2548296
      %v3472 = vadd.f32 %v3452, 0.2548296
      %v3473 = vadd.f32 %v3453, 0.2548296
      %v3474 = vadd.f32 %v3454, 0.2548296
      %v3475 = vadd.f32 %v3455, 0.2548296
      %v3476 = vadd.f32 %v3456, 0.2548296
      %v3477 = vadd.f32 %v3457, 0.2548296
      %v3478 = vadd.f32 %v3458, 0.2548296
      %v3479 = vmul.f32 %v3459, %v3299
      %v3480 = vmul.f32 %v3460, %v3300
      %v3481 = vmul.f32 %v3461, %v3301
      %v3482 = vmul.f32 %v3462, %v3302
      %v3483 = vmul.f32 %v3463, %v3303
      %v3484 = vmul.f32 %v3464, %v3304
      %v3485 = vmul.f32 %v3465, %v3305
      %v3486 = vmul.f32 %v3466, %v3306
      %v3487 = vmul.f32 %v3467, %v3307
      %v3488 = vmul.f32 %v3468, %v3308
      %v3489 = vmul.f32 %v3469, %v3309
      %v3490 = vmul.f32 %v3470, %v3310
      %v3491 = vmul.f32 %v3471, %v3311
      %v3492 = vmul.f32 %v3472, %v3312
      %v3493 = vmul.f32 %v3473, %v3313
      %v3494 = vmul.f32 %v3474, %v3314
      %v3495 = vmul.f32 %v3475, %v3315
      %v3496 = vmul.f32 %v3476, %v3316
      %v3497 = vmul.f32 %v3477, %v3317
      %v3498 = vmul.f32 %v3478, %v3318
      %v3499 = vsub.f32 0.0, %v3239
      %v3500 = vsub.f32 0.0, %v3240
      %v3501 = vsub.f32 0.0, %v3241
      %v3502 = vsub.f32 0.0, %v3242
      %v3503 = vsub.f32 0.0, %v3243
      %v3504 = vsub.f32 0.0, %v3244
      %v3505 = vsub.f32 0.0, %v3245
      %v3506 = vsub.f32 0.0, %v3246
      %v3507 = vsub.f32 0.0, %v3247
      %v3508 = vsub.f32 0.0, %v3248
      %v3509 = vsub.f32 0.0, %v3249
      %v3510 = vsub.f32 0.0, %v3250
      %v3511 = vsub.f32 0.0, %v3251
      %v3512 = vsub.f32 0.0, %v3252
      %v3513 = vsub.f32 0.0, %v3253
      %v3514 = vsub.f32 0.0, %v3254
      %v3515 = vsub.f32 0.0, %v3255
      %v3516 = vsub.f32 0.0, %v3256
      %v3517 = vsub.f32 0.0, %v3257
      %v3518 = vsub.f32 0.0, %v3258
      %v3519 = vmul.f32 %v3499, %v3239
      %v3520 = vmul.f32 %v3500, %v3240
      %v3521 = vmul.f32 %v3501, %v3241
      %v3522 = vmul.f32 %v3502, %v3242
      %v3523 = vmul.f32 %v3503, %v3243
      %v3524 = vmul.f32 %v3504, %v3244
      %v3525 = vmul.f32 %v3505, %v3245
      %v3526 = vmul.f32 %v3506, %v3246
      %v3527 = vmul.f32 %v3507, %v3247
      %v3528 = vmul.f32 %v3508, %v3248
      %v3529 = vmul.f32 %v3509, %v3249
      %v3530 = vmul.f32 %v3510, %v3250
      %v3531 = vmul.f32 %v3511, %v3251
      %v3532 = vmul.f32 %v3512, %v3252
      %v3533 = vmul.f32 %v3513, %v3253
      %v3534 = vmul.f32 %v3514, %v3254
      %v3535 = vmul.f32 %v3515, %v3255
      %v3536 = vmul.f32 %v3516, %v3256
      %v3537 = vmul.f32 %v3517, %v3257
      %v3538 = vmul.f32 %v3518, %v3258
      %v3539 = vmul.f32 %v3519, 1.442695
      %v3540 = vpow.pop %v3539
      %v3541 = vmul.f32 %v3520, 1.442695
      %v3542 = vpow.pop %v3541
      %v3543 = vmul.f32 %v3521, 1.442695
      %v3544 = vpow.pop %v3543
      %v3545 = vmul.f32 %v3522, 1.442695
      %v3546 = vpow.pop %v3545
      %v3547 = vmul.f32 %v3523, 1.442695
      %v3548 = vpow.pop %v3547
      %v3549 = vmul.f32 %v3524, 1.442695
      %v3550 = vpow.pop %v3549
      %v3551 = vmul.f32 %v3525, 1.442695
      %v3552 = vpow.pop %v3551
      %v3553 = vmul.f32 %v3526, 1.442695
      %v3554 = vpow.pop %v3553
      %v3555 = vmul.f32 %v3527, 1.442695
      %v3556 = vpow.pop %v3555
      %v3557 = vmul.f32 %v3528, 1.442695
      %v3558 = vpow.pop %v3557
      %v3559 = vmul.f32 %v3529, 1.442695
      %v3560 = vpow.pop %v3559
      %v3561 = vmul.f32 %v3530, 1.442695
      %v3562 = vpow.pop %v3561
      %v3563 = vmul.f32 %v3531, 1.442695
      %v3564 = vpow.pop %v3563
      %v3565 = vmul.f32 %v3532, 1.442695
      %v3566 = vpow.pop %v3565
      %v3567 = vmul.f32 %v3533, 1.442695
      %v3568 = vpow.pop %v3567
      %v3569 = vmul.f32 %v3534, 1.442695
      %v3570 = vpow.pop %v3569
      %v3571 = vmul.f32 %v3535, 1.442695
      %v3572 = vpow.pop %v3571
      %v3573 = vmul.f32 %v3536, 1.442695
      %v3574 = vpow.pop %v3573
      %v3575 = vmul.f32 %v3537, 1.442695
      %v3576 = vpow.pop %v3575
      %v3577 = vmul.f32 %v3538, 1.442695
      %v3578 = vpow.pop %v3577
      %v3579 = vmul.f32 %v3479, %v3540
      %v3580 = vmul.f32 %v3480, %v3542
      %v3581 = vmul.f32 %v3481, %v3544
      %v3582 = vmul.f32 %v3482, %v3546
      %v3583 = vmul.f32 %v3483, %v3548
      %v3584 = vmul.f32 %v3484, %v3550
      %v3585 = vmul.f32 %v3485, %v3552
      %v3586 = vmul.f32 %v3486, %v3554
      %v3587 = vmul.f32 %v3487, %v3556
      %v3588 = vmul.f32 %v3488, %v3558
      %v3589 = vmul.f32 %v3489, %v3560
      %v3590 = vmul.f32 %v3490, %v3562
      %v3591 = vmul.f32 %v3491, %v3564
      %v3592 = vmul.f32 %v3492, %v3566
      %v3593 = vmul.f32 %v3493, %v3568
      %v3594 = vmul.f32 %v3494, %v3570
      %v3595 = vmul.f32 %v3495, %v3572
      %v3596 = vmul.f32 %v3496, %v3574
      %v3597 = vmul.f32 %v3497, %v3576
      %v3598 = vmul.f32 %v3498, %v3578
      %v3599 = vsub.f32 1.0, %v3579
      %v3600 = vsub.f32 1.0, %v3580
      %v3601 = vsub.f32 1.0, %v3581
      %v3602 = vsub.f32 1.0, %v3582
      %v3603 = vsub.f32 1.0, %v3583
      %v3604 = vsub.f32 1.0, %v3584
      %v3605 = vsub.f32 1.0, %v3585
      %v3606 = vsub.f32 1.0, %v3586
      %v3607 = vsub.f32 1.0, %v3587
      %v3608 = vsub.f32 1.0, %v3588
      %v3609 = vsub.f32 1.0, %v3589
      %v3610 = vsub.f32 1.0, %v3590
      %v3611 = vsub.f32 1.0, %v3591
      %v3612 = vsub.f32 1.0, %v3592
      %v3613 = vsub.f32 1.0, %v3593
      %v3614 = vsub.f32 1.0, %v3594
      %v3615 = vsub.f32 1.0, %v3595
      %v3616 = vsub.f32 1.0, %v3596
      %v3617 = vsub.f32 1.0, %v3597
      %v3618 = vsub.f32 1.0, %v3598
      %v3619 = vmul.f32 %v3219, %v3599
      %v3620 = vmul.f32 %v3220, %v3600
      %v3621 = vmul.f32 %v3221, %v3601
      %v3622 = vmul.f32 %v3222, %v3602
      %v3623 = vmul.f32 %v3223, %v3603
      %v3624 = vmul.f32 %v3224, %v3604
      %v3625 = vmul.f32 %v3225, %v3605
      %v3626 = vmul.f32 %v3226, %v3606
      %v3627 = vmul.f32 %v3227, %v3607
      %v3628 = vmul.f32 %v3228, %v3608
      %v3629 = vmul.f32 %v3229, %v3609
      %v3630 = vmul.f32 %v3230, %v3610
      %v3631 = vmul.f32 %v3231, %v3611
      %v3632 = vmul.f32 %v3232, %v3612
      %v3633 = vmul.f32 %v3233, %v3613
      %v3634 = vmul.f32 %v3234, %v3614
      %v3635 = vmul.f32 %v3235, %v3615
      %v3636 = vmul.f32 %v3236, %v3616
      %v3637 = vmul.f32 %v3237, %v3617
      %v3638 = vmul.f32 %v3238, %v3618
      %v3639 = vadd.f32 %v3619, 1.0
      %v3640 = vadd.f32 %v3620, 1.0
      %v3641 = vadd.f32 %v3621, 1.0
      %v3642 = vadd.f32 %v3622, 1.0
      %v3643 = vadd.f32 %v3623, 1.0
      %v3644 = vadd.f32 %v3624, 1.0
      %v3645 = vadd.f32 %v3625, 1.0
      %v3646 = vadd.f32 %v3626, 1.0
      %v3647 = vadd.f32 %v3627, 1.0
      %v3648 = vadd.f32 %v3628, 1.0
      %v3649 = vadd.f32 %v3629, 1.0
      %v3650 = vadd.f32 %v3630, 1.0
      %v3651 = vadd.f32 %v3631, 1.0
      %v3652 = vadd.f32 %v3632, 1.0
      %v3653 = vadd.f32 %v3633, 1.0
      %v3654 = vadd.f32 %v3634, 1.0
      %v3655 = vadd.f32 %v3635, 1.0
      %v3656 = vadd.f32 %v3636, 1.0
      %v3657 = vadd.f32 %v3637, 1.0
      %v3658 = vadd.f32 %v3638, 1.0
      %v3659 = vmul.f32 %v3159, %v3639
      %v3660 = vmul.f32 %v3160, %v3640
      %v3661 = vmul.f32 %v3161, %v3641
      %v3662 = vmul.f32 %v3162, %v3642
      %v3663 = vmul.f32 %v3163, %v3643
      %v3664 = vmul.f32 %v3164, %v3644
      %v3665 = vmul.f32 %v3165, %v3645
      %v3666 = vmul.f32 %v3166, %v3646
      %v3667 = vmul.f32 %v3167, %v3647
      %v3668 = vmul.f32 %v3168, %v3648
      %v3669 = vmul.f32 %v3169, %v3649
      %v3670 = vmul.f32 %v3170, %v3650
      %v3671 = vmul.f32 %v3171, %v3651
      %v3672 = vmul.f32 %v3172, %v3652
      %v3673 = vmul.f32 %v3173, %v3653
      %v3674 = vmul.f32 %v3174, %v3654
      %v3675 = vmul.f32 %v3175, %v3655
      %v3676 = vmul.f32 %v3176, %v3656
      %v3677 = vmul.f32 %v3177, %v3657
      %v3678 = vmul.f32 %v3178, %v3658
      %v3679 = vpack.c.bf16 %v3663, %v3659
      %v3680 = vpack.c.bf16 %v3664, %v3660
      %v3681 = vpack.c.bf16 %v3665, %v3661
      %v3682 = vpack.c.bf16 %v3666, %v3662
      %v3683 = vpack.c.bf16 %v3671, %v3667
      %v3684 = vpack.c.bf16 %v3672, %v3668
      %v3685 = vpack.c.bf16 %v3673, %v3669
      %v3686 = vpack.c.bf16 %v3674, %v3670
      %v3687 = vpack.c.bf16 %v3675, %v3675
      %v3688 = vpack.c.bf16 %v3676, %v3676
      %v3689 = vpack.c.bf16 %v3677, %v3677
      %v3690 = vpack.c.bf16 %v3678, %v3678
      %v3691 = vld [vmem:[%s13] sm:$0xf]
      %v3692 = vld [vmem:[%s13 + $0x4] sm:$0xf]
      %v3693 = vld [vmem:[%s13 + $0x8] sm:$0xf]
      %v3694 = vld [vmem:[%s13 + $0xc] sm:$0xf]
      %v3695 = vld [vmem:[%s13 + $0x10] sm:$0xf]
      %v3696 = vld [vmem:[%s13 + $0x14] sm:$0xf]
      %v3697 = vld [vmem:[%s13 + $0x18] sm:$0xf]
      %v3698 = vld [vmem:[%s13 + $0x1c] sm:$0xf]
      %v3699 = vld [vmem:[%s13 + $0x20] sm:$0xf]
      %v3700 = vld [vmem:[%s13 + $0x24] sm:$0xf]
      %v3701 = vld [vmem:[%s13 + $0x28] sm:$0xf]
      %v3702 = vld [vmem:[%s13 + $0x2c] sm:$0xf]
      %v3703 = vld [vmem:[%s13 + $0x30] sm:$0xf]
      %v3704 = vld [vmem:[%s13 + $0x34] sm:$0xf]
      %v3705 = vld [vmem:[%s13 + $0x38] sm:$0xf]
      %v3706 = vld [vmem:[%s13 + $0x3c] sm:$0xf]
      %v3707 = vld [vmem:[%s13 + $0x40] sm:$0xf]
      %v3708 = vld [vmem:[%s13 + $0x44] sm:$0xf]
      %v3709 = vld [vmem:[%s13 + $0x48] sm:$0xf]
      %v3710 = vld [vmem:[%s13 + $0x4c] sm:$0xf]
      %v3711 = vld [vmem:[%s13 + $0x50] sm:$0xf]
      %v3712 = vld [vmem:[%s13 + $0x54] sm:$0xf]
      %v3713 = vld [vmem:[%s13 + $0x58] sm:$0xf]
      %v3714 = vld [vmem:[%s13 + $0x5c] sm:$0xf]
      %v3715 = vld [vmem:[%s13 + $0x60] sm:$0xf]
      %v3716 = vld [vmem:[%s13 + $0x64] sm:$0xf]
      %v3717 = vld [vmem:[%s13 + $0x68] sm:$0xf]
      %v3718 = vld [vmem:[%s13 + $0x6c] sm:$0xf]
      %v3719 = vld [vmem:[%s13 + $0x70] sm:$0xf]
      %v3720 = vld [vmem:[%s13 + $0x74] sm:$0xf]
      %v3721 = vld [vmem:[%s13 + $0x78] sm:$0xf]
      %v3722 = vld [vmem:[%s13 + $0x7c] sm:$0xf]
      %v3723 = vld [vmem:[%s13 + $0x80] sm:$0xf]
      %v3724 = vld [vmem:[%s13 + $0x84] sm:$0xf]
      %v3725 = vld [vmem:[%s13 + $0x88] sm:$0xf]
      %v3726 = vld [vmem:[%s13 + $0x8c] sm:$0xf]
      %v3727 = vld [vmem:[%s13 + $0x90] sm:$0xf]
      %v3728 = vld [vmem:[%s13 + $0x94] sm:$0xf]
      %v3729 = vld [vmem:[%s13 + $0x98] sm:$0xf]
      %v3730 = vld [vmem:[%s13 + $0x9c] sm:$0xf]
      %v3731 = vld [vmem:[%s13 + $0xa0] sm:$0xf]
      %v3732 = vld [vmem:[%s13 + $0xa4] sm:$0xf]
      %v3733 = vld [vmem:[%s13 + $0xa8] sm:$0xf]
      %v3734 = vld [vmem:[%s13 + $0xac] sm:$0xf]
      %v3735 = vld [vmem:[%s13 + $0xb0] sm:$0xf]
      %v3736 = vld [vmem:[%s13 + $0xb4] sm:$0xf]
      %v3737 = vld [vmem:[%s13 + $0xb8] sm:$0xf]
      %v3738 = vld [vmem:[%s13 + $0xbc] sm:$0xf]
      %v3739 = vld [vmem:[%s13 + $0xc0] sm:$0xf]
      %v3740 = vld [vmem:[%s13 + $0xc4] sm:$0xf]
      %v3741 = vld [vmem:[%s13 + $0xc8] sm:$0xf]
      %v3742 = vld [vmem:[%s13 + $0xcc] sm:$0xf]
      %v3743 = vld [vmem:[%s13 + $0xd0] sm:$0xf]
      %v3744 = vld [vmem:[%s13 + $0xd4] sm:$0xf]
      %v3745 = vld [vmem:[%s13 + $0xd8] sm:$0xf]
      %v3746 = vld [vmem:[%s13 + $0xdc] sm:$0xf]
      %v3747 = vld [vmem:[%s13 + $0xe0] sm:$0xf]
      %v3748 = vld [vmem:[%s13 + $0xe4] sm:$0xf]
      %v3749 = vld [vmem:[%s13 + $0xe8] sm:$0xf]
      %v3750 = vld [vmem:[%s13 + $0xec] sm:$0xf]
      %v3751 = vld [vmem:[%s13 + $0xf0] sm:$0xf]
      %v3752 = vld [vmem:[%s13 + $0xf4] sm:$0xf]
      %v3753 = vld [vmem:[%s13 + $0xf8] sm:$0xf]
      %v3754 = vld [vmem:[%s13 + $0xfc] sm:$0xf]
      %v3819 = vunpack.c.l.b16 %v3691
      %v3820 = vunpack.c.l.b16 %v3692
      %v3821 = vunpack.c.l.b16 %v3693
      %v3822 = vunpack.c.l.b16 %v3694
      %v3823 = vunpack.c.l.b16 %v3695
      %v3824 = vunpack.c.l.b16 %v3696
      %v3825 = vunpack.c.l.b16 %v3697
      %v3826 = vunpack.c.l.b16 %v3698
      %v3827 = vunpack.c.l.b16 %v3699
      %v3828 = vunpack.c.l.b16 %v3700
      %v3829 = vunpack.c.l.b16 %v3701
      %v3830 = vunpack.c.l.b16 %v3702
      %v3831 = vunpack.c.l.b16 %v3703
      %v3832 = vunpack.c.l.b16 %v3704
      %v3833 = vunpack.c.l.b16 %v3705
      %v3834 = vunpack.c.l.b16 %v3706
      %v3835 = vunpack.c.l.b16 %v3707
      %v3836 = vunpack.c.l.b16 %v3708
      %v3837 = vunpack.c.l.b16 %v3709
      %v3838 = vunpack.c.l.b16 %v3710
      %v3839 = vunpack.c.l.b16 %v3711
      %v3840 = vunpack.c.l.b16 %v3712
      %v3841 = vunpack.c.l.b16 %v3713
      %v3842 = vunpack.c.l.b16 %v3714
      %v3843 = vunpack.c.l.b16 %v3715
      %v3844 = vunpack.c.l.b16 %v3716
      %v3845 = vunpack.c.l.b16 %v3717
      %v3846 = vunpack.c.l.b16 %v3718
      %v3847 = vunpack.c.l.b16 %v3719
      %v3848 = vunpack.c.l.b16 %v3720
      %v3849 = vunpack.c.l.b16 %v3721
      %v3850 = vunpack.c.l.b16 %v3722
      %v3851 = vunpack.c.l.b16 %v3723
      %v3852 = vunpack.c.l.b16 %v3724
      %v3853 = vunpack.c.l.b16 %v3725
      %v3854 = vunpack.c.l.b16 %v3726
      %v3855 = vunpack.c.l.b16 %v3727
      %v3856 = vunpack.c.l.b16 %v3728
      %v3857 = vunpack.c.l.b16 %v3729
      %v3858 = vunpack.c.l.b16 %v3730
      %v3859 = vunpack.c.l.b16 %v3731
      %v3860 = vunpack.c.l.b16 %v3732
      %v3861 = vunpack.c.l.b16 %v3733
      %v3862 = vunpack.c.l.b16 %v3734
      %v3863 = vunpack.c.l.b16 %v3735
      %v3864 = vunpack.c.l.b16 %v3736
      %v3865 = vunpack.c.l.b16 %v3737
      %v3866 = vunpack.c.l.b16 %v3738
      %v3867 = vunpack.c.l.b16 %v3739
      %v3868 = vunpack.c.l.b16 %v3740
      %v3869 = vunpack.c.l.b16 %v3741
      %v3870 = vunpack.c.l.b16 %v3742
      %v3871 = vunpack.c.l.b16 %v3743
      %v3872 = vunpack.c.l.b16 %v3744
      %v3873 = vunpack.c.l.b16 %v3745
      %v3874 = vunpack.c.l.b16 %v3746
      %v3875 = vunpack.c.l.b16 %v3747
      %v3876 = vunpack.c.l.b16 %v3748
      %v3877 = vunpack.c.l.b16 %v3749
      %v3878 = vunpack.c.l.b16 %v3750
      %v3879 = vunpack.c.l.b16 %v3751
      %v3880 = vunpack.c.l.b16 %v3752
      %v3881 = vunpack.c.l.b16 %v3753
      %v3882 = vunpack.c.l.b16 %v3754
      %v3883 = vpack.c.b16 %v3820, %v3819
      %v3884 = vpack.c.b16 %v3822, %v3821
      %v3885 = vpack.c.b16 %v3824, %v3823
      %v3886 = vpack.c.b16 %v3826, %v3825
      %v3887 = vpack.c.b16 %v3828, %v3827
      %v3888 = vpack.c.b16 %v3830, %v3829
      %v3889 = vpack.c.b16 %v3832, %v3831
      %v3890 = vpack.c.b16 %v3834, %v3833
      %v3891 = vpack.c.b16 %v3836, %v3835
      %v3892 = vpack.c.b16 %v3838, %v3837
      %v3893 = vpack.c.b16 %v3840, %v3839
      %v3894 = vpack.c.b16 %v3842, %v3841
      %v3895 = vpack.c.b16 %v3844, %v3843
      %v3896 = vpack.c.b16 %v3846, %v3845
      %v3897 = vpack.c.b16 %v3848, %v3847
      %v3898 = vpack.c.b16 %v3850, %v3849
      %v3899 = vpack.c.b16 %v3852, %v3851
      %v3900 = vpack.c.b16 %v3854, %v3853
      %v3901 = vpack.c.b16 %v3856, %v3855
      %v3902 = vpack.c.b16 %v3858, %v3857
      %v3903 = vpack.c.b16 %v3860, %v3859
      %v3904 = vpack.c.b16 %v3862, %v3861
      %v3905 = vpack.c.b16 %v3864, %v3863
      %v3906 = vpack.c.b16 %v3866, %v3865
      %v3907 = vpack.c.b16 %v3868, %v3867
      %v3908 = vpack.c.b16 %v3870, %v3869
      %v3909 = vpack.c.b16 %v3872, %v3871
      %v3910 = vpack.c.b16 %v3874, %v3873
      %v3911 = vpack.c.b16 %v3876, %v3875
      %v3912 = vpack.c.b16 %v3878, %v3877
      %v3913 = vpack.c.b16 %v3880, %v3879
      %v3914 = vpack.c.b16 %v3882, %v3881
      %3947 = vmatpush.bf16.msra.mxu0 %v3890
      %3948 = vmatpush.bf16.msra.mxu0 %v3889
      %3949 = vmatpush.bf16.msra.mxu0 %v3888
      %3950 = vmatpush.bf16.msra.mxu0 %v3887
      %3951 = vmatpush.bf16.msra.mxu0 %v3886
      %3952 = vmatpush.bf16.msra.mxu0 %v3885
      %3953 = vmatpush.bf16.msra.mxu0 %v3884
      %3954 = vmatpush.bf16.msra.mxu0 %v3883
      %3955 = vmatmul.bf16.gmra.mxu0 %v3679
      %v3956 = vpop.f32.mrf.mxu0
      %v3957 = vadd.f32 0.0, %v3956
      %v3958 = vpop.f32.mrf.mxu0
      %v3959 = vadd.f32 0.0, %v3958
      %3960 = vmatmul.bf16.gmra.mxu0 %v3683
      %v3961 = vpop.f32.mrf.mxu0
      %v3962 = vadd.f32 0.0, %v3961
      %v3963 = vpop.f32.mrf.mxu0
      %v3964 = vadd.f32 0.0, %v3963
      %3965 = vmatmul.bf16.gmra.mxu0 %v3687
      %v3966 = vpop.f32.mrf.mxu0
      %v3967 = vadd.f32 0.0, %v3966
      %v3968 = vpop.f32.mrf.mxu0
      %3969 = vdwg.mxu0
      %3970 = vmatpush.bf16.msra.mxu0 %v3898
      %3971 = vmatpush.bf16.msra.mxu0 %v3897
      %3972 = vmatpush.bf16.msra.mxu0 %v3896
      %3973 = vmatpush.bf16.msra.mxu0 %v3895
      %3974 = vmatpush.bf16.msra.mxu0 %v3894
      %3975 = vmatpush.bf16.msra.mxu0 %v3893
      %3976 = vmatpush.bf16.msra.mxu0 %v3892
      %3977 = vmatpush.bf16.msra.mxu0 %v3891
      %3978 = vmatmul.bf16.gmra.mxu0 %v3680
      %v3979 = vpop.f32.mrf.mxu0
      %v3980 = vadd.f32 %v3957, %v3979
      %v3981 = vpop.f32.mrf.mxu0
      %v3982 = vadd.f32 %v3959, %v3981
      %3983 = vmatmul.bf16.gmra.mxu0 %v3684
      %v3984 = vpop.f32.mrf.mxu0
      %v3985 = vadd.f32 %v3962, %v3984
      %v3986 = vpop.f32.mrf.mxu0
      %v3987 = vadd.f32 %v3964, %v3986
      %3988 = vmatmul.bf16.gmra.mxu0 %v3688
      %v3989 = vpop.f32.mrf.mxu0
      %v3990 = vadd.f32 %v3967, %v3989
      %v3991 = vpop.f32.mrf.mxu0
      %3992 = vdwg.mxu0
      %3993 = vmatpush.bf16.msra.mxu0 %v3906
      %3994 = vmatpush.bf16.msra.mxu0 %v3905
      %3995 = vmatpush.bf16.msra.mxu0 %v3904
      %3996 = vmatpush.bf16.msra.mxu0 %v3903
      %3997 = vmatpush.bf16.msra.mxu0 %v3902
      %3998 = vmatpush.bf16.msra.mxu0 %v3901
      %3999 = vmatpush.bf16.msra.mxu0 %v3900
      %4000 = vmatpush.bf16.msra.mxu0 %v3899
      %4001 = vmatmul.bf16.gmra.mxu0 %v3681
      %v4002 = vpop.f32.mrf.mxu0
      %v4003 = vadd.f32 %v3980, %v4002
      %v4004 = vpop.f32.mrf.mxu0
      %v4005 = vadd.f32 %v3982, %v4004
      %4006 = vmatmul.bf16.gmra.mxu0 %v3685
      %v4007 = vpop.f32.mrf.mxu0
      %v4008 = vadd.f32 %v3985, %v4007
      %v4009 = vpop.f32.mrf.mxu0
      %v4010 = vadd.f32 %v3987, %v4009
      %4011 = vmatmul.bf16.gmra.mxu0 %v3689
      %v4012 = vpop.f32.mrf.mxu0
      %v4013 = vadd.f32 %v3990, %v4012
      %v4014 = vpop.f32.mrf.mxu0
      %4015 = vdwg.mxu0
      %4016 = vmatpush.bf16.msra.mxu0 %v3914
      %4017 = vmatpush.bf16.msra.mxu0 %v3913
      %4018 = vmatpush.bf16.msra.mxu0 %v3912
      %4019 = vmatpush.bf16.msra.mxu0 %v3911
      %4020 = vmatpush.bf16.msra.mxu0 %v3910
      %4021 = vmatpush.bf16.msra.mxu0 %v3909
      %4022 = vmatpush.bf16.msra.mxu0 %v3908
      %4023 = vmatpush.bf16.msra.mxu0 %v3907
      %4024 = vmatmul.bf16.gmra.mxu0 %v3682
      %v4025 = vpop.f32.mrf.mxu0
      %v4026 = vadd.f32 %v4003, %v4025
      %v4027 = vpop.f32.mrf.mxu0
      %v4028 = vadd.f32 %v4005, %v4027
      %4029 = vmatmul.bf16.gmra.mxu0 %v3686
      %v4030 = vpop.f32.mrf.mxu0
      %v4031 = vadd.f32 %v4008, %v4030
      %v4032 = vpop.f32.mrf.mxu0
      %v4033 = vadd.f32 %v4010, %v4032
      %4034 = vmatmul.bf16.gmra.mxu0 %v3690
      %v4035 = vpop.f32.mrf.mxu0
      %v4036 = vadd.f32 %v4013, %v4035
      %v4037 = vpop.f32.mrf.mxu0
      %4038 = vdwg.mxu0
      %v4039 = vadd.f32 %v2739, %v4026
      %v4040 = vadd.f32 %v2740, %v4028
      %v4041 = vadd.f32 %v2741, %v4031
      %v4042 = vadd.f32 %v2742, %v4033
      %v4043 = vadd.f32 %v2743, %v4036
      %v4044 = vld [vmem:[%s14] sm:$0x1]
      %v4046 = vperm.slane %v4044, 0
      %v4048 = vadd.f32 %v4039, %v4046
      %v4049 = vadd.f32 %v4040, %v4046
      %v4050 = vadd.f32 %v4041, %v4046
      %v4051 = vadd.f32 %v4042, %v4046
      %v4052 = vadd.f32 %v4043, %v4046
      %s4053 = scalar_lea.vmem %s3, 1
      %v4054 = vld [vmem:[%s4053] sm:$0x1]
      %s4055 = scalar_lea.vmem %s4, 1
      %v4056 = vld [vmem:[%s4055] sm:$0x1]
      %4057 = vadd.xlane.f32.xlu0 %v4048
      %v4058 = vpop.xlane.xlu0 %4057
      %4059 = vadd.xlane.f32.xlu0 %v4049
      %v4060 = vpop.xlane.xlu0 %4059
      %4061 = vadd.xlane.f32.xlu0 %v4050
      %v4062 = vpop.xlane.xlu0 %4061
      %4063 = vadd.xlane.f32.xlu0 %v4051
      %v4064 = vpop.xlane.xlu0 %4063
      %4065 = vadd.xlane.f32.xlu0 %v4052
      %v4066 = vpop.xlane.xlu0 %4065
      %v4067 = vmul.f32 %v4058, %v1245
      %v4068 = vmul.f32 %v4060, %v1245
      %v4069 = vmul.f32 %v4062, %v1245
      %v4070 = vmul.f32 %v4064, %v1245
      %v4071 = vmul.f32 %v4066, %v1245
      %v4072 = vsub.f32 %v4048, %v4067
      %v4073 = vsub.f32 %v4049, %v4068
      %v4074 = vsub.f32 %v4050, %v4069
      %v4075 = vsub.f32 %v4051, %v4070
      %v4076 = vsub.f32 %v4052, %v4071
      %v4077 = vmul.f32 %v4072, %v4072
      %v4078 = vmul.f32 %v4073, %v4073
      %v4079 = vmul.f32 %v4074, %v4074
      %v4080 = vmul.f32 %v4075, %v4075
      %v4081 = vmul.f32 %v4076, %v4076
      %4082 = vadd.xlane.f32.xlu0 %v4077
      %v4083 = vpop.xlane.xlu0 %4082
      %4084 = vadd.xlane.f32.xlu0 %v4078
      %v4085 = vpop.xlane.xlu0 %4084
      %4086 = vadd.xlane.f32.xlu0 %v4079
      %v4087 = vpop.xlane.xlu0 %4086
      %4088 = vadd.xlane.f32.xlu0 %v4080
      %v4089 = vpop.xlane.xlu0 %4088
      %4090 = vadd.xlane.f32.xlu0 %v4081
      %v4091 = vpop.xlane.xlu0 %4090
      %v4092 = vmul.f32 %v4083, %v1245
      %v4093 = vmul.f32 %v4085, %v1245
      %v4094 = vmul.f32 %v4087, %v1245
      %v4095 = vmul.f32 %v4089, %v1245
      %v4096 = vmul.f32 %v4091, %v1245
      %v4097 = vadd.f32 %v4092, 1e-06
      %v4098 = vadd.f32 %v4093, 1e-06
      %v4099 = vadd.f32 %v4094, 1e-06
      %v4100 = vadd.f32 %v4095, 1e-06
      %v4101 = vadd.f32 %v4096, 1e-06
      %v4102 = vrsqrt.pop %v4097
      %v4103 = vmul.f32 %v4102, %v4097
      %v4104 = vmul.f32 %v4103, %v4102
      %v4105 = vmul.f32 0.5, %v4104
      %v4106 = vsub.f32 1.5, %v4105
      %v4107 = vmul.f32 %v4102, %v4106
      %vm4108 = vweird.f32 %v4097
      %vm4109 = vweird.f32 %v4102
      %vm4110 = vmor %vm4108, %vm4109
      %v4111 = vsel %vm4110, %v4102, %v4107
      %v4112 = vrsqrt.pop %v4098
      %v4113 = vmul.f32 %v4112, %v4098
      %v4114 = vmul.f32 %v4113, %v4112
      %v4115 = vmul.f32 0.5, %v4114
      %v4116 = vsub.f32 1.5, %v4115
      %v4117 = vmul.f32 %v4112, %v4116
      %vm4118 = vweird.f32 %v4098
      %vm4119 = vweird.f32 %v4112
      %vm4120 = vmor %vm4118, %vm4119
      %v4121 = vsel %vm4120, %v4112, %v4117
      %v4122 = vrsqrt.pop %v4099
      %v4123 = vmul.f32 %v4122, %v4099
      %v4124 = vmul.f32 %v4123, %v4122
      %v4125 = vmul.f32 0.5, %v4124
      %v4126 = vsub.f32 1.5, %v4125
      %v4127 = vmul.f32 %v4122, %v4126
      %vm4128 = vweird.f32 %v4099
      %vm4129 = vweird.f32 %v4122
      %vm4130 = vmor %vm4128, %vm4129
      %v4131 = vsel %vm4130, %v4122, %v4127
      %v4132 = vrsqrt.pop %v4100
      %v4133 = vmul.f32 %v4132, %v4100
      %v4134 = vmul.f32 %v4133, %v4132
      %v4135 = vmul.f32 0.5, %v4134
      %v4136 = vsub.f32 1.5, %v4135
      %v4137 = vmul.f32 %v4132, %v4136
      %vm4138 = vweird.f32 %v4100
      %vm4139 = vweird.f32 %v4132
      %vm4140 = vmor %vm4138, %vm4139
      %v4141 = vsel %vm4140, %v4132, %v4137
      %v4142 = vrsqrt.pop %v4101
      %v4143 = vmul.f32 %v4142, %v4101
      %v4144 = vmul.f32 %v4143, %v4142
      %v4145 = vmul.f32 0.5, %v4144
      %v4146 = vsub.f32 1.5, %v4145
      %v4147 = vmul.f32 %v4142, %v4146
      %vm4148 = vweird.f32 %v4101
      %vm4149 = vweird.f32 %v4142
      %vm4150 = vmor %vm4148, %vm4149
      %v4151 = vsel %vm4150, %v4142, %v4147
      %v4152 = vmul.f32 %v4072, %v4111
      %v4153 = vmul.f32 %v4073, %v4121
      %v4154 = vmul.f32 %v4074, %v4131
      %v4155 = vmul.f32 %v4075, %v4141
      %v4156 = vmul.f32 %v4076, %v4151
      %v4158 = vperm.slane %v4054, 0
      %v4160 = vmul.f32 %v4152, %v4158
      %v4161 = vmul.f32 %v4153, %v4158
      %v4162 = vmul.f32 %v4154, %v4158
      %v4163 = vmul.f32 %v4155, %v4158
      %v4164 = vmul.f32 %v4156, %v4158
      %v4166 = vperm.slane %v4056, 0
      %v4168 = vadd.f32 %v4160, %v4166
      %v4169 = vadd.f32 %v4161, %v4166
      %v4170 = vadd.f32 %v4162, %v4166
      %v4171 = vadd.f32 %v4163, %v4166
      %v4172 = vadd.f32 %v4164, %v4166
      %v4173 = vpack.c.bf16 %v4169, %v4168
      %v4174 = vpack.c.bf16 %v4171, %v4170
      %v4175 = vpack.c.bf16 %v4172, %v4172
      %s4176 = scalar_lea.vmem %s5, 192
      %v4177 = vld [vmem:[%s4176] sm:$0xff]
      %v4178 = vld [vmem:[%s4176 + $0x8] sm:$0xf]
      %v4179 = vld [vmem:[%s4176 + $0xc] sm:$0xff]
      %v4180 = vld [vmem:[%s4176 + $0x14] sm:$0xf]
      %v4181 = vld [vmem:[%s4176 + $0x18] sm:$0xff]
      %v4182 = vld [vmem:[%s4176 + $0x20] sm:$0xf]
      %v4183 = vld [vmem:[%s4176 + $0x24] sm:$0xff]
      %v4184 = vld [vmem:[%s4176 + $0x2c] sm:$0xf]
      %v4185 = vld [vmem:[%s4176 + $0x30] sm:$0xff]
      %v4186 = vld [vmem:[%s4176 + $0x38] sm:$0xf]
      %v4187 = vld [vmem:[%s4176 + $0x3c] sm:$0xff]
      %v4188 = vld [vmem:[%s4176 + $0x44] sm:$0xf]
      %v4189 = vld [vmem:[%s4176 + $0x48] sm:$0xff]
      %v4190 = vld [vmem:[%s4176 + $0x50] sm:$0xf]
      %v4191 = vld [vmem:[%s4176 + $0x54] sm:$0xff]
      %v4192 = vld [vmem:[%s4176 + $0x5c] sm:$0xf]
      %v4193 = vld [vmem:[%s4176 + $0x60] sm:$0xff]
      %v4194 = vld [vmem:[%s4176 + $0x68] sm:$0xf]
      %v4195 = vld [vmem:[%s4176 + $0x6c] sm:$0xff]
      %v4196 = vld [vmem:[%s4176 + $0x74] sm:$0xf]
      %v4197 = vld [vmem:[%s4176 + $0x78] sm:$0xff]
      %v4198 = vld [vmem:[%s4176 + $0x80] sm:$0xf]
      %v4199 = vld [vmem:[%s4176 + $0x84] sm:$0xff]
      %v4200 = vld [vmem:[%s4176 + $0x8c] sm:$0xf]
      %v4201 = vld [vmem:[%s4176 + $0x90] sm:$0xff]
      %v4202 = vld [vmem:[%s4176 + $0x98] sm:$0xf]
      %v4203 = vld [vmem:[%s4176 + $0x9c] sm:$0xff]
      %v4204 = vld [vmem:[%s4176 + $0xa4] sm:$0xf]
      %v4205 = vld [vmem:[%s4176 + $0xa8] sm:$0xff]
      %v4206 = vld [vmem:[%s4176 + $0xb0] sm:$0xf]
      %v4207 = vld [vmem:[%s4176 + $0xb4] sm:$0xff]
      %v4208 = vld [vmem:[%s4176 + $0xbc] sm:$0xf]
      %s4209 = scalar_lea.vmem %s6, 3
      %v4210 = vld [vmem:[%s4209] sm:$0x7]
      %v4212 = vperm.slane %v4210, 0
      %v4213 = vperm.slane %v4210, 1
      %v4214 = vperm.slane %v4210, 2
      %v4250 = vunpack.c.l.b16 %v4177
      %v4251 = vunpack.c.h.b16 %v4177
      %v4252 = vunpack.c.l.b16 %v4178
      %v4253 = vunpack.c.l.b16 %v4179
      %v4254 = vunpack.c.h.b16 %v4179
      %v4255 = vunpack.c.l.b16 %v4180
      %v4256 = vunpack.c.l.b16 %v4181
      %v4257 = vunpack.c.h.b16 %v4181
      %v4258 = vunpack.c.l.b16 %v4182
      %v4259 = vunpack.c.l.b16 %v4183
      %v4260 = vunpack.c.h.b16 %v4183
      %v4261 = vunpack.c.l.b16 %v4184
      %v4262 = vunpack.c.l.b16 %v4185
      %v4263 = vunpack.c.h.b16 %v4185
      %v4264 = vunpack.c.l.b16 %v4186
      %v4265 = vunpack.c.l.b16 %v4187
      %v4266 = vunpack.c.h.b16 %v4187
      %v4267 = vunpack.c.l.b16 %v4188
      %v4268 = vunpack.c.l.b16 %v4189
      %v4269 = vunpack.c.h.b16 %v4189
      %v4270 = vunpack.c.l.b16 %v4190
      %v4271 = vunpack.c.l.b16 %v4191
      %v4272 = vunpack.c.h.b16 %v4191
      %v4273 = vunpack.c.l.b16 %v4192
      %v4274 = vunpack.c.l.b16 %v4193
      %v4275 = vunpack.c.h.b16 %v4193
      %v4276 = vunpack.c.l.b16 %v4194
      %v4277 = vunpack.c.l.b16 %v4195
      %v4278 = vunpack.c.h.b16 %v4195
      %v4279 = vunpack.c.l.b16 %v4196
      %v4280 = vunpack.c.l.b16 %v4197
      %v4281 = vunpack.c.h.b16 %v4197
      %v4282 = vunpack.c.l.b16 %v4198
      %v4283 = vunpack.c.l.b16 %v4199
      %v4284 = vunpack.c.h.b16 %v4199
      %v4285 = vunpack.c.l.b16 %v4200
      %v4286 = vunpack.c.l.b16 %v4201
      %v4287 = vunpack.c.h.b16 %v4201
      %v4288 = vunpack.c.l.b16 %v4202
      %v4289 = vunpack.c.l.b16 %v4203
      %v4290 = vunpack.c.h.b16 %v4203
      %v4291 = vunpack.c.l.b16 %v4204
      %v4292 = vunpack.c.l.b16 %v4205
      %v4293 = vunpack.c.h.b16 %v4205
      %v4294 = vunpack.c.l.b16 %v4206
      %v4295 = vunpack.c.l.b16 %v4207
      %v4296 = vunpack.c.h.b16 %v4207
      %v4297 = vunpack.c.l.b16 %v4208
      %v4298 = vpack.c.b16 %v4253, %v4250
      %v4299 = vpack.c.b16 %v4254, %v4251
      %v4300 = vpack.c.b16 %v4255, %v4252
      %v4301 = vpack.c.b16 %v4259, %v4256
      %v4302 = vpack.c.b16 %v4260, %v4257
      %v4303 = vpack.c.b16 %v4261, %v4258
      %v4304 = vpack.c.b16 %v4265, %v4262
      %v4305 = vpack.c.b16 %v4266, %v4263
      %v4306 = vpack.c.b16 %v4267, %v4264
      %v4307 = vpack.c.b16 %v4271, %v4268
      %v4308 = vpack.c.b16 %v4272, %v4269
      %v4309 = vpack.c.b16 %v4273, %v4270
      %v4310 = vpack.c.b16 %v4277, %v4274
      %v4311 = vpack.c.b16 %v4278, %v4275
      %v4312 = vpack.c.b16 %v4279, %v4276
      %v4313 = vpack.c.b16 %v4283, %v4280
      %v4314 = vpack.c.b16 %v4284, %v4281
      %v4315 = vpack.c.b16 %v4285, %v4282
      %v4316 = vpack.c.b16 %v4289, %v4286
      %v4317 = vpack.c.b16 %v4290, %v4287
      %v4318 = vpack.c.b16 %v4291, %v4288
      %v4319 = vpack.c.b16 %v4295, %v4292
      %v4320 = vpack.c.b16 %v4296, %v4293
      %v4321 = vpack.c.b16 %v4297, %v4294
      %4346 = vmatpush.bf16.msra.mxu0 %v4319
      %4347 = vmatpush.bf16.msra.mxu0 %v4316
      %4348 = vmatpush.bf16.msra.mxu0 %v4313
      %4349 = vmatpush.bf16.msra.mxu0 %v4310
      %4350 = vmatpush.bf16.msra.mxu0 %v4307
      %4351 = vmatpush.bf16.msra.mxu0 %v4304
      %4352 = vmatpush.bf16.msra.mxu0 %v4301
      %4353 = vmatpush.bf16.msra.mxu0 %v4298
      %4354 = vmatmul.bf16.gmra.mxu0 %v4173
      %v4355 = vpop.f32.mrf.mxu0
      %v4356 = vadd.f32 %v4212, %v4355
      %v4357 = vpop.f32.mrf.mxu0
      %v4358 = vadd.f32 %v4212, %v4357
      %4359 = vmatmul.bf16.gmra.mxu0 %v4174
      %v4360 = vpop.f32.mrf.mxu0
      %v4361 = vadd.f32 %v4212, %v4360
      %v4362 = vpop.f32.mrf.mxu0
      %v4363 = vadd.f32 %v4212, %v4362
      %4364 = vmatmul.bf16.gmra.mxu0 %v4175
      %v4365 = vpop.f32.mrf.mxu0
      %v4366 = vadd.f32 %v4212, %v4365
      %v4367 = vpop.f32.mrf.mxu0
      %4368 = vdwg.mxu0
      %4369 = vmatpush.bf16.msra.mxu0 %v4320
      %4370 = vmatpush.bf16.msra.mxu0 %v4317
      %4371 = vmatpush.bf16.msra.mxu0 %v4314
      %4372 = vmatpush.bf16.msra.mxu0 %v4311
      %4373 = vmatpush.bf16.msra.mxu0 %v4308
      %4374 = vmatpush.bf16.msra.mxu0 %v4305
      %4375 = vmatpush.bf16.msra.mxu0 %v4302
      %4376 = vmatpush.bf16.msra.mxu0 %v4299
      %4377 = vmatmul.bf16.gmra.mxu0 %v4173
      %v4378 = vpop.f32.mrf.mxu0
      %v4379 = vadd.f32 %v4213, %v4378
      %v4380 = vpop.f32.mrf.mxu0
      %v4381 = vadd.f32 %v4213, %v4380
      %4382 = vmatmul.bf16.gmra.mxu0 %v4174
      %v4383 = vpop.f32.mrf.mxu0
      %v4384 = vadd.f32 %v4213, %v4383
      %v4385 = vpop.f32.mrf.mxu0
      %v4386 = vadd.f32 %v4213, %v4385
      %4387 = vmatmul.bf16.gmra.mxu0 %v4175
      %v4388 = vpop.f32.mrf.mxu0
      %v4389 = vadd.f32 %v4213, %v4388
      %v4390 = vpop.f32.mrf.mxu0
      %4391 = vdwg.mxu0
      %4392 = vmatpush.bf16.msra.mxu0 %v4321
      %4393 = vmatpush.bf16.msra.mxu0 %v4318
      %4394 = vmatpush.bf16.msra.mxu0 %v4315
      %4395 = vmatpush.bf16.msra.mxu0 %v4312
      %4396 = vmatpush.bf16.msra.mxu0 %v4309
      %4397 = vmatpush.bf16.msra.mxu0 %v4306
      %4398 = vmatpush.bf16.msra.mxu0 %v4303
      %4399 = vmatpush.bf16.msra.mxu0 %v4300
      %4400 = vmatmul.bf16.gmra.mxu0 %v4173
      %v4401 = vpop.f32.mrf.mxu0
      %v4402 = vadd.f32 %v4214, %v4401
      %v4403 = vpop.f32.mrf.mxu0
      %v4404 = vadd.f32 %v4214, %v4403
      %4405 = vmatmul.bf16.gmra.mxu0 %v4174
      %v4406 = vpop.f32.mrf.mxu0
      %v4407 = vadd.f32 %v4214, %v4406
      %v4408 = vpop.f32.mrf.mxu0
      %v4409 = vadd.f32 %v4214, %v4408
      %4410 = vmatmul.bf16.gmra.mxu0 %v4175
      %v4411 = vpop.f32.mrf.mxu0
      %v4412 = vadd.f32 %v4214, %v4411
      %v4413 = vpop.f32.mrf.mxu0
      %4414 = vdwg.mxu0
      %v4415 = vpack.c.bf16 %v4356, %v4356
      %v4416 = vpack.c.bf16 %v4379, %v4379
      %v4417 = vpack.c.bf16 %v4402, %v4402
      %v4419 = vsel %vm1595, %v4415, 0
      %v4422 = vsel %vm1595, %v4416, 0
      %4424 = vmatpush.bf16.xpose.msra.mxu0 0
      %4425 = vmatpush.bf16.xpose.msra.mxu0 0
      %4426 = vmatpush.bf16.xpose.msra.mxu0 0
      %4427 = vmatpush.bf16.xpose.msra.mxu0 0
      %4428 = vmatpush.bf16.xpose.msra.mxu0 0
      %4429 = vmatpush.bf16.xpose.msra.mxu0 0
      %4430 = vmatpush.bf16.xpose.msra.mxu0 0
      %4431 = vmatpush.bf16.xpose.msra.mxu0 %v4422
      %4432 = vmatmul.bf16.gmra.mxu0 %v4419
      %v4433 = vpop.f32.mrf.mxu0
      %v4434 = vadd.f32 0.0, %v4433
      %v4435 = vpop.f32.mrf.mxu0
      %4436 = vdwg.mxu0
      %v4437 = vsel %vm1615, %v4434, -inf
      %4438 = vmax.xlane.f32.xlu0 %v4437
      %v4439 = vpop.xlane.xlu0 %4438
      %v4440 = vsub.f32 %v4434, %v4439
      %v4441 = vmul.f32 %v4440, 1.442695
      %v4442 = vpow.pop %v4441
      %v4443 = vsel %vm1615, %v4442, 0.0
      %4444 = vadd.xlane.f32.xlu0 %v4443
      %v4445 = vpop.xlane.xlu0 %4444
      %v4446 = vrcp.pop %v4445
      %v4447 = vmul.f32 %v4442, %v4446
      %v4448 = vpack.c.bf16 %v4447, %v4447
      %v4450 = vsel %vm1628, %v4448, 0
      %v4453 = vand.u32 %v4417, %v1635
      %4455 = vmatpush.bf16.msra.mxu0 0
      %4456 = vmatpush.bf16.msra.mxu0 0
      %4457 = vmatpush.bf16.msra.mxu0 0
      %4458 = vmatpush.bf16.msra.mxu0 0
      %4459 = vmatpush.bf16.msra.mxu0 0
      %4460 = vmatpush.bf16.msra.mxu0 0
      %4461 = vmatpush.bf16.msra.mxu0 0
      %4462 = vmatpush.bf16.msra.mxu0 %v4453
      %4463 = vmatmul.bf16.gmra.mxu0 %v4450
      %v4464 = vpop.f32.mrf.mxu0
      %v4465 = vadd.f32 0.0, %v4464
      %v4466 = vpop.f32.mrf.mxu0
      %4467 = vdwg.mxu0
      %4468 = vst.msk [vmem:[#allocation2] sm:$0x1f] %vm1652, %v4465
      %4470 = vrot.lane.b32.xlu0 %v4415, 64
      %v4471 = vpop.permute.xlu0 %4470
      %4473 = vrot.lane.b32.xlu0 %v4416, 64
      %v4474 = vpop.permute.xlu0 %4473
      %v4476 = vsel %vm1595, %v4471, 0
      %v4479 = vsel %vm1595, %v4474, 0
      %4481 = vmatpush.bf16.xpose.msra.mxu0 0
      %4482 = vmatpush.bf16.xpose.msra.mxu0 0
      %4483 = vmatpush.bf16.xpose.msra.mxu0 0
      %4484 = vmatpush.bf16.xpose.msra.mxu0 0
      %4485 = vmatpush.bf16.xpose.msra.mxu0 0
      %4486 = vmatpush.bf16.xpose.msra.mxu0 0
      %4487 = vmatpush.bf16.xpose.msra.mxu0 0
      %4488 = vmatpush.bf16.xpose.msra.mxu0 %v4479
      %4489 = vmatmul.bf16.gmra.mxu0 %v4476
      %v4490 = vpop.f32.mrf.mxu0
      %v4491 = vadd.f32 0.0, %v4490
      %v4492 = vpop.f32.mrf.mxu0
      %4493 = vdwg.mxu0
      %v4494 = vsel %vm1615, %v4491, -inf
      %4495 = vmax.xlane.f32.xlu0 %v4494
      %v4496 = vpop.xlane.xlu0 %4495
      %v4497 = vsub.f32 %v4491, %v4496
      %v4498 = vmul.f32 %v4497, 1.442695
      %v4499 = vpow.pop %v4498
      %v4500 = vsel %vm1615, %v4499, 0.0
      %4501 = vadd.xlane.f32.xlu0 %v4500
      %v4502 = vpop.xlane.xlu0 %4501
      %v4503 = vrcp.pop %v4502
      %v4504 = vmul.f32 %v4499, %v4503
      %v4505 = vpack.c.bf16 %v4504, %v4504
      %4507 = vrot.lane.b32.xlu0 %v4417, 64
      %v4508 = vpop.permute.xlu0 %4507
      %v4510 = vsel %vm1628, %v4505, 0
      %v4513 = vand.u32 %v4508, %v1635
      %4515 = vmatpush.bf16.msra.mxu0 0
      %4516 = vmatpush.bf16.msra.mxu0 0
      %4517 = vmatpush.bf16.msra.mxu0 0
      %4518 = vmatpush.bf16.msra.mxu0 0
      %4519 = vmatpush.bf16.msra.mxu0 0
      %4520 = vmatpush.bf16.msra.mxu0 0
      %4521 = vmatpush.bf16.msra.mxu0 0
      %4522 = vmatpush.bf16.msra.mxu0 %v4513
      %4523 = vmatmul.bf16.gmra.mxu0 %v4510
      %v4524 = vpop.f32.mrf.mxu0
      %v4525 = vadd.f32 0.0, %v4524
      %v4526 = vpop.f32.mrf.mxu0
      %4527 = vdwg.mxu0
      %4529 = vrot.lane.b32.xlu0 %v4525, 64
      %v4530 = vpop.permute.xlu0 %4529
      %4532 = vst.msk [vmem:[#allocation2] sm:$0x1f] %vm1717, %v4530
      %v4533 = vpack.c.bf16 %v4358, %v4356
      %v4534 = vpack.c.bf16 %v4381, %v4379
      %v4535 = vpack.c.bf16 %v4404, %v4402
      %v4537 = vshrl.u32 %v4533, 16
      %v4539 = vrot.slane %v4537, 2
      %v4540 = vshll.u32 %v4533, 16
      %v4542 = vrot.slane %v4540, 3
      %v4543 = vor.u32 %v4539, %v4542
      %v4545 = vshrl.u32 %v4534, 16
      %v4547 = vrot.slane %v4545, 2
      %v4548 = vshll.u32 %v4534, 16
      %v4550 = vrot.slane %v4548, 3
      %v4551 = vor.u32 %v4547, %v4550
      %v4553 = vsel %vm1595, %v4543, 0
      %v4556 = vsel %vm1595, %v4551, 0
      %4558 = vmatpush.bf16.xpose.msra.mxu0 0
      %4559 = vmatpush.bf16.xpose.msra.mxu0 0
      %4560 = vmatpush.bf16.xpose.msra.mxu0 0
      %4561 = vmatpush.bf16.xpose.msra.mxu0 0
      %4562 = vmatpush.bf16.xpose.msra.mxu0 0
      %4563 = vmatpush.bf16.xpose.msra.mxu0 0
      %4564 = vmatpush.bf16.xpose.msra.mxu0 0
      %4565 = vmatpush.bf16.xpose.msra.mxu0 %v4556
      %4566 = vmatmul.bf16.gmra.mxu0 %v4553
      %v4567 = vpop.f32.mrf.mxu0
      %v4568 = vadd.f32 0.0, %v4567
      %v4569 = vpop.f32.mrf.mxu0
      %4570 = vdwg.mxu0
      %v4571 = vsel %vm1615, %v4568, -inf
      %4572 = vmax.xlane.f32.xlu0 %v4571
      %v4573 = vpop.xlane.xlu0 %4572
      %v4574 = vsub.f32 %v4568, %v4573
      %v4575 = vmul.f32 %v4574, 1.442695
      %v4576 = vpow.pop %v4575
      %v4577 = vsel %vm1615, %v4576, 0.0
      %4578 = vadd.xlane.f32.xlu0 %v4577
      %v4579 = vpop.xlane.xlu0 %4578
      %v4580 = vrcp.pop %v4579
      %v4581 = vmul.f32 %v4576, %v4580
      %v4582 = vpack.c.bf16 %v4581, %v4581
      %v4584 = vshrl.u32 %v4535, 16
      %v4586 = vrot.slane %v4584, 2
      %v4587 = vshll.u32 %v4535, 16
      %v4589 = vrot.slane %v4587, 3
      %v4590 = vor.u32 %v4586, %v4589
      %v4592 = vsel %vm1628, %v4582, 0
      %v4595 = vand.u32 %v4590, %v1635
      %4597 = vmatpush.bf16.msra.mxu0 0
      %4598 = vmatpush.bf16.msra.mxu0 0
      %4599 = vmatpush.bf16.msra.mxu0 0
      %4600 = vmatpush.bf16.msra.mxu0 0
      %4601 = vmatpush.bf16.msra.mxu0 0
      %4602 = vmatpush.bf16.msra.mxu0 0
      %4603 = vmatpush.bf16.msra.mxu0 0
      %4604 = vmatpush.bf16.msra.mxu0 %v4595
      %4605 = vmatmul.bf16.gmra.mxu0 %v4592
      %v4606 = vpop.f32.mrf.mxu0
      %v4607 = vadd.f32 0.0, %v4606
      %v4608 = vpop.f32.mrf.mxu0
      %4609 = vdwg.mxu0
      %4610 = vst.msk [vmem:[#allocation2 + $0x5] sm:$0x1f] %vm1652, %v4607
      %4611 = vrot.lane.b32.xlu0 %v4543, 64
      %v4612 = vpop.permute.xlu0 %4611
      %4613 = vrot.lane.b32.xlu0 %v4551, 64
      %v4614 = vpop.permute.xlu0 %4613
      %v4616 = vsel %vm1595, %v4612, 0
      %v4619 = vsel %vm1595, %v4614, 0
      %4621 = vmatpush.bf16.xpose.msra.mxu0 0
      %4622 = vmatpush.bf16.xpose.msra.mxu0 0
      %4623 = vmatpush.bf16.xpose.msra.mxu0 0
      %4624 = vmatpush.bf16.xpose.msra.mxu0 0
      %4625 = vmatpush.bf16.xpose.msra.mxu0 0
      %4626 = vmatpush.bf16.xpose.msra.mxu0 0
      %4627 = vmatpush.bf16.xpose.msra.mxu0 0
      %4628 = vmatpush.bf16.xpose.msra.mxu0 %v4619
      %4629 = vmatmul.bf16.gmra.mxu0 %v4616
      %v4630 = vpop.f32.mrf.mxu0
      %v4631 = vadd.f32 0.0, %v4630
      %v4632 = vpop.f32.mrf.mxu0
      %4633 = vdwg.mxu0
      %v4634 = vsel %vm1615, %v4631, -inf
      %4635 = vmax.xlane.f32.xlu0 %v4634
      %v4636 = vpop.xlane.xlu0 %4635
      %v4637 = vsub.f32 %v4631, %v4636
      %v4638 = vmul.f32 %v4637, 1.442695
      %v4639 = vpow.pop %v4638
      %v4640 = vsel %vm1615, %v4639, 0.0
      %4641 = vadd.xlane.f32.xlu0 %v4640
      %v4642 = vpop.xlane.xlu0 %4641
      %v4643 = vrcp.pop %v4642
      %v4644 = vmul.f32 %v4639, %v4643
      %v4645 = vpack.c.bf16 %v4644, %v4644
      %4646 = vrot.lane.b32.xlu0 %v4590, 64
      %v4647 = vpop.permute.xlu0 %4646
      %v4649 = vsel %vm1628, %v4645, 0
      %v4652 = vand.u32 %v4647, %v1635
      %4654 = vmatpush.bf16.msra.mxu0 0
      %4655 = vmatpush.bf16.msra.mxu0 0
      %4656 = vmatpush.bf16.msra.mxu0 0
      %4657 = vmatpush.bf16.msra.mxu0 0
      %4658 = vmatpush.bf16.msra.mxu0 0
      %4659 = vmatpush.bf16.msra.mxu0 0
      %4660 = vmatpush.bf16.msra.mxu0 0
      %4661 = vmatpush.bf16.msra.mxu0 %v4652
      %4662 = vmatmul.bf16.gmra.mxu0 %v4649
      %v4663 = vpop.f32.mrf.mxu0
      %v4664 = vadd.f32 0.0, %v4663
      %v4665 = vpop.f32.mrf.mxu0
      %4666 = vdwg.mxu0
      %4668 = vrot.lane.b32.xlu0 %v4664, 64
      %v4669 = vpop.permute.xlu0 %4668
      %4671 = vst.msk [vmem:[#allocation2 + $0x5] sm:$0x1f] %vm1717, %v4669
      %v4672 = vpack.c.bf16 %v4358, %v4358
      %v4673 = vpack.c.bf16 %v4381, %v4381
      %v4674 = vpack.c.bf16 %v4404, %v4404
      %v4676 = vrot.slane %v4672, 1
      %v4678 = vrot.slane %v4673, 1
      %v4680 = vsel %vm1595, %v4676, 0
      %v4683 = vsel %vm1595, %v4678, 0
      %4685 = vmatpush.bf16.xpose.msra.mxu0 0
      %4686 = vmatpush.bf16.xpose.msra.mxu0 0
      %4687 = vmatpush.bf16.xpose.msra.mxu0 0
      %4688 = vmatpush.bf16.xpose.msra.mxu0 0
      %4689 = vmatpush.bf16.xpose.msra.mxu0 0
      %4690 = vmatpush.bf16.xpose.msra.mxu0 0
      %4691 = vmatpush.bf16.xpose.msra.mxu0 0
      %4692 = vmatpush.bf16.xpose.msra.mxu0 %v4683
      %4693 = vmatmul.bf16.gmra.mxu0 %v4680
      %v4694 = vpop.f32.mrf.mxu0
      %v4695 = vadd.f32 0.0, %v4694
      %v4696 = vpop.f32.mrf.mxu0
      %4697 = vdwg.mxu0
      %v4698 = vsel %vm1615, %v4695, -inf
      %4699 = vmax.xlane.f32.xlu0 %v4698
      %v4700 = vpop.xlane.xlu0 %4699
      %v4701 = vsub.f32 %v4695, %v4700
      %v4702 = vmul.f32 %v4701, 1.442695
      %v4703 = vpow.pop %v4702
      %v4704 = vsel %vm1615, %v4703, 0.0
      %4705 = vadd.xlane.f32.xlu0 %v4704
      %v4706 = vpop.xlane.xlu0 %4705
      %v4707 = vrcp.pop %v4706
      %v4708 = vmul.f32 %v4703, %v4707
      %v4709 = vpack.c.bf16 %v4708, %v4708
      %v4711 = vrot.slane %v4674, 1
      %v4713 = vsel %vm1628, %v4709, 0
      %v4716 = vand.u32 %v4711, %v1635
      %4718 = vmatpush.bf16.msra.mxu0 0
      %4719 = vmatpush.bf16.msra.mxu0 0
      %4720 = vmatpush.bf16.msra.mxu0 0
      %4721 = vmatpush.bf16.msra.mxu0 0
      %4722 = vmatpush.bf16.msra.mxu0 0
      %4723 = vmatpush.bf16.msra.mxu0 0
      %4724 = vmatpush.bf16.msra.mxu0 0
      %4725 = vmatpush.bf16.msra.mxu0 %v4716
      %4726 = vmatmul.bf16.gmra.mxu0 %v4713
      %v4727 = vpop.f32.mrf.mxu0
      %v4728 = vadd.f32 0.0, %v4727
      %v4729 = vpop.f32.mrf.mxu0
      %4730 = vdwg.mxu0
      %4731 = vst.msk [vmem:[#allocation2 + $0xa] sm:$0x1f] %vm1652, %v4728
      %4732 = vrot.lane.b32.xlu0 %v4676, 64
      %v4733 = vpop.permute.xlu0 %4732
      %4734 = vrot.lane.b32.xlu0 %v4678, 64
      %v4735 = vpop.permute.xlu0 %4734
      %v4737 = vsel %vm1595, %v4733, 0
      %v4740 = vsel %vm1595, %v4735, 0
      %4742 = vmatpush.bf16.xpose.msra.mxu0 0
      %4743 = vmatpush.bf16.xpose.msra.mxu0 0
      %4744 = vmatpush.bf16.xpose.msra.mxu0 0
      %4745 = vmatpush.bf16.xpose.msra.mxu0 0
      %4746 = vmatpush.bf16.xpose.msra.mxu0 0
      %4747 = vmatpush.bf16.xpose.msra.mxu0 0
      %4748 = vmatpush.bf16.xpose.msra.mxu0 0
      %4749 = vmatpush.bf16.xpose.msra.mxu0 %v4740
      %4750 = vmatmul.bf16.gmra.mxu0 %v4737
      %v4751 = vpop.f32.mrf.mxu0
      %v4752 = vadd.f32 0.0, %v4751
      %v4753 = vpop.f32.mrf.mxu0
      %4754 = vdwg.mxu0
      %v4755 = vsel %vm1615, %v4752, -inf
      %4756 = vmax.xlane.f32.xlu0 %v4755
      %v4757 = vpop.xlane.xlu0 %4756
      %v4758 = vsub.f32 %v4752, %v4757
      %v4759 = vmul.f32 %v4758, 1.442695
      %v4760 = vpow.pop %v4759
      %v4761 = vsel %vm1615, %v4760, 0.0
      %4762 = vadd.xlane.f32.xlu0 %v4761
      %v4763 = vpop.xlane.xlu0 %4762
      %v4764 = vrcp.pop %v4763
      %v4765 = vmul.f32 %v4760, %v4764
      %v4766 = vpack.c.bf16 %v4765, %v4765
      %4767 = vrot.lane.b32.xlu0 %v4711, 64
      %v4768 = vpop.permute.xlu0 %4767
      %v4770 = vsel %vm1628, %v4766, 0
      %v4773 = vand.u32 %v4768, %v1635
      %4775 = vmatpush.bf16.msra.mxu0 0
      %4776 = vmatpush.bf16.msra.mxu0 0
      %4777 = vmatpush.bf16.msra.mxu0 0
      %4778 = vmatpush.bf16.msra.mxu0 0
      %4779 = vmatpush.bf16.msra.mxu0 0
      %4780 = vmatpush.bf16.msra.mxu0 0
      %4781 = vmatpush.bf16.msra.mxu0 0
      %4782 = vmatpush.bf16.msra.mxu0 %v4773
      %4783 = vmatmul.bf16.gmra.mxu0 %v4770
      %v4784 = vpop.f32.mrf.mxu0
      %v4785 = vadd.f32 0.0, %v4784
      %v4786 = vpop.f32.mrf.mxu0
      %4787 = vdwg.mxu0
      %4789 = vrot.lane.b32.xlu0 %v4785, 64
      %v4790 = vpop.permute.xlu0 %4789
      %4792 = vst.msk [vmem:[#allocation2 + $0xa] sm:$0x1f] %vm1717, %v4790
      %v4793 = vpack.c.bf16 %v4361, %v4358
      %v4794 = vpack.c.bf16 %v4384, %v4381
      %v4795 = vpack.c.bf16 %v4407, %v4404
      %v4797 = vshrl.u32 %v4793, 16
      %v4799 = vrot.slane %v4797, 3
      %v4800 = vshll.u32 %v4793, 16
      %v4802 = vrot.slane %v4800, 4
      %v4803 = vor.u32 %v4799, %v4802
      %v4805 = vshrl.u32 %v4794, 16
      %v4807 = vrot.slane %v4805, 3
      %v4808 = vshll.u32 %v4794, 16
      %v4810 = vrot.slane %v4808, 4
      %v4811 = vor.u32 %v4807, %v4810
      %v4813 = vsel %vm1595, %v4803, 0
      %v4816 = vsel %vm1595, %v4811, 0
      %4818 = vmatpush.bf16.xpose.msra.mxu0 0
      %4819 = vmatpush.bf16.xpose.msra.mxu0 0
      %4820 = vmatpush.bf16.xpose.msra.mxu0 0
      %4821 = vmatpush.bf16.xpose.msra.mxu0 0
      %4822 = vmatpush.bf16.xpose.msra.mxu0 0
      %4823 = vmatpush.bf16.xpose.msra.mxu0 0
      %4824 = vmatpush.bf16.xpose.msra.mxu0 0
      %4825 = vmatpush.bf16.xpose.msra.mxu0 %v4816
      %4826 = vmatmul.bf16.gmra.mxu0 %v4813
      %v4827 = vpop.f32.mrf.mxu0
      %v4828 = vadd.f32 0.0, %v4827
      %v4829 = vpop.f32.mrf.mxu0
      %4830 = vdwg.mxu0
      %v4831 = vsel %vm1615, %v4828, -inf
      %4832 = vmax.xlane.f32.xlu0 %v4831
      %v4833 = vpop.xlane.xlu0 %4832
      %v4834 = vsub.f32 %v4828, %v4833
      %v4835 = vmul.f32 %v4834, 1.442695
      %v4836 = vpow.pop %v4835
      %v4837 = vsel %vm1615, %v4836, 0.0
      %4838 = vadd.xlane.f32.xlu0 %v4837
      %v4839 = vpop.xlane.xlu0 %4838
      %v4840 = vrcp.pop %v4839
      %v4841 = vmul.f32 %v4836, %v4840
      %v4842 = vpack.c.bf16 %v4841, %v4841
      %v4844 = vshrl.u32 %v4795, 16
      %v4846 = vrot.slane %v4844, 3
      %v4847 = vshll.u32 %v4795, 16
      %v4849 = vrot.slane %v4847, 4
      %v4850 = vor.u32 %v4846, %v4849
      %v4852 = vsel %vm1628, %v4842, 0
      %v4855 = vand.u32 %v4850, %v1635
      %4857 = vmatpush.bf16.msra.mxu0 0
      %4858 = vmatpush.bf16.msra.mxu0 0
      %4859 = vmatpush.bf16.msra.mxu0 0
      %4860 = vmatpush.bf16.msra.mxu0 0
      %4861 = vmatpush.bf16.msra.mxu0 0
      %4862 = vmatpush.bf16.msra.mxu0 0
      %4863 = vmatpush.bf16.msra.mxu0 0
      %4864 = vmatpush.bf16.msra.mxu0 %v4855
      %4865 = vmatmul.bf16.gmra.mxu0 %v4852
      %v4866 = vpop.f32.mrf.mxu0
      %v4867 = vadd.f32 0.0, %v4866
      %v4868 = vpop.f32.mrf.mxu0
      %4869 = vdwg.mxu0
      %4870 = vst.msk [vmem:[#allocation2 + $0xf] sm:$0x1f] %vm1652, %v4867
      %4871 = vrot.lane.b32.xlu0 %v4803, 64
      %v4872 = vpop.permute.xlu0 %4871
      %4873 = vrot.lane.b32.xlu0 %v4811, 64
      %v4874 = vpop.permute.xlu0 %4873
      %v4876 = vsel %vm1595, %v4872, 0
      %v4879 = vsel %vm1595, %v4874, 0
      %4881 = vmatpush.bf16.xpose.msra.mxu0 0
      %4882 = vmatpush.bf16.xpose.msra.mxu0 0
      %4883 = vmatpush.bf16.xpose.msra.mxu0 0
      %4884 = vmatpush.bf16.xpose.msra.mxu0 0
      %4885 = vmatpush.bf16.xpose.msra.mxu0 0
      %4886 = vmatpush.bf16.xpose.msra.mxu0 0
      %4887 = vmatpush.bf16.xpose.msra.mxu0 0
      %4888 = vmatpush.bf16.xpose.msra.mxu0 %v4879
      %4889 = vmatmul.bf16.gmra.mxu0 %v4876
      %v4890 = vpop.f32.mrf.mxu0
      %v4891 = vadd.f32 0.0, %v4890
      %v4892 = vpop.f32.mrf.mxu0
      %4893 = vdwg.mxu0
      %v4894 = vsel %vm1615, %v4891, -inf
      %4895 = vmax.xlane.f32.xlu0 %v4894
      %v4896 = vpop.xlane.xlu0 %4895
      %v4897 = vsub.f32 %v4891, %v4896
      %v4898 = vmul.f32 %v4897, 1.442695
      %v4899 = vpow.pop %v4898
      %v4900 = vsel %vm1615, %v4899, 0.0
      %4901 = vadd.xlane.f32.xlu0 %v4900
      %v4902 = vpop.xlane.xlu0 %4901
      %v4903 = vrcp.pop %v4902
      %v4904 = vmul.f32 %v4899, %v4903
      %v4905 = vpack.c.bf16 %v4904, %v4904
      %4906 = vrot.lane.b32.xlu0 %v4850, 64
      %v4907 = vpop.permute.xlu0 %4906
      %v4909 = vsel %vm1628, %v4905, 0
      %v4912 = vand.u32 %v4907, %v1635
      %4914 = vmatpush.bf16.msra.mxu0 0
      %4915 = vmatpush.bf16.msra.mxu0 0
      %4916 = vmatpush.bf16.msra.mxu0 0
      %4917 = vmatpush.bf16.msra.mxu0 0
      %4918 = vmatpush.bf16.msra.mxu0 0
      %4919 = vmatpush.bf16.msra.mxu0 0
      %4920 = vmatpush.bf16.msra.mxu0 0
      %4921 = vmatpush.bf16.msra.mxu0 %v4912
      %4922 = vmatmul.bf16.gmra.mxu0 %v4909
      %v4923 = vpop.f32.mrf.mxu0
      %v4924 = vadd.f32 0.0, %v4923
      %v4925 = vpop.f32.mrf.mxu0
      %4926 = vdwg.mxu0
      %4928 = vrot.lane.b32.xlu0 %v4924, 64
      %v4929 = vpop.permute.xlu0 %4928
      %4931 = vst.msk [vmem:[#allocation2 + $0xf] sm:$0x1f] %vm1717, %v4929
      %v4932 = vpack.c.bf16 %v4363, %v4361
      %v4933 = vpack.c.bf16 %v4386, %v4384
      %v4934 = vpack.c.bf16 %v4409, %v4407
      %v4936 = vrot.slane %v4932, 2
      %v4938 = vrot.slane %v4933, 2
      %v4940 = vsel %vm1595, %v4936, 0
      %v4943 = vsel %vm1595, %v4938, 0
      %4945 = vmatpush.bf16.xpose.msra.mxu0 0
      %4946 = vmatpush.bf16.xpose.msra.mxu0 0
      %4947 = vmatpush.bf16.xpose.msra.mxu0 0
      %4948 = vmatpush.bf16.xpose.msra.mxu0 0
      %4949 = vmatpush.bf16.xpose.msra.mxu0 0
      %4950 = vmatpush.bf16.xpose.msra.mxu0 0
      %4951 = vmatpush.bf16.xpose.msra.mxu0 0
      %4952 = vmatpush.bf16.xpose.msra.mxu0 %v4943
      %4953 = vmatmul.bf16.gmra.mxu0 %v4940
      %v4954 = vpop.f32.mrf.mxu0
      %v4955 = vadd.f32 0.0, %v4954
      %v4956 = vpop.f32.mrf.mxu0
      %4957 = vdwg.mxu0
      %v4958 = vsel %vm1615, %v4955, -inf
      %4959 = vmax.xlane.f32.xlu0 %v4958
      %v4960 = vpop.xlane.xlu0 %4959
      %v4961 = vsub.f32 %v4955, %v4960
      %v4962 = vmul.f32 %v4961, 1.442695
      %v4963 = vpow.pop %v4962
      %v4964 = vsel %vm1615, %v4963, 0.0
      %4965 = vadd.xlane.f32.xlu0 %v4964
      %v4966 = vpop.xlane.xlu0 %4965
      %v4967 = vrcp.pop %v4966
      %v4968 = vmul.f32 %v4963, %v4967
      %v4969 = vpack.c.bf16 %v4968, %v4968
      %v4971 = vrot.slane %v4934, 2
      %v4973 = vsel %vm1628, %v4969, 0
      %v4976 = vand.u32 %v4971, %v1635
      %4978 = vmatpush.bf16.msra.mxu0 0
      %4979 = vmatpush.bf16.msra.mxu0 0
      %4980 = vmatpush.bf16.msra.mxu0 0
      %4981 = vmatpush.bf16.msra.mxu0 0
      %4982 = vmatpush.bf16.msra.mxu0 0
      %4983 = vmatpush.bf16.msra.mxu0 0
      %4984 = vmatpush.bf16.msra.mxu0 0
      %4985 = vmatpush.bf16.msra.mxu0 %v4976
      %4986 = vmatmul.bf16.gmra.mxu0 %v4973
      %v4987 = vpop.f32.mrf.mxu0
      %v4988 = vadd.f32 0.0, %v4987
      %v4989 = vpop.f32.mrf.mxu0
      %4990 = vdwg.mxu0
      %4991 = vst.msk [vmem:[#allocation2 + $0x14] sm:$0x1f] %vm1652, %v4988
      %4992 = vrot.lane.b32.xlu0 %v4936, 64
      %v4993 = vpop.permute.xlu0 %4992
      %4994 = vrot.lane.b32.xlu0 %v4938, 64
      %v4995 = vpop.permute.xlu0 %4994
      %v4997 = vsel %vm1595, %v4993, 0
      %v5000 = vsel %vm1595, %v4995, 0
      %5002 = vmatpush.bf16.xpose.msra.mxu0 0
      %5003 = vmatpush.bf16.xpose.msra.mxu0 0
      %5004 = vmatpush.bf16.xpose.msra.mxu0 0
      %5005 = vmatpush.bf16.xpose.msra.mxu0 0
      %5006 = vmatpush.bf16.xpose.msra.mxu0 0
      %5007 = vmatpush.bf16.xpose.msra.mxu0 0
      %5008 = vmatpush.bf16.xpose.msra.mxu0 0
      %5009 = vmatpush.bf16.xpose.msra.mxu0 %v5000
      %5010 = vmatmul.bf16.gmra.mxu0 %v4997
      %v5011 = vpop.f32.mrf.mxu0
      %v5012 = vadd.f32 0.0, %v5011
      %v5013 = vpop.f32.mrf.mxu0
      %5014 = vdwg.mxu0
      %v5015 = vsel %vm1615, %v5012, -inf
      %5016 = vmax.xlane.f32.xlu0 %v5015
      %v5017 = vpop.xlane.xlu0 %5016
      %v5018 = vsub.f32 %v5012, %v5017
      %v5019 = vmul.f32 %v5018, 1.442695
      %v5020 = vpow.pop %v5019
      %v5021 = vsel %vm1615, %v5020, 0.0
      %5022 = vadd.xlane.f32.xlu0 %v5021
      %v5023 = vpop.xlane.xlu0 %5022
      %v5024 = vrcp.pop %v5023
      %v5025 = vmul.f32 %v5020, %v5024
      %v5026 = vpack.c.bf16 %v5025, %v5025
      %5027 = vrot.lane.b32.xlu0 %v4971, 64
      %v5028 = vpop.permute.xlu0 %5027
      %v5030 = vsel %vm1628, %v5026, 0
      %v5033 = vand.u32 %v5028, %v1635
      %5035 = vmatpush.bf16.msra.mxu0 0
      %5036 = vmatpush.bf16.msra.mxu0 0
      %5037 = vmatpush.bf16.msra.mxu0 0
      %5038 = vmatpush.bf16.msra.mxu0 0
      %5039 = vmatpush.bf16.msra.mxu0 0
      %5040 = vmatpush.bf16.msra.mxu0 0
      %5041 = vmatpush.bf16.msra.mxu0 0
      %5042 = vmatpush.bf16.msra.mxu0 %v5033
      %5043 = vmatmul.bf16.gmra.mxu0 %v5030
      %v5044 = vpop.f32.mrf.mxu0
      %v5045 = vadd.f32 0.0, %v5044
      %v5046 = vpop.f32.mrf.mxu0
      %5047 = vdwg.mxu0
      %5049 = vrot.lane.b32.xlu0 %v5045, 64
      %v5050 = vpop.permute.xlu0 %5049
      %5052 = vst.msk [vmem:[#allocation2 + $0x14] sm:$0x1f] %vm1717, %v5050
      %v5053 = vpack.c.bf16 %v4363, %v4363
      %v5054 = vpack.c.bf16 %v4386, %v4386
      %v5055 = vpack.c.bf16 %v4409, %v4409
      %v5057 = vshrl.u32 %v5053, 16
      %v5059 = vshll.u32 %v5053, 16
      %v5061 = vrot.slane %v5059, 1
      %v5062 = vor.u32 %v5057, %v5061
      %v5064 = vshrl.u32 %v5054, 16
      %v5066 = vshll.u32 %v5054, 16
      %v5068 = vrot.slane %v5066, 1
      %v5069 = vor.u32 %v5064, %v5068
      %v5071 = vsel %vm1595, %v5062, 0
      %v5074 = vsel %vm1595, %v5069, 0
      %5076 = vmatpush.bf16.xpose.msra.mxu0 0
      %5077 = vmatpush.bf16.xpose.msra.mxu0 0
      %5078 = vmatpush.bf16.xpose.msra.mxu0 0
      %5079 = vmatpush.bf16.xpose.msra.mxu0 0
      %5080 = vmatpush.bf16.xpose.msra.mxu0 0
      %5081 = vmatpush.bf16.xpose.msra.mxu0 0
      %5082 = vmatpush.bf16.xpose.msra.mxu0 0
      %5083 = vmatpush.bf16.xpose.msra.mxu0 %v5074
      %5084 = vmatmul.bf16.gmra.mxu0 %v5071
      %v5085 = vpop.f32.mrf.mxu0
      %v5086 = vadd.f32 0.0, %v5085
      %v5087 = vpop.f32.mrf.mxu0
      %5088 = vdwg.mxu0
      %v5089 = vsel %vm1615, %v5086, -inf
      %5090 = vmax.xlane.f32.xlu0 %v5089
      %v5091 = vpop.xlane.xlu0 %5090
      %v5092 = vsub.f32 %v5086, %v5091
      %v5093 = vmul.f32 %v5092, 1.442695
      %v5094 = vpow.pop %v5093
      %v5095 = vsel %vm1615, %v5094, 0.0
      %5096 = vadd.xlane.f32.xlu0 %v5095
      %v5097 = vpop.xlane.xlu0 %5096
      %v5098 = vrcp.pop %v5097
      %v5099 = vmul.f32 %v5094, %v5098
      %v5100 = vpack.c.bf16 %v5099, %v5099
      %v5102 = vshrl.u32 %v5055, 16
      %v5104 = vshll.u32 %v5055, 16
      %v5106 = vrot.slane %v5104, 1
      %v5107 = vor.u32 %v5102, %v5106
      %v5109 = vsel %vm1628, %v5100, 0
      %v5112 = vand.u32 %v5107, %v1635
      %5114 = vmatpush.bf16.msra.mxu0 0
      %5115 = vmatpush.bf16.msra.mxu0 0
      %5116 = vmatpush.bf16.msra.mxu0 0
      %5117 = vmatpush.bf16.msra.mxu0 0
      %5118 = vmatpush.bf16.msra.mxu0 0
      %5119 = vmatpush.bf16.msra.mxu0 0
      %5120 = vmatpush.bf16.msra.mxu0 0
      %5121 = vmatpush.bf16.msra.mxu0 %v5112
      %5122 = vmatmul.bf16.gmra.mxu0 %v5109
      %v5123 = vpop.f32.mrf.mxu0
      %v5124 = vadd.f32 0.0, %v5123
      %v5125 = vpop.f32.mrf.mxu0
      %5126 = vdwg.mxu0
      %5127 = vst.msk [vmem:[#allocation2 + $0x19] sm:$0x1f] %vm1652, %v5124
      %5128 = vrot.lane.b32.xlu0 %v5062, 64
      %v5129 = vpop.permute.xlu0 %5128
      %5130 = vrot.lane.b32.xlu0 %v5069, 64
      %v5131 = vpop.permute.xlu0 %5130
      %v5133 = vsel %vm1595, %v5129, 0
      %v5136 = vsel %vm1595, %v5131, 0
      %5138 = vmatpush.bf16.xpose.msra.mxu0 0
      %5139 = vmatpush.bf16.xpose.msra.mxu0 0
      %5140 = vmatpush.bf16.xpose.msra.mxu0 0
      %5141 = vmatpush.bf16.xpose.msra.mxu0 0
      %5142 = vmatpush.bf16.xpose.msra.mxu0 0
      %5143 = vmatpush.bf16.xpose.msra.mxu0 0
      %5144 = vmatpush.bf16.xpose.msra.mxu0 0
      %5145 = vmatpush.bf16.xpose.msra.mxu0 %v5136
      %5146 = vmatmul.bf16.gmra.mxu0 %v5133
      %v5147 = vpop.f32.mrf.mxu0
      %v5148 = vadd.f32 0.0, %v5147
      %v5149 = vpop.f32.mrf.mxu0
      %5150 = vdwg.mxu0
      %v5151 = vsel %vm1615, %v5148, -inf
      %5152 = vmax.xlane.f32.xlu0 %v5151
      %v5153 = vpop.xlane.xlu0 %5152
      %v5154 = vsub.f32 %v5148, %v5153
      %v5155 = vmul.f32 %v5154, 1.442695
      %v5156 = vpow.pop %v5155
      %v5157 = vsel %vm1615, %v5156, 0.0
      %5158 = vadd.xlane.f32.xlu0 %v5157
      %v5159 = vpop.xlane.xlu0 %5158
      %v5160 = vrcp.pop %v5159
      %v5161 = vmul.f32 %v5156, %v5160
      %v5162 = vpack.c.bf16 %v5161, %v5161
      %5163 = vrot.lane.b32.xlu0 %v5107, 64
      %v5164 = vpop.permute.xlu0 %5163
      %v5166 = vsel %vm1628, %v5162, 0
      %v5169 = vand.u32 %v5164, %v1635
      %5171 = vmatpush.bf16.msra.mxu0 0
      %5172 = vmatpush.bf16.msra.mxu0 0
      %5173 = vmatpush.bf16.msra.mxu0 0
      %5174 = vmatpush.bf16.msra.mxu0 0
      %5175 = vmatpush.bf16.msra.mxu0 0
      %5176 = vmatpush.bf16.msra.mxu0 0
      %5177 = vmatpush.bf16.msra.mxu0 0
      %5178 = vmatpush.bf16.msra.mxu0 %v5169
      %5179 = vmatmul.bf16.gmra.mxu0 %v5166
      %v5180 = vpop.f32.mrf.mxu0
      %v5181 = vadd.f32 0.0, %v5180
      %v5182 = vpop.f32.mrf.mxu0
      %5183 = vdwg.mxu0
      %5185 = vrot.lane.b32.xlu0 %v5181, 64
      %v5186 = vpop.permute.xlu0 %5185
      %5188 = vst.msk [vmem:[#allocation2 + $0x19] sm:$0x1f] %vm1717, %v5186
      %v5189 = vpack.c.bf16 %v4366, %v4363
      %v5190 = vpack.c.bf16 %v4389, %v4386
      %v5191 = vpack.c.bf16 %v4412, %v4409
      %v5193 = vrot.slane %v5189, 3
      %v5195 = vrot.slane %v5190, 3
      %v5197 = vsel %vm1595, %v5193, 0
      %v5200 = vsel %vm1595, %v5195, 0
      %5202 = vmatpush.bf16.xpose.msra.mxu0 0
      %5203 = vmatpush.bf16.xpose.msra.mxu0 0
      %5204 = vmatpush.bf16.xpose.msra.mxu0 0
      %5205 = vmatpush.bf16.xpose.msra.mxu0 0
      %5206 = vmatpush.bf16.xpose.msra.mxu0 0
      %5207 = vmatpush.bf16.xpose.msra.mxu0 0
      %5208 = vmatpush.bf16.xpose.msra.mxu0 0
      %5209 = vmatpush.bf16.xpose.msra.mxu0 %v5200
      %5210 = vmatmul.bf16.gmra.mxu0 %v5197
      %v5211 = vpop.f32.mrf.mxu0
      %v5212 = vadd.f32 0.0, %v5211
      %v5213 = vpop.f32.mrf.mxu0
      %5214 = vdwg.mxu0
      %v5215 = vsel %vm1615, %v5212, -inf
      %5216 = vmax.xlane.f32.xlu0 %v5215
      %v5217 = vpop.xlane.xlu0 %5216
      %v5218 = vsub.f32 %v5212, %v5217
      %v5219 = vmul.f32 %v5218, 1.442695
      %v5220 = vpow.pop %v5219
      %v5221 = vsel %vm1615, %v5220, 0.0
      %5222 = vadd.xlane.f32.xlu0 %v5221
      %v5223 = vpop.xlane.xlu0 %5222
      %v5224 = vrcp.pop %v5223
      %v5225 = vmul.f32 %v5220, %v5224
      %v5226 = vpack.c.bf16 %v5225, %v5225
      %v5228 = vrot.slane %v5191, 3
      %v5230 = vsel %vm1628, %v5226, 0
      %v5233 = vand.u32 %v5228, %v1635
      %5235 = vmatpush.bf16.msra.mxu0 0
      %5236 = vmatpush.bf16.msra.mxu0 0
      %5237 = vmatpush.bf16.msra.mxu0 0
      %5238 = vmatpush.bf16.msra.mxu0 0
      %5239 = vmatpush.bf16.msra.mxu0 0
      %5240 = vmatpush.bf16.msra.mxu0 0
      %5241 = vmatpush.bf16.msra.mxu0 0
      %5242 = vmatpush.bf16.msra.mxu0 %v5233
      %5243 = vmatmul.bf16.gmra.mxu0 %v5230
      %v5244 = vpop.f32.mrf.mxu0
      %v5245 = vadd.f32 0.0, %v5244
      %v5246 = vpop.f32.mrf.mxu0
      %5247 = vdwg.mxu0
      %5248 = vst.msk [vmem:[#allocation2 + $0x1e] sm:$0x1f] %vm1652, %v5245
      %5249 = vrot.lane.b32.xlu0 %v5193, 64
      %v5250 = vpop.permute.xlu0 %5249
      %5251 = vrot.lane.b32.xlu0 %v5195, 64
      %v5252 = vpop.permute.xlu0 %5251
      %v5254 = vsel %vm1595, %v5250, 0
      %v5257 = vsel %vm1595, %v5252, 0
      %5259 = vmatpush.bf16.xpose.msra.mxu0 0
      %5260 = vmatpush.bf16.xpose.msra.mxu0 0
      %5261 = vmatpush.bf16.xpose.msra.mxu0 0
      %5262 = vmatpush.bf16.xpose.msra.mxu0 0
      %5263 = vmatpush.bf16.xpose.msra.mxu0 0
      %5264 = vmatpush.bf16.xpose.msra.mxu0 0
      %5265 = vmatpush.bf16.xpose.msra.mxu0 0
      %5266 = vmatpush.bf16.xpose.msra.mxu0 %v5257
      %5267 = vmatmul.bf16.gmra.mxu0 %v5254
      %v5268 = vpop.f32.mrf.mxu0
      %v5269 = vadd.f32 0.0, %v5268
      %v5270 = vpop.f32.mrf.mxu0
      %5271 = vdwg.mxu0
      %v5272 = vsel %vm1615, %v5269, -inf
      %5273 = vmax.xlane.f32.xlu0 %v5272
      %v5274 = vpop.xlane.xlu0 %5273
      %v5275 = vsub.f32 %v5269, %v5274
      %v5276 = vmul.f32 %v5275, 1.442695
      %v5277 = vpow.pop %v5276
      %v5278 = vsel %vm1615, %v5277, 0.0
      %5279 = vadd.xlane.f32.xlu0 %v5278
      %v5280 = vpop.xlane.xlu0 %5279
      %v5281 = vrcp.pop %v5280
      %v5282 = vmul.f32 %v5277, %v5281
      %v5283 = vpack.c.bf16 %v5282, %v5282
      %5284 = vrot.lane.b32.xlu0 %v5228, 64
      %v5285 = vpop.permute.xlu0 %5284
      %v5287 = vsel %vm1628, %v5283, 0
      %v5290 = vand.u32 %v5285, %v1635
      %5292 = vmatpush.bf16.msra.mxu0 0
      %5293 = vmatpush.bf16.msra.mxu0 0
      %5294 = vmatpush.bf16.msra.mxu0 0
      %5295 = vmatpush.bf16.msra.mxu0 0
      %5296 = vmatpush.bf16.msra.mxu0 0
      %5297 = vmatpush.bf16.msra.mxu0 0
      %5298 = vmatpush.bf16.msra.mxu0 0
      %5299 = vmatpush.bf16.msra.mxu0 %v5290
      %5300 = vmatmul.bf16.gmra.mxu0 %v5287
      %v5301 = vpop.f32.mrf.mxu0
      %v5302 = vadd.f32 0.0, %v5301
      %v5303 = vpop.f32.mrf.mxu0
      %5304 = vdwg.mxu0
      %5306 = vrot.lane.b32.xlu0 %v5302, 64
      %v5307 = vpop.permute.xlu0 %5306
      %5309 = vst.msk [vmem:[#allocation2 + $0x1e] sm:$0x1f] %vm1717, %v5307
      %v5310 = vpack.c.bf16 %v4366, %v4366
      %v5311 = vpack.c.bf16 %v4389, %v4389
      %v5312 = vpack.c.bf16 %v4412, %v4412
      %v5314 = vshrl.u32 %v5310, 16
      %v5316 = vrot.slane %v5314, 1
      %v5317 = vshll.u32 %v5310, 16
      %v5319 = vrot.slane %v5317, 2
      %v5320 = vor.u32 %v5316, %v5319
      %v5322 = vshrl.u32 %v5311, 16
      %v5324 = vrot.slane %v5322, 1
      %v5325 = vshll.u32 %v5311, 16
      %v5327 = vrot.slane %v5325, 2
      %v5328 = vor.u32 %v5324, %v5327
      %v5330 = vsel %vm1595, %v5320, 0
      %v5333 = vsel %vm1595, %v5328, 0
      %5335 = vmatpush.bf16.xpose.msra.mxu0 0
      %5336 = vmatpush.bf16.xpose.msra.mxu0 0
      %5337 = vmatpush.bf16.xpose.msra.mxu0 0
      %5338 = vmatpush.bf16.xpose.msra.mxu0 0
      %5339 = vmatpush.bf16.xpose.msra.mxu0 0
      %5340 = vmatpush.bf16.xpose.msra.mxu0 0
      %5341 = vmatpush.bf16.xpose.msra.mxu0 0
      %5342 = vmatpush.bf16.xpose.msra.mxu0 %v5333
      %5343 = vmatmul.bf16.gmra.mxu0 %v5330
      %v5344 = vpop.f32.mrf.mxu0
      %v5345 = vadd.f32 0.0, %v5344
      %v5346 = vpop.f32.mrf.mxu0
      %5347 = vdwg.mxu0
      %v5348 = vsel %vm1615, %v5345, -inf
      %5349 = vmax.xlane.f32.xlu0 %v5348
      %v5350 = vpop.xlane.xlu0 %5349
      %v5351 = vsub.f32 %v5345, %v5350
      %v5352 = vmul.f32 %v5351, 1.442695
      %v5353 = vpow.pop %v5352
      %v5354 = vsel %vm1615, %v5353, 0.0
      %5355 = vadd.xlane.f32.xlu0 %v5354
      %v5356 = vpop.xlane.xlu0 %5355
      %v5357 = vrcp.pop %v5356
      %v5358 = vmul.f32 %v5353, %v5357
      %v5359 = vpack.c.bf16 %v5358, %v5358
      %v5361 = vshrl.u32 %v5312, 16
      %v5363 = vrot.slane %v5361, 1
      %v5364 = vshll.u32 %v5312, 16
      %v5366 = vrot.slane %v5364, 2
      %v5367 = vor.u32 %v5363, %v5366
      %v5369 = vsel %vm1628, %v5359, 0
      %v5372 = vand.u32 %v5367, %v1635
      %5374 = vmatpush.bf16.msra.mxu0 0
      %5375 = vmatpush.bf16.msra.mxu0 0
      %5376 = vmatpush.bf16.msra.mxu0 0
      %5377 = vmatpush.bf16.msra.mxu0 0
      %5378 = vmatpush.bf16.msra.mxu0 0
      %5379 = vmatpush.bf16.msra.mxu0 0
      %5380 = vmatpush.bf16.msra.mxu0 0
      %5381 = vmatpush.bf16.msra.mxu0 %v5372
      %5382 = vmatmul.bf16.gmra.mxu0 %v5369
      %v5383 = vpop.f32.mrf.mxu0
      %v5384 = vadd.f32 0.0, %v5383
      %v5385 = vpop.f32.mrf.mxu0
      %5386 = vdwg.mxu0
      %5387 = vst.msk [vmem:[#allocation2 + $0x23] sm:$0x1f] %vm1652, %v5384
      %5388 = vrot.lane.b32.xlu0 %v5320, 64
      %v5389 = vpop.permute.xlu0 %5388
      %5390 = vrot.lane.b32.xlu0 %v5328, 64
      %v5391 = vpop.permute.xlu0 %5390
      %v5393 = vsel %vm1595, %v5389, 0
      %v5396 = vsel %vm1595, %v5391, 0
      %5398 = vmatpush.bf16.xpose.msra.mxu0 0
      %5399 = vmatpush.bf16.xpose.msra.mxu0 0
      %5400 = vmatpush.bf16.xpose.msra.mxu0 0
      %5401 = vmatpush.bf16.xpose.msra.mxu0 0
      %5402 = vmatpush.bf16.xpose.msra.mxu0 0
      %5403 = vmatpush.bf16.xpose.msra.mxu0 0
      %5404 = vmatpush.bf16.xpose.msra.mxu0 0
      %5405 = vmatpush.bf16.xpose.msra.mxu0 %v5396
      %5406 = vmatmul.bf16.gmra.mxu0 %v5393
      %v5407 = vpop.f32.mrf.mxu0
      %v5408 = vadd.f32 0.0, %v5407
      %v5409 = vpop.f32.mrf.mxu0
      %5410 = vdwg.mxu0
      %v5411 = vsel %vm1615, %v5408, -inf
      %5412 = vmax.xlane.f32.xlu0 %v5411
      %v5413 = vpop.xlane.xlu0 %5412
      %v5414 = vsub.f32 %v5408, %v5413
      %v5415 = vmul.f32 %v5414, 1.442695
      %v5416 = vpow.pop %v5415
      %v5417 = vsel %vm1615, %v5416, 0.0
      %5418 = vadd.xlane.f32.xlu0 %v5417
      %v5419 = vpop.xlane.xlu0 %5418
      %v5420 = vrcp.pop %v5419
      %v5421 = vmul.f32 %v5416, %v5420
      %v5422 = vpack.c.bf16 %v5421, %v5421
      %5423 = vrot.lane.b32.xlu0 %v5367, 64
      %v5424 = vpop.permute.xlu0 %5423
      %v5426 = vsel %vm1628, %v5422, 0
      %v5429 = vand.u32 %v5424, %v1635
      %5431 = vmatpush.bf16.msra.mxu0 0
      %5432 = vmatpush.bf16.msra.mxu0 0
      %5433 = vmatpush.bf16.msra.mxu0 0
      %5434 = vmatpush.bf16.msra.mxu0 0
      %5435 = vmatpush.bf16.msra.mxu0 0
      %5436 = vmatpush.bf16.msra.mxu0 0
      %5437 = vmatpush.bf16.msra.mxu0 0
      %5438 = vmatpush.bf16.msra.mxu0 %v5429
      %5439 = vmatmul.bf16.gmra.mxu0 %v5426
      %v5440 = vpop.f32.mrf.mxu0
      %v5441 = vadd.f32 0.0, %v5440
      %v5442 = vpop.f32.mrf.mxu0
      %5443 = vdwg.mxu0
      %5445 = vrot.lane.b32.xlu0 %v5441, 64
      %v5446 = vpop.permute.xlu0 %5445
      %5448 = vst.msk [vmem:[#allocation2 + $0x23] sm:$0x1f] %vm1717, %v5446
      %v5449 = vld [vmem:[#allocation2] sm:$0xff]
      %v5450 = vld [vmem:[#allocation2 + $0x8] sm:$0xff]
      %v5451 = vld [vmem:[#allocation2 + $0x10] sm:$0xff]
      %v5452 = vld [vmem:[#allocation2 + $0x18] sm:$0xff]
      %v5453 = vld [vmem:[#allocation2 + $0x20] sm:$0xff]
      %v5454 = vpack.c.bf16 %v5450, %v5449
      %v5455 = vpack.c.bf16 %v5452, %v5451
      %v5456 = vpack.c.bf16 %v5453, %v5453
      %s5457 = scalar_lea.vmem %s7, 64
      %v5458 = vld [vmem:[%s5457] sm:$0xf]
      %v5459 = vld [vmem:[%s5457 + $0x4] sm:$0xf]
      %v5460 = vld [vmem:[%s5457 + $0x8] sm:$0xf]
      %v5461 = vld [vmem:[%s5457 + $0xc] sm:$0xf]
      %v5462 = vld [vmem:[%s5457 + $0x10] sm:$0xf]
      %v5463 = vld [vmem:[%s5457 + $0x14] sm:$0xf]
      %v5464 = vld [vmem:[%s5457 + $0x18] sm:$0xf]
      %v5465 = vld [vmem:[%s5457 + $0x1c] sm:$0xf]
      %v5466 = vld [vmem:[%s5457 + $0x20] sm:$0xf]
      %v5467 = vld [vmem:[%s5457 + $0x24] sm:$0xf]
      %v5468 = vld [vmem:[%s5457 + $0x28] sm:$0xf]
      %v5469 = vld [vmem:[%s5457 + $0x2c] sm:$0xf]
      %v5470 = vld [vmem:[%s5457 + $0x30] sm:$0xf]
      %v5471 = vld [vmem:[%s5457 + $0x34] sm:$0xf]
      %v5472 = vld [vmem:[%s5457 + $0x38] sm:$0xf]
      %v5473 = vld [vmem:[%s5457 + $0x3c] sm:$0xf]
      %v5490 = vunpack.c.l.b16 %v5458
      %v5491 = vunpack.c.l.b16 %v5459
      %v5492 = vunpack.c.l.b16 %v5460
      %v5493 = vunpack.c.l.b16 %v5461
      %v5494 = vunpack.c.l.b16 %v5462
      %v5495 = vunpack.c.l.b16 %v5463
      %v5496 = vunpack.c.l.b16 %v5464
      %v5497 = vunpack.c.l.b16 %v5465
      %v5498 = vunpack.c.l.b16 %v5466
      %v5499 = vunpack.c.l.b16 %v5467
      %v5500 = vunpack.c.l.b16 %v5468
      %v5501 = vunpack.c.l.b16 %v5469
      %v5502 = vunpack.c.l.b16 %v5470
      %v5503 = vunpack.c.l.b16 %v5471
      %v5504 = vunpack.c.l.b16 %v5472
      %v5505 = vunpack.c.l.b16 %v5473
      %v5506 = vpack.c.b16 %v5491, %v5490
      %v5507 = vpack.c.b16 %v5493, %v5492
      %v5508 = vpack.c.b16 %v5495, %v5494
      %v5509 = vpack.c.b16 %v5497, %v5496
      %v5510 = vpack.c.b16 %v5499, %v5498
      %v5511 = vpack.c.b16 %v5501, %v5500
      %v5512 = vpack.c.b16 %v5503, %v5502
      %v5513 = vpack.c.b16 %v5505, %v5504
      %5522 = vmatpush.bf16.msra.mxu0 %v5513
      %5523 = vmatpush.bf16.msra.mxu0 %v5512
      %5524 = vmatpush.bf16.msra.mxu0 %v5511
      %5525 = vmatpush.bf16.msra.mxu0 %v5510
      %5526 = vmatpush.bf16.msra.mxu0 %v5509
      %5527 = vmatpush.bf16.msra.mxu0 %v5508
      %5528 = vmatpush.bf16.msra.mxu0 %v5507
      %5529 = vmatpush.bf16.msra.mxu0 %v5506
      %5530 = vmatmul.bf16.gmra.mxu0 %v5454
      %v5531 = vpop.f32.mrf.mxu0
      %v5532 = vadd.f32 0.0, %v5531
      %v5533 = vpop.f32.mrf.mxu0
      %v5534 = vadd.f32 0.0, %v5533
      %5535 = vmatmul.bf16.gmra.mxu0 %v5455
      %v5536 = vpop.f32.mrf.mxu0
      %v5537 = vadd.f32 0.0, %v5536
      %v5538 = vpop.f32.mrf.mxu0
      %v5539 = vadd.f32 0.0, %v5538
      %5540 = vmatmul.bf16.gmra.mxu0 %v5456
      %v5541 = vpop.f32.mrf.mxu0
      %v5542 = vadd.f32 0.0, %v5541
      %v5543 = vpop.f32.mrf.mxu0
      %5544 = vdwg.mxu0
      %v5545 = vadd.f32 %v4048, %v5532
      %v5546 = vadd.f32 %v4049, %v5534
      %v5547 = vadd.f32 %v4050, %v5537
      %v5548 = vadd.f32 %v4051, %v5539
      %v5549 = vadd.f32 %v4052, %v5542
      %s5550 = scalar_lea.vmem %s8, 1
      %v5551 = vld [vmem:[%s5550] sm:$0x1]
      %v5553 = vperm.slane %v5551, 0
      %v5555 = vadd.f32 %v5545, %v5553
      %v5556 = vadd.f32 %v5546, %v5553
      %v5557 = vadd.f32 %v5547, %v5553
      %v5558 = vadd.f32 %v5548, %v5553
      %v5559 = vadd.f32 %v5549, %v5553
      %s5560 = scalar_lea.vmem %s9, 1
      %v5561 = vld [vmem:[%s5560] sm:$0x1]
      %s5562 = scalar_lea.vmem %s10, 1
      %v5563 = vld [vmem:[%s5562] sm:$0x1]
      %5564 = vadd.xlane.f32.xlu0 %v5555
      %v5565 = vpop.xlane.xlu0 %5564
      %5566 = vadd.xlane.f32.xlu0 %v5556
      %v5567 = vpop.xlane.xlu0 %5566
      %5568 = vadd.xlane.f32.xlu0 %v5557
      %v5569 = vpop.xlane.xlu0 %5568
      %5570 = vadd.xlane.f32.xlu0 %v5558
      %v5571 = vpop.xlane.xlu0 %5570
      %5572 = vadd.xlane.f32.xlu0 %v5559
      %v5573 = vpop.xlane.xlu0 %5572
      %v5574 = vmul.f32 %v5565, %v1245
      %v5575 = vmul.f32 %v5567, %v1245
      %v5576 = vmul.f32 %v5569, %v1245
      %v5577 = vmul.f32 %v5571, %v1245
      %v5578 = vmul.f32 %v5573, %v1245
      %v5579 = vsub.f32 %v5555, %v5574
      %v5580 = vsub.f32 %v5556, %v5575
      %v5581 = vsub.f32 %v5557, %v5576
      %v5582 = vsub.f32 %v5558, %v5577
      %v5583 = vsub.f32 %v5559, %v5578
      %v5584 = vmul.f32 %v5579, %v5579
      %v5585 = vmul.f32 %v5580, %v5580
      %v5586 = vmul.f32 %v5581, %v5581
      %v5587 = vmul.f32 %v5582, %v5582
      %v5588 = vmul.f32 %v5583, %v5583
      %5589 = vadd.xlane.f32.xlu0 %v5584
      %v5590 = vpop.xlane.xlu0 %5589
      %5591 = vadd.xlane.f32.xlu0 %v5585
      %v5592 = vpop.xlane.xlu0 %5591
      %5593 = vadd.xlane.f32.xlu0 %v5586
      %v5594 = vpop.xlane.xlu0 %5593
      %5595 = vadd.xlane.f32.xlu0 %v5587
      %v5596 = vpop.xlane.xlu0 %5595
      %5597 = vadd.xlane.f32.xlu0 %v5588
      %v5598 = vpop.xlane.xlu0 %5597
      %v5599 = vmul.f32 %v5590, %v1245
      %v5600 = vmul.f32 %v5592, %v1245
      %v5601 = vmul.f32 %v5594, %v1245
      %v5602 = vmul.f32 %v5596, %v1245
      %v5603 = vmul.f32 %v5598, %v1245
      %v5604 = vadd.f32 %v5599, 1e-06
      %v5605 = vadd.f32 %v5600, 1e-06
      %v5606 = vadd.f32 %v5601, 1e-06
      %v5607 = vadd.f32 %v5602, 1e-06
      %v5608 = vadd.f32 %v5603, 1e-06
      %v5609 = vrsqrt.pop %v5604
      %v5610 = vmul.f32 %v5609, %v5604
      %v5611 = vmul.f32 %v5610, %v5609
      %v5612 = vmul.f32 0.5, %v5611
      %v5613 = vsub.f32 1.5, %v5612
      %v5614 = vmul.f32 %v5609, %v5613
      %vm5615 = vweird.f32 %v5604
      %vm5616 = vweird.f32 %v5609
      %vm5617 = vmor %vm5615, %vm5616
      %v5618 = vsel %vm5617, %v5609, %v5614
      %v5619 = vrsqrt.pop %v5605
      %v5620 = vmul.f32 %v5619, %v5605
      %v5621 = vmul.f32 %v5620, %v5619
      %v5622 = vmul.f32 0.5, %v5621
      %v5623 = vsub.f32 1.5, %v5622
      %v5624 = vmul.f32 %v5619, %v5623
      %vm5625 = vweird.f32 %v5605
      %vm5626 = vweird.f32 %v5619
      %vm5627 = vmor %vm5625, %vm5626
      %v5628 = vsel %vm5627, %v5619, %v5624
      %v5629 = vrsqrt.pop %v5606
      %v5630 = vmul.f32 %v5629, %v5606
      %v5631 = vmul.f32 %v5630, %v5629
      %v5632 = vmul.f32 0.5, %v5631
      %v5633 = vsub.f32 1.5, %v5632
      %v5634 = vmul.f32 %v5629, %v5633
      %vm5635 = vweird.f32 %v5606
      %vm5636 = vweird.f32 %v5629
      %vm5637 = vmor %vm5635, %vm5636
      %v5638 = vsel %vm5637, %v5629, %v5634
      %v5639 = vrsqrt.pop %v5607
      %v5640 = vmul.f32 %v5639, %v5607
      %v5641 = vmul.f32 %v5640, %v5639
      %v5642 = vmul.f32 0.5, %v5641
      %v5643 = vsub.f32 1.5, %v5642
      %v5644 = vmul.f32 %v5639, %v5643
      %vm5645 = vweird.f32 %v5607
      %vm5646 = vweird.f32 %v5639
      %vm5647 = vmor %vm5645, %vm5646
      %v5648 = vsel %vm5647, %v5639, %v5644
      %v5649 = vrsqrt.pop %v5608
      %v5650 = vmul.f32 %v5649, %v5608
      %v5651 = vmul.f32 %v5650, %v5649
      %v5652 = vmul.f32 0.5, %v5651
      %v5653 = vsub.f32 1.5, %v5652
      %v5654 = vmul.f32 %v5649, %v5653
      %vm5655 = vweird.f32 %v5608
      %vm5656 = vweird.f32 %v5649
      %vm5657 = vmor %vm5655, %vm5656
      %v5658 = vsel %vm5657, %v5649, %v5654
      %v5659 = vmul.f32 %v5579, %v5618
      %v5660 = vmul.f32 %v5580, %v5628
      %v5661 = vmul.f32 %v5581, %v5638
      %v5662 = vmul.f32 %v5582, %v5648
      %v5663 = vmul.f32 %v5583, %v5658
      %v5665 = vperm.slane %v5561, 0
      %v5667 = vmul.f32 %v5659, %v5665
      %v5668 = vmul.f32 %v5660, %v5665
      %v5669 = vmul.f32 %v5661, %v5665
      %v5670 = vmul.f32 %v5662, %v5665
      %v5671 = vmul.f32 %v5663, %v5665
      %v5673 = vperm.slane %v5563, 0
      %v5675 = vadd.f32 %v5667, %v5673
      %v5676 = vadd.f32 %v5668, %v5673
      %v5677 = vadd.f32 %v5669, %v5673
      %v5678 = vadd.f32 %v5670, %v5673
      %v5679 = vadd.f32 %v5671, %v5673
      %v5680 = vpack.c.bf16 %v5676, %v5675
      %v5681 = vpack.c.bf16 %v5678, %v5677
      %v5682 = vpack.c.bf16 %v5679, %v5679
      %s5683 = scalar_lea.vmem %s11, 256
      %v5684 = vld [vmem:[%s5683] sm:$0xff]
      %v5685 = vld [vmem:[%s5683 + $0x8] sm:$0xff]
      %v5686 = vld [vmem:[%s5683 + $0x10] sm:$0xff]
      %v5687 = vld [vmem:[%s5683 + $0x18] sm:$0xff]
      %v5688 = vld [vmem:[%s5683 + $0x20] sm:$0xff]
      %v5689 = vld [vmem:[%s5683 + $0x28] sm:$0xff]
      %v5690 = vld [vmem:[%s5683 + $0x30] sm:$0xff]
      %v5691 = vld [vmem:[%s5683 + $0x38] sm:$0xff]
      %v5692 = vld [vmem:[%s5683 + $0x40] sm:$0xff]
      %v5693 = vld [vmem:[%s5683 + $0x48] sm:$0xff]
      %v5694 = vld [vmem:[%s5683 + $0x50] sm:$0xff]
      %v5695 = vld [vmem:[%s5683 + $0x58] sm:$0xff]
      %v5696 = vld [vmem:[%s5683 + $0x60] sm:$0xff]
      %v5697 = vld [vmem:[%s5683 + $0x68] sm:$0xff]
      %v5698 = vld [vmem:[%s5683 + $0x70] sm:$0xff]
      %v5699 = vld [vmem:[%s5683 + $0x78] sm:$0xff]
      %v5700 = vld [vmem:[%s5683 + $0x80] sm:$0xff]
      %v5701 = vld [vmem:[%s5683 + $0x88] sm:$0xff]
      %v5702 = vld [vmem:[%s5683 + $0x90] sm:$0xff]
      %v5703 = vld [vmem:[%s5683 + $0x98] sm:$0xff]
      %v5704 = vld [vmem:[%s5683 + $0xa0] sm:$0xff]
      %v5705 = vld [vmem:[%s5683 + $0xa8] sm:$0xff]
      %v5706 = vld [vmem:[%s5683 + $0xb0] sm:$0xff]
      %v5707 = vld [vmem:[%s5683 + $0xb8] sm:$0xff]
      %v5708 = vld [vmem:[%s5683 + $0xc0] sm:$0xff]
      %v5709 = vld [vmem:[%s5683 + $0xc8] sm:$0xff]
      %v5710 = vld [vmem:[%s5683 + $0xd0] sm:$0xff]
      %v5711 = vld [vmem:[%s5683 + $0xd8] sm:$0xff]
      %v5712 = vld [vmem:[%s5683 + $0xe0] sm:$0xff]
      %v5713 = vld [vmem:[%s5683 + $0xe8] sm:$0xff]
      %v5714 = vld [vmem:[%s5683 + $0xf0] sm:$0xff]
      %v5715 = vld [vmem:[%s5683 + $0xf8] sm:$0xff]
      %s5716 = scalar_lea.vmem %s12, 4
      %v5717 = vld [vmem:[%s5716] sm:$0xf]
      %v5719 = vperm.slane %v5717, 0
      %v5720 = vperm.slane %v5717, 1
      %v5721 = vperm.slane %v5717, 2
      %v5722 = vperm.slane %v5717, 3
      %v5759 = vunpack.c.l.b16 %v5684
      %v5760 = vunpack.c.h.b16 %v5684
      %v5761 = vunpack.c.l.b16 %v5685
      %v5762 = vunpack.c.h.b16 %v5685
      %v5763 = vunpack.c.l.b16 %v5686
      %v5764 = vunpack.c.h.b16 %v5686
      %v5765 = vunpack.c.l.b16 %v5687
      %v5766 = vunpack.c.h.b16 %v5687
      %v5767 = vunpack.c.l.b16 %v5688
      %v5768 = vunpack.c.h.b16 %v5688
      %v5769 = vunpack.c.l.b16 %v5689
      %v5770 = vunpack.c.h.b16 %v5689
      %v5771 = vunpack.c.l.b16 %v5690
      %v5772 = vunpack.c.h.b16 %v5690
      %v5773 = vunpack.c.l.b16 %v5691
      %v5774 = vunpack.c.h.b16 %v5691
      %v5775 = vunpack.c.l.b16 %v5692
      %v5776 = vunpack.c.h.b16 %v5692
      %v5777 = vunpack.c.l.b16 %v5693
      %v5778 = vunpack.c.h.b16 %v5693
      %v5779 = vunpack.c.l.b16 %v5694
      %v5780 = vunpack.c.h.b16 %v5694
      %v5781 = vunpack.c.l.b16 %v5695
      %v5782 = vunpack.c.h.b16 %v5695
      %v5783 = vunpack.c.l.b16 %v5696
      %v5784 = vunpack.c.h.b16 %v5696
      %v5785 = vunpack.c.l.b16 %v5697
      %v5786 = vunpack.c.h.b16 %v5697
      %v5787 = vunpack.c.l.b16 %v5698
      %v5788 = vunpack.c.h.b16 %v5698
      %v5789 = vunpack.c.l.b16 %v5699
      %v5790 = vunpack.c.h.b16 %v5699
      %v5791 = vunpack.c.l.b16 %v5700
      %v5792 = vunpack.c.h.b16 %v5700
      %v5793 = vunpack.c.l.b16 %v5701
      %v5794 = vunpack.c.h.b16 %v5701
      %v5795 = vunpack.c.l.b16 %v5702
      %v5796 = vunpack.c.h.b16 %v5702
      %v5797 = vunpack.c.l.b16 %v5703
      %v5798 = vunpack.c.h.b16 %v5703
      %v5799 = vunpack.c.l.b16 %v5704
      %v5800 = vunpack.c.h.b16 %v5704
      %v5801 = vunpack.c.l.b16 %v5705
      %v5802 = vunpack.c.h.b16 %v5705
      %v5803 = vunpack.c.l.b16 %v5706
      %v5804 = vunpack.c.h.b16 %v5706
      %v5805 = vunpack.c.l.b16 %v5707
      %v5806 = vunpack.c.h.b16 %v5707
      %v5807 = vunpack.c.l.b16 %v5708
      %v5808 = vunpack.c.h.b16 %v5708
      %v5809 = vunpack.c.l.b16 %v5709
      %v5810 = vunpack.c.h.b16 %v5709
      %v5811 = vunpack.c.l.b16 %v5710
      %v5812 = vunpack.c.h.b16 %v5710
      %v5813 = vunpack.c.l.b16 %v5711
      %v5814 = vunpack.c.h.b16 %v5711
      %v5815 = vunpack.c.l.b16 %v5712
      %v5816 = vunpack.c.h.b16 %v5712
      %v5817 = vunpack.c.l.b16 %v5713
      %v5818 = vunpack.c.h.b16 %v5713
      %v5819 = vunpack.c.l.b16 %v5714
      %v5820 = vunpack.c.h.b16 %v5714
      %v5821 = vunpack.c.l.b16 %v5715
      %v5822 = vunpack.c.h.b16 %v5715
      %v5823 = vpack.c.b16 %v5763, %v5759
      %v5824 = vpack.c.b16 %v5764, %v5760
      %v5825 = vpack.c.b16 %v5765, %v5761
      %v5826 = vpack.c.b16 %v5766, %v5762
      %v5827 = vpack.c.b16 %v5771, %v5767
      %v5828 = vpack.c.b16 %v5772, %v5768
      %v5829 = vpack.c.b16 %v5773, %v5769
      %v5830 = vpack.c.b16 %v5774, %v5770
      %v5831 = vpack.c.b16 %v5779, %v5775
      %v5832 = vpack.c.b16 %v5780, %v5776
      %v5833 = vpack.c.b16 %v5781, %v5777
      %v5834 = vpack.c.b16 %v5782, %v5778
      %v5835 = vpack.c.b16 %v5787, %v5783
      %v5836 = vpack.c.b16 %v5788, %v5784
      %v5837 = vpack.c.b16 %v5789, %v5785
      %v5838 = vpack.c.b16 %v5790, %v5786
      %v5839 = vpack.c.b16 %v5795, %v5791
      %v5840 = vpack.c.b16 %v5796, %v5792
      %v5841 = vpack.c.b16 %v5797, %v5793
      %v5842 = vpack.c.b16 %v5798, %v5794
      %v5843 = vpack.c.b16 %v5803, %v5799
      %v5844 = vpack.c.b16 %v5804, %v5800
      %v5845 = vpack.c.b16 %v5805, %v5801
      %v5846 = vpack.c.b16 %v5806, %v5802
      %v5847 = vpack.c.b16 %v5811, %v5807
      %v5848 = vpack.c.b16 %v5812, %v5808
      %v5849 = vpack.c.b16 %v5813, %v5809
      %v5850 = vpack.c.b16 %v5814, %v5810
      %v5851 = vpack.c.b16 %v5819, %v5815
      %v5852 = vpack.c.b16 %v5820, %v5816
      %v5853 = vpack.c.b16 %v5821, %v5817
      %v5854 = vpack.c.b16 %v5822, %v5818
      %5887 = vmatpush.bf16.msra.mxu0 %v5851
      %5888 = vmatpush.bf16.msra.mxu0 %v5847
      %5889 = vmatpush.bf16.msra.mxu0 %v5843
      %5890 = vmatpush.bf16.msra.mxu0 %v5839
      %5891 = vmatpush.bf16.msra.mxu0 %v5835
      %5892 = vmatpush.bf16.msra.mxu0 %v5831
      %5893 = vmatpush.bf16.msra.mxu0 %v5827
      %5894 = vmatpush.bf16.msra.mxu0 %v5823
      %5895 = vmatmul.bf16.gmra.mxu0 %v5680
      %v5896 = vpop.f32.mrf.mxu0
      %v5897 = vadd.f32 %v5719, %v5896
      %v5898 = vpop.f32.mrf.mxu0
      %v5899 = vadd.f32 %v5719, %v5898
      %5900 = vmatmul.bf16.gmra.mxu0 %v5681
      %v5901 = vpop.f32.mrf.mxu0
      %v5902 = vadd.f32 %v5719, %v5901
      %v5903 = vpop.f32.mrf.mxu0
      %v5904 = vadd.f32 %v5719, %v5903
      %5905 = vmatmul.bf16.gmra.mxu0 %v5682
      %v5906 = vpop.f32.mrf.mxu0
      %v5907 = vadd.f32 %v5719, %v5906
      %v5908 = vpop.f32.mrf.mxu0
      %5909 = vdwg.mxu0
      %5910 = vmatpush.bf16.msra.mxu0 %v5852
      %5911 = vmatpush.bf16.msra.mxu0 %v5848
      %5912 = vmatpush.bf16.msra.mxu0 %v5844
      %5913 = vmatpush.bf16.msra.mxu0 %v5840
      %5914 = vmatpush.bf16.msra.mxu0 %v5836
      %5915 = vmatpush.bf16.msra.mxu0 %v5832
      %5916 = vmatpush.bf16.msra.mxu0 %v5828
      %5917 = vmatpush.bf16.msra.mxu0 %v5824
      %5918 = vmatmul.bf16.gmra.mxu0 %v5680
      %v5919 = vpop.f32.mrf.mxu0
      %v5920 = vadd.f32 %v5720, %v5919
      %v5921 = vpop.f32.mrf.mxu0
      %v5922 = vadd.f32 %v5720, %v5921
      %5923 = vmatmul.bf16.gmra.mxu0 %v5681
      %v5924 = vpop.f32.mrf.mxu0
      %v5925 = vadd.f32 %v5720, %v5924
      %v5926 = vpop.f32.mrf.mxu0
      %v5927 = vadd.f32 %v5720, %v5926
      %5928 = vmatmul.bf16.gmra.mxu0 %v5682
      %v5929 = vpop.f32.mrf.mxu0
      %v5930 = vadd.f32 %v5720, %v5929
      %v5931 = vpop.f32.mrf.mxu0
      %5932 = vdwg.mxu0
      %5933 = vmatpush.bf16.msra.mxu0 %v5853
      %5934 = vmatpush.bf16.msra.mxu0 %v5849
      %5935 = vmatpush.bf16.msra.mxu0 %v5845
      %5936 = vmatpush.bf16.msra.mxu0 %v5841
      %5937 = vmatpush.bf16.msra.mxu0 %v5837
      %5938 = vmatpush.bf16.msra.mxu0 %v5833
      %5939 = vmatpush.bf16.msra.mxu0 %v5829
      %5940 = vmatpush.bf16.msra.mxu0 %v5825
      %5941 = vmatmul.bf16.gmra.mxu0 %v5680
      %v5942 = vpop.f32.mrf.mxu0
      %v5943 = vadd.f32 %v5721, %v5942
      %v5944 = vpop.f32.mrf.mxu0
      %v5945 = vadd.f32 %v5721, %v5944
      %5946 = vmatmul.bf16.gmra.mxu0 %v5681
      %v5947 = vpop.f32.mrf.mxu0
      %v5948 = vadd.f32 %v5721, %v5947
      %v5949 = vpop.f32.mrf.mxu0
      %v5950 = vadd.f32 %v5721, %v5949
      %5951 = vmatmul.bf16.gmra.mxu0 %v5682
      %v5952 = vpop.f32.mrf.mxu0
      %v5953 = vadd.f32 %v5721, %v5952
      %v5954 = vpop.f32.mrf.mxu0
      %5955 = vdwg.mxu0
      %5956 = vmatpush.bf16.msra.mxu0 %v5854
      %5957 = vmatpush.bf16.msra.mxu0 %v5850
      %5958 = vmatpush.bf16.msra.mxu0 %v5846
      %5959 = vmatpush.bf16.msra.mxu0 %v5842
      %5960 = vmatpush.bf16.msra.mxu0 %v5838
      %5961 = vmatpush.bf16.msra.mxu0 %v5834
      %5962 = vmatpush.bf16.msra.mxu0 %v5830
      %5963 = vmatpush.bf16.msra.mxu0 %v5826
      %5964 = vmatmul.bf16.gmra.mxu0 %v5680
      %v5965 = vpop.f32.mrf.mxu0
      %v5966 = vadd.f32 %v5722, %v5965
      %v5967 = vpop.f32.mrf.mxu0
      %v5968 = vadd.f32 %v5722, %v5967
      %5969 = vmatmul.bf16.gmra.mxu0 %v5681
      %v5970 = vpop.f32.mrf.mxu0
      %v5971 = vadd.f32 %v5722, %v5970
      %v5972 = vpop.f32.mrf.mxu0
      %v5973 = vadd.f32 %v5722, %v5972
      %5974 = vmatmul.bf16.gmra.mxu0 %v5682
      %v5975 = vpop.f32.mrf.mxu0
      %v5976 = vadd.f32 %v5722, %v5975
      %v5977 = vpop.f32.mrf.mxu0
      %5978 = vdwg.mxu0
      %v5979 = vmul.f32 %v5897, 0.5
      %v5980 = vmul.f32 %v5920, 0.5
      %v5981 = vmul.f32 %v5943, 0.5
      %v5982 = vmul.f32 %v5966, 0.5
      %v5983 = vmul.f32 %v5899, 0.5
      %v5984 = vmul.f32 %v5922, 0.5
      %v5985 = vmul.f32 %v5945, 0.5
      %v5986 = vmul.f32 %v5968, 0.5
      %v5987 = vmul.f32 %v5902, 0.5
      %v5988 = vmul.f32 %v5925, 0.5
      %v5989 = vmul.f32 %v5948, 0.5
      %v5990 = vmul.f32 %v5971, 0.5
      %v5991 = vmul.f32 %v5904, 0.5
      %v5992 = vmul.f32 %v5927, 0.5
      %v5993 = vmul.f32 %v5950, 0.5
      %v5994 = vmul.f32 %v5973, 0.5
      %v5995 = vmul.f32 %v5907, 0.5
      %v5996 = vmul.f32 %v5930, 0.5
      %v5997 = vmul.f32 %v5953, 0.5
      %v5998 = vmul.f32 %v5976, 0.5
      %v5999 = vmul.f32 %v5897, 0.70710677
      %v6000 = vmul.f32 %v5920, 0.70710677
      %v6001 = vmul.f32 %v5943, 0.70710677
      %v6002 = vmul.f32 %v5966, 0.70710677
      %v6003 = vmul.f32 %v5899, 0.70710677
      %v6004 = vmul.f32 %v5922, 0.70710677
      %v6005 = vmul.f32 %v5945, 0.70710677
      %v6006 = vmul.f32 %v5968, 0.70710677
      %v6007 = vmul.f32 %v5902, 0.70710677
      %v6008 = vmul.f32 %v5925, 0.70710677
      %v6009 = vmul.f32 %v5948, 0.70710677
      %v6010 = vmul.f32 %v5971, 0.70710677
      %v6011 = vmul.f32 %v5904, 0.70710677
      %v6012 = vmul.f32 %v5927, 0.70710677
      %v6013 = vmul.f32 %v5950, 0.70710677
      %v6014 = vmul.f32 %v5973, 0.70710677
      %v6015 = vmul.f32 %v5907, 0.70710677
      %v6016 = vmul.f32 %v5930, 0.70710677
      %v6017 = vmul.f32 %v5953, 0.70710677
      %v6018 = vmul.f32 %v5976, 0.70710677
      %vm6019 = vcmp.ge.f32.partialorder %v5999, 0.0
      %vm6020 = vcmp.ge.f32.partialorder %v6000, 0.0
      %vm6021 = vcmp.ge.f32.partialorder %v6001, 0.0
      %vm6022 = vcmp.ge.f32.partialorder %v6002, 0.0
      %vm6023 = vcmp.ge.f32.partialorder %v6003, 0.0
      %vm6024 = vcmp.ge.f32.partialorder %v6004, 0.0
      %vm6025 = vcmp.ge.f32.partialorder %v6005, 0.0
      %vm6026 = vcmp.ge.f32.partialorder %v6006, 0.0
      %vm6027 = vcmp.ge.f32.partialorder %v6007, 0.0
      %vm6028 = vcmp.ge.f32.partialorder %v6008, 0.0
      %vm6029 = vcmp.ge.f32.partialorder %v6009, 0.0
      %vm6030 = vcmp.ge.f32.partialorder %v6010, 0.0
      %vm6031 = vcmp.ge.f32.partialorder %v6011, 0.0
      %vm6032 = vcmp.ge.f32.partialorder %v6012, 0.0
      %vm6033 = vcmp.ge.f32.partialorder %v6013, 0.0
      %vm6034 = vcmp.ge.f32.partialorder %v6014, 0.0
      %vm6035 = vcmp.ge.f32.partialorder %v6015, 0.0
      %vm6036 = vcmp.ge.f32.partialorder %v6016, 0.0
      %vm6037 = vcmp.ge.f32.partialorder %v6017, 0.0
      %vm6038 = vcmp.ge.f32.partialorder %v6018, 0.0
      %v6039 = vsel %vm6019, 1.0, -1.0
      %v6040 = vsel %vm6020, 1.0, -1.0
      %v6041 = vsel %vm6021, 1.0, -1.0
      %v6042 = vsel %vm6022, 1.0, -1.0
      %v6043 = vsel %vm6023, 1.0, -1.0
      %v6044 = vsel %vm6024, 1.0, -1.0
      %v6045 = vsel %vm6025, 1.0, -1.0
      %v6046 = vsel %vm6026, 1.0, -1.0
      %v6047 = vsel %vm6027, 1.0, -1.0
      %v6048 = vsel %vm6028, 1.0, -1.0
      %v6049 = vsel %vm6029, 1.0, -1.0
      %v6050 = vsel %vm6030, 1.0, -1.0
      %v6051 = vsel %vm6031, 1.0, -1.0
      %v6052 = vsel %vm6032, 1.0, -1.0
      %v6053 = vsel %vm6033, 1.0, -1.0
      %v6054 = vsel %vm6034, 1.0, -1.0
      %v6055 = vsel %vm6035, 1.0, -1.0
      %v6056 = vsel %vm6036, 1.0, -1.0
      %v6057 = vsel %vm6037, 1.0, -1.0
      %v6058 = vsel %vm6038, 1.0, -1.0
      %v6059 = vand.u32 2147483647, %v5999
      %v6060 = vand.u32 2147483647, %v6000
      %v6061 = vand.u32 2147483647, %v6001
      %v6062 = vand.u32 2147483647, %v6002
      %v6063 = vand.u32 2147483647, %v6003
      %v6064 = vand.u32 2147483647, %v6004
      %v6065 = vand.u32 2147483647, %v6005
      %v6066 = vand.u32 2147483647, %v6006
      %v6067 = vand.u32 2147483647, %v6007
      %v6068 = vand.u32 2147483647, %v6008
      %v6069 = vand.u32 2147483647, %v6009
      %v6070 = vand.u32 2147483647, %v6010
      %v6071 = vand.u32 2147483647, %v6011
      %v6072 = vand.u32 2147483647, %v6012
      %v6073 = vand.u32 2147483647, %v6013
      %v6074 = vand.u32 2147483647, %v6014
      %v6075 = vand.u32 2147483647, %v6015
      %v6076 = vand.u32 2147483647, %v6016
      %v6077 = vand.u32 2147483647, %v6017
      %v6078 = vand.u32 2147483647, %v6018
      %v6079 = vmul.f32 %v6059, 0.3275911
      %v6080 = vmul.f32 %v6060, 0.3275911
      %v6081 = vmul.f32 %v6061, 0.3275911
      %v6082 = vmul.f32 %v6062, 0.3275911
      %v6083 = vmul.f32 %v6063, 0.3275911
      %v6084 = vmul.f32 %v6064, 0.3275911
      %v6085 = vmul.f32 %v6065, 0.3275911
      %v6086 = vmul.f32 %v6066, 0.3275911
      %v6087 = vmul.f32 %v6067, 0.3275911
      %v6088 = vmul.f32 %v6068, 0.3275911
      %v6089 = vmul.f32 %v6069, 0.3275911
      %v6090 = vmul.f32 %v6070, 0.3275911
      %v6091 = vmul.f32 %v6071, 0.3275911
      %v6092 = vmul.f32 %v6072, 0.3275911
      %v6093 = vmul.f32 %v6073, 0.3275911
      %v6094 = vmul.f32 %v6074, 0.3275911
      %v6095 = vmul.f32 %v6075, 0.3275911
      %v6096 = vmul.f32 %v6076, 0.3275911
      %v6097 = vmul.f32 %v6077, 0.3275911
      %v6098 = vmul.f32 %v6078, 0.3275911
      %v6099 = vadd.f32 %v6079, 1.0
      %v6100 = vadd.f32 %v6080, 1.0
      %v6101 = vadd.f32 %v6081, 1.0
      %v6102 = vadd.f32 %v6082, 1.0
      %v6103 = vadd.f32 %v6083, 1.0
      %v6104 = vadd.f32 %v6084, 1.0
      %v6105 = vadd.f32 %v6085, 1.0
      %v6106 = vadd.f32 %v6086, 1.0
      %v6107 = vadd.f32 %v6087, 1.0
      %v6108 = vadd.f32 %v6088, 1.0
      %v6109 = vadd.f32 %v6089, 1.0
      %v6110 = vadd.f32 %v6090, 1.0
      %v6111 = vadd.f32 %v6091, 1.0
      %v6112 = vadd.f32 %v6092, 1.0
      %v6113 = vadd.f32 %v6093, 1.0
      %v6114 = vadd.f32 %v6094, 1.0
      %v6115 = vadd.f32 %v6095, 1.0
      %v6116 = vadd.f32 %v6096, 1.0
      %v6117 = vadd.f32 %v6097, 1.0
      %v6118 = vadd.f32 %v6098, 1.0
      %v6119 = vrcp.pop %v6099
      %v6120 = vrcp.pop %v6100
      %v6121 = vrcp.pop %v6101
      %v6122 = vrcp.pop %v6102
      %v6123 = vrcp.pop %v6103
      %v6124 = vrcp.pop %v6104
      %v6125 = vrcp.pop %v6105
      %v6126 = vrcp.pop %v6106
      %v6127 = vrcp.pop %v6107
      %v6128 = vrcp.pop %v6108
      %v6129 = vrcp.pop %v6109
      %v6130 = vrcp.pop %v6110
      %v6131 = vrcp.pop %v6111
      %v6132 = vrcp.pop %v6112
      %v6133 = vrcp.pop %v6113
      %v6134 = vrcp.pop %v6114
      %v6135 = vrcp.pop %v6115
      %v6136 = vrcp.pop %v6116
      %v6137 = vrcp.pop %v6117
      %v6138 = vrcp.pop %v6118
      %v6139 = vmul.f32 %v6119, 1.0614054
      %v6140 = vmul.f32 %v6120, 1.0614054
      %v6141 = vmul.f32 %v6121, 1.0614054
      %v6142 = vmul.f32 %v6122, 1.0614054
      %v6143 = vmul.f32 %v6123, 1.0614054
      %v6144 = vmul.f32 %v6124, 1.0614054
      %v6145 = vmul.f32 %v6125, 1.0614054
      %v6146 = vmul.f32 %v6126, 1.0614054
      %v6147 = vmul.f32 %v6127, 1.0614054
      %v6148 = vmul.f32 %v6128, 1.0614054
      %v6149 = vmul.f32 %v6129, 1.0614054
      %v6150 = vmul.f32 %v6130, 1.0614054
      %v6151 = vmul.f32 %v6131, 1.0614054
      %v6152 = vmul.f32 %v6132, 1.0614054
      %v6153 = vmul.f32 %v6133, 1.0614054
      %v6154 = vmul.f32 %v6134, 1.0614054
      %v6155 = vmul.f32 %v6135, 1.0614054
      %v6156 = vmul.f32 %v6136, 1.0614054
      %v6157 = vmul.f32 %v6137, 1.0614054
      %v6158 = vmul.f32 %v6138, 1.0614054
      %v6159 = vadd.f32 %v6139, -1.4531521
      %v6160 = vadd.f32 %v6140, -1.4531521
      %v6161 = vadd.f32 %v6141, -1.4531521
      %v6162 = vadd.f32 %v6142, -1.4531521
      %v6163 = vadd.f32 %v6143, -1.4531521
      %v6164 = vadd.f32 %v6144, -1.4531521
      %v6165 = vadd.f32 %v6145, -1.4531521
      %v6166 = vadd.f32 %v6146, -1.4531521
      %v6167 = vadd.f32 %v6147, -1.4531521
      %v6168 = vadd.f32 %v6148, -1.4531521
      %v6169 = vadd.f32 %v6149, -1.4531521
      %v6170 = vadd.f32 %v6150, -1.4531521
      %v6171 = vadd.f32 %v6151, -1.4531521
      %v6172 = vadd.f32 %v6152, -1.4531521
      %v6173 = vadd.f32 %v6153, -1.4531521
      %v6174 = vadd.f32 %v6154, -1.4531521
      %v6175 = vadd.f32 %v6155, -1.4531521
      %v6176 = vadd.f32 %v6156, -1.4531521
      %v6177 = vadd.f32 %v6157, -1.4531521
      %v6178 = vadd.f32 %v6158, -1.4531521
      %v6179 = vmul.f32 %v6159, %v6119
      %v6180 = vmul.f32 %v6160, %v6120
      %v6181 = vmul.f32 %v6161, %v6121
      %v6182 = vmul.f32 %v6162, %v6122
      %v6183 = vmul.f32 %v6163, %v6123
      %v6184 = vmul.f32 %v6164, %v6124
      %v6185 = vmul.f32 %v6165, %v6125
      %v6186 = vmul.f32 %v6166, %v6126
      %v6187 = vmul.f32 %v6167, %v6127
      %v6188 = vmul.f32 %v6168, %v6128
      %v6189 = vmul.f32 %v6169, %v6129
      %v6190 = vmul.f32 %v6170, %v6130
      %v6191 = vmul.f32 %v6171, %v6131
      %v6192 = vmul.f32 %v6172, %v6132
      %v6193 = vmul.f32 %v6173, %v6133
      %v6194 = vmul.f32 %v6174, %v6134
      %v6195 = vmul.f32 %v6175, %v6135
      %v6196 = vmul.f32 %v6176, %v6136
      %v6197 = vmul.f32 %v6177, %v6137
      %v6198 = vmul.f32 %v6178, %v6138
      %v6199 = vadd.f32 %v6179, 1.4214138
      %v6200 = vadd.f32 %v6180, 1.4214138
      %v6201 = vadd.f32 %v6181, 1.4214138
      %v6202 = vadd.f32 %v6182, 1.4214138
      %v6203 = vadd.f32 %v6183, 1.4214138
      %v6204 = vadd.f32 %v6184, 1.4214138
      %v6205 = vadd.f32 %v6185, 1.4214138
      %v6206 = vadd.f32 %v6186, 1.4214138
      %v6207 = vadd.f32 %v6187, 1.4214138
      %v6208 = vadd.f32 %v6188, 1.4214138
      %v6209 = vadd.f32 %v6189, 1.4214138
      %v6210 = vadd.f32 %v6190, 1.4214138
      %v6211 = vadd.f32 %v6191, 1.4214138
      %v6212 = vadd.f32 %v6192, 1.4214138
      %v6213 = vadd.f32 %v6193, 1.4214138
      %v6214 = vadd.f32 %v6194, 1.4214138
      %v6215 = vadd.f32 %v6195, 1.4214138
      %v6216 = vadd.f32 %v6196, 1.4214138
      %v6217 = vadd.f32 %v6197, 1.4214138
      %v6218 = vadd.f32 %v6198, 1.4214138
      %v6219 = vmul.f32 %v6199, %v6119
      %v6220 = vmul.f32 %v6200, %v6120
      %v6221 = vmul.f32 %v6201, %v6121
      %v6222 = vmul.f32 %v6202, %v6122
      %v6223 = vmul.f32 %v6203, %v6123
      %v6224 = vmul.f32 %v6204, %v6124
      %v6225 = vmul.f32 %v6205, %v6125
      %v6226 = vmul.f32 %v6206, %v6126
      %v6227 = vmul.f32 %v6207, %v6127
      %v6228 = vmul.f32 %v6208, %v6128
      %v6229 = vmul.f32 %v6209, %v6129
      %v6230 = vmul.f32 %v6210, %v6130
      %v6231 = vmul.f32 %v6211, %v6131
      %v6232 = vmul.f32 %v6212, %v6132
      %v6233 = vmul.f32 %v6213, %v6133
      %v6234 = vmul.f32 %v6214, %v6134
      %v6235 = vmul.f32 %v6215, %v6135
      %v6236 = vmul.f32 %v6216, %v6136
      %v6237 = vmul.f32 %v6217, %v6137
      %v6238 = vmul.f32 %v6218, %v6138
      %v6239 = vadd.f32 %v6219, -0.28449672
      %v6240 = vadd.f32 %v6220, -0.28449672
      %v6241 = vadd.f32 %v6221, -0.28449672
      %v6242 = vadd.f32 %v6222, -0.28449672
      %v6243 = vadd.f32 %v6223, -0.28449672
      %v6244 = vadd.f32 %v6224, -0.28449672
      %v6245 = vadd.f32 %v6225, -0.28449672
      %v6246 = vadd.f32 %v6226, -0.28449672
      %v6247 = vadd.f32 %v6227, -0.28449672
      %v6248 = vadd.f32 %v6228, -0.28449672
      %v6249 = vadd.f32 %v6229, -0.28449672
      %v6250 = vadd.f32 %v6230, -0.28449672
      %v6251 = vadd.f32 %v6231, -0.28449672
      %v6252 = vadd.f32 %v6232, -0.28449672
      %v6253 = vadd.f32 %v6233, -0.28449672
      %v6254 = vadd.f32 %v6234, -0.28449672
      %v6255 = vadd.f32 %v6235, -0.28449672
      %v6256 = vadd.f32 %v6236, -0.28449672
      %v6257 = vadd.f32 %v6237, -0.28449672
      %v6258 = vadd.f32 %v6238, -0.28449672
      %v6259 = vmul.f32 %v6239, %v6119
      %v6260 = vmul.f32 %v6240, %v6120
      %v6261 = vmul.f32 %v6241, %v6121
      %v6262 = vmul.f32 %v6242, %v6122
      %v6263 = vmul.f32 %v6243, %v6123
      %v6264 = vmul.f32 %v6244, %v6124
      %v6265 = vmul.f32 %v6245, %v6125
      %v6266 = vmul.f32 %v6246, %v6126
      %v6267 = vmul.f32 %v6247, %v6127
      %v6268 = vmul.f32 %v6248, %v6128
      %v6269 = vmul.f32 %v6249, %v6129
      %v6270 = vmul.f32 %v6250, %v6130
      %v6271 = vmul.f32 %v6251, %v6131
      %v6272 = vmul.f32 %v6252, %v6132
      %v6273 = vmul.f32 %v6253, %v6133
      %v6274 = vmul.f32 %v6254, %v6134
      %v6275 = vmul.f32 %v6255, %v6135
      %v6276 = vmul.f32 %v6256, %v6136
      %v6277 = vmul.f32 %v6257, %v6137
      %v6278 = vmul.f32 %v6258, %v6138
      %v6279 = vadd.f32 %v6259, 0.2548296
      %v6280 = vadd.f32 %v6260, 0.2548296
      %v6281 = vadd.f32 %v6261, 0.2548296
      %v6282 = vadd.f32 %v6262, 0.2548296
      %v6283 = vadd.f32 %v6263, 0.2548296
      %v6284 = vadd.f32 %v6264, 0.2548296
      %v6285 = vadd.f32 %v6265, 0.2548296
      %v6286 = vadd.f32 %v6266, 0.2548296
      %v6287 = vadd.f32 %v6267, 0.2548296
      %v6288 = vadd.f32 %v6268, 0.2548296
      %v6289 = vadd.f32 %v6269, 0.2548296
      %v6290 = vadd.f32 %v6270, 0.2548296
      %v6291 = vadd.f32 %v6271, 0.2548296
      %v6292 = vadd.f32 %v6272, 0.2548296
      %v6293 = vadd.f32 %v6273, 0.2548296
      %v6294 = vadd.f32 %v6274, 0.2548296
      %v6295 = vadd.f32 %v6275, 0.2548296
      %v6296 = vadd.f32 %v6276, 0.2548296
      %v6297 = vadd.f32 %v6277, 0.2548296
      %v6298 = vadd.f32 %v6278, 0.2548296
      %v6299 = vmul.f32 %v6279, %v6119
      %v6300 = vmul.f32 %v6280, %v6120
      %v6301 = vmul.f32 %v6281, %v6121
      %v6302 = vmul.f32 %v6282, %v6122
      %v6303 = vmul.f32 %v6283, %v6123
      %v6304 = vmul.f32 %v6284, %v6124
      %v6305 = vmul.f32 %v6285, %v6125
      %v6306 = vmul.f32 %v6286, %v6126
      %v6307 = vmul.f32 %v6287, %v6127
      %v6308 = vmul.f32 %v6288, %v6128
      %v6309 = vmul.f32 %v6289, %v6129
      %v6310 = vmul.f32 %v6290, %v6130
      %v6311 = vmul.f32 %v6291, %v6131
      %v6312 = vmul.f32 %v6292, %v6132
      %v6313 = vmul.f32 %v6293, %v6133
      %v6314 = vmul.f32 %v6294, %v6134
      %v6315 = vmul.f32 %v6295, %v6135
      %v6316 = vmul.f32 %v6296, %v6136
      %v6317 = vmul.f32 %v6297, %v6137
      %v6318 = vmul.f32 %v6298, %v6138
      %v6319 = vsub.f32 0.0, %v6059
      %v6320 = vsub.f32 0.0, %v6060
      %v6321 = vsub.f32 0.0, %v6061
      %v6322 = vsub.f32 0.0, %v6062
      %v6323 = vsub.f32 0.0, %v6063
      %v6324 = vsub.f32 0.0, %v6064
      %v6325 = vsub.f32 0.0, %v6065
      %v6326 = vsub.f32 0.0, %v6066
      %v6327 = vsub.f32 0.0, %v6067
      %v6328 = vsub.f32 0.0, %v6068
      %v6329 = vsub.f32 0.0, %v6069
      %v6330 = vsub.f32 0.0, %v6070
      %v6331 = vsub.f32 0.0, %v6071
      %v6332 = vsub.f32 0.0, %v6072
      %v6333 = vsub.f32 0.0, %v6073
      %v6334 = vsub.f32 0.0, %v6074
      %v6335 = vsub.f32 0.0, %v6075
      %v6336 = vsub.f32 0.0, %v6076
      %v6337 = vsub.f32 0.0, %v6077
      %v6338 = vsub.f32 0.0, %v6078
      %v6339 = vmul.f32 %v6319, %v6059
      %v6340 = vmul.f32 %v6320, %v6060
      %v6341 = vmul.f32 %v6321, %v6061
      %v6342 = vmul.f32 %v6322, %v6062
      %v6343 = vmul.f32 %v6323, %v6063
      %v6344 = vmul.f32 %v6324, %v6064
      %v6345 = vmul.f32 %v6325, %v6065
      %v6346 = vmul.f32 %v6326, %v6066
      %v6347 = vmul.f32 %v6327, %v6067
      %v6348 = vmul.f32 %v6328, %v6068
      %v6349 = vmul.f32 %v6329, %v6069
      %v6350 = vmul.f32 %v6330, %v6070
      %v6351 = vmul.f32 %v6331, %v6071
      %v6352 = vmul.f32 %v6332, %v6072
      %v6353 = vmul.f32 %v6333, %v6073
      %v6354 = vmul.f32 %v6334, %v6074
      %v6355 = vmul.f32 %v6335, %v6075
      %v6356 = vmul.f32 %v6336, %v6076
      %v6357 = vmul.f32 %v6337, %v6077
      %v6358 = vmul.f32 %v6338, %v6078
      %v6359 = vmul.f32 %v6339, 1.442695
      %v6360 = vpow.pop %v6359
      %v6361 = vmul.f32 %v6340, 1.442695
      %v6362 = vpow.pop %v6361
      %v6363 = vmul.f32 %v6341, 1.442695
      %v6364 = vpow.pop %v6363
      %v6365 = vmul.f32 %v6342, 1.442695
      %v6366 = vpow.pop %v6365
      %v6367 = vmul.f32 %v6343, 1.442695
      %v6368 = vpow.pop %v6367
      %v6369 = vmul.f32 %v6344, 1.442695
      %v6370 = vpow.pop %v6369
      %v6371 = vmul.f32 %v6345, 1.442695
      %v6372 = vpow.pop %v6371
      %v6373 = vmul.f32 %v6346, 1.442695
      %v6374 = vpow.pop %v6373
      %v6375 = vmul.f32 %v6347, 1.442695
      %v6376 = vpow.pop %v6375
      %v6377 = vmul.f32 %v6348, 1.442695
      %v6378 = vpow.pop %v6377
      %v6379 = vmul.f32 %v6349, 1.442695
      %v6380 = vpow.pop %v6379
      %v6381 = vmul.f32 %v6350, 1.442695
      %v6382 = vpow.pop %v6381
      %v6383 = vmul.f32 %v6351, 1.442695
      %v6384 = vpow.pop %v6383
      %v6385 = vmul.f32 %v6352, 1.442695
      %v6386 = vpow.pop %v6385
      %v6387 = vmul.f32 %v6353, 1.442695
      %v6388 = vpow.pop %v6387
      %v6389 = vmul.f32 %v6354, 1.442695
      %v6390 = vpow.pop %v6389
      %v6391 = vmul.f32 %v6355, 1.442695
      %v6392 = vpow.pop %v6391
      %v6393 = vmul.f32 %v6356, 1.442695
      %v6394 = vpow.pop %v6393
      %v6395 = vmul.f32 %v6357, 1.442695
      %v6396 = vpow.pop %v6395
      %v6397 = vmul.f32 %v6358, 1.442695
      %v6398 = vpow.pop %v6397
      %v6399 = vmul.f32 %v6299, %v6360
      %v6400 = vmul.f32 %v6300, %v6362
      %v6401 = vmul.f32 %v6301, %v6364
      %v6402 = vmul.f32 %v6302, %v6366
      %v6403 = vmul.f32 %v6303, %v6368
      %v6404 = vmul.f32 %v6304, %v6370
      %v6405 = vmul.f32 %v6305, %v6372
      %v6406 = vmul.f32 %v6306, %v6374
      %v6407 = vmul.f32 %v6307, %v6376
      %v6408 = vmul.f32 %v6308, %v6378
      %v6409 = vmul.f32 %v6309, %v6380
      %v6410 = vmul.f32 %v6310, %v6382
      %v6411 = vmul.f32 %v6311, %v6384
      %v6412 = vmul.f32 %v6312, %v6386
      %v6413 = vmul.f32 %v6313, %v6388
      %v6414 = vmul.f32 %v6314, %v6390
      %v6415 = vmul.f32 %v6315, %v6392
      %v6416 = vmul.f32 %v6316, %v6394
      %v6417 = vmul.f32 %v6317, %v6396
      %v6418 = vmul.f32 %v6318, %v6398
      %v6419 = vsub.f32 1.0, %v6399
      %v6420 = vsub.f32 1.0, %v6400
      %v6421 = vsub.f32 1.0, %v6401
      %v6422 = vsub.f32 1.0, %v6402
      %v6423 = vsub.f32 1.0, %v6403
      %v6424 = vsub.f32 1.0, %v6404
      %v6425 = vsub.f32 1.0, %v6405
      %v6426 = vsub.f32 1.0, %v6406
      %v6427 = vsub.f32 1.0, %v6407
      %v6428 = vsub.f32 1.0, %v6408
      %v6429 = vsub.f32 1.0, %v6409
      %v6430 = vsub.f32 1.0, %v6410
      %v6431 = vsub.f32 1.0, %v6411
      %v6432 = vsub.f32 1.0, %v6412
      %v6433 = vsub.f32 1.0, %v6413
      %v6434 = vsub.f32 1.0, %v6414
      %v6435 = vsub.f32 1.0, %v6415
      %v6436 = vsub.f32 1.0, %v6416
      %v6437 = vsub.f32 1.0, %v6417
      %v6438 = vsub.f32 1.0, %v6418
      %v6439 = vmul.f32 %v6039, %v6419
      %v6440 = vmul.f32 %v6040, %v6420
      %v6441 = vmul.f32 %v6041, %v6421
      %v6442 = vmul.f32 %v6042, %v6422
      %v6443 = vmul.f32 %v6043, %v6423
      %v6444 = vmul.f32 %v6044, %v6424
      %v6445 = vmul.f32 %v6045, %v6425
      %v6446 = vmul.f32 %v6046, %v6426
      %v6447 = vmul.f32 %v6047, %v6427
      %v6448 = vmul.f32 %v6048, %v6428
      %v6449 = vmul.f32 %v6049, %v6429
      %v6450 = vmul.f32 %v6050, %v6430
      %v6451 = vmul.f32 %v6051, %v6431
      %v6452 = vmul.f32 %v6052, %v6432
      %v6453 = vmul.f32 %v6053, %v6433
      %v6454 = vmul.f32 %v6054, %v6434
      %v6455 = vmul.f32 %v6055, %v6435
      %v6456 = vmul.f32 %v6056, %v6436
      %v6457 = vmul.f32 %v6057, %v6437
      %v6458 = vmul.f32 %v6058, %v6438
      %v6459 = vadd.f32 %v6439, 1.0
      %v6460 = vadd.f32 %v6440, 1.0
      %v6461 = vadd.f32 %v6441, 1.0
      %v6462 = vadd.f32 %v6442, 1.0
      %v6463 = vadd.f32 %v6443, 1.0
      %v6464 = vadd.f32 %v6444, 1.0
      %v6465 = vadd.f32 %v6445, 1.0
      %v6466 = vadd.f32 %v6446, 1.0
      %v6467 = vadd.f32 %v6447, 1.0
      %v6468 = vadd.f32 %v6448, 1.0
      %v6469 = vadd.f32 %v6449, 1.0
      %v6470 = vadd.f32 %v6450, 1.0
      %v6471 = vadd.f32 %v6451, 1.0
      %v6472 = vadd.f32 %v6452, 1.0
      %v6473 = vadd.f32 %v6453, 1.0
      %v6474 = vadd.f32 %v6454, 1.0
      %v6475 = vadd.f32 %v6455, 1.0
      %v6476 = vadd.f32 %v6456, 1.0
      %v6477 = vadd.f32 %v6457, 1.0
      %v6478 = vadd.f32 %v6458, 1.0
      %v6479 = vmul.f32 %v5979, %v6459
      %v6480 = vmul.f32 %v5980, %v6460
      %v6481 = vmul.f32 %v5981, %v6461
      %v6482 = vmul.f32 %v5982, %v6462
      %v6483 = vmul.f32 %v5983, %v6463
      %v6484 = vmul.f32 %v5984, %v6464
      %v6485 = vmul.f32 %v5985, %v6465
      %v6486 = vmul.f32 %v5986, %v6466
      %v6487 = vmul.f32 %v5987, %v6467
      %v6488 = vmul.f32 %v5988, %v6468
      %v6489 = vmul.f32 %v5989, %v6469
      %v6490 = vmul.f32 %v5990, %v6470
      %v6491 = vmul.f32 %v5991, %v6471
      %v6492 = vmul.f32 %v5992, %v6472
      %v6493 = vmul.f32 %v5993, %v6473
      %v6494 = vmul.f32 %v5994, %v6474
      %v6495 = vmul.f32 %v5995, %v6475
      %v6496 = vmul.f32 %v5996, %v6476
      %v6497 = vmul.f32 %v5997, %v6477
      %v6498 = vmul.f32 %v5998, %v6478
      %v6499 = vpack.c.bf16 %v6483, %v6479
      %v6500 = vpack.c.bf16 %v6484, %v6480
      %v6501 = vpack.c.bf16 %v6485, %v6481
      %v6502 = vpack.c.bf16 %v6486, %v6482
      %v6503 = vpack.c.bf16 %v6491, %v6487
      %v6504 = vpack.c.bf16 %v6492, %v6488
      %v6505 = vpack.c.bf16 %v6493, %v6489
      %v6506 = vpack.c.bf16 %v6494, %v6490
      %v6507 = vpack.c.bf16 %v6495, %v6495
      %v6508 = vpack.c.bf16 %v6496, %v6496
      %v6509 = vpack.c.bf16 %v6497, %v6497
      %v6510 = vpack.c.bf16 %v6498, %v6498
      %s6511 = scalar_lea.vmem %s13, 256
      %v6512 = vld [vmem:[%s6511] sm:$0xf]
      %v6513 = vld [vmem:[%s6511 + $0x4] sm:$0xf]
      %v6514 = vld [vmem:[%s6511 + $0x8] sm:$0xf]
      %v6515 = vld [vmem:[%s6511 + $0xc] sm:$0xf]
      %v6516 = vld [vmem:[%s6511 + $0x10] sm:$0xf]
      %v6517 = vld [vmem:[%s6511 + $0x14] sm:$0xf]
      %v6518 = vld [vmem:[%s6511 + $0x18] sm:$0xf]
      %v6519 = vld [vmem:[%s6511 + $0x1c] sm:$0xf]
      %v6520 = vld [vmem:[%s6511 + $0x20] sm:$0xf]
      %v6521 = vld [vmem:[%s6511 + $0x24] sm:$0xf]
      %v6522 = vld [vmem:[%s6511 + $0x28] sm:$0xf]
      %v6523 = vld [vmem:[%s6511 + $0x2c] sm:$0xf]
      %v6524 = vld [vmem:[%s6511 + $0x30] sm:$0xf]
      %v6525 = vld [vmem:[%s6511 + $0x34] sm:$0xf]
      %v6526 = vld [vmem:[%s6511 + $0x38] sm:$0xf]
      %v6527 = vld [vmem:[%s6511 + $0x3c] sm:$0xf]
      %v6528 = vld [vmem:[%s6511 + $0x40] sm:$0xf]
      %v6529 = vld [vmem:[%s6511 + $0x44] sm:$0xf]
      %v6530 = vld [vmem:[%s6511 + $0x48] sm:$0xf]
      %v6531 = vld [vmem:[%s6511 + $0x4c] sm:$0xf]
      %v6532 = vld [vmem:[%s6511 + $0x50] sm:$0xf]
      %v6533 = vld [vmem:[%s6511 + $0x54] sm:$0xf]
      %v6534 = vld [vmem:[%s6511 + $0x58] sm:$0xf]
      %v6535 = vld [vmem:[%s6511 + $0x5c] sm:$0xf]
      %v6536 = vld [vmem:[%s6511 + $0x60] sm:$0xf]
      %v6537 = vld [vmem:[%s6511 + $0x64] sm:$0xf]
      %v6538 = vld [vmem:[%s6511 + $0x68] sm:$0xf]
      %v6539 = vld [vmem:[%s6511 + $0x6c] sm:$0xf]
      %v6540 = vld [vmem:[%s6511 + $0x70] sm:$0xf]
      %v6541 = vld [vmem:[%s6511 + $0x74] sm:$0xf]
      %v6542 = vld [vmem:[%s6511 + $0x78] sm:$0xf]
      %v6543 = vld [vmem:[%s6511 + $0x7c] sm:$0xf]
      %v6544 = vld [vmem:[%s6511 + $0x80] sm:$0xf]
      %v6545 = vld [vmem:[%s6511 + $0x84] sm:$0xf]
      %v6546 = vld [vmem:[%s6511 + $0x88] sm:$0xf]
      %v6547 = vld [vmem:[%s6511 + $0x8c] sm:$0xf]
      %v6548 = vld [vmem:[%s6511 + $0x90] sm:$0xf]
      %v6549 = vld [vmem:[%s6511 + $0x94] sm:$0xf]
      %v6550 = vld [vmem:[%s6511 + $0x98] sm:$0xf]
      %v6551 = vld [vmem:[%s6511 + $0x9c] sm:$0xf]
      %v6552 = vld [vmem:[%s6511 + $0xa0] sm:$0xf]
      %v6553 = vld [vmem:[%s6511 + $0xa4] sm:$0xf]
      %v6554 = vld [vmem:[%s6511 + $0xa8] sm:$0xf]
      %v6555 = vld [vmem:[%s6511 + $0xac] sm:$0xf]
      %v6556 = vld [vmem:[%s6511 + $0xb0] sm:$0xf]
      %v6557 = vld [vmem:[%s6511 + $0xb4] sm:$0xf]
      %v6558 = vld [vmem:[%s6511 + $0xb8] sm:$0xf]
      %v6559 = vld [vmem:[%s6511 + $0xbc] sm:$0xf]
      %v6560 = vld [vmem:[%s6511 + $0xc0] sm:$0xf]
      %v6561 = vld [vmem:[%s6511 + $0xc4] sm:$0xf]
      %v6562 = vld [vmem:[%s6511 + $0xc8] sm:$0xf]
      %v6563 = vld [vmem:[%s6511 + $0xcc] sm:$0xf]
      %v6564 = vld [vmem:[%s6511 + $0xd0] sm:$0xf]
      %v6565 = vld [vmem:[%s6511 + $0xd4] sm:$0xf]
      %v6566 = vld [vmem:[%s6511 + $0xd8] sm:$0xf]
      %v6567 = vld [vmem:[%s6511 + $0xdc] sm:$0xf]
      %v6568 = vld [vmem:[%s6511 + $0xe0] sm:$0xf]
      %v6569 = vld [vmem:[%s6511 + $0xe4] sm:$0xf]
      %v6570 = vld [vmem:[%s6511 + $0xe8] sm:$0xf]
      %v6571 = vld [vmem:[%s6511 + $0xec] sm:$0xf]
      %v6572 = vld [vmem:[%s6511 + $0xf0] sm:$0xf]
      %v6573 = vld [vmem:[%s6511 + $0xf4] sm:$0xf]
      %v6574 = vld [vmem:[%s6511 + $0xf8] sm:$0xf]
      %v6575 = vld [vmem:[%s6511 + $0xfc] sm:$0xf]
      %v6640 = vunpack.c.l.b16 %v6512
      %v6641 = vunpack.c.l.b16 %v6513
      %v6642 = vunpack.c.l.b16 %v6514
      %v6643 = vunpack.c.l.b16 %v6515
      %v6644 = vunpack.c.l.b16 %v6516
      %v6645 = vunpack.c.l.b16 %v6517
      %v6646 = vunpack.c.l.b16 %v6518
      %v6647 = vunpack.c.l.b16 %v6519
      %v6648 = vunpack.c.l.b16 %v6520
      %v6649 = vunpack.c.l.b16 %v6521
      %v6650 = vunpack.c.l.b16 %v6522
      %v6651 = vunpack.c.l.b16 %v6523
      %v6652 = vunpack.c.l.b16 %v6524
      %v6653 = vunpack.c.l.b16 %v6525
      %v6654 = vunpack.c.l.b16 %v6526
      %v6655 = vunpack.c.l.b16 %v6527
      %v6656 = vunpack.c.l.b16 %v6528
      %v6657 = vunpack.c.l.b16 %v6529
      %v6658 = vunpack.c.l.b16 %v6530
      %v6659 = vunpack.c.l.b16 %v6531
      %v6660 = vunpack.c.l.b16 %v6532
      %v6661 = vunpack.c.l.b16 %v6533
      %v6662 = vunpack.c.l.b16 %v6534
      %v6663 = vunpack.c.l.b16 %v6535
      %v6664 = vunpack.c.l.b16 %v6536
      %v6665 = vunpack.c.l.b16 %v6537
      %v6666 = vunpack.c.l.b16 %v6538
      %v6667 = vunpack.c.l.b16 %v6539
      %v6668 = vunpack.c.l.b16 %v6540
      %v6669 = vunpack.c.l.b16 %v6541
      %v6670 = vunpack.c.l.b16 %v6542
      %v6671 = vunpack.c.l.b16 %v6543
      %v6672 = vunpack.c.l.b16 %v6544
      %v6673 = vunpack.c.l.b16 %v6545
      %v6674 = vunpack.c.l.b16 %v6546
      %v6675 = vunpack.c.l.b16 %v6547
      %v6676 = vunpack.c.l.b16 %v6548
      %v6677 = vunpack.c.l.b16 %v6549
      %v6678 = vunpack.c.l.b16 %v6550
      %v6679 = vunpack.c.l.b16 %v6551
      %v6680 = vunpack.c.l.b16 %v6552
      %v6681 = vunpack.c.l.b16 %v6553
      %v6682 = vunpack.c.l.b16 %v6554
      %v6683 = vunpack.c.l.b16 %v6555
      %v6684 = vunpack.c.l.b16 %v6556
      %v6685 = vunpack.c.l.b16 %v6557
      %v6686 = vunpack.c.l.b16 %v6558
      %v6687 = vunpack.c.l.b16 %v6559
      %v6688 = vunpack.c.l.b16 %v6560
      %v6689 = vunpack.c.l.b16 %v6561
      %v6690 = vunpack.c.l.b16 %v6562
      %v6691 = vunpack.c.l.b16 %v6563
      %v6692 = vunpack.c.l.b16 %v6564
      %v6693 = vunpack.c.l.b16 %v6565
      %v6694 = vunpack.c.l.b16 %v6566
      %v6695 = vunpack.c.l.b16 %v6567
      %v6696 = vunpack.c.l.b16 %v6568
      %v6697 = vunpack.c.l.b16 %v6569
      %v6698 = vunpack.c.l.b16 %v6570
      %v6699 = vunpack.c.l.b16 %v6571
      %v6700 = vunpack.c.l.b16 %v6572
      %v6701 = vunpack.c.l.b16 %v6573
      %v6702 = vunpack.c.l.b16 %v6574
      %v6703 = vunpack.c.l.b16 %v6575
      %v6704 = vpack.c.b16 %v6641, %v6640
      %v6705 = vpack.c.b16 %v6643, %v6642
      %v6706 = vpack.c.b16 %v6645, %v6644
      %v6707 = vpack.c.b16 %v6647, %v6646
      %v6708 = vpack.c.b16 %v6649, %v6648
      %v6709 = vpack.c.b16 %v6651, %v6650
      %v6710 = vpack.c.b16 %v6653, %v6652
      %v6711 = vpack.c.b16 %v6655, %v6654
      %v6712 = vpack.c.b16 %v6657, %v6656
      %v6713 = vpack.c.b16 %v6659, %v6658
      %v6714 = vpack.c.b16 %v6661, %v6660
      %v6715 = vpack.c.b16 %v6663, %v6662
      %v6716 = vpack.c.b16 %v6665, %v6664
      %v6717 = vpack.c.b16 %v6667, %v6666
      %v6718 = vpack.c.b16 %v6669, %v6668
      %v6719 = vpack.c.b16 %v6671, %v6670
      %v6720 = vpack.c.b16 %v6673, %v6672
      %v6721 = vpack.c.b16 %v6675, %v6674
      %v6722 = vpack.c.b16 %v6677, %v6676
      %v6723 = vpack.c.b16 %v6679, %v6678
      %v6724 = vpack.c.b16 %v6681, %v6680
      %v6725 = vpack.c.b16 %v6683, %v6682
      %v6726 = vpack.c.b16 %v6685, %v6684
      %v6727 = vpack.c.b16 %v6687, %v6686
      %v6728 = vpack.c.b16 %v6689, %v6688
      %v6729 = vpack.c.b16 %v6691, %v6690
      %v6730 = vpack.c.b16 %v6693, %v6692
      %v6731 = vpack.c.b16 %v6695, %v6694
      %v6732 = vpack.c.b16 %v6697, %v6696
      %v6733 = vpack.c.b16 %v6699, %v6698
      %v6734 = vpack.c.b16 %v6701, %v6700
      %v6735 = vpack.c.b16 %v6703, %v6702
      %6768 = vmatpush.bf16.msra.mxu0 %v6711
      %6769 = vmatpush.bf16.msra.mxu0 %v6710
      %6770 = vmatpush.bf16.msra.mxu0 %v6709
      %6771 = vmatpush.bf16.msra.mxu0 %v6708
      %6772 = vmatpush.bf16.msra.mxu0 %v6707
      %6773 = vmatpush.bf16.msra.mxu0 %v6706
      %6774 = vmatpush.bf16.msra.mxu0 %v6705
      %6775 = vmatpush.bf16.msra.mxu0 %v6704
      %6776 = vmatmul.bf16.gmra.mxu0 %v6499
      %v6777 = vpop.f32.mrf.mxu0
      %v6778 = vadd.f32 0.0, %v6777
      %v6779 = vpop.f32.mrf.mxu0
      %v6780 = vadd.f32 0.0, %v6779
      %6781 = vmatmul.bf16.gmra.mxu0 %v6503
      %v6782 = vpop.f32.mrf.mxu0
      %v6783 = vadd.f32 0.0, %v6782
      %v6784 = vpop.f32.mrf.mxu0
      %v6785 = vadd.f32 0.0, %v6784
      %6786 = vmatmul.bf16.gmra.mxu0 %v6507
      %v6787 = vpop.f32.mrf.mxu0
      %v6788 = vadd.f32 0.0, %v6787
      %v6789 = vpop.f32.mrf.mxu0
      %6790 = vdwg.mxu0
      %6791 = vmatpush.bf16.msra.mxu0 %v6719
      %6792 = vmatpush.bf16.msra.mxu0 %v6718
      %6793 = vmatpush.bf16.msra.mxu0 %v6717
      %6794 = vmatpush.bf16.msra.mxu0 %v6716
      %6795 = vmatpush.bf16.msra.mxu0 %v6715
      %6796 = vmatpush.bf16.msra.mxu0 %v6714
      %6797 = vmatpush.bf16.msra.mxu0 %v6713
      %6798 = vmatpush.bf16.msra.mxu0 %v6712
      %6799 = vmatmul.bf16.gmra.mxu0 %v6500
      %v6800 = vpop.f32.mrf.mxu0
      %v6801 = vadd.f32 %v6778, %v6800
      %v6802 = vpop.f32.mrf.mxu0
      %v6803 = vadd.f32 %v6780, %v6802
      %6804 = vmatmul.bf16.gmra.mxu0 %v6504
      %v6805 = vpop.f32.mrf.mxu0
      %v6806 = vadd.f32 %v6783, %v6805
      %v6807 = vpop.f32.mrf.mxu0
      %v6808 = vadd.f32 %v6785, %v6807
      %6809 = vmatmul.bf16.gmra.mxu0 %v6508
      %v6810 = vpop.f32.mrf.mxu0
      %v6811 = vadd.f32 %v6788, %v6810
      %v6812 = vpop.f32.mrf.mxu0
      %6813 = vdwg.mxu0
      %6814 = vmatpush.bf16.msra.mxu0 %v6727
      %6815 = vmatpush.bf16.msra.mxu0 %v6726
      %6816 = vmatpush.bf16.msra.mxu0 %v6725
      %6817 = vmatpush.bf16.msra.mxu0 %v6724
      %6818 = vmatpush.bf16.msra.mxu0 %v6723
      %6819 = vmatpush.bf16.msra.mxu0 %v6722
      %6820 = vmatpush.bf16.msra.mxu0 %v6721
      %6821 = vmatpush.bf16.msra.mxu0 %v6720
      %6822 = vmatmul.bf16.gmra.mxu0 %v6501
      %v6823 = vpop.f32.mrf.mxu0
      %v6824 = vadd.f32 %v6801, %v6823
      %v6825 = vpop.f32.mrf.mxu0
      %v6826 = vadd.f32 %v6803, %v6825
      %6827 = vmatmul.bf16.gmra.mxu0 %v6505
      %v6828 = vpop.f32.mrf.mxu0
      %v6829 = vadd.f32 %v6806, %v6828
      %v6830 = vpop.f32.mrf.mxu0
      %v6831 = vadd.f32 %v6808, %v6830
      %6832 = vmatmul.bf16.gmra.mxu0 %v6509
      %v6833 = vpop.f32.mrf.mxu0
      %v6834 = vadd.f32 %v6811, %v6833
      %v6835 = vpop.f32.mrf.mxu0
      %6836 = vdwg.mxu0
      %6837 = vmatpush.bf16.msra.mxu0 %v6735
      %6838 = vmatpush.bf16.msra.mxu0 %v6734
      %6839 = vmatpush.bf16.msra.mxu0 %v6733
      %6840 = vmatpush.bf16.msra.mxu0 %v6732
      %6841 = vmatpush.bf16.msra.mxu0 %v6731
      %6842 = vmatpush.bf16.msra.mxu0 %v6730
      %6843 = vmatpush.bf16.msra.mxu0 %v6729
      %6844 = vmatpush.bf16.msra.mxu0 %v6728
      %6845 = vmatmul.bf16.gmra.mxu0 %v6502
      %v6846 = vpop.f32.mrf.mxu0
      %v6847 = vadd.f32 %v6824, %v6846
      %v6848 = vpop.f32.mrf.mxu0
      %v6849 = vadd.f32 %v6826, %v6848
      %6850 = vmatmul.bf16.gmra.mxu0 %v6506
      %v6851 = vpop.f32.mrf.mxu0
      %v6852 = vadd.f32 %v6829, %v6851
      %v6853 = vpop.f32.mrf.mxu0
      %v6854 = vadd.f32 %v6831, %v6853
      %6855 = vmatmul.bf16.gmra.mxu0 %v6510
      %v6856 = vpop.f32.mrf.mxu0
      %v6857 = vadd.f32 %v6834, %v6856
      %v6858 = vpop.f32.mrf.mxu0
      %6859 = vdwg.mxu0
      %v6860 = vadd.f32 %v5555, %v6847
      %v6861 = vadd.f32 %v5556, %v6849
      %v6862 = vadd.f32 %v5557, %v6852
      %v6863 = vadd.f32 %v5558, %v6854
      %v6864 = vadd.f32 %v5559, %v6857
      %s6865 = scalar_lea.vmem %s14, 1
      %v6866 = vld [vmem:[%s6865] sm:$0x1]
      %v6868 = vperm.slane %v6866, 0
      %v6870 = vadd.f32 %v6860, %v6868
      %v6871 = vadd.f32 %v6861, %v6868
      %v6872 = vadd.f32 %v6862, %v6868
      %v6873 = vadd.f32 %v6863, %v6868
      %v6874 = vadd.f32 %v6864, %v6868
      %v6875 = vld [vmem:[%s15] sm:$0x1]
      %v6876 = vld [vmem:[%s16] sm:$0x1]
      %6877 = vadd.xlane.f32.xlu0 %v6870
      %v6878 = vpop.xlane.xlu0 %6877
      %6879 = vadd.xlane.f32.xlu0 %v6871
      %v6880 = vpop.xlane.xlu0 %6879
      %6881 = vadd.xlane.f32.xlu0 %v6872
      %v6882 = vpop.xlane.xlu0 %6881
      %6883 = vadd.xlane.f32.xlu0 %v6873
      %v6884 = vpop.xlane.xlu0 %6883
      %6885 = vadd.xlane.f32.xlu0 %v6874
      %v6886 = vpop.xlane.xlu0 %6885
      %v6887 = vmul.f32 %v6878, %v1245
      %v6888 = vmul.f32 %v6880, %v1245
      %v6889 = vmul.f32 %v6882, %v1245
      %v6890 = vmul.f32 %v6884, %v1245
      %v6891 = vmul.f32 %v6886, %v1245
      %v6892 = vsub.f32 %v6870, %v6887
      %v6893 = vsub.f32 %v6871, %v6888
      %v6894 = vsub.f32 %v6872, %v6889
      %v6895 = vsub.f32 %v6873, %v6890
      %v6896 = vsub.f32 %v6874, %v6891
      %v6897 = vmul.f32 %v6892, %v6892
      %v6898 = vmul.f32 %v6893, %v6893
      %v6899 = vmul.f32 %v6894, %v6894
      %v6900 = vmul.f32 %v6895, %v6895
      %v6901 = vmul.f32 %v6896, %v6896
      %6902 = vadd.xlane.f32.xlu0 %v6897
      %v6903 = vpop.xlane.xlu0 %6902
      %6904 = vadd.xlane.f32.xlu0 %v6898
      %v6905 = vpop.xlane.xlu0 %6904
      %6906 = vadd.xlane.f32.xlu0 %v6899
      %v6907 = vpop.xlane.xlu0 %6906
      %6908 = vadd.xlane.f32.xlu0 %v6900
      %v6909 = vpop.xlane.xlu0 %6908
      %6910 = vadd.xlane.f32.xlu0 %v6901
      %v6911 = vpop.xlane.xlu0 %6910
      %v6912 = vmul.f32 %v6903, %v1245
      %v6913 = vmul.f32 %v6905, %v1245
      %v6914 = vmul.f32 %v6907, %v1245
      %v6915 = vmul.f32 %v6909, %v1245
      %v6916 = vmul.f32 %v6911, %v1245
      %v6917 = vadd.f32 %v6912, 1e-06
      %v6918 = vadd.f32 %v6913, 1e-06
      %v6919 = vadd.f32 %v6914, 1e-06
      %v6920 = vadd.f32 %v6915, 1e-06
      %v6921 = vadd.f32 %v6916, 1e-06
      %v6922 = vrsqrt.pop %v6917
      %v6923 = vmul.f32 %v6922, %v6917
      %v6924 = vmul.f32 %v6923, %v6922
      %v6925 = vmul.f32 0.5, %v6924
      %v6926 = vsub.f32 1.5, %v6925
      %v6927 = vmul.f32 %v6922, %v6926
      %vm6928 = vweird.f32 %v6917
      %vm6929 = vweird.f32 %v6922
      %vm6930 = vmor %vm6928, %vm6929
      %v6931 = vsel %vm6930, %v6922, %v6927
      %v6932 = vrsqrt.pop %v6918
      %v6933 = vmul.f32 %v6932, %v6918
      %v6934 = vmul.f32 %v6933, %v6932
      %v6935 = vmul.f32 0.5, %v6934
      %v6936 = vsub.f32 1.5, %v6935
      %v6937 = vmul.f32 %v6932, %v6936
      %vm6938 = vweird.f32 %v6918
      %vm6939 = vweird.f32 %v6932
      %vm6940 = vmor %vm6938, %vm6939
      %v6941 = vsel %vm6940, %v6932, %v6937
      %v6942 = vrsqrt.pop %v6919
      %v6943 = vmul.f32 %v6942, %v6919
      %v6944 = vmul.f32 %v6943, %v6942
      %v6945 = vmul.f32 0.5, %v6944
      %v6946 = vsub.f32 1.5, %v6945
      %v6947 = vmul.f32 %v6942, %v6946
      %vm6948 = vweird.f32 %v6919
      %vm6949 = vweird.f32 %v6942
      %vm6950 = vmor %vm6948, %vm6949
      %v6951 = vsel %vm6950, %v6942, %v6947
      %v6952 = vrsqrt.pop %v6920
      %v6953 = vmul.f32 %v6952, %v6920
      %v6954 = vmul.f32 %v6953, %v6952
      %v6955 = vmul.f32 0.5, %v6954
      %v6956 = vsub.f32 1.5, %v6955
      %v6957 = vmul.f32 %v6952, %v6956
      %vm6958 = vweird.f32 %v6920
      %vm6959 = vweird.f32 %v6952
      %vm6960 = vmor %vm6958, %vm6959
      %v6961 = vsel %vm6960, %v6952, %v6957
      %v6962 = vrsqrt.pop %v6921
      %v6963 = vmul.f32 %v6962, %v6921
      %v6964 = vmul.f32 %v6963, %v6962
      %v6965 = vmul.f32 0.5, %v6964
      %v6966 = vsub.f32 1.5, %v6965
      %v6967 = vmul.f32 %v6962, %v6966
      %vm6968 = vweird.f32 %v6921
      %vm6969 = vweird.f32 %v6962
      %vm6970 = vmor %vm6968, %vm6969
      %v6971 = vsel %vm6970, %v6962, %v6967
      %v6972 = vmul.f32 %v6892, %v6931
      %v6973 = vmul.f32 %v6893, %v6941
      %v6974 = vmul.f32 %v6894, %v6951
      %v6975 = vmul.f32 %v6895, %v6961
      %v6976 = vmul.f32 %v6896, %v6971
      %v6978 = vperm.slane %v6875, 0
      %v6980 = vmul.f32 %v6972, %v6978
      %v6981 = vmul.f32 %v6973, %v6978
      %v6982 = vmul.f32 %v6974, %v6978
      %v6983 = vmul.f32 %v6975, %v6978
      %v6984 = vmul.f32 %v6976, %v6978
      %v6986 = vperm.slane %v6876, 0
      %v6988 = vadd.f32 %v6980, %v6986
      %v6989 = vadd.f32 %v6981, %v6986
      %v6990 = vadd.f32 %v6982, %v6986
      %v6991 = vadd.f32 %v6983, %v6986
      %v6992 = vadd.f32 %v6984, %v6986
      %v6993 = vpack.c.bf16 %v6989, %v6988
      %v6994 = vpack.c.bf16 %v6991, %v6990
      %v6995 = vpack.c.bf16 %v6992, %v6992
      %v6996 = vld [vmem:[%s17] sm:$0xff]
      %v6997 = vld [vmem:[%s17 + $0x8] sm:$0xff]
      %v6998 = vld [vmem:[%s17 + $0x10] sm:$0xff]
      %v6999 = vld [vmem:[%s17 + $0x18] sm:$0xff]
      %v7000 = vld [vmem:[%s17 + $0x20] sm:$0xff]
      %v7001 = vld [vmem:[%s17 + $0x28] sm:$0xff]
      %v7002 = vld [vmem:[%s17 + $0x30] sm:$0xff]
      %v7003 = vld [vmem:[%s17 + $0x38] sm:$0xff]
      %v7004 = vld [vmem:[%s17 + $0x40] sm:$0xff]
      %v7005 = vld [vmem:[%s17 + $0x48] sm:$0xff]
      %v7006 = vld [vmem:[%s17 + $0x50] sm:$0xff]
      %v7007 = vld [vmem:[%s17 + $0x58] sm:$0xff]
      %v7008 = vld [vmem:[%s17 + $0x60] sm:$0xff]
      %v7009 = vld [vmem:[%s17 + $0x68] sm:$0xff]
      %v7010 = vld [vmem:[%s17 + $0x70] sm:$0xff]
      %v7011 = vld [vmem:[%s17 + $0x78] sm:$0xff]
      %v7012 = vld [vmem:[%s18] sm:$0x3]
      %v7014 = vperm.slane %v7012, 0
      %v7015 = vperm.slane %v7012, 1
      %v7034 = vunpack.c.l.b16 %v6996
      %v7035 = vunpack.c.h.b16 %v6996
      %v7036 = vunpack.c.l.b16 %v6997
      %v7037 = vunpack.c.h.b16 %v6997
      %v7038 = vunpack.c.l.b16 %v6998
      %v7039 = vunpack.c.h.b16 %v6998
      %v7040 = vunpack.c.l.b16 %v6999
      %v7041 = vunpack.c.h.b16 %v6999
      %v7042 = vunpack.c.l.b16 %v7000
      %v7043 = vunpack.c.h.b16 %v7000
      %v7044 = vunpack.c.l.b16 %v7001
      %v7045 = vunpack.c.h.b16 %v7001
      %v7046 = vunpack.c.l.b16 %v7002
      %v7047 = vunpack.c.h.b16 %v7002
      %v7048 = vunpack.c.l.b16 %v7003
      %v7049 = vunpack.c.h.b16 %v7003
      %v7050 = vunpack.c.l.b16 %v7004
      %v7051 = vunpack.c.h.b16 %v7004
      %v7052 = vunpack.c.l.b16 %v7005
      %v7053 = vunpack.c.h.b16 %v7005
      %v7054 = vunpack.c.l.b16 %v7006
      %v7055 = vunpack.c.h.b16 %v7006
      %v7056 = vunpack.c.l.b16 %v7007
      %v7057 = vunpack.c.h.b16 %v7007
      %v7058 = vunpack.c.l.b16 %v7008
      %v7059 = vunpack.c.h.b16 %v7008
      %v7060 = vunpack.c.l.b16 %v7009
      %v7061 = vunpack.c.h.b16 %v7009
      %v7062 = vunpack.c.l.b16 %v7010
      %v7063 = vunpack.c.h.b16 %v7010
      %v7064 = vunpack.c.l.b16 %v7011
      %v7065 = vunpack.c.h.b16 %v7011
      %v7066 = vpack.c.b16 %v7036, %v7034
      %v7067 = vpack.c.b16 %v7037, %v7035
      %v7068 = vpack.c.b16 %v7040, %v7038
      %v7069 = vpack.c.b16 %v7041, %v7039
      %v7070 = vpack.c.b16 %v7044, %v7042
      %v7071 = vpack.c.b16 %v7045, %v7043
      %v7072 = vpack.c.b16 %v7048, %v7046
      %v7073 = vpack.c.b16 %v7049, %v7047
      %v7074 = vpack.c.b16 %v7052, %v7050
      %v7075 = vpack.c.b16 %v7053, %v7051
      %v7076 = vpack.c.b16 %v7056, %v7054
      %v7077 = vpack.c.b16 %v7057, %v7055
      %v7078 = vpack.c.b16 %v7060, %v7058
      %v7079 = vpack.c.b16 %v7061, %v7059
      %v7080 = vpack.c.b16 %v7064, %v7062
      %v7081 = vpack.c.b16 %v7065, %v7063
      %7098 = vmatpush.bf16.msra.mxu0 %v7080
      %7099 = vmatpush.bf16.msra.mxu0 %v7078
      %7100 = vmatpush.bf16.msra.mxu0 %v7076
      %7101 = vmatpush.bf16.msra.mxu0 %v7074
      %7102 = vmatpush.bf16.msra.mxu0 %v7072
      %7103 = vmatpush.bf16.msra.mxu0 %v7070
      %7104 = vmatpush.bf16.msra.mxu0 %v7068
      %7105 = vmatpush.bf16.msra.mxu0 %v7066
      %7106 = vmatmul.bf16.gmra.mxu0 %v6993
      %v7107 = vpop.f32.mrf.mxu0
      %v7108 = vadd.f32 %v7014, %v7107
      %v7109 = vpop.f32.mrf.mxu0
      %v7110 = vadd.f32 %v7014, %v7109
      %7111 = vmatmul.bf16.gmra.mxu0 %v6994
      %v7112 = vpop.f32.mrf.mxu0
      %v7113 = vadd.f32 %v7014, %v7112
      %v7114 = vpop.f32.mrf.mxu0
      %v7115 = vadd.f32 %v7014, %v7114
      %7116 = vmatmul.bf16.gmra.mxu0 %v6995
      %v7117 = vpop.f32.mrf.mxu0
      %v7118 = vadd.f32 %v7014, %v7117
      %v7119 = vpop.f32.mrf.mxu0
      %7120 = vdwg.mxu0
      %7121 = vmatpush.bf16.msra.mxu0 %v7081
      %7122 = vmatpush.bf16.msra.mxu0 %v7079
      %7123 = vmatpush.bf16.msra.mxu0 %v7077
      %7124 = vmatpush.bf16.msra.mxu0 %v7075
      %7125 = vmatpush.bf16.msra.mxu0 %v7073
      %7126 = vmatpush.bf16.msra.mxu0 %v7071
      %7127 = vmatpush.bf16.msra.mxu0 %v7069
      %7128 = vmatpush.bf16.msra.mxu0 %v7067
      %7129 = vmatmul.bf16.gmra.mxu0 %v6993
      %v7130 = vpop.f32.mrf.mxu0
      %v7131 = vadd.f32 %v7015, %v7130
      %v7132 = vpop.f32.mrf.mxu0
      %v7133 = vadd.f32 %v7015, %v7132
      %7134 = vmatmul.bf16.gmra.mxu0 %v6994
      %v7135 = vpop.f32.mrf.mxu0
      %v7136 = vadd.f32 %v7015, %v7135
      %v7137 = vpop.f32.mrf.mxu0
      %v7138 = vadd.f32 %v7015, %v7137
      %7139 = vmatmul.bf16.gmra.mxu0 %v6995
      %v7140 = vpop.f32.mrf.mxu0
      %v7141 = vadd.f32 %v7015, %v7140
      %v7142 = vpop.f32.mrf.mxu0
      %7143 = vdwg.mxu0
      %7144 = vst [vmem:[%s602] sm:$0xff] %v7108
      %7145 = vst [vmem:[%s602 + $0x8] sm:$0xff] %v7131
      %7146 = vst [vmem:[%s602 + $0x10] sm:$0xff] %v7110
      %7147 = vst [vmem:[%s602 + $0x18] sm:$0xff] %v7133
      %7148 = vst [vmem:[%s602 + $0x20] sm:$0xff] %v7113
      %7149 = vst [vmem:[%s602 + $0x28] sm:$0xff] %v7136
      %7150 = vst [vmem:[%s602 + $0x30] sm:$0xff] %v7115
      %7151 = vst [vmem:[%s602 + $0x38] sm:$0xff] %v7138
      %7152 = vst [vmem:[%s602 + $0x40] sm:$0xff] %v7118
      %7153 = vst [vmem:[%s602 + $0x48] sm:$0xff] %v7141
      %p7154 = scmp.lt.s32.totalorder %s30, 1
      %s7155 = scalar_select %p7154, %s30, 1
      %s7156 = smul.addr %s7155, 10
      %s7157 = smul.addr %s7156, 8
      %s7158 = scalar_lea.vmem %s19, %s7157
      // Predicated region
      $region97: #{vit_encoder_forward.1} parent=95 // pred_check
        %p7159 = pneg %p452
      $region98: #{vit_encoder_forward.1} parent=95 // pred_check_branch
        %7161 = sbr.rel (%p7159) target = $region100
      $region99: #{vit_encoder_forward.1} parent=95 // pred_region
        _
      $region100: #{vit_encoder_forward.1} parent=95 // pred_fallthru
        _
    $region96: #{vit_encoder_forward.1} parent=5 // pred_fallthru
      _
    %p7162 = scmp.le.s32.totalorder 2, %s25
    // Predicated region
    $region101: #{vit_encoder_forward.1} parent=5 // pred_check
      %p7163 = pneg %p7162
    $region102: #{vit_encoder_forward.1} parent=5 // pred_check_branch
      %7165 = sbr.rel (%p7163) target = $region104
    $region103: #{vit_encoder_forward.1} parent=5 // pred_region
      %s7166 = ssub.s32 %s25, 2
      // Predicated region
      $region105: #{vit_encoder_forward.1} parent=103 // pred_check
        %p7167 = pneg %p458
      $region106: #{vit_encoder_forward.1} parent=103 // pred_check_branch
        %7169 = sbr.rel (%p7167) target = $region108
      $region107: #{vit_encoder_forward.1} parent=103 // pred_region
        %p7170 = scmp.lt.s32.totalorder %s31, 1
        %s7171 = scalar_select %p7170, %s31, 1
        %s7172 = smul.addr %s7171, 10
        %s7173 = smul.addr %s7172, 8
        %s7174 = scalar_lea.vmem %s19, %s7173
      $region108: #{vit_encoder_forward.1} parent=103 // pred_fallthru
        _
    $region104: #{vit_encoder_forward.1} parent=5 // pred_fallthru
      _
  $region6: #{vit_encoder_forward.1} parent=0 // loop_footer
    %s29 = sadd.s32 1, %s25
  $region7: #{vit_encoder_forward.1} parent=0 // loop_footer_branch
    %24 = sbr.rel target = $region3
  $region8: #{vit_encoder_forward.1} parent=0 // loop_exit
    _

</llo_original>
